<compile_context>
chip_gen: v6e
topology: v6e:2x2x1
jax: 0.10.0
libtpu: 0.0.40
codegen_flags: <defaults>
</compile_context>

<pallas_src>
import functools

import jax
import jax.numpy as jnp
from jax.experimental import pallas as pl
from jax.experimental.pallas import tpu as pltpu


# --------------------------------------------------------------------------------------
# One-time probe of pltpu.roll's shift convention (run OUTSIDE jit; result is cached).
# "left"  : roll(x, k, axis)[i] == x[(i + k) % n]
# "right" : roll(x, k, axis)[i] == x[(i - k) % n]   (numpy/jnp.roll convention)
# "slice" : fall back to unambiguous static lane slices inside the kernel.
# --------------------------------------------------------------------------------------
_ROLL_MODE_CACHE = []


def _detect_roll_mode():
    if _ROLL_MODE_CACHE:
        return _ROLL_MODE_CACHE[0]
    mode = "slice"
    try:
        def _probe(o_ref):
            x = jax.lax.broadcasted_iota(jnp.int32, (8, 1024), 1).astype(jnp.float32)
            o_ref[...] = pltpu.roll(x, 1, 1)

        arr = jax.device_get(
            pl.pallas_call(
                _probe, out_shape=jax.ShapeDtypeStruct((8, 1024), jnp.float32))())
        p0, p127 = int(arr[0, 0]), int(arr[0, 127])
        if p0 == 1 and p127 == 128:          # whole-row left rotation
            mode = "left"
        elif p0 == 1023 and p127 == 126:     # whole-row numpy-style rotation
            mode = "right"
    except Exception:
        mode = "slice"
    _ROLL_MODE_CACHE.append(mode)
    return mode


# --------------------------------------------------------------------------------------
# Kernel A: conv1 (3x3 stride 2) + ReLU + conv2 (3x3 stride 1) + ReLU, per batch image.
# Inputs are wrapper-built lane-dense im2col patches (9*Cin, S_pad); both convs run in
# transposed orientation so the result lands directly in (NF, S_pad) CHW layout.
# Spatial lanes are H1*W1-indexed (padded to S_pad); invalid/pad lanes hold finite
# garbage that is cancelled by zero rows in the repacked fc weight.
# --------------------------------------------------------------------------------------
def _conv_stack_kernel(p_ref, w1_ref, b1_ref, w2_ref, b2_ref, out_ref,
                       *, nf, w1dim, s_pad, roll_mode):
    patches = p_ref[0]                                            # (9*Cin, S_pad) f32

    # conv1: one MXU push, lane-dense result (NF, S_pad)
    conv1 = jnp.dot(w1_ref[...], patches, preferred_element_type=jnp.float32)
    conv1 = jnp.maximum(conv1 + b1_ref[...], 0.0)

    # conv2 taps: lane-shift the conv1 map by ky*W1+kx for each of the 9 taps.
    if roll_mode == "slice":
        ext = jnp.concatenate(
            [conv1, jnp.zeros((nf, 128), jnp.float32)], axis=1)   # 128-aligned concat

    taps = []
    for ky in range(3):
        for kx in range(3):
            off = ky * w1dim + kx
            if off == 0:
                taps.append(conv1)
            elif roll_mode == "slice":
                taps.append(ext[:, off:off + s_pad])
            else:
                shift = off if roll_mode == "left" else s_pad - off
                taps.append(pltpu.roll(conv1, shift, 1))          # XLU lane rotate
    taps = jnp.concatenate(taps, axis=0)                          # (9*NF, S_pad)

    # conv2: one MXU push, lane-dense result (NF, S_pad)
    conv2 = jnp.dot(w2_ref[...], taps, preferred_element_type=jnp.float32)
    conv2 = jnp.maximum(conv2 + b2_ref[...], 0.0)
    out_ref[0] = conv2.astype(out_ref.dtype)                      # bf16, lane-dense store


# --------------------------------------------------------------------------------------
# Kernel B: fc (K-tiled NT matmul + bias) + LayerNorm + tanh.
# Weight stream is bf16, lane-dense (F, K_pad); accumulator and LN/tanh stay in f32.
# --------------------------------------------------------------------------------------
def _fc_ln_tanh_kernel(h_ref, w_ref, b_ref, g_ref, beta_ref, out_ref, acc_ref, *, eps):
    k = pl.program_id(0)

    @pl.when(k == 0)
    def _():
        acc_ref[...] = jnp.zeros_like(acc_ref)

    acc_ref[...] += jax.lax.dot_general(
        h_ref[...], w_ref[...],
        dimension_numbers=(((1,), (1,)), ((), ())),               # NT: contract last dims
        preferred_element_type=jnp.float32)

    @pl.when(k == pl.num_programs(0) - 1)
    def _():
        y = acc_ref[...] + b_ref[...]
        mu = jnp.mean(y, axis=-1, keepdims=True)
        var = jnp.mean(jnp.square(y - mu), axis=-1, keepdims=True)
        yn = (y - mu) * jax.lax.rsqrt(var + eps)
        out_ref[...] = jnp.tanh(yn * g_ref[...] + beta_ref[...])


# --------------------------------------------------------------------------------------
# One-time parameter repacking (per weight update, NOT per forward call)
# --------------------------------------------------------------------------------------
def prepare_params(params, obs_shape, depth_segm=False):
    C, H, W = obs_shape
    NF = params['w1'].shape[0]
    F = params['fc_w'].shape[0]
    H1, W1 = (H - 3) // 2 + 1, (W - 3) // 2 + 1
    H2, W2 = H1 - 2, W1 - 2
    S1 = H1 * W1
    S_pad = ((S1 + 127) // 128) * 128

    w1 = params['w1'].astype(jnp.float32)
    if not depth_segm:
        # Fold the /255 normalization of the first 3 (RGB) channels into conv1 weights.
        scale = jnp.where(jnp.arange(C) < 3, 1.0 / 255.0, 1.0).astype(jnp.float32)
        w1 = w1 * scale[None, :, None, None]
    # (out,in,kh,kw) -> (out,kh,kw,in) -> (NF, 9*Cin); columns are (tap, channel)-ordered
    w1t = jnp.transpose(w1, (0, 2, 3, 1)).reshape(NF, 9 * C)
    w2t = jnp.transpose(params['w2'].astype(jnp.float32), (0, 2, 3, 1)).reshape(NF, 9 * NF)

    # fc weight scatter: PyTorch flatten index c*H2*W2 + y*W2 + x maps to the kernel-A
    # layout index c*S_pad + y*W1 + x; all other (border / wrapped / pad) lanes get zero
    # rows so the kernel never has to mask invalid conv2 lanes.
    fc_w = params['fc_w'].astype(jnp.float32).reshape(F, NF, H2, W2)
    fc_w = jnp.pad(fc_w, ((0, 0), (0, 0), (0, H1 - H2), (0, W1 - W2)))
    fc_w = fc_w.reshape(F, NF, S1)
    fc_w = jnp.pad(fc_w, ((0, 0), (0, 0), (0, S_pad - S1)))
    fc_wt = fc_w.reshape(F, NF * S_pad).astype(jnp.bfloat16)      # (F, K_pad) lane-dense bf16

    return dict(
        w1t=w1t,
        b1=params['b1'].reshape(NF, 1).astype(jnp.float32),
        w2t=w2t,
        b2=params['b2'].reshape(NF, 1).astype(jnp.float32),
        fc_wt=fc_wt,
        fc_b=params['fc_b'].reshape(1, F).astype(jnp.float32),
        ln_g=params['ln_g'].reshape(1, F).astype(jnp.float32),
        ln_b=params['ln_b'].reshape(1, F).astype(jnp.float32),
    )


# --------------------------------------------------------------------------------------
# Forward wrapper
# --------------------------------------------------------------------------------------
def pixel_encoder_forward(obs, prep, roll_mode=None, n_k=2):
    """obs: float32 NCHW (B, C, H, W) with H == W in {64, 84, 100, 128}."""
    B, C, H, W = obs.shape
    NF = prep['w1t'].shape[0]
    F = prep['fc_b'].shape[1]
    H1, W1 = (H - 3) // 2 + 1, (W - 3) // 2 + 1
    K_pad = prep['fc_wt'].shape[1]
    S_pad = K_pad // NF
    if roll_mode is None:
        roll_mode = _detect_roll_mode()   # cached; prime it outside jit once

    # conv1 im2col hoisted to XLA: lane-dense patches (B, 9*Cin, S_pad), stride-2 taps.
    taps = []
    for ky in range(3):
        for kx in range(3):
            taps.append(obs[:, :, ky:ky + 2 * H1 - 1:2, kx:kx + 2 * W1 - 1:2])
    patches = jnp.stack(taps, axis=1).reshape(B, 9 * C, H1 * W1)
    patches = jnp.pad(patches, ((0, 0), (0, 0), (0, S_pad - H1 * W1)))

    # TODO(synk): if B == 1 on v7x, re-split this grid over NF/spatial tiles so the
    # second TensorCore is not idle.
    conv_out = pl.pallas_call(
        functools.partial(_conv_stack_kernel, nf=NF, w1dim=W1, s_pad=S_pad,
                          roll_mode=roll_mode),
        out_shape=jax.ShapeDtypeStruct((B, NF, S_pad), jnp.bfloat16),
        grid=(B,),
        in_specs=[
            pl.BlockSpec((1, 9 * C, S_pad), lambda b: (b, 0, 0)),
            pl.BlockSpec((NF, 9 * C), lambda b: (0, 0)),
            pl.BlockSpec((NF, 1), lambda b: (0, 0)),
            pl.BlockSpec((NF, 9 * NF), lambda b: (0, 0)),
            pl.BlockSpec((NF, 1), lambda b: (0, 0)),
        ],
        out_specs=pl.BlockSpec((1, NF, S_pad), lambda b: (b, 0, 0)),
        compiler_params=pltpu.CompilerParams(dimension_semantics=("parallel",)),
    )(patches, prep['w1t'], prep['b1'], prep['w2t'], prep['b2'])

    # CHW-extended flatten (matches the fc_wt scatter); padded/border lanes hit zero rows.
    h = conv_out.reshape(B, K_pad)                                # bf16

    # K-tiled, pipelined fc + LayerNorm + tanh.  n_k=2 default (weight stream is small
    # after bf16 + lane-dense repack, so grid-step overhead dominates on v7x; neutral
    # on v5e — raise to 4 there if desired).
    while n_k > 1 and K_pad % (n_k * 128) != 0:
        n_k //= 2
    TK = K_pad // n_k

    out = pl.pallas_call(
        functools.partial(_fc_ln_tanh_kernel, eps=1e-5),
        out_shape=jax.ShapeDtypeStruct((B, F), jnp.float32),
        grid=(n_k,),
        in_specs=[
            pl.BlockSpec((B, TK), lambda k: (0, k)),
            pl.BlockSpec((F, TK), lambda k: (0, k)),
            pl.BlockSpec((1, F), lambda k: (0, 0)),
            pl.BlockSpec((1, F), lambda k: (0, 0)),
            pl.BlockSpec((1, F), lambda k: (0, 0)),
        ],
        out_specs=pl.BlockSpec((B, F), lambda k: (0, 0)),
        scratch_shapes=[pltpu.VMEM((B, F), jnp.float32)],
        compiler_params=pltpu.CompilerParams(dimension_semantics=("arbitrary",)),
    )(h, prep['fc_wt'], prep['fc_b'], prep['ln_g'], prep['ln_b'])
    return out


# --------------------------------------------------------------------------------------
# Deterministic parameter init (PyTorch-default-style uniform bounds)
# --------------------------------------------------------------------------------------
def init_params(key, obs_shape, feature_dim, num_filters=32):
    C, H, W = obs_shape
    H1 = (H - 3) // 2 + 1
    H2 = H1 - 2
    Kf = num_filters * H2 * H2
    ks = jax.random.split(key, 6)

    def unif(k, shape, fan_in):
        b = 1.0 / (fan_in ** 0.5)
        return jax.random.uniform(k, shape, jnp.float32, -b, b)

    return dict(
        w1=unif(ks[0], (num_filters, C, 3, 3), C * 9),
        b1=unif(ks[1], (num_filters,), C * 9),
        w2=unif(ks[2], (num_filters, num_filters, 3, 3), num_filters * 9),
        b2=unif(ks[3], (num_filters,), num_filters * 9),
        fc_w=unif(ks[4], (feature_dim, Kf), Kf),
        fc_b=unif(ks[5], (feature_dim,), Kf),
        ln_g=jnp.ones((feature_dim,), jnp.float32),
        ln_b=jnp.zeros((feature_dim,), jnp.float32),
    )


# --------------------------------------------------------------------------------------
# Pure-JAX reference (mirrors the PyTorch forward, f32 HIGHEST precision)
# --------------------------------------------------------------------------------------
def reference_forward(obs, params):
    x = jnp.concatenate([obs[:, :3] / 255.0, obs[:, 3:]], axis=1)
    hp = jax.lax.Precision.HIGHEST
    y = jax.lax.conv_general_dilated(x, params['w1'], (2, 2), 'VALID',
                                     dimension_numbers=('NCHW', 'OIHW', 'NCHW'), precision=hp)
    y = jax.nn.relu(y + params['b1'][None, :, None, None])
    y = jax.lax.conv_general_dilated(y, params['w2'], (1, 1), 'VALID',
                                     dimension_numbers=('NCHW', 'OIHW', 'NCHW'), precision=hp)
    y = jax.nn.relu(y + params['b2'][None, :, None, None])
    h = y.reshape(y.shape[0], -1)
    hfc = jnp.dot(h, params['fc_w'].T, precision=hp) + params['fc_b']
    mu = hfc.mean(-1, keepdims=True)
    var = ((hfc - mu) ** 2).mean(-1, keepdims=True)
    hn = (hfc - mu) / jnp.sqrt(var + 1e-5) * params['ln_g'] + params['ln_b']
    return jnp.tanh(hn)


if __name__ == "__main__":
    B = 2
    obs_shape = (4, 64, 64)      # RGBD, 64x64 -> OUT_DIM_64[2] == 29
    feature_dim = 32

    key = jax.random.PRNGKey(0)
    kp, krgb, kd = jax.random.split(key, 3)
    params = init_params(kp, obs_shape, feature_dim)
    rgb = jax.random.uniform(krgb, (B, 3, 64, 64), jnp.float32, 0.0, 255.0)
    depth = jax.random.uniform(kd, (B, 1, 64, 64), jnp.float32, 0.0, 5.0)
    obs = jnp.concatenate([rgb, depth], axis=1)                  # (B, 4, 64, 64) NCHW

    _detect_roll_mode()                                          # prime probe outside jit
    prep = prepare_params(params, obs_shape)                     # one-time weight repack
    out = jax.jit(pixel_encoder_forward)(obs, prep)
    out = jax.block_until_ready(out)
    assert out.shape == (B, feature_dim), out.shape

    # Tolerance relaxed vs the f32 HIGHEST-precision reference because the fc weight
    # stream and conv activations are intentionally bf16 (perf feedback); accumulation
    # and LN/tanh are f32 so the error stays well under 2e-2.
    ref = reference_forward(obs, params)
    if not bool(jnp.allclose(out, ref, atol=2e-2, rtol=2e-2)):
        raise AssertionError(
            f"mismatch vs reference: max abs diff {float(jnp.max(jnp.abs(out - ref)))}")

    print("KERNEL_OK")
</pallas_src>

<mosaic_0001>
module attributes {stable_mosaic.version = 11 : i64} {
  func.func @_conv_stack_kernel(%arg0: i32, %arg1: memref<1x36x1024xf32, #tpu.memory_space<vmem>>, %arg2: memref<32x36xf32, #tpu.memory_space<vmem>>, %arg3: memref<32x1xf32, #tpu.memory_space<vmem>>, %arg4: memref<32x288xf32, #tpu.memory_space<vmem>>, %arg5: memref<32x1xf32, #tpu.memory_space<vmem>>, %arg6: memref<1x32x1024xbf16, #tpu.memory_space<vmem>>) attributes {dimension_semantics = [#tpu.dimension_semantics<parallel>], iteration_bounds = array<i64: 2>, scalar_prefetch = 0 : i64, scratch_operands = 0 : i64, tpu.core_type = #tpu.core_type<tc>, window_params = [{transform_indices = @transform_0, window_bounds = array<i64: 1, 36, 1024>}, {pipeline_mode = #tpu.pipeline_mode<synchronous>, transform_indices = @transform_1, window_bounds = array<i64: 32, 36>}, {pipeline_mode = #tpu.pipeline_mode<synchronous>, transform_indices = @transform_2, window_bounds = array<i64: 32, 1>}, {pipeline_mode = #tpu.pipeline_mode<synchronous>, transform_indices = @transform_3, window_bounds = array<i64: 32, 288>}, {pipeline_mode = #tpu.pipeline_mode<synchronous>, transform_indices = @transform_4, window_bounds = array<i64: 32, 1>}, {transform_indices = @transform_5, window_bounds = array<i64: 1, 32, 1024>}]} {
    %c0 = arith.constant 0 : index
    %c0_0 = arith.constant 0 : index
    %c0_1 = arith.constant 0 : index
    %0 = vector.load %arg1[%c0, %c0_0, %c0_1] : memref<1x36x1024xf32, #tpu.memory_space<vmem>>, vector<1x36x1024xf32>
    %1 = vector.shape_cast %0 : vector<1x36x1024xf32> to vector<36x1024xf32>
    %c0_2 = arith.constant 0 : index
    %c0_3 = arith.constant 0 : index
    %2 = vector.load %arg2[%c0_2, %c0_3] : memref<32x36xf32, #tpu.memory_space<vmem>>, vector<32x36xf32>
    %cst = arith.constant dense<0.000000e+00> : vector<32x1024xf32>
    %3 = tpu.matmul %2, %1, %cst {dimension_numbers = #tpu.dot_dimension_numbers<[1], [0], [0], [1], [0, 0, 1, 1], [], []>} : vector<32x36xf32>, vector<36x1024xf32>, vector<32x1024xf32> -> vector<32x1024xf32>
    %c0_4 = arith.constant 0 : index
    %c0_5 = arith.constant 0 : index
    %4 = vector.load %arg3[%c0_4, %c0_5] : memref<32x1xf32, #tpu.memory_space<vmem>>, vector<32x1xf32>
    %5 = vector.broadcast %4 : vector<32x1xf32> to vector<32x1024xf32>
    %6 = arith.addf %3, %5 : vector<32x1024xf32>
    %cst_6 = arith.constant 0.000000e+00 : f32
    %7 = vector.broadcast %cst_6 : f32 to vector<32x1024xf32>
    %8 = arith.maximumf %6, %7 : vector<32x1024xf32>
    %cst_7 = arith.constant 0.000000e+00 : f32
    %9 = vector.broadcast %cst_7 : f32 to vector<32x128xf32>
    %10 = tpu.concatenate %8, %9 in 1 : vector<32x1024xf32>, vector<32x128xf32> -> vector<32x1152xf32>
    %11 = vector.extract_strided_slice %10 {offsets = [0, 1], sizes = [32, 1024], strides = [1, 1]} : vector<32x1152xf32> to vector<32x1024xf32>
    %12 = vector.extract_strided_slice %10 {offsets = [0, 2], sizes = [32, 1024], strides = [1, 1]} : vector<32x1152xf32> to vector<32x1024xf32>
    %13 = vector.extract_strided_slice %10 {offsets = [0, 31], sizes = [32, 1024], strides = [1, 1]} : vector<32x1152xf32> to vector<32x1024xf32>
    %14 = vector.extract_strided_slice %10 {offsets = [0, 32], sizes = [32, 1024], strides = [1, 1]} : vector<32x1152xf32> to vector<32x1024xf32>
    %15 = vector.extract_strided_slice %10 {offsets = [0, 33], sizes = [32, 1024], strides = [1, 1]} : vector<32x1152xf32> to vector<32x1024xf32>
    %16 = vector.extract_strided_slice %10 {offsets = [0, 62], sizes = [32, 1024], strides = [1, 1]} : vector<32x1152xf32> to vector<32x1024xf32>
    %17 = vector.extract_strided_slice %10 {offsets = [0, 63], sizes = [32, 1024], strides = [1, 1]} : vector<32x1152xf32> to vector<32x1024xf32>
    %18 = vector.extract_strided_slice %10 {offsets = [0, 64], sizes = [32, 1024], strides = [1, 1]} : vector<32x1152xf32> to vector<32x1024xf32>
    %19 = tpu.concatenate %8, %11, %12, %13, %14, %15, %16, %17, %18 in 0 : vector<32x1024xf32>, vector<32x1024xf32>, vector<32x1024xf32>, vector<32x1024xf32>, vector<32x1024xf32>, vector<32x1024xf32>, vector<32x1024xf32>, vector<32x1024xf32>, vector<32x1024xf32> -> vector<288x1024xf32>
    %c0_8 = arith.constant 0 : index
    %c0_9 = arith.constant 0 : index
    %20 = vector.load %arg4[%c0_8, %c0_9] : memref<32x288xf32, #tpu.memory_space<vmem>>, vector<32x288xf32>
    %cst_10 = arith.constant dense<0.000000e+00> : vector<32x1024xf32>
    %21 = tpu.matmul %20, %19, %cst_10 {dimension_numbers = #tpu.dot_dimension_numbers<[1], [0], [0], [1], [0, 0, 1, 1], [], []>} : vector<32x288xf32>, vector<288x1024xf32>, vector<32x1024xf32> -> vector<32x1024xf32>
    %c0_11 = arith.constant 0 : index
    %c0_12 = arith.constant 0 : index
    %22 = vector.load %arg5[%c0_11, %c0_12] : memref<32x1xf32, #tpu.memory_space<vmem>>, vector<32x1xf32>
    %23 = vector.broadcast %22 : vector<32x1xf32> to vector<32x1024xf32>
    %24 = arith.addf %21, %23 : vector<32x1024xf32>
    %cst_13 = arith.constant 0.000000e+00 : f32
    %25 = vector.broadcast %cst_13 : f32 to vector<32x1024xf32>
    %26 = arith.maximumf %24, %25 : vector<32x1024xf32>
    %27 = arith.truncf %26 : vector<32x1024xf32> to vector<32x1024xbf16>
    %c0_14 = arith.constant 0 : index
    %c0_15 = arith.constant 0 : index
    %c0_16 = arith.constant 0 : index
    %28 = vector.load %arg6[%c0_14, %c0_15, %c0_16] : memref<1x32x1024xbf16, #tpu.memory_space<vmem>>, vector<1x32x1024xbf16>
    %29 = vector.shape_cast %28 : vector<1x32x1024xbf16> to vector<32x1024xbf16>
    %30 = vector.shape_cast %27 : vector<32x1024xbf16> to vector<1x32x1024xbf16>
    tpu.vector_store %arg6[%c0_14, %c0_15, %c0_16], %30 {strides = array<i32>} : memref<1x32x1024xbf16, #tpu.memory_space<vmem>>, vector<1x32x1024xbf16>,
    return
  }
  func.func @transform_0(%arg0: i32) -> (i32, i32, i32) {
    %c0_i32 = arith.constant 0 : i32
    %c0_i32_0 = arith.constant 0 : i32
    %c0_i32_1 = arith.constant 0 : i32
    return %arg0, %c0_i32, %c0_i32_0 : i32, i32, i32
  }
  func.func @transform_1(%arg0: i32) -> (i32, i32) {
    %c0_i32 = arith.constant 0 : i32
    %c0_i32_0 = arith.constant 0 : i32
    %c0_i32_1 = arith.constant 0 : i32
    return %c0_i32, %c0_i32_0 : i32, i32
  }
  func.func @transform_2(%arg0: i32) -> (i32, i32) {
    %c0_i32 = arith.constant 0 : i32
    %c0_i32_0 = arith.constant 0 : i32
    %c0_i32_1 = arith.constant 0 : i32
    return %c0_i32, %c0_i32_0 : i32, i32
  }
  func.func @transform_3(%arg0: i32) -> (i32, i32) {
    %c0_i32 = arith.constant 0 : i32
    %c0_i32_0 = arith.constant 0 : i32
    %c0_i32_1 = arith.constant 0 : i32
    return %c0_i32, %c0_i32_0 : i32, i32
  }
  func.func @transform_4(%arg0: i32) -> (i32, i32) {
    %c0_i32 = arith.constant 0 : i32
    %c0_i32_0 = arith.constant 0 : i32
    %c0_i32_1 = arith.constant 0 : i32
    return %c0_i32, %c0_i32_0 : i32, i32
  }
  func.func @transform_5(%arg0: i32) -> (i32, i32, i32) {
    %c0_i32 = arith.constant 0 : i32
    %c0_i32_0 = arith.constant 0 : i32
    %c0_i32_1 = arith.constant 0 : i32
    return %arg0, %c0_i32, %c0_i32_0 : i32, i32, i32
  }
}

module attributes {stable_mosaic.version = 11 : i64} {
  func.func @_fc_ln_tanh_kernel(%arg0: i32, %arg1: memref<2x16384xbf16, #tpu.memory_space<vmem>>, %arg2: memref<32x16384xbf16, #tpu.memory_space<vmem>>, %arg3: memref<1x32xf32, #tpu.memory_space<vmem>>, %arg4: memref<1x32xf32, #tpu.memory_space<vmem>>, %arg5: memref<1x32xf32, #tpu.memory_space<vmem>>, %arg6: memref<2x32xf32, #tpu.memory_space<vmem>>, %arg7: memref<2x32xf32, #tpu.memory_space<vmem>>) attributes {dimension_semantics = [#tpu.dimension_semantics<arbitrary>], iteration_bounds = array<i64: 2>, scalar_prefetch = 0 : i64, scratch_operands = 1 : i64, tpu.core_type = #tpu.core_type<tc>, window_params = [{transform_indices = @transform_0, window_bounds = array<i64: 2, 16384>}, {transform_indices = @transform_1, window_bounds = array<i64: 32, 16384>}, {pipeline_mode = #tpu.pipeline_mode<synchronous>, transform_indices = @transform_2, window_bounds = array<i64: 1, 32>}, {pipeline_mode = #tpu.pipeline_mode<synchronous>, transform_indices = @transform_3, window_bounds = array<i64: 1, 32>}, {pipeline_mode = #tpu.pipeline_mode<synchronous>, transform_indices = @transform_4, window_bounds = array<i64: 1, 32>}, {pipeline_mode = #tpu.pipeline_mode<synchronous>, transform_indices = @transform_5, window_bounds = array<i64: 2, 32>}]} {
    %c0_i32 = arith.constant 0 : i32
    %0 = arith.cmpi eq, %arg0, %c0_i32 : i32
    %1 = arith.extui %0 : i1 to i32
    %c0_i32_0 = arith.constant 0 : i32
    %2 = arith.cmpi ne, %1, %c0_i32_0 : i32
    scf.if %2 {
      %cst_9 = arith.constant 0.000000e+00 : f32
      %12 = vector.broadcast %cst_9 : f32 to vector<2x32xf32>
      %c0_10 = arith.constant 0 : index
      %c0_11 = arith.constant 0 : index
      %13 = vector.load %arg7[%c0_10, %c0_11] : memref<2x32xf32, #tpu.memory_space<vmem>>, vector<2x32xf32>
      tpu.vector_store %arg7[%c0_10, %c0_11], %12 {strides = array<i32>} : memref<2x32xf32, #tpu.memory_space<vmem>>, vector<2x32xf32>,
    } else {
    }
    %c0 = arith.constant 0 : index
    %c0_1 = arith.constant 0 : index
    %3 = vector.load %arg7[%c0, %c0_1] : memref<2x32xf32, #tpu.memory_space<vmem>>, vector<2x32xf32>
    %c0_2 = arith.constant 0 : index
    %c0_3 = arith.constant 0 : index
    %4 = vector.load %arg1[%c0_2, %c0_3] : memref<2x16384xbf16, #tpu.memory_space<vmem>>, vector<2x16384xbf16>
    %c0_4 = arith.constant 0 : index
    %c0_5 = arith.constant 0 : index
    %5 = vector.load %arg2[%c0_4, %c0_5] : memref<32x16384xbf16, #tpu.memory_space<vmem>>, vector<32x16384xbf16>
    %cst = arith.constant dense<0.000000e+00> : vector<2x32xf32>
    %6 = tpu.matmul %4, %5, %cst {dimension_numbers = #tpu.dot_dimension_numbers<[1], [1], [0], [0], [0, 0, 1, 0], [], []>} : vector<2x16384xbf16>, vector<32x16384xbf16>, vector<2x32xf32> -> vector<2x32xf32>
    %7 = arith.addf %3, %6 : vector<2x32xf32>
    %c0_6 = arith.constant 0 : index
    %c0_7 = arith.constant 0 : index
    %8 = vector.load %arg7[%c0_6, %c0_7] : memref<2x32xf32, #tpu.memory_space<vmem>>, vector<2x32xf32>
    tpu.vector_store %arg7[%c0_6, %c0_7], %7 {strides = array<i32>} : memref<2x32xf32, #tpu.memory_space<vmem>>, vector<2x32xf32>,
    %c1_i32 = arith.constant 1 : i32
    %9 = arith.cmpi eq, %arg0, %c1_i32 : i32
    %10 = arith.extui %9 : i1 to i32
    %c0_i32_8 = arith.constant 0 : i32
    %11 = arith.cmpi ne, %10, %c0_i32_8 : i32
    scf.if %11 {
      %c0_9 = arith.constant 0 : index
      %c0_10 = arith.constant 0 : index
      %12 = vector.load %arg7[%c0_9, %c0_10] : memref<2x32xf32, #tpu.memory_space<vmem>>, vector<2x32xf32>
      %c0_11 = arith.constant 0 : index
      %c0_12 = arith.constant 0 : index
      %13 = vector.load %arg3[%c0_11, %c0_12] : memref<1x32xf32, #tpu.memory_space<vmem>>, vector<1x32xf32>
      %14 = vector.broadcast %13 : vector<1x32xf32> to vector<2x32xf32>
      %15 = arith.addf %12, %14 : vector<2x32xf32>
      %cst_13 = arith.constant dense<0.000000e+00> : vector<2xf32>
      %16 = vector.multi_reduction <add>, %15, %cst_13 [1] : vector<2x32xf32> to vector<2xf32>
      %17 = vector.shape_cast %16 : vector<2xf32> to vector<2x1xf32>
      %cst_14 = arith.constant 3.200000e+01 : f32
      %18 = vector.broadcast %cst_14 : f32 to vector<2x1xf32>
      %19 = arith.divf %17, %18 : vector<2x1xf32>
      %20 = vector.broadcast %19 : vector<2x1xf32> to vector<2x32xf32>
      %21 = arith.subf %15, %20 : vector<2x32xf32>
      %22 = arith.mulf %21, %21 : vector<2x32xf32>
      %cst_15 = arith.constant dense<0.000000e+00> : vector<2xf32>
      %23 = vector.multi_reduction <add>, %22, %cst_15 [1] : vector<2x32xf32> to vector<2xf32>
      %24 = vector.shape_cast %23 : vector<2xf32> to vector<2x1xf32>
      %cst_16 = arith.constant 3.200000e+01 : f32
      %25 = vector.broadcast %cst_16 : f32 to vector<2x1xf32>
      %26 = arith.divf %24, %25 : vector<2x1xf32>
      %27 = vector.broadcast %19 : vector<2x1xf32> to vector<2x32xf32>
      %28 = arith.subf %15, %27 : vector<2x32xf32>
      %cst_17 = arith.constant 9.99999974E-6 : f32
      %29 = vector.broadcast %cst_17 : f32 to vector<2x1xf32>
      %30 = arith.addf %26, %29 : vector<2x1xf32>
      %31 = math.rsqrt %30 : vector<2x1xf32>
      %32 = vector.broadcast %31 : vector<2x1xf32> to vector<2x32xf32>
      %33 = arith.mulf %28, %32 : vector<2x32xf32>
      %c0_18 = arith.constant 0 : index
      %c0_19 = arith.constant 0 : index
      %34 = vector.load %arg4[%c0_18, %c0_19] : memref<1x32xf32, #tpu.memory_space<vmem>>, vector<1x32xf32>
      %35 = vector.broadcast %34 : vector<1x32xf32> to vector<2x32xf32>
      %36 = arith.mulf %33, %35 : vector<2x32xf32>
      %c0_20 = arith.constant 0 : index
      %c0_21 = arith.constant 0 : index
      %37 = vector.load %arg5[%c0_20, %c0_21] : memref<1x32xf32, #tpu.memory_space<vmem>>, vector<1x32xf32>
      %38 = vector.broadcast %37 : vector<1x32xf32> to vector<2x32xf32>
      %39 = arith.addf %36, %38 : vector<2x32xf32>
      %40 = math.tanh %39 : vector<2x32xf32>
      %c0_22 = arith.constant 0 : index
      %c0_23 = arith.constant 0 : index
      %41 = vector.load %arg6[%c0_22, %c0_23] : memref<2x32xf32, #tpu.memory_space<vmem>>, vector<2x32xf32>
      tpu.vector_store %arg6[%c0_22, %c0_23], %40 {strides = array<i32>} : memref<2x32xf32, #tpu.memory_space<vmem>>, vector<2x32xf32>,
    } else {
    }
    return
  }
  func.func @transform_0(%arg0: i32) -> (i32, i32) {
    %c0_i32 = arith.constant 0 : i32
    %c0_i32_0 = arith.constant 0 : i32
    return %c0_i32, %arg0 : i32, i32
  }
  func.func @transform_1(%arg0: i32) -> (i32, i32) {
    %c0_i32 = arith.constant 0 : i32
    %c0_i32_0 = arith.constant 0 : i32
    return %c0_i32, %arg0 : i32, i32
  }
  func.func @transform_2(%arg0: i32) -> (i32, i32) {
    %c0_i32 = arith.constant 0 : i32
    %c0_i32_0 = arith.constant 0 : i32
    %c0_i32_1 = arith.constant 0 : i32
    return %c0_i32, %c0_i32_0 : i32, i32
  }
  func.func @transform_3(%arg0: i32) -> (i32, i32) {
    %c0_i32 = arith.constant 0 : i32
    %c0_i32_0 = arith.constant 0 : i32
    %c0_i32_1 = arith.constant 0 : i32
    return %c0_i32, %c0_i32_0 : i32, i32
  }
  func.func @transform_4(%arg0: i32) -> (i32, i32) {
    %c0_i32 = arith.constant 0 : i32
    %c0_i32_0 = arith.constant 0 : i32
    %c0_i32_1 = arith.constant 0 : i32
    return %c0_i32, %c0_i32_0 : i32, i32
  }
  func.func @transform_5(%arg0: i32) -> (i32, i32) {
    %c0_i32 = arith.constant 0 : i32
    %c0_i32_0 = arith.constant 0 : i32
    %c0_i32_1 = arith.constant 0 : i32
    return %c0_i32, %c0_i32_0 : i32, i32
  }
}

</mosaic_0001>

<llo_original>
// kernel: pixel_encoder_forward.2
$region0: #{pixel_encoder_forward.2}
  #allocation0 [shape = 'u32[]', space=smem, size = 0x4, offset = 0x4, fixed_abs, tag = 'smem constant byte address 0x4 - core index']
  #allocation1 [shape = 'u32[144,128]{1,0:T(1,128)}', space=vmem, size = 0x12000, scoped, tag = 'internal scratch']
  %s0 = inlined_call_operand.vmem [shape: f32[2,36,1024], index: 0, kind: input, shape index: {}]
  %s1 = inlined_call_operand.vmem [shape: f32[32,36], index: 1, kind: input, shape index: {}]
  %s2 = inlined_call_operand.vmem [shape: f32[32,1], index: 2, kind: input, shape index: {}]
  %s3 = inlined_call_operand.vmem [shape: f32[32,288], index: 3, kind: input, shape index: {}]
  %s4 = inlined_call_operand.vmem [shape: f32[32,1], index: 4, kind: input, shape index: {}]
  %s5 = inlined_call_operand.vmem [shape: bf16[2,32,1024], index: 5, kind: output, shape index: {}]
  %s6 = sld [smem:[#allocation0]]
  $region53: #{pixel_encoder_forward.2} parent=0
    _
  %s8 = ssub.s32 1, %s6
  %s9 = scalar_select 0, %s8, %s6
  loop: start=0, step=1, limit=4
  $region2: #{pixel_encoder_forward.2} parent=0 // loop_pre_header
    _
  $region3: #{pixel_encoder_forward.2} parent=0 // loop_header
    %s11 = sphi 0, %s15
    %p12 = scmp.ge.s32.totalorder %s11, 4
    %s21 = sphi 0, %s23
    %s24 = sphi 0, %s21
    %s25 = sphi 0, %s24
    %s41 = sphi 0, %s25
    %s45 = sphi 0, %s45
    %s47 = sphi 0, %s45
    %s48 = sphi 0, %s47
    %s62 = sphi 0, %s48
    %s66 = sphi 0, %s66
    %s68 = sphi 0, %s66
    %s69 = sphi 0, %s68
    %s83 = sphi 0, %s69
    %s87 = sphi 0, %s87
    %s89 = sphi 0, %s87
    %s90 = sphi 0, %s89
    %s104 = sphi 0, %s90
    %s108 = sphi 0, %s108
    %s110 = sphi 0, %s108
    %s111 = sphi 0, %s110
    %s125 = sphi 0, %s111
    %s131 = sphi 0, %s133
    %s134 = sphi 0, %s131
    %s135 = sphi 0, %s134
    %s151 = sphi 0, %s135
  $region4: #{pixel_encoder_forward.2} parent=0 // loop_header_branch
    %14 = sbr.rel (%p12) target = $region8
  $region5: #{pixel_encoder_forward.2} parent=0 // loop_body
    %s16 = ssub.s32 %s11, 1
    %s17 = ssub.s32 %s11, 2
    %s18 = sadd.s32 %s11, 1
    %s19 = ssub.s32 %s11, %s18
    %p20 = scmp.eq.s32.totalorder %s19, 0
    %s22 = sadd.s32 %s21, 1
    %s23 = scalar_select %p20, %s21, %s22
    %p26 = pneg %p20
    %p27 = scmp.eq.s32.totalorder %s11, 1
    %p28 = por %p26, %p27
    %p29 = scmp.ne.s32.totalorder %s21, %s24
    %p30 = scmp.eq.s32.totalorder %s11, 0
    %p31 = por %p29, %p30
    %p32 = scmp.ne.s32.totalorder %s21, %s24
    %p33 = scmp.eq.s32.totalorder %s16, 1
    %p34 = por %p32, %p33
    %p35 = scmp.ne.s32.totalorder %s24, %s25
    %p36 = scmp.eq.s32.totalorder %s16, 0
    %p37 = por %p35, %p36
    %p38 = scmp.ne.s32.totalorder %s24, %s25
    %p39 = scmp.eq.s32.totalorder %s17, 1
    %p40 = por %p38, %p39
    %p42 = scmp.ne.s32.totalorder %s25, %s41
    %p43 = scmp.eq.s32.totalorder %s17, 0
    %p44 = por %p42, %p43
    %s46 = sadd.s32 %s45, 1
    %p49 = scmp.eq.s32.totalorder %s11, 1
    %p50 = scmp.ne.s32.totalorder %s45, %s47
    %p51 = scmp.eq.s32.totalorder %s11, 0
    %p52 = por %p50, %p51
    %p53 = scmp.ne.s32.totalorder %s45, %s47
    %p54 = scmp.eq.s32.totalorder %s16, 1
    %p55 = por %p53, %p54
    %p56 = scmp.ne.s32.totalorder %s47, %s48
    %p57 = scmp.eq.s32.totalorder %s16, 0
    %p58 = por %p56, %p57
    %p59 = scmp.ne.s32.totalorder %s47, %s48
    %p60 = scmp.eq.s32.totalorder %s17, 1
    %p61 = por %p59, %p60
    %p63 = scmp.ne.s32.totalorder %s48, %s62
    %p64 = scmp.eq.s32.totalorder %s17, 0
    %p65 = por %p63, %p64
    %s67 = sadd.s32 %s66, 1
    %p70 = scmp.eq.s32.totalorder %s11, 1
    %p71 = scmp.ne.s32.totalorder %s66, %s68
    %p72 = scmp.eq.s32.totalorder %s11, 0
    %p73 = por %p71, %p72
    %p74 = scmp.ne.s32.totalorder %s66, %s68
    %p75 = scmp.eq.s32.totalorder %s16, 1
    %p76 = por %p74, %p75
    %p77 = scmp.ne.s32.totalorder %s68, %s69
    %p78 = scmp.eq.s32.totalorder %s16, 0
    %p79 = por %p77, %p78
    %p80 = scmp.ne.s32.totalorder %s68, %s69
    %p81 = scmp.eq.s32.totalorder %s17, 1
    %p82 = por %p80, %p81
    %p84 = scmp.ne.s32.totalorder %s69, %s83
    %p85 = scmp.eq.s32.totalorder %s17, 0
    %p86 = por %p84, %p85
    %s88 = sadd.s32 %s87, 1
    %p91 = scmp.eq.s32.totalorder %s11, 1
    %p92 = scmp.ne.s32.totalorder %s87, %s89
    %p93 = scmp.eq.s32.totalorder %s11, 0
    %p94 = por %p92, %p93
    %p95 = scmp.ne.s32.totalorder %s87, %s89
    %p96 = scmp.eq.s32.totalorder %s16, 1
    %p97 = por %p95, %p96
    %p98 = scmp.ne.s32.totalorder %s89, %s90
    %p99 = scmp.eq.s32.totalorder %s16, 0
    %p100 = por %p98, %p99
    %p101 = scmp.ne.s32.totalorder %s89, %s90
    %p102 = scmp.eq.s32.totalorder %s17, 1
    %p103 = por %p101, %p102
    %p105 = scmp.ne.s32.totalorder %s90, %s104
    %p106 = scmp.eq.s32.totalorder %s17, 0
    %p107 = por %p105, %p106
    %s109 = sadd.s32 %s108, 1
    %p112 = scmp.eq.s32.totalorder %s11, 1
    %p113 = scmp.ne.s32.totalorder %s108, %s110
    %p114 = scmp.eq.s32.totalorder %s11, 0
    %p115 = por %p113, %p114
    %p116 = scmp.ne.s32.totalorder %s108, %s110
    %p117 = scmp.eq.s32.totalorder %s16, 1
    %p118 = por %p116, %p117
    %p119 = scmp.ne.s32.totalorder %s110, %s111
    %p120 = scmp.eq.s32.totalorder %s16, 0
    %p121 = por %p119, %p120
    %p122 = scmp.ne.s32.totalorder %s110, %s111
    %p123 = scmp.eq.s32.totalorder %s17, 1
    %p124 = por %p122, %p123
    %p126 = scmp.ne.s32.totalorder %s111, %s125
    %p127 = scmp.eq.s32.totalorder %s17, 0
    %p128 = por %p126, %p127
    %s129 = ssub.s32 %s11, %s18
    %p130 = scmp.eq.s32.totalorder %s129, 0
    %s132 = sadd.s32 %s131, 1
    %s133 = scalar_select %p130, %s131, %s132
    %p136 = pneg %p130
    %p137 = scmp.eq.s32.totalorder %s11, 1
    %p138 = por %p136, %p137
    %p139 = scmp.ne.s32.totalorder %s131, %s134
    %p140 = scmp.eq.s32.totalorder %s11, 0
    %p141 = por %p139, %p140
    %p142 = scmp.ne.s32.totalorder %s131, %s134
    %p143 = scmp.eq.s32.totalorder %s16, 1
    %p144 = por %p142, %p143
    %p145 = scmp.ne.s32.totalorder %s134, %s135
    %p146 = scmp.eq.s32.totalorder %s16, 0
    %p147 = por %p145, %p146
    %p148 = scmp.ne.s32.totalorder %s134, %s135
    %p149 = scmp.eq.s32.totalorder %s17, 1
    %p150 = por %p148, %p149
    %p152 = scmp.ne.s32.totalorder %s135, %s151
    %p153 = scmp.eq.s32.totalorder %s17, 0
    %p154 = por %p152, %p153
    %p155 = scmp.le.s32.totalorder 1, %s11
    %p156 = scmp.lt.s32.totalorder %s11, 3
    %p157 = pnand %p155, %p156
    %p158 = pneg %p157
    // Predicated region
    $region9: #{pixel_encoder_forward.2} parent=5 // pred_check
      _
    $region10: #{pixel_encoder_forward.2} parent=5 // pred_check_branch
      %160 = sbr.rel (%p157) target = $region12
    $region11: #{pixel_encoder_forward.2} parent=5 // pred_region
      %s161 = ssub.s32 %s11, 1
      // Predicated region
      $region13: #{pixel_encoder_forward.2} parent=11 // pred_check
        %p162 = pneg %p58
      $region14: #{pixel_encoder_forward.2} parent=11 // pred_check_branch
        %164 = sbr.rel (%p162) target = $region16
      $region15: #{pixel_encoder_forward.2} parent=11 // pred_region
        _
      $region16: #{pixel_encoder_forward.2} parent=11 // pred_fallthru
        _
      // Predicated region
      $region17: #{pixel_encoder_forward.2} parent=11 // pred_check
        %p165 = pneg %p79
      $region18: #{pixel_encoder_forward.2} parent=11 // pred_check_branch
        %167 = sbr.rel (%p165) target = $region20
      $region19: #{pixel_encoder_forward.2} parent=11 // pred_region
        _
      $region20: #{pixel_encoder_forward.2} parent=11 // pred_fallthru
        _
      // Predicated region
      $region21: #{pixel_encoder_forward.2} parent=11 // pred_check
        %p168 = pneg %p100
      $region22: #{pixel_encoder_forward.2} parent=11 // pred_check_branch
        %170 = sbr.rel (%p168) target = $region24
      $region23: #{pixel_encoder_forward.2} parent=11 // pred_region
        _
      $region24: #{pixel_encoder_forward.2} parent=11 // pred_fallthru
        _
      // Predicated region
      $region25: #{pixel_encoder_forward.2} parent=11 // pred_check
        %p171 = pneg %p121
      $region26: #{pixel_encoder_forward.2} parent=11 // pred_check_branch
        %173 = sbr.rel (%p171) target = $region28
      $region27: #{pixel_encoder_forward.2} parent=11 // pred_region
        _
      $region28: #{pixel_encoder_forward.2} parent=11 // pred_fallthru
        _
    $region12: #{pixel_encoder_forward.2} parent=5 // pred_fallthru
      _
    %p174 = scmp.lt.s32.totalorder %s11, 2
    // Predicated region
    $region29: #{pixel_encoder_forward.2} parent=5 // pred_check
      %p175 = pneg %p174
    $region30: #{pixel_encoder_forward.2} parent=5 // pred_check_branch
      %177 = sbr.rel (%p175) target = $region32
    $region31: #{pixel_encoder_forward.2} parent=5 // pred_region
      // Predicated region
      $region33: #{pixel_encoder_forward.2} parent=31 // pred_check
        %p178 = pneg %p31
      $region34: #{pixel_encoder_forward.2} parent=31 // pred_check_branch
        %180 = sbr.rel (%p178) target = $region36
      $region35: #{pixel_encoder_forward.2} parent=31 // pred_region
        %p181 = scmp.lt.s32.totalorder %s11, 1
        %s182 = scalar_select %p181, %s11, 1
        %s183 = smul.addr %s182, 40
        %s184 = smul.addr %s183, 8
        %s185 = scalar_lea.vmem %s0, %s184
      $region36: #{pixel_encoder_forward.2} parent=31 // pred_fallthru
        _
    $region32: #{pixel_encoder_forward.2} parent=5 // pred_fallthru
      _
    %p186 = scmp.le.s32.totalorder 1, %s11
    %p187 = scmp.lt.s32.totalorder %s11, 3
    %p188 = pnand %p186, %p187
    %p189 = pneg %p188
    // Predicated region
    $region37: #{pixel_encoder_forward.2} parent=5 // pred_check
      _
    $region38: #{pixel_encoder_forward.2} parent=5 // pred_check_branch
      %191 = sbr.rel (%p188) target = $region40
    $region39: #{pixel_encoder_forward.2} parent=5 // pred_region
      %s192 = ssub.s32 %s11, 1
      %p193 = scmp.lt.s32.totalorder %s16, 1
      %s194 = scalar_select %p193, %s16, 1
      %s195 = smul.addr %s194, 40
      %s196 = smul.addr %s195, 8
      %s197 = scalar_lea.vmem %s0, %s196
      %p198 = pneg %p37
      %p199 = pneg %p34
      %p200 = pneg %p58
      %p201 = pneg %p55
      %p202 = pneg %p79
      %p203 = pneg %p76
      %p204 = pneg %p100
      %p205 = pneg %p97
      %p206 = pneg %p121
      %p207 = pneg %p118
      %p208 = pneg %p147
      %p209 = pneg %p144
      %p210 = scmp.lt.s32.totalorder %s16, 1
      %s211 = scalar_select %p210, %s16, 1
      %s212 = smul.addr %s211, 32
      %s213 = smul.addr %s212, 4
      %s214 = scalar_lea.vmem %s5, %s213
      %p215 = scmp.lt.s32.totalorder %s16, 1
      %s216 = scalar_select %p215, %s16, 1
      %s217 = smul.addr %s216, 40
      %s218 = smul.addr %s217, 8
      %s219 = scalar_lea.vmem %s0, %s218
      %p220 = scmp.lt.s32.totalorder %s16, 1
      %s221 = scalar_select %p220, %s16, 1
      %s222 = smul.addr %s221, 32
      %s223 = smul.addr %s222, 4
      %s224 = scalar_lea.vmem %s5, %s223
      %v225 = vld [vmem:[%s219] sm:$0xff]
      %v226 = vld [vmem:[%s219 + $0x8] sm:$0xff]
      %v227 = vld [vmem:[%s219 + $0x10] sm:$0xff]
      %v228 = vld [vmem:[%s219 + $0x18] sm:$0xff]
      %v229 = vld [vmem:[%s219 + $0x20] sm:$0xff]
      %v230 = vld [vmem:[%s219 + $0x28] sm:$0xff]
      %v231 = vld [vmem:[%s219 + $0x30] sm:$0xff]
      %v232 = vld [vmem:[%s219 + $0x38] sm:$0xff]
      %v233 = vld [vmem:[%s219 + $0x40] sm:$0xff]
      %v234 = vld [vmem:[%s219 + $0x48] sm:$0xff]
      %v235 = vld [vmem:[%s219 + $0x50] sm:$0xff]
      %v236 = vld [vmem:[%s219 + $0x58] sm:$0xff]
      %v237 = vld [vmem:[%s219 + $0x60] sm:$0xff]
      %v238 = vld [vmem:[%s219 + $0x68] sm:$0xff]
      %v239 = vld [vmem:[%s219 + $0x70] sm:$0xff]
      %v240 = vld [vmem:[%s219 + $0x78] sm:$0xff]
      %v241 = vld [vmem:[%s219 + $0x80] sm:$0xff]
      %v242 = vld [vmem:[%s219 + $0x88] sm:$0xff]
      %v243 = vld [vmem:[%s219 + $0x90] sm:$0xff]
      %v244 = vld [vmem:[%s219 + $0x98] sm:$0xff]
      %v245 = vld [vmem:[%s219 + $0xa0] sm:$0xff]
      %v246 = vld [vmem:[%s219 + $0xa8] sm:$0xff]
      %v247 = vld [vmem:[%s219 + $0xb0] sm:$0xff]
      %v248 = vld [vmem:[%s219 + $0xb8] sm:$0xff]
      %v249 = vld [vmem:[%s219 + $0xc0] sm:$0xff]
      %v250 = vld [vmem:[%s219 + $0xc8] sm:$0xff]
      %v251 = vld [vmem:[%s219 + $0xd0] sm:$0xff]
      %v252 = vld [vmem:[%s219 + $0xd8] sm:$0xff]
      %v253 = vld [vmem:[%s219 + $0xe0] sm:$0xff]
      %v254 = vld [vmem:[%s219 + $0xe8] sm:$0xff]
      %v255 = vld [vmem:[%s219 + $0xf0] sm:$0xff]
      %v256 = vld [vmem:[%s219 + $0xf8] sm:$0xff]
      %v257 = vld [vmem:[%s219 + $0x100] sm:$0xf]
      %v258 = vld [vmem:[%s219 + $0x108] sm:$0xf]
      %v259 = vld [vmem:[%s219 + $0x110] sm:$0xf]
      %v260 = vld [vmem:[%s219 + $0x118] sm:$0xf]
      %v261 = vld [vmem:[%s219 + $0x120] sm:$0xf]
      %v262 = vld [vmem:[%s219 + $0x128] sm:$0xf]
      %v263 = vld [vmem:[%s219 + $0x130] sm:$0xf]
      %v264 = vld [vmem:[%s219 + $0x138] sm:$0xf]
      %v265 = vld [vmem:[%s1] sm:$0xff]
      %v266 = vld [vmem:[%s1 + $0x8] sm:$0xff]
      %v267 = vld [vmem:[%s1 + $0x10] sm:$0xff]
      %v268 = vld [vmem:[%s1 + $0x18] sm:$0xff]
      %v269 = vld [vmem:[%s2] sm:$0xff]
      %v270 = vld [vmem:[%s2 + $0x8] sm:$0xff]
      %v271 = vld [vmem:[%s2 + $0x10] sm:$0xff]
      %v272 = vld [vmem:[%s2 + $0x18] sm:$0xff]
      %274 = vset.pattern.permute.xlu0 0
      %275 = vperm.xlu0 %274, %v269
      %v276 = vpop.permute.xlu0 %275
      %279 = vset.pattern.permute.xlu0 0
      %280 = vperm.xlu0 %279, %v270
      %v281 = vpop.permute.xlu0 %280
      %284 = vset.pattern.permute.xlu0 0
      %285 = vperm.xlu0 %284, %v271
      %v286 = vpop.permute.xlu0 %285
      %289 = vset.pattern.permute.xlu0 0
      %290 = vperm.xlu0 %289, %v272
      %v291 = vpop.permute.xlu0 %290
      %vm293 = vcmask 293888
      %v295 = vsel %vm293, %v265, 0
      %v298 = vsel %vm293, %v266, 0
      %v301 = vsel %vm293, %v267, 0
      %v304 = vsel %vm293, %v268, 0
      %vm306 = vcmask 1043456
      %v308 = vsel %vm306, %v257, 0
      %v311 = vsel %vm306, %v258, 0
      %v314 = vsel %vm306, %v259, 0
      %v317 = vsel %vm306, %v260, 0
      %v320 = vsel %vm306, %v261, 0
      %v323 = vsel %vm306, %v262, 0
      %v326 = vsel %vm306, %v263, 0
      %v329 = vsel %vm306, %v264, 0
      %331 = vmatprep.subr.mxu0 0.0
      %332 = vmatpush1.msra.mxu0 0.0
      %333 = vmatprep.subr.mxu0 0.0
      %334 = vmatpush1.msra.mxu0 0.0
      %335 = vmatprep.subr.mxu0 0.0
      %336 = vmatpush1.msra.mxu0 0.0
      %337 = vmatprep.subr.mxu0 0.0
      %338 = vmatpush1.msra.mxu0 0.0
      %339 = vmatprep.subr.mxu0 0.0
      %340 = vmatpush1.msra.mxu0 0.0
      %341 = vmatprep.subr.mxu0 0.0
      %342 = vmatpush1.msra.mxu0 0.0
      %343 = vmatprep.subr.mxu0 0.0
      %344 = vmatpush1.msra.mxu0 0.0
      %345 = vmatprep.subr.mxu0 0.0
      %346 = vmatpush1.msra.mxu0 0.0
      %347 = vmatprep.subr.mxu0 0.0
      %348 = vmatpush1.msra.mxu0 0.0
      %349 = vmatprep.subr.mxu0 0.0
      %350 = vmatpush1.msra.mxu0 0.0
      %351 = vmatprep.subr.mxu0 0.0
      %352 = vmatpush1.msra.mxu0 0.0
      %353 = vmatprep.subr.mxu0 %v311
      %354 = vmatpush1.msra.mxu0 %v308
      %355 = vmatprep.subr.mxu0 %v250
      %356 = vmatpush1.msra.mxu0 %v249
      %357 = vmatprep.subr.mxu0 %v242
      %358 = vmatpush1.msra.mxu0 %v241
      %359 = vmatprep.subr.mxu0 %v234
      %360 = vmatpush1.msra.mxu0 %v233
      %361 = vmatprep.subr.mxu0 %v226
      %362 = vmatpush1.msra.mxu0 %v225
      %363 = vmatprep.subr.mxu0 0.0
      %364 = vmatpush2.msra.mxu0 0.0
      %365 = vmatprep.subr.mxu0 0.0
      %366 = vmatpush2.msra.mxu0 0.0
      %367 = vmatprep.subr.mxu0 0.0
      %368 = vmatpush2.msra.mxu0 0.0
      %369 = vmatprep.subr.mxu0 0.0
      %370 = vmatpush2.msra.mxu0 0.0
      %371 = vmatprep.subr.mxu0 0.0
      %372 = vmatpush2.msra.mxu0 0.0
      %373 = vmatprep.subr.mxu0 0.0
      %374 = vmatpush2.msra.mxu0 0.0
      %375 = vmatprep.subr.mxu0 0.0
      %376 = vmatpush2.msra.mxu0 0.0
      %377 = vmatprep.subr.mxu0 0.0
      %378 = vmatpush2.msra.mxu0 0.0
      %379 = vmatprep.subr.mxu0 0.0
      %380 = vmatpush2.msra.mxu0 0.0
      %381 = vmatprep.subr.mxu0 0.0
      %382 = vmatpush2.msra.mxu0 0.0
      %383 = vmatprep.subr.mxu0 0.0
      %384 = vmatpush2.msra.mxu0 0.0
      %385 = vmatprep.subr.mxu0 0.0
      %386 = vmatpush2.msra.mxu0 0.0
      %387 = vmatprep.subr.mxu0 0.0
      %388 = vmatpush2.msra.mxu0 0.0
      %389 = vmatprep.subr.mxu0 0.0
      %390 = vmatpush2.msra.mxu0 0.0
      %391 = vmatprep.subr.mxu0 0.0
      %392 = vmatpush2.msra.mxu0 0.0
      %393 = vmatprep.subr.mxu0 0.0
      %394 = vmatpush2.msra.mxu0 0.0
      %395 = vmatprep.mubr.f32.mxu0 0.0
      %396 = vmatmul.mubr.f32.gmra.mxu0 %v295
      %v397 = vpop.f32.mrf.mxu0
      %v398 = vadd.f32 %v276, %v397
      %v399 = vpop.f32.mrf.mxu0
      %v400 = vadd.f32 %v276, %v399
      %401 = vmatprep.mubr.f32.mxu0 0.0
      %402 = vmatmul.mubr.f32.gmra.mxu0 %v298
      %v403 = vpop.f32.mrf.mxu0
      %v404 = vadd.f32 %v281, %v403
      %v405 = vpop.f32.mrf.mxu0
      %v406 = vadd.f32 %v281, %v405
      %407 = vmatprep.mubr.f32.mxu0 0.0
      %408 = vmatmul.mubr.f32.gmra.mxu0 %v301
      %v409 = vpop.f32.mrf.mxu0
      %v410 = vadd.f32 %v286, %v409
      %v411 = vpop.f32.mrf.mxu0
      %v412 = vadd.f32 %v286, %v411
      %413 = vmatprep.mubr.f32.mxu0 0.0
      %414 = vmatmul.mubr.f32.gmra.mxu0 %v304
      %v415 = vpop.f32.mrf.mxu0
      %v416 = vadd.f32 %v291, %v415
      %v417 = vpop.f32.mrf.mxu0
      %v418 = vadd.f32 %v291, %v417
      %419 = vdwg.mxu0
      %420 = vmatprep.subr.mxu0 0.0
      %421 = vmatpush1.msra.mxu0 0.0
      %422 = vmatprep.subr.mxu0 0.0
      %423 = vmatpush1.msra.mxu0 0.0
      %424 = vmatprep.subr.mxu0 0.0
      %425 = vmatpush1.msra.mxu0 0.0
      %426 = vmatprep.subr.mxu0 0.0
      %427 = vmatpush1.msra.mxu0 0.0
      %428 = vmatprep.subr.mxu0 0.0
      %429 = vmatpush1.msra.mxu0 0.0
      %430 = vmatprep.subr.mxu0 0.0
      %431 = vmatpush1.msra.mxu0 0.0
      %432 = vmatprep.subr.mxu0 0.0
      %433 = vmatpush1.msra.mxu0 0.0
      %434 = vmatprep.subr.mxu0 0.0
      %435 = vmatpush1.msra.mxu0 0.0
      %436 = vmatprep.subr.mxu0 0.0
      %437 = vmatpush1.msra.mxu0 0.0
      %438 = vmatprep.subr.mxu0 0.0
      %439 = vmatpush1.msra.mxu0 0.0
      %440 = vmatprep.subr.mxu0 0.0
      %441 = vmatpush1.msra.mxu0 0.0
      %442 = vmatprep.subr.mxu0 %v317
      %443 = vmatpush1.msra.mxu0 %v314
      %444 = vmatprep.subr.mxu0 %v252
      %445 = vmatpush1.msra.mxu0 %v251
      %446 = vmatprep.subr.mxu0 %v244
      %447 = vmatpush1.msra.mxu0 %v243
      %448 = vmatprep.subr.mxu0 %v236
      %449 = vmatpush1.msra.mxu0 %v235
      %450 = vmatprep.subr.mxu0 %v228
      %451 = vmatpush1.msra.mxu0 %v227
      %452 = vmatprep.subr.mxu0 0.0
      %453 = vmatpush2.msra.mxu0 0.0
      %454 = vmatprep.subr.mxu0 0.0
      %455 = vmatpush2.msra.mxu0 0.0
      %456 = vmatprep.subr.mxu0 0.0
      %457 = vmatpush2.msra.mxu0 0.0
      %458 = vmatprep.subr.mxu0 0.0
      %459 = vmatpush2.msra.mxu0 0.0
      %460 = vmatprep.subr.mxu0 0.0
      %461 = vmatpush2.msra.mxu0 0.0
      %462 = vmatprep.subr.mxu0 0.0
      %463 = vmatpush2.msra.mxu0 0.0
      %464 = vmatprep.subr.mxu0 0.0
      %465 = vmatpush2.msra.mxu0 0.0
      %466 = vmatprep.subr.mxu0 0.0
      %467 = vmatpush2.msra.mxu0 0.0
      %468 = vmatprep.subr.mxu0 0.0
      %469 = vmatpush2.msra.mxu0 0.0
      %470 = vmatprep.subr.mxu0 0.0
      %471 = vmatpush2.msra.mxu0 0.0
      %472 = vmatprep.subr.mxu0 0.0
      %473 = vmatpush2.msra.mxu0 0.0
      %474 = vmatprep.subr.mxu0 0.0
      %475 = vmatpush2.msra.mxu0 0.0
      %476 = vmatprep.subr.mxu0 0.0
      %477 = vmatpush2.msra.mxu0 0.0
      %478 = vmatprep.subr.mxu0 0.0
      %479 = vmatpush2.msra.mxu0 0.0
      %480 = vmatprep.subr.mxu0 0.0
      %481 = vmatpush2.msra.mxu0 0.0
      %482 = vmatprep.subr.mxu0 0.0
      %483 = vmatpush2.msra.mxu0 0.0
      %484 = vmatprep.mubr.f32.mxu0 0.0
      %485 = vmatmul.mubr.f32.gmra.mxu0 %v295
      %v486 = vpop.f32.mrf.mxu0
      %v487 = vadd.f32 %v276, %v486
      %v488 = vpop.f32.mrf.mxu0
      %v489 = vadd.f32 %v276, %v488
      %490 = vmatprep.mubr.f32.mxu0 0.0
      %491 = vmatmul.mubr.f32.gmra.mxu0 %v298
      %v492 = vpop.f32.mrf.mxu0
      %v493 = vadd.f32 %v281, %v492
      %v494 = vpop.f32.mrf.mxu0
      %v495 = vadd.f32 %v281, %v494
      %496 = vmatprep.mubr.f32.mxu0 0.0
      %497 = vmatmul.mubr.f32.gmra.mxu0 %v301
      %v498 = vpop.f32.mrf.mxu0
      %v499 = vadd.f32 %v286, %v498
      %v500 = vpop.f32.mrf.mxu0
      %v501 = vadd.f32 %v286, %v500
      %502 = vmatprep.mubr.f32.mxu0 0.0
      %503 = vmatmul.mubr.f32.gmra.mxu0 %v304
      %v504 = vpop.f32.mrf.mxu0
      %v505 = vadd.f32 %v291, %v504
      %v506 = vpop.f32.mrf.mxu0
      %v507 = vadd.f32 %v291, %v506
      %508 = vdwg.mxu0
      %509 = vmatprep.subr.mxu0 0.0
      %510 = vmatpush1.msra.mxu0 0.0
      %511 = vmatprep.subr.mxu0 0.0
      %512 = vmatpush1.msra.mxu0 0.0
      %513 = vmatprep.subr.mxu0 0.0
      %514 = vmatpush1.msra.mxu0 0.0
      %515 = vmatprep.subr.mxu0 0.0
      %516 = vmatpush1.msra.mxu0 0.0
      %517 = vmatprep.subr.mxu0 0.0
      %518 = vmatpush1.msra.mxu0 0.0
      %519 = vmatprep.subr.mxu0 0.0
      %520 = vmatpush1.msra.mxu0 0.0
      %521 = vmatprep.subr.mxu0 0.0
      %522 = vmatpush1.msra.mxu0 0.0
      %523 = vmatprep.subr.mxu0 0.0
      %524 = vmatpush1.msra.mxu0 0.0
      %525 = vmatprep.subr.mxu0 0.0
      %526 = vmatpush1.msra.mxu0 0.0
      %527 = vmatprep.subr.mxu0 0.0
      %528 = vmatpush1.msra.mxu0 0.0
      %529 = vmatprep.subr.mxu0 0.0
      %530 = vmatpush1.msra.mxu0 0.0
      %531 = vmatprep.subr.mxu0 %v323
      %532 = vmatpush1.msra.mxu0 %v320
      %533 = vmatprep.subr.mxu0 %v254
      %534 = vmatpush1.msra.mxu0 %v253
      %535 = vmatprep.subr.mxu0 %v246
      %536 = vmatpush1.msra.mxu0 %v245
      %537 = vmatprep.subr.mxu0 %v238
      %538 = vmatpush1.msra.mxu0 %v237
      %539 = vmatprep.subr.mxu0 %v230
      %540 = vmatpush1.msra.mxu0 %v229
      %541 = vmatprep.subr.mxu0 0.0
      %542 = vmatpush2.msra.mxu0 0.0
      %543 = vmatprep.subr.mxu0 0.0
      %544 = vmatpush2.msra.mxu0 0.0
      %545 = vmatprep.subr.mxu0 0.0
      %546 = vmatpush2.msra.mxu0 0.0
      %547 = vmatprep.subr.mxu0 0.0
      %548 = vmatpush2.msra.mxu0 0.0
      %549 = vmatprep.subr.mxu0 0.0
      %550 = vmatpush2.msra.mxu0 0.0
      %551 = vmatprep.subr.mxu0 0.0
      %552 = vmatpush2.msra.mxu0 0.0
      %553 = vmatprep.subr.mxu0 0.0
      %554 = vmatpush2.msra.mxu0 0.0
      %555 = vmatprep.subr.mxu0 0.0
      %556 = vmatpush2.msra.mxu0 0.0
      %557 = vmatprep.subr.mxu0 0.0
      %558 = vmatpush2.msra.mxu0 0.0
      %559 = vmatprep.subr.mxu0 0.0
      %560 = vmatpush2.msra.mxu0 0.0
      %561 = vmatprep.subr.mxu0 0.0
      %562 = vmatpush2.msra.mxu0 0.0
      %563 = vmatprep.subr.mxu0 0.0
      %564 = vmatpush2.msra.mxu0 0.0
      %565 = vmatprep.subr.mxu0 0.0
      %566 = vmatpush2.msra.mxu0 0.0
      %567 = vmatprep.subr.mxu0 0.0
      %568 = vmatpush2.msra.mxu0 0.0
      %569 = vmatprep.subr.mxu0 0.0
      %570 = vmatpush2.msra.mxu0 0.0
      %571 = vmatprep.subr.mxu0 0.0
      %572 = vmatpush2.msra.mxu0 0.0
      %573 = vmatprep.mubr.f32.mxu0 0.0
      %574 = vmatmul.mubr.f32.gmra.mxu0 %v295
      %v575 = vpop.f32.mrf.mxu0
      %v576 = vadd.f32 %v276, %v575
      %v577 = vpop.f32.mrf.mxu0
      %v578 = vadd.f32 %v276, %v577
      %579 = vmatprep.mubr.f32.mxu0 0.0
      %580 = vmatmul.mubr.f32.gmra.mxu0 %v298
      %v581 = vpop.f32.mrf.mxu0
      %v582 = vadd.f32 %v281, %v581
      %v583 = vpop.f32.mrf.mxu0
      %v584 = vadd.f32 %v281, %v583
      %585 = vmatprep.mubr.f32.mxu0 0.0
      %586 = vmatmul.mubr.f32.gmra.mxu0 %v301
      %v587 = vpop.f32.mrf.mxu0
      %v588 = vadd.f32 %v286, %v587
      %v589 = vpop.f32.mrf.mxu0
      %v590 = vadd.f32 %v286, %v589
      %591 = vmatprep.mubr.f32.mxu0 0.0
      %592 = vmatmul.mubr.f32.gmra.mxu0 %v304
      %v593 = vpop.f32.mrf.mxu0
      %v594 = vadd.f32 %v291, %v593
      %v595 = vpop.f32.mrf.mxu0
      %v596 = vadd.f32 %v291, %v595
      %597 = vdwg.mxu0
      %598 = vmatprep.subr.mxu0 0.0
      %599 = vmatpush1.msra.mxu0 0.0
      %600 = vmatprep.subr.mxu0 0.0
      %601 = vmatpush1.msra.mxu0 0.0
      %602 = vmatprep.subr.mxu0 0.0
      %603 = vmatpush1.msra.mxu0 0.0
      %604 = vmatprep.subr.mxu0 0.0
      %605 = vmatpush1.msra.mxu0 0.0
      %606 = vmatprep.subr.mxu0 0.0
      %607 = vmatpush1.msra.mxu0 0.0
      %608 = vmatprep.subr.mxu0 0.0
      %609 = vmatpush1.msra.mxu0 0.0
      %610 = vmatprep.subr.mxu0 0.0
      %611 = vmatpush1.msra.mxu0 0.0
      %612 = vmatprep.subr.mxu0 0.0
      %613 = vmatpush1.msra.mxu0 0.0
      %614 = vmatprep.subr.mxu0 0.0
      %615 = vmatpush1.msra.mxu0 0.0
      %616 = vmatprep.subr.mxu0 0.0
      %617 = vmatpush1.msra.mxu0 0.0
      %618 = vmatprep.subr.mxu0 0.0
      %619 = vmatpush1.msra.mxu0 0.0
      %620 = vmatprep.subr.mxu0 %v329
      %621 = vmatpush1.msra.mxu0 %v326
      %622 = vmatprep.subr.mxu0 %v256
      %623 = vmatpush1.msra.mxu0 %v255
      %624 = vmatprep.subr.mxu0 %v248
      %625 = vmatpush1.msra.mxu0 %v247
      %626 = vmatprep.subr.mxu0 %v240
      %627 = vmatpush1.msra.mxu0 %v239
      %628 = vmatprep.subr.mxu0 %v232
      %629 = vmatpush1.msra.mxu0 %v231
      %630 = vmatprep.subr.mxu0 0.0
      %631 = vmatpush2.msra.mxu0 0.0
      %632 = vmatprep.subr.mxu0 0.0
      %633 = vmatpush2.msra.mxu0 0.0
      %634 = vmatprep.subr.mxu0 0.0
      %635 = vmatpush2.msra.mxu0 0.0
      %636 = vmatprep.subr.mxu0 0.0
      %637 = vmatpush2.msra.mxu0 0.0
      %638 = vmatprep.subr.mxu0 0.0
      %639 = vmatpush2.msra.mxu0 0.0
      %640 = vmatprep.subr.mxu0 0.0
      %641 = vmatpush2.msra.mxu0 0.0
      %642 = vmatprep.subr.mxu0 0.0
      %643 = vmatpush2.msra.mxu0 0.0
      %644 = vmatprep.subr.mxu0 0.0
      %645 = vmatpush2.msra.mxu0 0.0
      %646 = vmatprep.subr.mxu0 0.0
      %647 = vmatpush2.msra.mxu0 0.0
      %648 = vmatprep.subr.mxu0 0.0
      %649 = vmatpush2.msra.mxu0 0.0
      %650 = vmatprep.subr.mxu0 0.0
      %651 = vmatpush2.msra.mxu0 0.0
      %652 = vmatprep.subr.mxu0 0.0
      %653 = vmatpush2.msra.mxu0 0.0
      %654 = vmatprep.subr.mxu0 0.0
      %655 = vmatpush2.msra.mxu0 0.0
      %656 = vmatprep.subr.mxu0 0.0
      %657 = vmatpush2.msra.mxu0 0.0
      %658 = vmatprep.subr.mxu0 0.0
      %659 = vmatpush2.msra.mxu0 0.0
      %660 = vmatprep.subr.mxu0 0.0
      %661 = vmatpush2.msra.mxu0 0.0
      %662 = vmatprep.mubr.f32.mxu0 0.0
      %663 = vmatmul.mubr.f32.gmra.mxu0 %v295
      %v664 = vpop.f32.mrf.mxu0
      %v665 = vadd.f32 %v276, %v664
      %v666 = vpop.f32.mrf.mxu0
      %v667 = vadd.f32 %v276, %v666
      %668 = vmatprep.mubr.f32.mxu0 0.0
      %669 = vmatmul.mubr.f32.gmra.mxu0 %v298
      %v670 = vpop.f32.mrf.mxu0
      %v671 = vadd.f32 %v281, %v670
      %v672 = vpop.f32.mrf.mxu0
      %v673 = vadd.f32 %v281, %v672
      %674 = vmatprep.mubr.f32.mxu0 0.0
      %675 = vmatmul.mubr.f32.gmra.mxu0 %v301
      %v676 = vpop.f32.mrf.mxu0
      %v677 = vadd.f32 %v286, %v676
      %v678 = vpop.f32.mrf.mxu0
      %v679 = vadd.f32 %v286, %v678
      %680 = vmatprep.mubr.f32.mxu0 0.0
      %681 = vmatmul.mubr.f32.gmra.mxu0 %v304
      %v682 = vpop.f32.mrf.mxu0
      %v683 = vadd.f32 %v291, %v682
      %v684 = vpop.f32.mrf.mxu0
      %v685 = vadd.f32 %v291, %v684
      %686 = vdwg.mxu0
      %v687 = vmax.f32 %v398, 0.0
      %v688 = vmax.f32 %v400, 0.0
      %v689 = vmax.f32 %v487, 0.0
      %v690 = vmax.f32 %v489, 0.0
      %v691 = vmax.f32 %v576, 0.0
      %v692 = vmax.f32 %v578, 0.0
      %v693 = vmax.f32 %v665, 0.0
      %v694 = vmax.f32 %v667, 0.0
      %v695 = vmax.f32 %v404, 0.0
      %v696 = vmax.f32 %v406, 0.0
      %v697 = vmax.f32 %v493, 0.0
      %v698 = vmax.f32 %v495, 0.0
      %v699 = vmax.f32 %v582, 0.0
      %v700 = vmax.f32 %v584, 0.0
      %v701 = vmax.f32 %v671, 0.0
      %v702 = vmax.f32 %v673, 0.0
      %v703 = vmax.f32 %v410, 0.0
      %v704 = vmax.f32 %v412, 0.0
      %v705 = vmax.f32 %v499, 0.0
      %v706 = vmax.f32 %v501, 0.0
      %v707 = vmax.f32 %v588, 0.0
      %v708 = vmax.f32 %v590, 0.0
      %v709 = vmax.f32 %v677, 0.0
      %v710 = vmax.f32 %v679, 0.0
      %v711 = vmax.f32 %v416, 0.0
      %v712 = vmax.f32 %v418, 0.0
      %v713 = vmax.f32 %v505, 0.0
      %v714 = vmax.f32 %v507, 0.0
      %v715 = vmax.f32 %v594, 0.0
      %v716 = vmax.f32 %v596, 0.0
      %v717 = vmax.f32 %v683, 0.0
      %v718 = vmax.f32 %v685, 0.0
      %752 = vrot.lane.b32.xlu0 %v687, 127
      %v753 = vpop.permute.xlu0 %752
      %754 = vrot.lane.b32.xlu0 %v688, 127
      %v755 = vpop.permute.xlu0 %754
      %756 = vrot.lane.b32.xlu0 %v689, 127
      %v757 = vpop.permute.xlu0 %756
      %758 = vrot.lane.b32.xlu0 %v690, 127
      %v759 = vpop.permute.xlu0 %758
      %760 = vrot.lane.b32.xlu0 %v691, 127
      %v761 = vpop.permute.xlu0 %760
      %762 = vrot.lane.b32.xlu0 %v692, 127
      %v763 = vpop.permute.xlu0 %762
      %764 = vrot.lane.b32.xlu0 %v693, 127
      %v765 = vpop.permute.xlu0 %764
      %766 = vrot.lane.b32.xlu0 %v694, 127
      %v767 = vpop.permute.xlu0 %766
      %768 = vrot.lane.b32.xlu0 0.0, 127
      %v769 = vpop.permute.xlu0 %768
      %770 = vrot.lane.b32.xlu0 %v695, 127
      %v771 = vpop.permute.xlu0 %770
      %772 = vrot.lane.b32.xlu0 %v696, 127
      %v773 = vpop.permute.xlu0 %772
      %774 = vrot.lane.b32.xlu0 %v697, 127
      %v775 = vpop.permute.xlu0 %774
      %776 = vrot.lane.b32.xlu0 %v698, 127
      %v777 = vpop.permute.xlu0 %776
      %778 = vrot.lane.b32.xlu0 %v699, 127
      %v779 = vpop.permute.xlu0 %778
      %780 = vrot.lane.b32.xlu0 %v700, 127
      %v781 = vpop.permute.xlu0 %780
      %782 = vrot.lane.b32.xlu0 %v701, 127
      %v783 = vpop.permute.xlu0 %782
      %784 = vrot.lane.b32.xlu0 %v702, 127
      %v785 = vpop.permute.xlu0 %784
      %786 = vrot.lane.b32.xlu0 %v703, 127
      %v787 = vpop.permute.xlu0 %786
      %788 = vrot.lane.b32.xlu0 %v704, 127
      %v789 = vpop.permute.xlu0 %788
      %790 = vrot.lane.b32.xlu0 %v705, 127
      %v791 = vpop.permute.xlu0 %790
      %792 = vrot.lane.b32.xlu0 %v706, 127
      %v793 = vpop.permute.xlu0 %792
      %794 = vrot.lane.b32.xlu0 %v707, 127
      %v795 = vpop.permute.xlu0 %794
      %796 = vrot.lane.b32.xlu0 %v708, 127
      %v797 = vpop.permute.xlu0 %796
      %798 = vrot.lane.b32.xlu0 %v709, 127
      %v799 = vpop.permute.xlu0 %798
      %800 = vrot.lane.b32.xlu0 %v710, 127
      %v801 = vpop.permute.xlu0 %800
      %802 = vrot.lane.b32.xlu0 %v711, 127
      %v803 = vpop.permute.xlu0 %802
      %804 = vrot.lane.b32.xlu0 %v712, 127
      %v805 = vpop.permute.xlu0 %804
      %806 = vrot.lane.b32.xlu0 %v713, 127
      %v807 = vpop.permute.xlu0 %806
      %808 = vrot.lane.b32.xlu0 %v714, 127
      %v809 = vpop.permute.xlu0 %808
      %810 = vrot.lane.b32.xlu0 %v715, 127
      %v811 = vpop.permute.xlu0 %810
      %812 = vrot.lane.b32.xlu0 %v716, 127
      %v813 = vpop.permute.xlu0 %812
      %814 = vrot.lane.b32.xlu0 %v717, 127
      %v815 = vpop.permute.xlu0 %814
      %816 = vrot.lane.b32.xlu0 %v718, 127
      %v817 = vpop.permute.xlu0 %816
      %vm818 = vcmask 1039360
      %v819 = vsel %vm818, %v753, %v755
      %v820 = vsel %vm818, %v755, %v757
      %v821 = vsel %vm818, %v757, %v759
      %v822 = vsel %vm818, %v759, %v761
      %v823 = vsel %vm818, %v761, %v763
      %v824 = vsel %vm818, %v763, %v765
      %v825 = vsel %vm818, %v765, %v767
      %v826 = vsel %vm818, %v767, %v769
      %v827 = vsel %vm818, %v771, %v773
      %v828 = vsel %vm818, %v773, %v775
      %v829 = vsel %vm818, %v775, %v777
      %v830 = vsel %vm818, %v777, %v779
      %v831 = vsel %vm818, %v779, %v781
      %v832 = vsel %vm818, %v781, %v783
      %v833 = vsel %vm818, %v783, %v785
      %v834 = vsel %vm818, %v785, %v769
      %v835 = vsel %vm818, %v787, %v789
      %v836 = vsel %vm818, %v789, %v791
      %v837 = vsel %vm818, %v791, %v793
      %v838 = vsel %vm818, %v793, %v795
      %v839 = vsel %vm818, %v795, %v797
      %v840 = vsel %vm818, %v797, %v799
      %v841 = vsel %vm818, %v799, %v801
      %v842 = vsel %vm818, %v801, %v769
      %v843 = vsel %vm818, %v803, %v805
      %v844 = vsel %vm818, %v805, %v807
      %v845 = vsel %vm818, %v807, %v809
      %v846 = vsel %vm818, %v809, %v811
      %v847 = vsel %vm818, %v811, %v813
      %v848 = vsel %vm818, %v813, %v815
      %v849 = vsel %vm818, %v815, %v817
      %v850 = vsel %vm818, %v817, %v769
      %883 = vrot.lane.b32.xlu0 %v687, 126
      %v884 = vpop.permute.xlu0 %883
      %885 = vrot.lane.b32.xlu0 %v688, 126
      %v886 = vpop.permute.xlu0 %885
      %887 = vrot.lane.b32.xlu0 %v689, 126
      %v888 = vpop.permute.xlu0 %887
      %889 = vrot.lane.b32.xlu0 %v690, 126
      %v890 = vpop.permute.xlu0 %889
      %891 = vrot.lane.b32.xlu0 %v691, 126
      %v892 = vpop.permute.xlu0 %891
      %893 = vrot.lane.b32.xlu0 %v692, 126
      %v894 = vpop.permute.xlu0 %893
      %895 = vrot.lane.b32.xlu0 %v693, 126
      %v896 = vpop.permute.xlu0 %895
      %897 = vrot.lane.b32.xlu0 %v694, 126
      %v898 = vpop.permute.xlu0 %897
      %899 = vrot.lane.b32.xlu0 0.0, 126
      %v900 = vpop.permute.xlu0 %899
      %901 = vrot.lane.b32.xlu0 %v695, 126
      %v902 = vpop.permute.xlu0 %901
      %903 = vrot.lane.b32.xlu0 %v696, 126
      %v904 = vpop.permute.xlu0 %903
      %905 = vrot.lane.b32.xlu0 %v697, 126
      %v906 = vpop.permute.xlu0 %905
      %907 = vrot.lane.b32.xlu0 %v698, 126
      %v908 = vpop.permute.xlu0 %907
      %909 = vrot.lane.b32.xlu0 %v699, 126
      %v910 = vpop.permute.xlu0 %909
      %911 = vrot.lane.b32.xlu0 %v700, 126
      %v912 = vpop.permute.xlu0 %911
      %913 = vrot.lane.b32.xlu0 %v701, 126
      %v914 = vpop.permute.xlu0 %913
      %915 = vrot.lane.b32.xlu0 %v702, 126
      %v916 = vpop.permute.xlu0 %915
      %917 = vrot.lane.b32.xlu0 %v703, 126
      %v918 = vpop.permute.xlu0 %917
      %919 = vrot.lane.b32.xlu0 %v704, 126
      %v920 = vpop.permute.xlu0 %919
      %921 = vrot.lane.b32.xlu0 %v705, 126
      %v922 = vpop.permute.xlu0 %921
      %923 = vrot.lane.b32.xlu0 %v706, 126
      %v924 = vpop.permute.xlu0 %923
      %925 = vrot.lane.b32.xlu0 %v707, 126
      %v926 = vpop.permute.xlu0 %925
      %927 = vrot.lane.b32.xlu0 %v708, 126
      %v928 = vpop.permute.xlu0 %927
      %929 = vrot.lane.b32.xlu0 %v709, 126
      %v930 = vpop.permute.xlu0 %929
      %931 = vrot.lane.b32.xlu0 %v710, 126
      %v932 = vpop.permute.xlu0 %931
      %933 = vrot.lane.b32.xlu0 %v711, 126
      %v934 = vpop.permute.xlu0 %933
      %935 = vrot.lane.b32.xlu0 %v712, 126
      %v936 = vpop.permute.xlu0 %935
      %937 = vrot.lane.b32.xlu0 %v713, 126
      %v938 = vpop.permute.xlu0 %937
      %939 = vrot.lane.b32.xlu0 %v714, 126
      %v940 = vpop.permute.xlu0 %939
      %941 = vrot.lane.b32.xlu0 %v715, 126
      %v942 = vpop.permute.xlu0 %941
      %943 = vrot.lane.b32.xlu0 %v716, 126
      %v944 = vpop.permute.xlu0 %943
      %945 = vrot.lane.b32.xlu0 %v717, 126
      %v946 = vpop.permute.xlu0 %945
      %947 = vrot.lane.b32.xlu0 %v718, 126
      %v948 = vpop.permute.xlu0 %947
      %vm949 = vcmask 1031168
      %v950 = vsel %vm949, %v884, %v886
      %v951 = vsel %vm949, %v886, %v888
      %v952 = vsel %vm949, %v888, %v890
      %v953 = vsel %vm949, %v890, %v892
      %v954 = vsel %vm949, %v892, %v894
      %v955 = vsel %vm949, %v894, %v896
      %v956 = vsel %vm949, %v896, %v898
      %v957 = vsel %vm949, %v898, %v900
      %v958 = vsel %vm949, %v902, %v904
      %v959 = vsel %vm949, %v904, %v906
      %v960 = vsel %vm949, %v906, %v908
      %v961 = vsel %vm949, %v908, %v910
      %v962 = vsel %vm949, %v910, %v912
      %v963 = vsel %vm949, %v912, %v914
      %v964 = vsel %vm949, %v914, %v916
      %v965 = vsel %vm949, %v916, %v900
      %v966 = vsel %vm949, %v918, %v920
      %v967 = vsel %vm949, %v920, %v922
      %v968 = vsel %vm949, %v922, %v924
      %v969 = vsel %vm949, %v924, %v926
      %v970 = vsel %vm949, %v926, %v928
      %v971 = vsel %vm949, %v928, %v930
      %v972 = vsel %vm949, %v930, %v932
      %v973 = vsel %vm949, %v932, %v900
      %v974 = vsel %vm949, %v934, %v936
      %v975 = vsel %vm949, %v936, %v938
      %v976 = vsel %vm949, %v938, %v940
      %v977 = vsel %vm949, %v940, %v942
      %v978 = vsel %vm949, %v942, %v944
      %v979 = vsel %vm949, %v944, %v946
      %v980 = vsel %vm949, %v946, %v948
      %v981 = vsel %vm949, %v948, %v900
      %1014 = vrot.lane.b32.xlu0 %v687, 97
      %v1015 = vpop.permute.xlu0 %1014
      %1016 = vrot.lane.b32.xlu0 %v688, 97
      %v1017 = vpop.permute.xlu0 %1016
      %1018 = vrot.lane.b32.xlu0 %v689, 97
      %v1019 = vpop.permute.xlu0 %1018
      %1020 = vrot.lane.b32.xlu0 %v690, 97
      %v1021 = vpop.permute.xlu0 %1020
      %1022 = vrot.lane.b32.xlu0 %v691, 97
      %v1023 = vpop.permute.xlu0 %1022
      %1024 = vrot.lane.b32.xlu0 %v692, 97
      %v1025 = vpop.permute.xlu0 %1024
      %1026 = vrot.lane.b32.xlu0 %v693, 97
      %v1027 = vpop.permute.xlu0 %1026
      %1028 = vrot.lane.b32.xlu0 %v694, 97
      %v1029 = vpop.permute.xlu0 %1028
      %1030 = vrot.lane.b32.xlu0 0.0, 97
      %v1031 = vpop.permute.xlu0 %1030
      %1032 = vrot.lane.b32.xlu0 %v695, 97
      %v1033 = vpop.permute.xlu0 %1032
      %1034 = vrot.lane.b32.xlu0 %v696, 97
      %v1035 = vpop.permute.xlu0 %1034
      %1036 = vrot.lane.b32.xlu0 %v697, 97
      %v1037 = vpop.permute.xlu0 %1036
      %1038 = vrot.lane.b32.xlu0 %v698, 97
      %v1039 = vpop.permute.xlu0 %1038
      %1040 = vrot.lane.b32.xlu0 %v699, 97
      %v1041 = vpop.permute.xlu0 %1040
      %1042 = vrot.lane.b32.xlu0 %v700, 97
      %v1043 = vpop.permute.xlu0 %1042
      %1044 = vrot.lane.b32.xlu0 %v701, 97
      %v1045 = vpop.permute.xlu0 %1044
      %1046 = vrot.lane.b32.xlu0 %v702, 97
      %v1047 = vpop.permute.xlu0 %1046
      %1048 = vrot.lane.b32.xlu0 %v703, 97
      %v1049 = vpop.permute.xlu0 %1048
      %1050 = vrot.lane.b32.xlu0 %v704, 97
      %v1051 = vpop.permute.xlu0 %1050
      %1052 = vrot.lane.b32.xlu0 %v705, 97
      %v1053 = vpop.permute.xlu0 %1052
      %1054 = vrot.lane.b32.xlu0 %v706, 97
      %v1055 = vpop.permute.xlu0 %1054
      %1056 = vrot.lane.b32.xlu0 %v707, 97
      %v1057 = vpop.permute.xlu0 %1056
      %1058 = vrot.lane.b32.xlu0 %v708, 97
      %v1059 = vpop.permute.xlu0 %1058
      %1060 = vrot.lane.b32.xlu0 %v709, 97
      %v1061 = vpop.permute.xlu0 %1060
      %1062 = vrot.lane.b32.xlu0 %v710, 97
      %v1063 = vpop.permute.xlu0 %1062
      %1064 = vrot.lane.b32.xlu0 %v711, 97
      %v1065 = vpop.permute.xlu0 %1064
      %1066 = vrot.lane.b32.xlu0 %v712, 97
      %v1067 = vpop.permute.xlu0 %1066
      %1068 = vrot.lane.b32.xlu0 %v713, 97
      %v1069 = vpop.permute.xlu0 %1068
      %1070 = vrot.lane.b32.xlu0 %v714, 97
      %v1071 = vpop.permute.xlu0 %1070
      %1072 = vrot.lane.b32.xlu0 %v715, 97
      %v1073 = vpop.permute.xlu0 %1072
      %1074 = vrot.lane.b32.xlu0 %v716, 97
      %v1075 = vpop.permute.xlu0 %1074
      %1076 = vrot.lane.b32.xlu0 %v717, 97
      %v1077 = vpop.permute.xlu0 %1076
      %1078 = vrot.lane.b32.xlu0 %v718, 97
      %v1079 = vpop.permute.xlu0 %1078
      %vm1080 = vcmask 793600
      %v1081 = vsel %vm1080, %v1015, %v1017
      %v1082 = vsel %vm1080, %v1017, %v1019
      %v1083 = vsel %vm1080, %v1019, %v1021
      %v1084 = vsel %vm1080, %v1021, %v1023
      %v1085 = vsel %vm1080, %v1023, %v1025
      %v1086 = vsel %vm1080, %v1025, %v1027
      %v1087 = vsel %vm1080, %v1027, %v1029
      %v1088 = vsel %vm1080, %v1029, %v1031
      %v1089 = vsel %vm1080, %v1033, %v1035
      %v1090 = vsel %vm1080, %v1035, %v1037
      %v1091 = vsel %vm1080, %v1037, %v1039
      %v1092 = vsel %vm1080, %v1039, %v1041
      %v1093 = vsel %vm1080, %v1041, %v1043
      %v1094 = vsel %vm1080, %v1043, %v1045
      %v1095 = vsel %vm1080, %v1045, %v1047
      %v1096 = vsel %vm1080, %v1047, %v1031
      %v1097 = vsel %vm1080, %v1049, %v1051
      %v1098 = vsel %vm1080, %v1051, %v1053
      %v1099 = vsel %vm1080, %v1053, %v1055
      %v1100 = vsel %vm1080, %v1055, %v1057
      %v1101 = vsel %vm1080, %v1057, %v1059
      %v1102 = vsel %vm1080, %v1059, %v1061
      %v1103 = vsel %vm1080, %v1061, %v1063
      %v1104 = vsel %vm1080, %v1063, %v1031
      %v1105 = vsel %vm1080, %v1065, %v1067
      %v1106 = vsel %vm1080, %v1067, %v1069
      %v1107 = vsel %vm1080, %v1069, %v1071
      %v1108 = vsel %vm1080, %v1071, %v1073
      %v1109 = vsel %vm1080, %v1073, %v1075
      %v1110 = vsel %vm1080, %v1075, %v1077
      %v1111 = vsel %vm1080, %v1077, %v1079
      %v1112 = vsel %vm1080, %v1079, %v1031
      %1145 = vrot.lane.b32.xlu0 %v687, 96
      %v1146 = vpop.permute.xlu0 %1145
      %1147 = vrot.lane.b32.xlu0 %v688, 96
      %v1148 = vpop.permute.xlu0 %1147
      %1149 = vrot.lane.b32.xlu0 %v689, 96
      %v1150 = vpop.permute.xlu0 %1149
      %1151 = vrot.lane.b32.xlu0 %v690, 96
      %v1152 = vpop.permute.xlu0 %1151
      %1153 = vrot.lane.b32.xlu0 %v691, 96
      %v1154 = vpop.permute.xlu0 %1153
      %1155 = vrot.lane.b32.xlu0 %v692, 96
      %v1156 = vpop.permute.xlu0 %1155
      %1157 = vrot.lane.b32.xlu0 %v693, 96
      %v1158 = vpop.permute.xlu0 %1157
      %1159 = vrot.lane.b32.xlu0 %v694, 96
      %v1160 = vpop.permute.xlu0 %1159
      %1161 = vrot.lane.b32.xlu0 0.0, 96
      %v1162 = vpop.permute.xlu0 %1161
      %1163 = vrot.lane.b32.xlu0 %v695, 96
      %v1164 = vpop.permute.xlu0 %1163
      %1165 = vrot.lane.b32.xlu0 %v696, 96
      %v1166 = vpop.permute.xlu0 %1165
      %1167 = vrot.lane.b32.xlu0 %v697, 96
      %v1168 = vpop.permute.xlu0 %1167
      %1169 = vrot.lane.b32.xlu0 %v698, 96
      %v1170 = vpop.permute.xlu0 %1169
      %1171 = vrot.lane.b32.xlu0 %v699, 96
      %v1172 = vpop.permute.xlu0 %1171
      %1173 = vrot.lane.b32.xlu0 %v700, 96
      %v1174 = vpop.permute.xlu0 %1173
      %1175 = vrot.lane.b32.xlu0 %v701, 96
      %v1176 = vpop.permute.xlu0 %1175
      %1177 = vrot.lane.b32.xlu0 %v702, 96
      %v1178 = vpop.permute.xlu0 %1177
      %1179 = vrot.lane.b32.xlu0 %v703, 96
      %v1180 = vpop.permute.xlu0 %1179
      %1181 = vrot.lane.b32.xlu0 %v704, 96
      %v1182 = vpop.permute.xlu0 %1181
      %1183 = vrot.lane.b32.xlu0 %v705, 96
      %v1184 = vpop.permute.xlu0 %1183
      %1185 = vrot.lane.b32.xlu0 %v706, 96
      %v1186 = vpop.permute.xlu0 %1185
      %1187 = vrot.lane.b32.xlu0 %v707, 96
      %v1188 = vpop.permute.xlu0 %1187
      %1189 = vrot.lane.b32.xlu0 %v708, 96
      %v1190 = vpop.permute.xlu0 %1189
      %1191 = vrot.lane.b32.xlu0 %v709, 96
      %v1192 = vpop.permute.xlu0 %1191
      %1193 = vrot.lane.b32.xlu0 %v710, 96
      %v1194 = vpop.permute.xlu0 %1193
      %1195 = vrot.lane.b32.xlu0 %v711, 96
      %v1196 = vpop.permute.xlu0 %1195
      %1197 = vrot.lane.b32.xlu0 %v712, 96
      %v1198 = vpop.permute.xlu0 %1197
      %1199 = vrot.lane.b32.xlu0 %v713, 96
      %v1200 = vpop.permute.xlu0 %1199
      %1201 = vrot.lane.b32.xlu0 %v714, 96
      %v1202 = vpop.permute.xlu0 %1201
      %1203 = vrot.lane.b32.xlu0 %v715, 96
      %v1204 = vpop.permute.xlu0 %1203
      %1205 = vrot.lane.b32.xlu0 %v716, 96
      %v1206 = vpop.permute.xlu0 %1205
      %1207 = vrot.lane.b32.xlu0 %v717, 96
      %v1208 = vpop.permute.xlu0 %1207
      %1209 = vrot.lane.b32.xlu0 %v718, 96
      %v1210 = vpop.permute.xlu0 %1209
      %vm1211 = vcmask 785408
      %v1212 = vsel %vm1211, %v1146, %v1148
      %v1213 = vsel %vm1211, %v1148, %v1150
      %v1214 = vsel %vm1211, %v1150, %v1152
      %v1215 = vsel %vm1211, %v1152, %v1154
      %v1216 = vsel %vm1211, %v1154, %v1156
      %v1217 = vsel %vm1211, %v1156, %v1158
      %v1218 = vsel %vm1211, %v1158, %v1160
      %v1219 = vsel %vm1211, %v1160, %v1162
      %v1220 = vsel %vm1211, %v1164, %v1166
      %v1221 = vsel %vm1211, %v1166, %v1168
      %v1222 = vsel %vm1211, %v1168, %v1170
      %v1223 = vsel %vm1211, %v1170, %v1172
      %v1224 = vsel %vm1211, %v1172, %v1174
      %v1225 = vsel %vm1211, %v1174, %v1176
      %v1226 = vsel %vm1211, %v1176, %v1178
      %v1227 = vsel %vm1211, %v1178, %v1162
      %v1228 = vsel %vm1211, %v1180, %v1182
      %v1229 = vsel %vm1211, %v1182, %v1184
      %v1230 = vsel %vm1211, %v1184, %v1186
      %v1231 = vsel %vm1211, %v1186, %v1188
      %v1232 = vsel %vm1211, %v1188, %v1190
      %v1233 = vsel %vm1211, %v1190, %v1192
      %v1234 = vsel %vm1211, %v1192, %v1194
      %v1235 = vsel %vm1211, %v1194, %v1162
      %v1236 = vsel %vm1211, %v1196, %v1198
      %v1237 = vsel %vm1211, %v1198, %v1200
      %v1238 = vsel %vm1211, %v1200, %v1202
      %v1239 = vsel %vm1211, %v1202, %v1204
      %v1240 = vsel %vm1211, %v1204, %v1206
      %v1241 = vsel %vm1211, %v1206, %v1208
      %v1242 = vsel %vm1211, %v1208, %v1210
      %v1243 = vsel %vm1211, %v1210, %v1162
      %1276 = vrot.lane.b32.xlu0 %v687, 95
      %v1277 = vpop.permute.xlu0 %1276
      %1278 = vrot.lane.b32.xlu0 %v688, 95
      %v1279 = vpop.permute.xlu0 %1278
      %1280 = vrot.lane.b32.xlu0 %v689, 95
      %v1281 = vpop.permute.xlu0 %1280
      %1282 = vrot.lane.b32.xlu0 %v690, 95
      %v1283 = vpop.permute.xlu0 %1282
      %1284 = vrot.lane.b32.xlu0 %v691, 95
      %v1285 = vpop.permute.xlu0 %1284
      %1286 = vrot.lane.b32.xlu0 %v692, 95
      %v1287 = vpop.permute.xlu0 %1286
      %1288 = vrot.lane.b32.xlu0 %v693, 95
      %v1289 = vpop.permute.xlu0 %1288
      %1290 = vrot.lane.b32.xlu0 %v694, 95
      %v1291 = vpop.permute.xlu0 %1290
      %1292 = vrot.lane.b32.xlu0 0.0, 95
      %v1293 = vpop.permute.xlu0 %1292
      %1294 = vrot.lane.b32.xlu0 %v695, 95
      %v1295 = vpop.permute.xlu0 %1294
      %1296 = vrot.lane.b32.xlu0 %v696, 95
      %v1297 = vpop.permute.xlu0 %1296
      %1298 = vrot.lane.b32.xlu0 %v697, 95
      %v1299 = vpop.permute.xlu0 %1298
      %1300 = vrot.lane.b32.xlu0 %v698, 95
      %v1301 = vpop.permute.xlu0 %1300
      %1302 = vrot.lane.b32.xlu0 %v699, 95
      %v1303 = vpop.permute.xlu0 %1302
      %1304 = vrot.lane.b32.xlu0 %v700, 95
      %v1305 = vpop.permute.xlu0 %1304
      %1306 = vrot.lane.b32.xlu0 %v701, 95
      %v1307 = vpop.permute.xlu0 %1306
      %1308 = vrot.lane.b32.xlu0 %v702, 95
      %v1309 = vpop.permute.xlu0 %1308
      %1310 = vrot.lane.b32.xlu0 %v703, 95
      %v1311 = vpop.permute.xlu0 %1310
      %1312 = vrot.lane.b32.xlu0 %v704, 95
      %v1313 = vpop.permute.xlu0 %1312
      %1314 = vrot.lane.b32.xlu0 %v705, 95
      %v1315 = vpop.permute.xlu0 %1314
      %1316 = vrot.lane.b32.xlu0 %v706, 95
      %v1317 = vpop.permute.xlu0 %1316
      %1318 = vrot.lane.b32.xlu0 %v707, 95
      %v1319 = vpop.permute.xlu0 %1318
      %1320 = vrot.lane.b32.xlu0 %v708, 95
      %v1321 = vpop.permute.xlu0 %1320
      %1322 = vrot.lane.b32.xlu0 %v709, 95
      %v1323 = vpop.permute.xlu0 %1322
      %1324 = vrot.lane.b32.xlu0 %v710, 95
      %v1325 = vpop.permute.xlu0 %1324
      %1326 = vrot.lane.b32.xlu0 %v711, 95
      %v1327 = vpop.permute.xlu0 %1326
      %1328 = vrot.lane.b32.xlu0 %v712, 95
      %v1329 = vpop.permute.xlu0 %1328
      %1330 = vrot.lane.b32.xlu0 %v713, 95
      %v1331 = vpop.permute.xlu0 %1330
      %1332 = vrot.lane.b32.xlu0 %v714, 95
      %v1333 = vpop.permute.xlu0 %1332
      %1334 = vrot.lane.b32.xlu0 %v715, 95
      %v1335 = vpop.permute.xlu0 %1334
      %1336 = vrot.lane.b32.xlu0 %v716, 95
      %v1337 = vpop.permute.xlu0 %1336
      %1338 = vrot.lane.b32.xlu0 %v717, 95
      %v1339 = vpop.permute.xlu0 %1338
      %1340 = vrot.lane.b32.xlu0 %v718, 95
      %v1341 = vpop.permute.xlu0 %1340
      %vm1342 = vcmask 777216
      %v1343 = vsel %vm1342, %v1277, %v1279
      %v1344 = vsel %vm1342, %v1279, %v1281
      %v1345 = vsel %vm1342, %v1281, %v1283
      %v1346 = vsel %vm1342, %v1283, %v1285
      %v1347 = vsel %vm1342, %v1285, %v1287
      %v1348 = vsel %vm1342, %v1287, %v1289
      %v1349 = vsel %vm1342, %v1289, %v1291
      %v1350 = vsel %vm1342, %v1291, %v1293
      %v1351 = vsel %vm1342, %v1295, %v1297
      %v1352 = vsel %vm1342, %v1297, %v1299
      %v1353 = vsel %vm1342, %v1299, %v1301
      %v1354 = vsel %vm1342, %v1301, %v1303
      %v1355 = vsel %vm1342, %v1303, %v1305
      %v1356 = vsel %vm1342, %v1305, %v1307
      %v1357 = vsel %vm1342, %v1307, %v1309
      %v1358 = vsel %vm1342, %v1309, %v1293
      %v1359 = vsel %vm1342, %v1311, %v1313
      %v1360 = vsel %vm1342, %v1313, %v1315
      %v1361 = vsel %vm1342, %v1315, %v1317
      %v1362 = vsel %vm1342, %v1317, %v1319
      %v1363 = vsel %vm1342, %v1319, %v1321
      %v1364 = vsel %vm1342, %v1321, %v1323
      %v1365 = vsel %vm1342, %v1323, %v1325
      %v1366 = vsel %vm1342, %v1325, %v1293
      %v1367 = vsel %vm1342, %v1327, %v1329
      %v1368 = vsel %vm1342, %v1329, %v1331
      %v1369 = vsel %vm1342, %v1331, %v1333
      %v1370 = vsel %vm1342, %v1333, %v1335
      %v1371 = vsel %vm1342, %v1335, %v1337
      %v1372 = vsel %vm1342, %v1337, %v1339
      %v1373 = vsel %vm1342, %v1339, %v1341
      %v1374 = vsel %vm1342, %v1341, %v1293
      %1407 = vrot.lane.b32.xlu0 %v687, 66
      %v1408 = vpop.permute.xlu0 %1407
      %1409 = vrot.lane.b32.xlu0 %v688, 66
      %v1410 = vpop.permute.xlu0 %1409
      %1411 = vrot.lane.b32.xlu0 %v689, 66
      %v1412 = vpop.permute.xlu0 %1411
      %1413 = vrot.lane.b32.xlu0 %v690, 66
      %v1414 = vpop.permute.xlu0 %1413
      %1415 = vrot.lane.b32.xlu0 %v691, 66
      %v1416 = vpop.permute.xlu0 %1415
      %1417 = vrot.lane.b32.xlu0 %v692, 66
      %v1418 = vpop.permute.xlu0 %1417
      %1419 = vrot.lane.b32.xlu0 %v693, 66
      %v1420 = vpop.permute.xlu0 %1419
      %1421 = vrot.lane.b32.xlu0 %v694, 66
      %v1422 = vpop.permute.xlu0 %1421
      %1423 = vrot.lane.b32.xlu0 0.0, 66
      %v1424 = vpop.permute.xlu0 %1423
      %1425 = vrot.lane.b32.xlu0 %v695, 66
      %v1426 = vpop.permute.xlu0 %1425
      %1427 = vrot.lane.b32.xlu0 %v696, 66
      %v1428 = vpop.permute.xlu0 %1427
      %1429 = vrot.lane.b32.xlu0 %v697, 66
      %v1430 = vpop.permute.xlu0 %1429
      %1431 = vrot.lane.b32.xlu0 %v698, 66
      %v1432 = vpop.permute.xlu0 %1431
      %1433 = vrot.lane.b32.xlu0 %v699, 66
      %v1434 = vpop.permute.xlu0 %1433
      %1435 = vrot.lane.b32.xlu0 %v700, 66
      %v1436 = vpop.permute.xlu0 %1435
      %1437 = vrot.lane.b32.xlu0 %v701, 66
      %v1438 = vpop.permute.xlu0 %1437
      %1439 = vrot.lane.b32.xlu0 %v702, 66
      %v1440 = vpop.permute.xlu0 %1439
      %1441 = vrot.lane.b32.xlu0 %v703, 66
      %v1442 = vpop.permute.xlu0 %1441
      %1443 = vrot.lane.b32.xlu0 %v704, 66
      %v1444 = vpop.permute.xlu0 %1443
      %1445 = vrot.lane.b32.xlu0 %v705, 66
      %v1446 = vpop.permute.xlu0 %1445
      %1447 = vrot.lane.b32.xlu0 %v706, 66
      %v1448 = vpop.permute.xlu0 %1447
      %1449 = vrot.lane.b32.xlu0 %v707, 66
      %v1450 = vpop.permute.xlu0 %1449
      %1451 = vrot.lane.b32.xlu0 %v708, 66
      %v1452 = vpop.permute.xlu0 %1451
      %1453 = vrot.lane.b32.xlu0 %v709, 66
      %v1454 = vpop.permute.xlu0 %1453
      %1455 = vrot.lane.b32.xlu0 %v710, 66
      %v1456 = vpop.permute.xlu0 %1455
      %1457 = vrot.lane.b32.xlu0 %v711, 66
      %v1458 = vpop.permute.xlu0 %1457
      %1459 = vrot.lane.b32.xlu0 %v712, 66
      %v1460 = vpop.permute.xlu0 %1459
      %1461 = vrot.lane.b32.xlu0 %v713, 66
      %v1462 = vpop.permute.xlu0 %1461
      %1463 = vrot.lane.b32.xlu0 %v714, 66
      %v1464 = vpop.permute.xlu0 %1463
      %1465 = vrot.lane.b32.xlu0 %v715, 66
      %v1466 = vpop.permute.xlu0 %1465
      %1467 = vrot.lane.b32.xlu0 %v716, 66
      %v1468 = vpop.permute.xlu0 %1467
      %1469 = vrot.lane.b32.xlu0 %v717, 66
      %v1470 = vpop.permute.xlu0 %1469
      %1471 = vrot.lane.b32.xlu0 %v718, 66
      %v1472 = vpop.permute.xlu0 %1471
      %vm1473 = vcmask 539648
      %v1474 = vsel %vm1473, %v1408, %v1410
      %v1475 = vsel %vm1473, %v1410, %v1412
      %v1476 = vsel %vm1473, %v1412, %v1414
      %v1477 = vsel %vm1473, %v1414, %v1416
      %v1478 = vsel %vm1473, %v1416, %v1418
      %v1479 = vsel %vm1473, %v1418, %v1420
      %v1480 = vsel %vm1473, %v1420, %v1422
      %v1481 = vsel %vm1473, %v1422, %v1424
      %v1482 = vsel %vm1473, %v1426, %v1428
      %v1483 = vsel %vm1473, %v1428, %v1430
      %v1484 = vsel %vm1473, %v1430, %v1432
      %v1485 = vsel %vm1473, %v1432, %v1434
      %v1486 = vsel %vm1473, %v1434, %v1436
      %v1487 = vsel %vm1473, %v1436, %v1438
      %v1488 = vsel %vm1473, %v1438, %v1440
      %v1489 = vsel %vm1473, %v1440, %v1424
      %v1490 = vsel %vm1473, %v1442, %v1444
      %v1491 = vsel %vm1473, %v1444, %v1446
      %v1492 = vsel %vm1473, %v1446, %v1448
      %v1493 = vsel %vm1473, %v1448, %v1450
      %v1494 = vsel %vm1473, %v1450, %v1452
      %v1495 = vsel %vm1473, %v1452, %v1454
      %v1496 = vsel %vm1473, %v1454, %v1456
      %v1497 = vsel %vm1473, %v1456, %v1424
      %v1498 = vsel %vm1473, %v1458, %v1460
      %v1499 = vsel %vm1473, %v1460, %v1462
      %v1500 = vsel %vm1473, %v1462, %v1464
      %v1501 = vsel %vm1473, %v1464, %v1466
      %v1502 = vsel %vm1473, %v1466, %v1468
      %v1503 = vsel %vm1473, %v1468, %v1470
      %v1504 = vsel %vm1473, %v1470, %v1472
      %v1505 = vsel %vm1473, %v1472, %v1424
      %1538 = vrot.lane.b32.xlu0 %v687, 65
      %v1539 = vpop.permute.xlu0 %1538
      %1540 = vrot.lane.b32.xlu0 %v688, 65
      %v1541 = vpop.permute.xlu0 %1540
      %1542 = vrot.lane.b32.xlu0 %v689, 65
      %v1543 = vpop.permute.xlu0 %1542
      %1544 = vrot.lane.b32.xlu0 %v690, 65
      %v1545 = vpop.permute.xlu0 %1544
      %1546 = vrot.lane.b32.xlu0 %v691, 65
      %v1547 = vpop.permute.xlu0 %1546
      %1548 = vrot.lane.b32.xlu0 %v692, 65
      %v1549 = vpop.permute.xlu0 %1548
      %1550 = vrot.lane.b32.xlu0 %v693, 65
      %v1551 = vpop.permute.xlu0 %1550
      %1552 = vrot.lane.b32.xlu0 %v694, 65
      %v1553 = vpop.permute.xlu0 %1552
      %1554 = vrot.lane.b32.xlu0 0.0, 65
      %v1555 = vpop.permute.xlu0 %1554
      %1556 = vrot.lane.b32.xlu0 %v695, 65
      %v1557 = vpop.permute.xlu0 %1556
      %1558 = vrot.lane.b32.xlu0 %v696, 65
      %v1559 = vpop.permute.xlu0 %1558
      %1560 = vrot.lane.b32.xlu0 %v697, 65
      %v1561 = vpop.permute.xlu0 %1560
      %1562 = vrot.lane.b32.xlu0 %v698, 65
      %v1563 = vpop.permute.xlu0 %1562
      %1564 = vrot.lane.b32.xlu0 %v699, 65
      %v1565 = vpop.permute.xlu0 %1564
      %1566 = vrot.lane.b32.xlu0 %v700, 65
      %v1567 = vpop.permute.xlu0 %1566
      %1568 = vrot.lane.b32.xlu0 %v701, 65
      %v1569 = vpop.permute.xlu0 %1568
      %1570 = vrot.lane.b32.xlu0 %v702, 65
      %v1571 = vpop.permute.xlu0 %1570
      %1572 = vrot.lane.b32.xlu0 %v703, 65
      %v1573 = vpop.permute.xlu0 %1572
      %1574 = vrot.lane.b32.xlu0 %v704, 65
      %v1575 = vpop.permute.xlu0 %1574
      %1576 = vrot.lane.b32.xlu0 %v705, 65
      %v1577 = vpop.permute.xlu0 %1576
      %1578 = vrot.lane.b32.xlu0 %v706, 65
      %v1579 = vpop.permute.xlu0 %1578
      %1580 = vrot.lane.b32.xlu0 %v707, 65
      %v1581 = vpop.permute.xlu0 %1580
      %1582 = vrot.lane.b32.xlu0 %v708, 65
      %v1583 = vpop.permute.xlu0 %1582
      %1584 = vrot.lane.b32.xlu0 %v709, 65
      %v1585 = vpop.permute.xlu0 %1584
      %1586 = vrot.lane.b32.xlu0 %v710, 65
      %v1587 = vpop.permute.xlu0 %1586
      %1588 = vrot.lane.b32.xlu0 %v711, 65
      %v1589 = vpop.permute.xlu0 %1588
      %1590 = vrot.lane.b32.xlu0 %v712, 65
      %v1591 = vpop.permute.xlu0 %1590
      %1592 = vrot.lane.b32.xlu0 %v713, 65
      %v1593 = vpop.permute.xlu0 %1592
      %1594 = vrot.lane.b32.xlu0 %v714, 65
      %v1595 = vpop.permute.xlu0 %1594
      %1596 = vrot.lane.b32.xlu0 %v715, 65
      %v1597 = vpop.permute.xlu0 %1596
      %1598 = vrot.lane.b32.xlu0 %v716, 65
      %v1599 = vpop.permute.xlu0 %1598
      %1600 = vrot.lane.b32.xlu0 %v717, 65
      %v1601 = vpop.permute.xlu0 %1600
      %1602 = vrot.lane.b32.xlu0 %v718, 65
      %v1603 = vpop.permute.xlu0 %1602
      %vm1604 = vcmask 531456
      %v1605 = vsel %vm1604, %v1539, %v1541
      %v1606 = vsel %vm1604, %v1541, %v1543
      %v1607 = vsel %vm1604, %v1543, %v1545
      %v1608 = vsel %vm1604, %v1545, %v1547
      %v1609 = vsel %vm1604, %v1547, %v1549
      %v1610 = vsel %vm1604, %v1549, %v1551
      %v1611 = vsel %vm1604, %v1551, %v1553
      %v1612 = vsel %vm1604, %v1553, %v1555
      %v1613 = vsel %vm1604, %v1557, %v1559
      %v1614 = vsel %vm1604, %v1559, %v1561
      %v1615 = vsel %vm1604, %v1561, %v1563
      %v1616 = vsel %vm1604, %v1563, %v1565
      %v1617 = vsel %vm1604, %v1565, %v1567
      %v1618 = vsel %vm1604, %v1567, %v1569
      %v1619 = vsel %vm1604, %v1569, %v1571
      %v1620 = vsel %vm1604, %v1571, %v1555
      %v1621 = vsel %vm1604, %v1573, %v1575
      %v1622 = vsel %vm1604, %v1575, %v1577
      %v1623 = vsel %vm1604, %v1577, %v1579
      %v1624 = vsel %vm1604, %v1579, %v1581
      %v1625 = vsel %vm1604, %v1581, %v1583
      %v1626 = vsel %vm1604, %v1583, %v1585
      %v1627 = vsel %vm1604, %v1585, %v1587
      %v1628 = vsel %vm1604, %v1587, %v1555
      %v1629 = vsel %vm1604, %v1589, %v1591
      %v1630 = vsel %vm1604, %v1591, %v1593
      %v1631 = vsel %vm1604, %v1593, %v1595
      %v1632 = vsel %vm1604, %v1595, %v1597
      %v1633 = vsel %vm1604, %v1597, %v1599
      %v1634 = vsel %vm1604, %v1599, %v1601
      %v1635 = vsel %vm1604, %v1601, %v1603
      %v1636 = vsel %vm1604, %v1603, %v1555
      %1669 = vrot.lane.b32.xlu0 %v687, 64
      %v1670 = vpop.permute.xlu0 %1669
      %1671 = vrot.lane.b32.xlu0 %v688, 64
      %v1672 = vpop.permute.xlu0 %1671
      %1673 = vrot.lane.b32.xlu0 %v689, 64
      %v1674 = vpop.permute.xlu0 %1673
      %1675 = vrot.lane.b32.xlu0 %v690, 64
      %v1676 = vpop.permute.xlu0 %1675
      %1677 = vrot.lane.b32.xlu0 %v691, 64
      %v1678 = vpop.permute.xlu0 %1677
      %1679 = vrot.lane.b32.xlu0 %v692, 64
      %v1680 = vpop.permute.xlu0 %1679
      %1681 = vrot.lane.b32.xlu0 %v693, 64
      %v1682 = vpop.permute.xlu0 %1681
      %1683 = vrot.lane.b32.xlu0 %v694, 64
      %v1684 = vpop.permute.xlu0 %1683
      %1685 = vrot.lane.b32.xlu0 0.0, 64
      %v1686 = vpop.permute.xlu0 %1685
      %1687 = vrot.lane.b32.xlu0 %v695, 64
      %v1688 = vpop.permute.xlu0 %1687
      %1689 = vrot.lane.b32.xlu0 %v696, 64
      %v1690 = vpop.permute.xlu0 %1689
      %1691 = vrot.lane.b32.xlu0 %v697, 64
      %v1692 = vpop.permute.xlu0 %1691
      %1693 = vrot.lane.b32.xlu0 %v698, 64
      %v1694 = vpop.permute.xlu0 %1693
      %1695 = vrot.lane.b32.xlu0 %v699, 64
      %v1696 = vpop.permute.xlu0 %1695
      %1697 = vrot.lane.b32.xlu0 %v700, 64
      %v1698 = vpop.permute.xlu0 %1697
      %1699 = vrot.lane.b32.xlu0 %v701, 64
      %v1700 = vpop.permute.xlu0 %1699
      %1701 = vrot.lane.b32.xlu0 %v702, 64
      %v1702 = vpop.permute.xlu0 %1701
      %1703 = vrot.lane.b32.xlu0 %v703, 64
      %v1704 = vpop.permute.xlu0 %1703
      %1705 = vrot.lane.b32.xlu0 %v704, 64
      %v1706 = vpop.permute.xlu0 %1705
      %1707 = vrot.lane.b32.xlu0 %v705, 64
      %v1708 = vpop.permute.xlu0 %1707
      %1709 = vrot.lane.b32.xlu0 %v706, 64
      %v1710 = vpop.permute.xlu0 %1709
      %1711 = vrot.lane.b32.xlu0 %v707, 64
      %v1712 = vpop.permute.xlu0 %1711
      %1713 = vrot.lane.b32.xlu0 %v708, 64
      %v1714 = vpop.permute.xlu0 %1713
      %1715 = vrot.lane.b32.xlu0 %v709, 64
      %v1716 = vpop.permute.xlu0 %1715
      %1717 = vrot.lane.b32.xlu0 %v710, 64
      %v1718 = vpop.permute.xlu0 %1717
      %1719 = vrot.lane.b32.xlu0 %v711, 64
      %v1720 = vpop.permute.xlu0 %1719
      %1721 = vrot.lane.b32.xlu0 %v712, 64
      %v1722 = vpop.permute.xlu0 %1721
      %1723 = vrot.lane.b32.xlu0 %v713, 64
      %v1724 = vpop.permute.xlu0 %1723
      %1725 = vrot.lane.b32.xlu0 %v714, 64
      %v1726 = vpop.permute.xlu0 %1725
      %1727 = vrot.lane.b32.xlu0 %v715, 64
      %v1728 = vpop.permute.xlu0 %1727
      %1729 = vrot.lane.b32.xlu0 %v716, 64
      %v1730 = vpop.permute.xlu0 %1729
      %1731 = vrot.lane.b32.xlu0 %v717, 64
      %v1732 = vpop.permute.xlu0 %1731
      %1733 = vrot.lane.b32.xlu0 %v718, 64
      %v1734 = vpop.permute.xlu0 %1733
      %vm1735 = vcmask 523264
      %v1736 = vsel %vm1735, %v1670, %v1672
      %v1737 = vsel %vm1735, %v1672, %v1674
      %v1738 = vsel %vm1735, %v1674, %v1676
      %v1739 = vsel %vm1735, %v1676, %v1678
      %v1740 = vsel %vm1735, %v1678, %v1680
      %v1741 = vsel %vm1735, %v1680, %v1682
      %v1742 = vsel %vm1735, %v1682, %v1684
      %v1743 = vsel %vm1735, %v1684, %v1686
      %v1744 = vsel %vm1735, %v1688, %v1690
      %v1745 = vsel %vm1735, %v1690, %v1692
      %v1746 = vsel %vm1735, %v1692, %v1694
      %v1747 = vsel %vm1735, %v1694, %v1696
      %v1748 = vsel %vm1735, %v1696, %v1698
      %v1749 = vsel %vm1735, %v1698, %v1700
      %v1750 = vsel %vm1735, %v1700, %v1702
      %v1751 = vsel %vm1735, %v1702, %v1686
      %v1752 = vsel %vm1735, %v1704, %v1706
      %v1753 = vsel %vm1735, %v1706, %v1708
      %v1754 = vsel %vm1735, %v1708, %v1710
      %v1755 = vsel %vm1735, %v1710, %v1712
      %v1756 = vsel %vm1735, %v1712, %v1714
      %v1757 = vsel %vm1735, %v1714, %v1716
      %v1758 = vsel %vm1735, %v1716, %v1718
      %v1759 = vsel %vm1735, %v1718, %v1686
      %v1760 = vsel %vm1735, %v1720, %v1722
      %v1761 = vsel %vm1735, %v1722, %v1724
      %v1762 = vsel %vm1735, %v1724, %v1726
      %v1763 = vsel %vm1735, %v1726, %v1728
      %v1764 = vsel %vm1735, %v1728, %v1730
      %v1765 = vsel %vm1735, %v1730, %v1732
      %v1766 = vsel %vm1735, %v1732, %v1734
      %v1767 = vsel %vm1735, %v1734, %v1686
      %v1800 = vld [vmem:[%s3] sm:$0xff]
      %v1801 = vld [vmem:[%s3 + $0x8] sm:$0xff]
      %v1802 = vld [vmem:[%s3 + $0x10] sm:$0xff]
      %v1803 = vld [vmem:[%s3 + $0x18] sm:$0xff]
      %v1804 = vld [vmem:[%s3 + $0x20] sm:$0xff]
      %v1805 = vld [vmem:[%s3 + $0x28] sm:$0xff]
      %v1806 = vld [vmem:[%s3 + $0x30] sm:$0xff]
      %v1807 = vld [vmem:[%s3 + $0x38] sm:$0xff]
      %v1808 = vld [vmem:[%s3 + $0x40] sm:$0xff]
      %v1809 = vld [vmem:[%s3 + $0x48] sm:$0xff]
      %v1810 = vld [vmem:[%s3 + $0x50] sm:$0xff]
      %v1811 = vld [vmem:[%s3 + $0x58] sm:$0xff]
      %v1812 = vld [vmem:[%s4] sm:$0xff]
      %v1813 = vld [vmem:[%s4 + $0x8] sm:$0xff]
      %v1814 = vld [vmem:[%s4 + $0x10] sm:$0xff]
      %v1815 = vld [vmem:[%s4 + $0x18] sm:$0xff]
      %1817 = vset.pattern.permute.xlu0 0
      %1818 = vperm.xlu0 %1817, %v1812
      %v1819 = vpop.permute.xlu0 %1818
      %1822 = vset.pattern.permute.xlu0 0
      %1823 = vperm.xlu0 %1822, %v1813
      %v1824 = vpop.permute.xlu0 %1823
      %1827 = vset.pattern.permute.xlu0 0
      %1828 = vperm.xlu0 %1827, %v1814
      %v1829 = vpop.permute.xlu0 %1828
      %1832 = vset.pattern.permute.xlu0 0
      %1833 = vperm.xlu0 %1832, %v1815
      %v1834 = vpop.permute.xlu0 %1833
      %vm1836 = vcmask 261120
      %v1838 = vsel %vm1836, %v1802, 0
      %v1841 = vsel %vm1836, %v1805, 0
      %v1844 = vsel %vm1836, %v1808, 0
      %v1847 = vsel %vm1836, %v1811, 0
      %1849 = vmatprep.subr.mxu0 %v1106
      %1850 = vmatpush1.msra.mxu0 %v1105
      %1851 = vmatprep.subr.mxu0 %v1098
      %1852 = vmatpush1.msra.mxu0 %v1097
      %1853 = vmatprep.subr.mxu0 %v1090
      %1854 = vmatpush1.msra.mxu0 %v1089
      %1855 = vmatprep.subr.mxu0 %v1082
      %1856 = vmatpush1.msra.mxu0 %v1081
      %1857 = vmatprep.subr.mxu0 %v975
      %1858 = vmatpush1.msra.mxu0 %v974
      %1859 = vmatprep.subr.mxu0 %v967
      %1860 = vmatpush1.msra.mxu0 %v966
      %1861 = vmatprep.subr.mxu0 %v959
      %1862 = vmatpush1.msra.mxu0 %v958
      %1863 = vmatprep.subr.mxu0 %v951
      %1864 = vmatpush1.msra.mxu0 %v950
      %1865 = vmatprep.subr.mxu0 %v844
      %1866 = vmatpush1.msra.mxu0 %v843
      %1867 = vmatprep.subr.mxu0 %v836
      %1868 = vmatpush1.msra.mxu0 %v835
      %1869 = vmatprep.subr.mxu0 %v828
      %1870 = vmatpush1.msra.mxu0 %v827
      %1871 = vmatprep.subr.mxu0 %v820
      %1872 = vmatpush1.msra.mxu0 %v819
      %1873 = vmatprep.subr.mxu0 %v712
      %1874 = vmatpush1.msra.mxu0 %v711
      %1875 = vmatprep.subr.mxu0 %v704
      %1876 = vmatpush1.msra.mxu0 %v703
      %1877 = vmatprep.subr.mxu0 %v696
      %1878 = vmatpush1.msra.mxu0 %v695
      %1879 = vmatprep.subr.mxu0 %v688
      %1880 = vmatpush1.msra.mxu0 %v687
      %1881 = vmatprep.subr.mxu0 %v1630
      %1882 = vmatpush2.msra.mxu0 %v1629
      %1883 = vmatprep.subr.mxu0 %v1622
      %1884 = vmatpush2.msra.mxu0 %v1621
      %1885 = vmatprep.subr.mxu0 %v1614
      %1886 = vmatpush2.msra.mxu0 %v1613
      %1887 = vmatprep.subr.mxu0 %v1606
      %1888 = vmatpush2.msra.mxu0 %v1605
      %1889 = vmatprep.subr.mxu0 %v1499
      %1890 = vmatpush2.msra.mxu0 %v1498
      %1891 = vmatprep.subr.mxu0 %v1491
      %1892 = vmatpush2.msra.mxu0 %v1490
      %1893 = vmatprep.subr.mxu0 %v1483
      %1894 = vmatpush2.msra.mxu0 %v1482
      %1895 = vmatprep.subr.mxu0 %v1475
      %1896 = vmatpush2.msra.mxu0 %v1474
      %1897 = vmatprep.subr.mxu0 %v1368
      %1898 = vmatpush2.msra.mxu0 %v1367
      %1899 = vmatprep.subr.mxu0 %v1360
      %1900 = vmatpush2.msra.mxu0 %v1359
      %1901 = vmatprep.subr.mxu0 %v1352
      %1902 = vmatpush2.msra.mxu0 %v1351
      %1903 = vmatprep.subr.mxu0 %v1344
      %1904 = vmatpush2.msra.mxu0 %v1343
      %1905 = vmatprep.subr.mxu0 %v1237
      %1906 = vmatpush2.msra.mxu0 %v1236
      %1907 = vmatprep.subr.mxu0 %v1229
      %1908 = vmatpush2.msra.mxu0 %v1228
      %1909 = vmatprep.subr.mxu0 %v1221
      %1910 = vmatpush2.msra.mxu0 %v1220
      %1911 = vmatprep.subr.mxu0 %v1213
      %1912 = vmatpush2.msra.mxu0 %v1212
      %1913 = vmatprep.mubr.f32.mxu0 %v1801
      %1914 = vmatmul.mubr.f32.gmra.mxu0 %v1800
      %v1915 = vpop.f32.mrf.mxu0
      %v1916 = vadd.f32 %v1819, %v1915
      %v1917 = vpop.f32.mrf.mxu0
      %v1918 = vadd.f32 %v1819, %v1917
      %1919 = vmatprep.mubr.f32.mxu0 %v1804
      %1920 = vmatmul.mubr.f32.gmra.mxu0 %v1803
      %v1921 = vpop.f32.mrf.mxu0
      %v1922 = vadd.f32 %v1824, %v1921
      %v1923 = vpop.f32.mrf.mxu0
      %v1924 = vadd.f32 %v1824, %v1923
      %1925 = vmatprep.mubr.f32.mxu0 %v1807
      %1926 = vmatmul.mubr.f32.gmra.mxu0 %v1806
      %v1927 = vpop.f32.mrf.mxu0
      %v1928 = vadd.f32 %v1829, %v1927
      %v1929 = vpop.f32.mrf.mxu0
      %v1930 = vadd.f32 %v1829, %v1929
      %1931 = vmatprep.mubr.f32.mxu0 %v1810
      %1932 = vmatmul.mubr.f32.gmra.mxu0 %v1809
      %v1933 = vpop.f32.mrf.mxu0
      %v1934 = vadd.f32 %v1834, %v1933
      %v1935 = vpop.f32.mrf.mxu0
      %v1936 = vadd.f32 %v1834, %v1935
      %1937 = vdwg.mxu0
      %1938 = vmatprep.subr.mxu0 0.0
      %1939 = vmatpush1.msra.mxu0 0.0
      %1940 = vmatprep.subr.mxu0 0.0
      %1941 = vmatpush1.msra.mxu0 0.0
      %1942 = vmatprep.subr.mxu0 0.0
      %1943 = vmatpush1.msra.mxu0 0.0
      %1944 = vmatprep.subr.mxu0 0.0
      %1945 = vmatpush1.msra.mxu0 0.0
      %1946 = vmatprep.subr.mxu0 0.0
      %1947 = vmatpush1.msra.mxu0 0.0
      %1948 = vmatprep.subr.mxu0 0.0
      %1949 = vmatpush1.msra.mxu0 0.0
      %1950 = vmatprep.subr.mxu0 0.0
      %1951 = vmatpush1.msra.mxu0 0.0
      %1952 = vmatprep.subr.mxu0 0.0
      %1953 = vmatpush1.msra.mxu0 0.0
      %1954 = vmatprep.subr.mxu0 0.0
      %1955 = vmatpush1.msra.mxu0 0.0
      %1956 = vmatprep.subr.mxu0 0.0
      %1957 = vmatpush1.msra.mxu0 0.0
      %1958 = vmatprep.subr.mxu0 0.0
      %1959 = vmatpush1.msra.mxu0 0.0
      %1960 = vmatprep.subr.mxu0 0.0
      %1961 = vmatpush1.msra.mxu0 0.0
      %1962 = vmatprep.subr.mxu0 %v1761
      %1963 = vmatpush1.msra.mxu0 %v1760
      %1964 = vmatprep.subr.mxu0 %v1753
      %1965 = vmatpush1.msra.mxu0 %v1752
      %1966 = vmatprep.subr.mxu0 %v1745
      %1967 = vmatpush1.msra.mxu0 %v1744
      %1968 = vmatprep.subr.mxu0 %v1737
      %1969 = vmatpush1.msra.mxu0 %v1736
      %1970 = vmatprep.subr.mxu0 0.0
      %1971 = vmatpush2.msra.mxu0 0.0
      %1972 = vmatprep.subr.mxu0 0.0
      %1973 = vmatpush2.msra.mxu0 0.0
      %1974 = vmatprep.subr.mxu0 0.0
      %1975 = vmatpush2.msra.mxu0 0.0
      %1976 = vmatprep.subr.mxu0 0.0
      %1977 = vmatpush2.msra.mxu0 0.0
      %1978 = vmatprep.subr.mxu0 0.0
      %1979 = vmatpush2.msra.mxu0 0.0
      %1980 = vmatprep.subr.mxu0 0.0
      %1981 = vmatpush2.msra.mxu0 0.0
      %1982 = vmatprep.subr.mxu0 0.0
      %1983 = vmatpush2.msra.mxu0 0.0
      %1984 = vmatprep.subr.mxu0 0.0
      %1985 = vmatpush2.msra.mxu0 0.0
      %1986 = vmatprep.subr.mxu0 0.0
      %1987 = vmatpush2.msra.mxu0 0.0
      %1988 = vmatprep.subr.mxu0 0.0
      %1989 = vmatpush2.msra.mxu0 0.0
      %1990 = vmatprep.subr.mxu0 0.0
      %1991 = vmatpush2.msra.mxu0 0.0
      %1992 = vmatprep.subr.mxu0 0.0
      %1993 = vmatpush2.msra.mxu0 0.0
      %1994 = vmatprep.subr.mxu0 0.0
      %1995 = vmatpush2.msra.mxu0 0.0
      %1996 = vmatprep.subr.mxu0 0.0
      %1997 = vmatpush2.msra.mxu0 0.0
      %1998 = vmatprep.subr.mxu0 0.0
      %1999 = vmatpush2.msra.mxu0 0.0
      %2000 = vmatprep.subr.mxu0 0.0
      %2001 = vmatpush2.msra.mxu0 0.0
      %2002 = vmatprep.mubr.f32.mxu0 0.0
      %2003 = vmatmul.mubr.f32.gmra.mxu0 %v1838
      %v2004 = vpop.f32.mrf.mxu0
      %v2005 = vadd.f32 %v1916, %v2004
      %v2006 = vpop.f32.mrf.mxu0
      %v2007 = vadd.f32 %v1918, %v2006
      %2008 = vmatprep.mubr.f32.mxu0 0.0
      %2009 = vmatmul.mubr.f32.gmra.mxu0 %v1841
      %v2010 = vpop.f32.mrf.mxu0
      %v2011 = vadd.f32 %v1922, %v2010
      %v2012 = vpop.f32.mrf.mxu0
      %v2013 = vadd.f32 %v1924, %v2012
      %2014 = vmatprep.mubr.f32.mxu0 0.0
      %2015 = vmatmul.mubr.f32.gmra.mxu0 %v1844
      %v2016 = vpop.f32.mrf.mxu0
      %v2017 = vadd.f32 %v1928, %v2016
      %v2018 = vpop.f32.mrf.mxu0
      %v2019 = vadd.f32 %v1930, %v2018
      %2020 = vmatprep.mubr.f32.mxu0 0.0
      %2021 = vmatmul.mubr.f32.gmra.mxu0 %v1847
      %v2022 = vpop.f32.mrf.mxu0
      %v2023 = vadd.f32 %v1934, %v2022
      %v2024 = vpop.f32.mrf.mxu0
      %v2025 = vadd.f32 %v1936, %v2024
      %2026 = vdwg.mxu0
      %2027 = vmatprep.subr.mxu0 %v1108
      %2028 = vmatpush1.msra.mxu0 %v1107
      %2029 = vmatprep.subr.mxu0 %v1100
      %2030 = vmatpush1.msra.mxu0 %v1099
      %2031 = vmatprep.subr.mxu0 %v1092
      %2032 = vmatpush1.msra.mxu0 %v1091
      %2033 = vmatprep.subr.mxu0 %v1084
      %2034 = vmatpush1.msra.mxu0 %v1083
      %2035 = vmatprep.subr.mxu0 %v977
      %2036 = vmatpush1.msra.mxu0 %v976
      %2037 = vmatprep.subr.mxu0 %v969
      %2038 = vmatpush1.msra.mxu0 %v968
      %2039 = vmatprep.subr.mxu0 %v961
      %2040 = vmatpush1.msra.mxu0 %v960
      %2041 = vmatprep.subr.mxu0 %v953
      %2042 = vmatpush1.msra.mxu0 %v952
      %2043 = vmatprep.subr.mxu0 %v846
      %2044 = vmatpush1.msra.mxu0 %v845
      %2045 = vmatprep.subr.mxu0 %v838
      %2046 = vmatpush1.msra.mxu0 %v837
      %2047 = vmatprep.subr.mxu0 %v830
      %2048 = vmatpush1.msra.mxu0 %v829
      %2049 = vmatprep.subr.mxu0 %v822
      %2050 = vmatpush1.msra.mxu0 %v821
      %2051 = vmatprep.subr.mxu0 %v714
      %2052 = vmatpush1.msra.mxu0 %v713
      %2053 = vmatprep.subr.mxu0 %v706
      %2054 = vmatpush1.msra.mxu0 %v705
      %2055 = vmatprep.subr.mxu0 %v698
      %2056 = vmatpush1.msra.mxu0 %v697
      %2057 = vmatprep.subr.mxu0 %v690
      %2058 = vmatpush1.msra.mxu0 %v689
      %2059 = vmatprep.subr.mxu0 %v1632
      %2060 = vmatpush2.msra.mxu0 %v1631
      %2061 = vmatprep.subr.mxu0 %v1624
      %2062 = vmatpush2.msra.mxu0 %v1623
      %2063 = vmatprep.subr.mxu0 %v1616
      %2064 = vmatpush2.msra.mxu0 %v1615
      %2065 = vmatprep.subr.mxu0 %v1608
      %2066 = vmatpush2.msra.mxu0 %v1607
      %2067 = vmatprep.subr.mxu0 %v1501
      %2068 = vmatpush2.msra.mxu0 %v1500
      %2069 = vmatprep.subr.mxu0 %v1493
      %2070 = vmatpush2.msra.mxu0 %v1492
      %2071 = vmatprep.subr.mxu0 %v1485
      %2072 = vmatpush2.msra.mxu0 %v1484
      %2073 = vmatprep.subr.mxu0 %v1477
      %2074 = vmatpush2.msra.mxu0 %v1476
      %2075 = vmatprep.subr.mxu0 %v1370
      %2076 = vmatpush2.msra.mxu0 %v1369
      %2077 = vmatprep.subr.mxu0 %v1362
      %2078 = vmatpush2.msra.mxu0 %v1361
      %2079 = vmatprep.subr.mxu0 %v1354
      %2080 = vmatpush2.msra.mxu0 %v1353
      %2081 = vmatprep.subr.mxu0 %v1346
      %2082 = vmatpush2.msra.mxu0 %v1345
      %2083 = vmatprep.subr.mxu0 %v1239
      %2084 = vmatpush2.msra.mxu0 %v1238
      %2085 = vmatprep.subr.mxu0 %v1231
      %2086 = vmatpush2.msra.mxu0 %v1230
      %2087 = vmatprep.subr.mxu0 %v1223
      %2088 = vmatpush2.msra.mxu0 %v1222
      %2089 = vmatprep.subr.mxu0 %v1215
      %2090 = vmatpush2.msra.mxu0 %v1214
      %2091 = vmatprep.mubr.f32.mxu0 %v1801
      %2092 = vmatmul.mubr.f32.gmra.mxu0 %v1800
      %v2093 = vpop.f32.mrf.mxu0
      %v2094 = vadd.f32 %v1819, %v2093
      %v2095 = vpop.f32.mrf.mxu0
      %v2096 = vadd.f32 %v1819, %v2095
      %2097 = vmatprep.mubr.f32.mxu0 %v1804
      %2098 = vmatmul.mubr.f32.gmra.mxu0 %v1803
      %v2099 = vpop.f32.mrf.mxu0
      %v2100 = vadd.f32 %v1824, %v2099
      %v2101 = vpop.f32.mrf.mxu0
      %v2102 = vadd.f32 %v1824, %v2101
      %2103 = vmatprep.mubr.f32.mxu0 %v1807
      %2104 = vmatmul.mubr.f32.gmra.mxu0 %v1806
      %v2105 = vpop.f32.mrf.mxu0
      %v2106 = vadd.f32 %v1829, %v2105
      %v2107 = vpop.f32.mrf.mxu0
      %v2108 = vadd.f32 %v1829, %v2107
      %2109 = vmatprep.mubr.f32.mxu0 %v1810
      %2110 = vmatmul.mubr.f32.gmra.mxu0 %v1809
      %v2111 = vpop.f32.mrf.mxu0
      %v2112 = vadd.f32 %v1834, %v2111
      %v2113 = vpop.f32.mrf.mxu0
      %v2114 = vadd.f32 %v1834, %v2113
      %2115 = vdwg.mxu0
      %2116 = vmatprep.subr.mxu0 0.0
      %2117 = vmatpush1.msra.mxu0 0.0
      %2118 = vmatprep.subr.mxu0 0.0
      %2119 = vmatpush1.msra.mxu0 0.0
      %2120 = vmatprep.subr.mxu0 0.0
      %2121 = vmatpush1.msra.mxu0 0.0
      %2122 = vmatprep.subr.mxu0 0.0
      %2123 = vmatpush1.msra.mxu0 0.0
      %2124 = vmatprep.subr.mxu0 0.0
      %2125 = vmatpush1.msra.mxu0 0.0
      %2126 = vmatprep.subr.mxu0 0.0
      %2127 = vmatpush1.msra.mxu0 0.0
      %2128 = vmatprep.subr.mxu0 0.0
      %2129 = vmatpush1.msra.mxu0 0.0
      %2130 = vmatprep.subr.mxu0 0.0
      %2131 = vmatpush1.msra.mxu0 0.0
      %2132 = vmatprep.subr.mxu0 0.0
      %2133 = vmatpush1.msra.mxu0 0.0
      %2134 = vmatprep.subr.mxu0 0.0
      %2135 = vmatpush1.msra.mxu0 0.0
      %2136 = vmatprep.subr.mxu0 0.0
      %2137 = vmatpush1.msra.mxu0 0.0
      %2138 = vmatprep.subr.mxu0 0.0
      %2139 = vmatpush1.msra.mxu0 0.0
      %2140 = vmatprep.subr.mxu0 %v1763
      %2141 = vmatpush1.msra.mxu0 %v1762
      %2142 = vmatprep.subr.mxu0 %v1755
      %2143 = vmatpush1.msra.mxu0 %v1754
      %2144 = vmatprep.subr.mxu0 %v1747
      %2145 = vmatpush1.msra.mxu0 %v1746
      %2146 = vmatprep.subr.mxu0 %v1739
      %2147 = vmatpush1.msra.mxu0 %v1738
      %2148 = vmatprep.subr.mxu0 0.0
      %2149 = vmatpush2.msra.mxu0 0.0
      %2150 = vmatprep.subr.mxu0 0.0
      %2151 = vmatpush2.msra.mxu0 0.0
      %2152 = vmatprep.subr.mxu0 0.0
      %2153 = vmatpush2.msra.mxu0 0.0
      %2154 = vmatprep.subr.mxu0 0.0
      %2155 = vmatpush2.msra.mxu0 0.0
      %2156 = vmatprep.subr.mxu0 0.0
      %2157 = vmatpush2.msra.mxu0 0.0
      %2158 = vmatprep.subr.mxu0 0.0
      %2159 = vmatpush2.msra.mxu0 0.0
      %2160 = vmatprep.subr.mxu0 0.0
      %2161 = vmatpush2.msra.mxu0 0.0
      %2162 = vmatprep.subr.mxu0 0.0
      %2163 = vmatpush2.msra.mxu0 0.0
      %2164 = vmatprep.subr.mxu0 0.0
      %2165 = vmatpush2.msra.mxu0 0.0
      %2166 = vmatprep.subr.mxu0 0.0
      %2167 = vmatpush2.msra.mxu0 0.0
      %2168 = vmatprep.subr.mxu0 0.0
      %2169 = vmatpush2.msra.mxu0 0.0
      %2170 = vmatprep.subr.mxu0 0.0
      %2171 = vmatpush2.msra.mxu0 0.0
      %2172 = vmatprep.subr.mxu0 0.0
      %2173 = vmatpush2.msra.mxu0 0.0
      %2174 = vmatprep.subr.mxu0 0.0
      %2175 = vmatpush2.msra.mxu0 0.0
      %2176 = vmatprep.subr.mxu0 0.0
      %2177 = vmatpush2.msra.mxu0 0.0
      %2178 = vmatprep.subr.mxu0 0.0
      %2179 = vmatpush2.msra.mxu0 0.0
      %2180 = vmatprep.mubr.f32.mxu0 0.0
      %2181 = vmatmul.mubr.f32.gmra.mxu0 %v1838
      %v2182 = vpop.f32.mrf.mxu0
      %v2183 = vadd.f32 %v2094, %v2182
      %v2184 = vpop.f32.mrf.mxu0
      %v2185 = vadd.f32 %v2096, %v2184
      %2186 = vmatprep.mubr.f32.mxu0 0.0
      %2187 = vmatmul.mubr.f32.gmra.mxu0 %v1841
      %v2188 = vpop.f32.mrf.mxu0
      %v2189 = vadd.f32 %v2100, %v2188
      %v2190 = vpop.f32.mrf.mxu0
      %v2191 = vadd.f32 %v2102, %v2190
      %2192 = vmatprep.mubr.f32.mxu0 0.0
      %2193 = vmatmul.mubr.f32.gmra.mxu0 %v1844
      %v2194 = vpop.f32.mrf.mxu0
      %v2195 = vadd.f32 %v2106, %v2194
      %v2196 = vpop.f32.mrf.mxu0
      %v2197 = vadd.f32 %v2108, %v2196
      %2198 = vmatprep.mubr.f32.mxu0 0.0
      %2199 = vmatmul.mubr.f32.gmra.mxu0 %v1847
      %v2200 = vpop.f32.mrf.mxu0
      %v2201 = vadd.f32 %v2112, %v2200
      %v2202 = vpop.f32.mrf.mxu0
      %v2203 = vadd.f32 %v2114, %v2202
      %2204 = vdwg.mxu0
      %2205 = vmatprep.subr.mxu0 %v1110
      %2206 = vmatpush1.msra.mxu0 %v1109
      %2207 = vmatprep.subr.mxu0 %v1102
      %2208 = vmatpush1.msra.mxu0 %v1101
      %2209 = vmatprep.subr.mxu0 %v1094
      %2210 = vmatpush1.msra.mxu0 %v1093
      %2211 = vmatprep.subr.mxu0 %v1086
      %2212 = vmatpush1.msra.mxu0 %v1085
      %2213 = vmatprep.subr.mxu0 %v979
      %2214 = vmatpush1.msra.mxu0 %v978
      %2215 = vmatprep.subr.mxu0 %v971
      %2216 = vmatpush1.msra.mxu0 %v970
      %2217 = vmatprep.subr.mxu0 %v963
      %2218 = vmatpush1.msra.mxu0 %v962
      %2219 = vmatprep.subr.mxu0 %v955
      %2220 = vmatpush1.msra.mxu0 %v954
      %2221 = vmatprep.subr.mxu0 %v848
      %2222 = vmatpush1.msra.mxu0 %v847
      %2223 = vmatprep.subr.mxu0 %v840
      %2224 = vmatpush1.msra.mxu0 %v839
      %2225 = vmatprep.subr.mxu0 %v832
      %2226 = vmatpush1.msra.mxu0 %v831
      %2227 = vmatprep.subr.mxu0 %v824
      %2228 = vmatpush1.msra.mxu0 %v823
      %2229 = vmatprep.subr.mxu0 %v716
      %2230 = vmatpush1.msra.mxu0 %v715
      %2231 = vmatprep.subr.mxu0 %v708
      %2232 = vmatpush1.msra.mxu0 %v707
      %2233 = vmatprep.subr.mxu0 %v700
      %2234 = vmatpush1.msra.mxu0 %v699
      %2235 = vmatprep.subr.mxu0 %v692
      %2236 = vmatpush1.msra.mxu0 %v691
      %2237 = vmatprep.subr.mxu0 %v1634
      %2238 = vmatpush2.msra.mxu0 %v1633
      %2239 = vmatprep.subr.mxu0 %v1626
      %2240 = vmatpush2.msra.mxu0 %v1625
      %2241 = vmatprep.subr.mxu0 %v1618
      %2242 = vmatpush2.msra.mxu0 %v1617
      %2243 = vmatprep.subr.mxu0 %v1610
      %2244 = vmatpush2.msra.mxu0 %v1609
      %2245 = vmatprep.subr.mxu0 %v1503
      %2246 = vmatpush2.msra.mxu0 %v1502
      %2247 = vmatprep.subr.mxu0 %v1495
      %2248 = vmatpush2.msra.mxu0 %v1494
      %2249 = vmatprep.subr.mxu0 %v1487
      %2250 = vmatpush2.msra.mxu0 %v1486
      %2251 = vmatprep.subr.mxu0 %v1479
      %2252 = vmatpush2.msra.mxu0 %v1478
      %2253 = vmatprep.subr.mxu0 %v1372
      %2254 = vmatpush2.msra.mxu0 %v1371
      %2255 = vmatprep.subr.mxu0 %v1364
      %2256 = vmatpush2.msra.mxu0 %v1363
      %2257 = vmatprep.subr.mxu0 %v1356
      %2258 = vmatpush2.msra.mxu0 %v1355
      %2259 = vmatprep.subr.mxu0 %v1348
      %2260 = vmatpush2.msra.mxu0 %v1347
      %2261 = vmatprep.subr.mxu0 %v1241
      %2262 = vmatpush2.msra.mxu0 %v1240
      %2263 = vmatprep.subr.mxu0 %v1233
      %2264 = vmatpush2.msra.mxu0 %v1232
      %2265 = vmatprep.subr.mxu0 %v1225
      %2266 = vmatpush2.msra.mxu0 %v1224
      %2267 = vmatprep.subr.mxu0 %v1217
      %2268 = vmatpush2.msra.mxu0 %v1216
      %2269 = vmatprep.mubr.f32.mxu0 %v1801
      %2270 = vmatmul.mubr.f32.gmra.mxu0 %v1800
      %v2271 = vpop.f32.mrf.mxu0
      %v2272 = vadd.f32 %v1819, %v2271
      %v2273 = vpop.f32.mrf.mxu0
      %v2274 = vadd.f32 %v1819, %v2273
      %2275 = vmatprep.mubr.f32.mxu0 %v1804
      %2276 = vmatmul.mubr.f32.gmra.mxu0 %v1803
      %v2277 = vpop.f32.mrf.mxu0
      %v2278 = vadd.f32 %v1824, %v2277
      %v2279 = vpop.f32.mrf.mxu0
      %v2280 = vadd.f32 %v1824, %v2279
      %2281 = vmatprep.mubr.f32.mxu0 %v1807
      %2282 = vmatmul.mubr.f32.gmra.mxu0 %v1806
      %v2283 = vpop.f32.mrf.mxu0
      %v2284 = vadd.f32 %v1829, %v2283
      %v2285 = vpop.f32.mrf.mxu0
      %v2286 = vadd.f32 %v1829, %v2285
      %2287 = vmatprep.mubr.f32.mxu0 %v1810
      %2288 = vmatmul.mubr.f32.gmra.mxu0 %v1809
      %v2289 = vpop.f32.mrf.mxu0
      %v2290 = vadd.f32 %v1834, %v2289
      %v2291 = vpop.f32.mrf.mxu0
      %v2292 = vadd.f32 %v1834, %v2291
      %2293 = vdwg.mxu0
      %2294 = vmatprep.subr.mxu0 0.0
      %2295 = vmatpush1.msra.mxu0 0.0
      %2296 = vmatprep.subr.mxu0 0.0
      %2297 = vmatpush1.msra.mxu0 0.0
      %2298 = vmatprep.subr.mxu0 0.0
      %2299 = vmatpush1.msra.mxu0 0.0
      %2300 = vmatprep.subr.mxu0 0.0
      %2301 = vmatpush1.msra.mxu0 0.0
      %2302 = vmatprep.subr.mxu0 0.0
      %2303 = vmatpush1.msra.mxu0 0.0
      %2304 = vmatprep.subr.mxu0 0.0
      %2305 = vmatpush1.msra.mxu0 0.0
      %2306 = vmatprep.subr.mxu0 0.0
      %2307 = vmatpush1.msra.mxu0 0.0
      %2308 = vmatprep.subr.mxu0 0.0
      %2309 = vmatpush1.msra.mxu0 0.0
      %2310 = vmatprep.subr.mxu0 0.0
      %2311 = vmatpush1.msra.mxu0 0.0
      %2312 = vmatprep.subr.mxu0 0.0
      %2313 = vmatpush1.msra.mxu0 0.0
      %2314 = vmatprep.subr.mxu0 0.0
      %2315 = vmatpush1.msra.mxu0 0.0
      %2316 = vmatprep.subr.mxu0 0.0
      %2317 = vmatpush1.msra.mxu0 0.0
      %2318 = vmatprep.subr.mxu0 %v1765
      %2319 = vmatpush1.msra.mxu0 %v1764
      %2320 = vmatprep.subr.mxu0 %v1757
      %2321 = vmatpush1.msra.mxu0 %v1756
      %2322 = vmatprep.subr.mxu0 %v1749
      %2323 = vmatpush1.msra.mxu0 %v1748
      %2324 = vmatprep.subr.mxu0 %v1741
      %2325 = vmatpush1.msra.mxu0 %v1740
      %2326 = vmatprep.subr.mxu0 0.0
      %2327 = vmatpush2.msra.mxu0 0.0
      %2328 = vmatprep.subr.mxu0 0.0
      %2329 = vmatpush2.msra.mxu0 0.0
      %2330 = vmatprep.subr.mxu0 0.0
      %2331 = vmatpush2.msra.mxu0 0.0
      %2332 = vmatprep.subr.mxu0 0.0
      %2333 = vmatpush2.msra.mxu0 0.0
      %2334 = vmatprep.subr.mxu0 0.0
      %2335 = vmatpush2.msra.mxu0 0.0
      %2336 = vmatprep.subr.mxu0 0.0
      %2337 = vmatpush2.msra.mxu0 0.0
      %2338 = vmatprep.subr.mxu0 0.0
      %2339 = vmatpush2.msra.mxu0 0.0
      %2340 = vmatprep.subr.mxu0 0.0
      %2341 = vmatpush2.msra.mxu0 0.0
      %2342 = vmatprep.subr.mxu0 0.0
      %2343 = vmatpush2.msra.mxu0 0.0
      %2344 = vmatprep.subr.mxu0 0.0
      %2345 = vmatpush2.msra.mxu0 0.0
      %2346 = vmatprep.subr.mxu0 0.0
      %2347 = vmatpush2.msra.mxu0 0.0
      %2348 = vmatprep.subr.mxu0 0.0
      %2349 = vmatpush2.msra.mxu0 0.0
      %2350 = vmatprep.subr.mxu0 0.0
      %2351 = vmatpush2.msra.mxu0 0.0
      %2352 = vmatprep.subr.mxu0 0.0
      %2353 = vmatpush2.msra.mxu0 0.0
      %2354 = vmatprep.subr.mxu0 0.0
      %2355 = vmatpush2.msra.mxu0 0.0
      %2356 = vmatprep.subr.mxu0 0.0
      %2357 = vmatpush2.msra.mxu0 0.0
      %2358 = vmatprep.mubr.f32.mxu0 0.0
      %2359 = vmatmul.mubr.f32.gmra.mxu0 %v1838
      %v2360 = vpop.f32.mrf.mxu0
      %v2361 = vadd.f32 %v2272, %v2360
      %v2362 = vpop.f32.mrf.mxu0
      %v2363 = vadd.f32 %v2274, %v2362
      %2364 = vmatprep.mubr.f32.mxu0 0.0
      %2365 = vmatmul.mubr.f32.gmra.mxu0 %v1841
      %v2366 = vpop.f32.mrf.mxu0
      %v2367 = vadd.f32 %v2278, %v2366
      %v2368 = vpop.f32.mrf.mxu0
      %v2369 = vadd.f32 %v2280, %v2368
      %2370 = vmatprep.mubr.f32.mxu0 0.0
      %2371 = vmatmul.mubr.f32.gmra.mxu0 %v1844
      %v2372 = vpop.f32.mrf.mxu0
      %v2373 = vadd.f32 %v2284, %v2372
      %v2374 = vpop.f32.mrf.mxu0
      %v2375 = vadd.f32 %v2286, %v2374
      %2376 = vmatprep.mubr.f32.mxu0 0.0
      %2377 = vmatmul.mubr.f32.gmra.mxu0 %v1847
      %v2378 = vpop.f32.mrf.mxu0
      %v2379 = vadd.f32 %v2290, %v2378
      %v2380 = vpop.f32.mrf.mxu0
      %v2381 = vadd.f32 %v2292, %v2380
      %2382 = vdwg.mxu0
      %2383 = vmatprep.subr.mxu0 %v1112
      %2384 = vmatpush1.msra.mxu0 %v1111
      %2385 = vmatprep.subr.mxu0 %v1104
      %2386 = vmatpush1.msra.mxu0 %v1103
      %2387 = vmatprep.subr.mxu0 %v1096
      %2388 = vmatpush1.msra.mxu0 %v1095
      %2389 = vmatprep.subr.mxu0 %v1088
      %2390 = vmatpush1.msra.mxu0 %v1087
      %2391 = vmatprep.subr.mxu0 %v981
      %2392 = vmatpush1.msra.mxu0 %v980
      %2393 = vmatprep.subr.mxu0 %v973
      %2394 = vmatpush1.msra.mxu0 %v972
      %2395 = vmatprep.subr.mxu0 %v965
      %2396 = vmatpush1.msra.mxu0 %v964
      %2397 = vmatprep.subr.mxu0 %v957
      %2398 = vmatpush1.msra.mxu0 %v956
      %2399 = vmatprep.subr.mxu0 %v850
      %2400 = vmatpush1.msra.mxu0 %v849
      %2401 = vmatprep.subr.mxu0 %v842
      %2402 = vmatpush1.msra.mxu0 %v841
      %2403 = vmatprep.subr.mxu0 %v834
      %2404 = vmatpush1.msra.mxu0 %v833
      %2405 = vmatprep.subr.mxu0 %v826
      %2406 = vmatpush1.msra.mxu0 %v825
      %2407 = vmatprep.subr.mxu0 %v718
      %2408 = vmatpush1.msra.mxu0 %v717
      %2409 = vmatprep.subr.mxu0 %v710
      %2410 = vmatpush1.msra.mxu0 %v709
      %2411 = vmatprep.subr.mxu0 %v702
      %2412 = vmatpush1.msra.mxu0 %v701
      %2413 = vmatprep.subr.mxu0 %v694
      %2414 = vmatpush1.msra.mxu0 %v693
      %2415 = vmatprep.subr.mxu0 %v1636
      %2416 = vmatpush2.msra.mxu0 %v1635
      %2417 = vmatprep.subr.mxu0 %v1628
      %2418 = vmatpush2.msra.mxu0 %v1627
      %2419 = vmatprep.subr.mxu0 %v1620
      %2420 = vmatpush2.msra.mxu0 %v1619
      %2421 = vmatprep.subr.mxu0 %v1612
      %2422 = vmatpush2.msra.mxu0 %v1611
      %2423 = vmatprep.subr.mxu0 %v1505
      %2424 = vmatpush2.msra.mxu0 %v1504
      %2425 = vmatprep.subr.mxu0 %v1497
      %2426 = vmatpush2.msra.mxu0 %v1496
      %2427 = vmatprep.subr.mxu0 %v1489
      %2428 = vmatpush2.msra.mxu0 %v1488
      %2429 = vmatprep.subr.mxu0 %v1481
      %2430 = vmatpush2.msra.mxu0 %v1480
      %2431 = vmatprep.subr.mxu0 %v1374
      %2432 = vmatpush2.msra.mxu0 %v1373
      %2433 = vmatprep.subr.mxu0 %v1366
      %2434 = vmatpush2.msra.mxu0 %v1365
      %2435 = vmatprep.subr.mxu0 %v1358
      %2436 = vmatpush2.msra.mxu0 %v1357
      %2437 = vmatprep.subr.mxu0 %v1350
      %2438 = vmatpush2.msra.mxu0 %v1349
      %2439 = vmatprep.subr.mxu0 %v1243
      %2440 = vmatpush2.msra.mxu0 %v1242
      %2441 = vmatprep.subr.mxu0 %v1235
      %2442 = vmatpush2.msra.mxu0 %v1234
      %2443 = vmatprep.subr.mxu0 %v1227
      %2444 = vmatpush2.msra.mxu0 %v1226
      %2445 = vmatprep.subr.mxu0 %v1219
      %2446 = vmatpush2.msra.mxu0 %v1218
      %2447 = vmatprep.mubr.f32.mxu0 %v1801
      %2448 = vmatmul.mubr.f32.gmra.mxu0 %v1800
      %v2449 = vpop.f32.mrf.mxu0
      %v2450 = vadd.f32 %v1819, %v2449
      %v2451 = vpop.f32.mrf.mxu0
      %v2452 = vadd.f32 %v1819, %v2451
      %2453 = vmatprep.mubr.f32.mxu0 %v1804
      %2454 = vmatmul.mubr.f32.gmra.mxu0 %v1803
      %v2455 = vpop.f32.mrf.mxu0
      %v2456 = vadd.f32 %v1824, %v2455
      %v2457 = vpop.f32.mrf.mxu0
      %v2458 = vadd.f32 %v1824, %v2457
      %2459 = vmatprep.mubr.f32.mxu0 %v1807
      %2460 = vmatmul.mubr.f32.gmra.mxu0 %v1806
      %v2461 = vpop.f32.mrf.mxu0
      %v2462 = vadd.f32 %v1829, %v2461
      %v2463 = vpop.f32.mrf.mxu0
      %v2464 = vadd.f32 %v1829, %v2463
      %2465 = vmatprep.mubr.f32.mxu0 %v1810
      %2466 = vmatmul.mubr.f32.gmra.mxu0 %v1809
      %v2467 = vpop.f32.mrf.mxu0
      %v2468 = vadd.f32 %v1834, %v2467
      %v2469 = vpop.f32.mrf.mxu0
      %v2470 = vadd.f32 %v1834, %v2469
      %2471 = vdwg.mxu0
      %2472 = vmatprep.subr.mxu0 0.0
      %2473 = vmatpush1.msra.mxu0 0.0
      %2474 = vmatprep.subr.mxu0 0.0
      %2475 = vmatpush1.msra.mxu0 0.0
      %2476 = vmatprep.subr.mxu0 0.0
      %2477 = vmatpush1.msra.mxu0 0.0
      %2478 = vmatprep.subr.mxu0 0.0
      %2479 = vmatpush1.msra.mxu0 0.0
      %2480 = vmatprep.subr.mxu0 0.0
      %2481 = vmatpush1.msra.mxu0 0.0
      %2482 = vmatprep.subr.mxu0 0.0
      %2483 = vmatpush1.msra.mxu0 0.0
      %2484 = vmatprep.subr.mxu0 0.0
      %2485 = vmatpush1.msra.mxu0 0.0
      %2486 = vmatprep.subr.mxu0 0.0
      %2487 = vmatpush1.msra.mxu0 0.0
      %2488 = vmatprep.subr.mxu0 0.0
      %2489 = vmatpush1.msra.mxu0 0.0
      %2490 = vmatprep.subr.mxu0 0.0
      %2491 = vmatpush1.msra.mxu0 0.0
      %2492 = vmatprep.subr.mxu0 0.0
      %2493 = vmatpush1.msra.mxu0 0.0
      %2494 = vmatprep.subr.mxu0 0.0
      %2495 = vmatpush1.msra.mxu0 0.0
      %2496 = vmatprep.subr.mxu0 %v1767
      %2497 = vmatpush1.msra.mxu0 %v1766
      %2498 = vmatprep.subr.mxu0 %v1759
      %2499 = vmatpush1.msra.mxu0 %v1758
      %2500 = vmatprep.subr.mxu0 %v1751
      %2501 = vmatpush1.msra.mxu0 %v1750
      %2502 = vmatprep.subr.mxu0 %v1743
      %2503 = vmatpush1.msra.mxu0 %v1742
      %2504 = vmatprep.subr.mxu0 0.0
      %2505 = vmatpush2.msra.mxu0 0.0
      %2506 = vmatprep.subr.mxu0 0.0
      %2507 = vmatpush2.msra.mxu0 0.0
      %2508 = vmatprep.subr.mxu0 0.0
      %2509 = vmatpush2.msra.mxu0 0.0
      %2510 = vmatprep.subr.mxu0 0.0
      %2511 = vmatpush2.msra.mxu0 0.0
      %2512 = vmatprep.subr.mxu0 0.0
      %2513 = vmatpush2.msra.mxu0 0.0
      %2514 = vmatprep.subr.mxu0 0.0
      %2515 = vmatpush2.msra.mxu0 0.0
      %2516 = vmatprep.subr.mxu0 0.0
      %2517 = vmatpush2.msra.mxu0 0.0
      %2518 = vmatprep.subr.mxu0 0.0
      %2519 = vmatpush2.msra.mxu0 0.0
      %2520 = vmatprep.subr.mxu0 0.0
      %2521 = vmatpush2.msra.mxu0 0.0
      %2522 = vmatprep.subr.mxu0 0.0
      %2523 = vmatpush2.msra.mxu0 0.0
      %2524 = vmatprep.subr.mxu0 0.0
      %2525 = vmatpush2.msra.mxu0 0.0
      %2526 = vmatprep.subr.mxu0 0.0
      %2527 = vmatpush2.msra.mxu0 0.0
      %2528 = vmatprep.subr.mxu0 0.0
      %2529 = vmatpush2.msra.mxu0 0.0
      %2530 = vmatprep.subr.mxu0 0.0
      %2531 = vmatpush2.msra.mxu0 0.0
      %2532 = vmatprep.subr.mxu0 0.0
      %2533 = vmatpush2.msra.mxu0 0.0
      %2534 = vmatprep.subr.mxu0 0.0
      %2535 = vmatpush2.msra.mxu0 0.0
      %2536 = vmatprep.mubr.f32.mxu0 0.0
      %2537 = vmatmul.mubr.f32.gmra.mxu0 %v1838
      %v2538 = vpop.f32.mrf.mxu0
      %v2539 = vadd.f32 %v2450, %v2538
      %v2540 = vpop.f32.mrf.mxu0
      %v2541 = vadd.f32 %v2452, %v2540
      %2542 = vmatprep.mubr.f32.mxu0 0.0
      %2543 = vmatmul.mubr.f32.gmra.mxu0 %v1841
      %v2544 = vpop.f32.mrf.mxu0
      %v2545 = vadd.f32 %v2456, %v2544
      %v2546 = vpop.f32.mrf.mxu0
      %v2547 = vadd.f32 %v2458, %v2546
      %2548 = vmatprep.mubr.f32.mxu0 0.0
      %2549 = vmatmul.mubr.f32.gmra.mxu0 %v1844
      %v2550 = vpop.f32.mrf.mxu0
      %v2551 = vadd.f32 %v2462, %v2550
      %v2552 = vpop.f32.mrf.mxu0
      %v2553 = vadd.f32 %v2464, %v2552
      %2554 = vmatprep.mubr.f32.mxu0 0.0
      %2555 = vmatmul.mubr.f32.gmra.mxu0 %v1847
      %v2556 = vpop.f32.mrf.mxu0
      %v2557 = vadd.f32 %v2468, %v2556
      %v2558 = vpop.f32.mrf.mxu0
      %v2559 = vadd.f32 %v2470, %v2558
      %2560 = vdwg.mxu0
      %v2561 = vmax.f32 %v2005, 0.0
      %v2562 = vmax.f32 %v2007, 0.0
      %v2563 = vmax.f32 %v2183, 0.0
      %v2564 = vmax.f32 %v2185, 0.0
      %v2565 = vmax.f32 %v2361, 0.0
      %v2566 = vmax.f32 %v2363, 0.0
      %v2567 = vmax.f32 %v2539, 0.0
      %v2568 = vmax.f32 %v2541, 0.0
      %v2569 = vmax.f32 %v2011, 0.0
      %v2570 = vmax.f32 %v2013, 0.0
      %v2571 = vmax.f32 %v2189, 0.0
      %v2572 = vmax.f32 %v2191, 0.0
      %v2573 = vmax.f32 %v2367, 0.0
      %v2574 = vmax.f32 %v2369, 0.0
      %v2575 = vmax.f32 %v2545, 0.0
      %v2576 = vmax.f32 %v2547, 0.0
      %v2577 = vmax.f32 %v2017, 0.0
      %v2578 = vmax.f32 %v2019, 0.0
      %v2579 = vmax.f32 %v2195, 0.0
      %v2580 = vmax.f32 %v2197, 0.0
      %v2581 = vmax.f32 %v2373, 0.0
      %v2582 = vmax.f32 %v2375, 0.0
      %v2583 = vmax.f32 %v2551, 0.0
      %v2584 = vmax.f32 %v2553, 0.0
      %v2585 = vmax.f32 %v2023, 0.0
      %v2586 = vmax.f32 %v2025, 0.0
      %v2587 = vmax.f32 %v2201, 0.0
      %v2588 = vmax.f32 %v2203, 0.0
      %v2589 = vmax.f32 %v2379, 0.0
      %v2590 = vmax.f32 %v2381, 0.0
      %v2591 = vmax.f32 %v2557, 0.0
      %v2592 = vmax.f32 %v2559, 0.0
      %v2593 = vpack.c.bf16 %v2569, %v2561
      %v2594 = vpack.c.bf16 %v2570, %v2562
      %v2595 = vpack.c.bf16 %v2571, %v2563
      %v2596 = vpack.c.bf16 %v2572, %v2564
      %v2597 = vpack.c.bf16 %v2573, %v2565
      %v2598 = vpack.c.bf16 %v2574, %v2566
      %v2599 = vpack.c.bf16 %v2575, %v2567
      %v2600 = vpack.c.bf16 %v2576, %v2568
      %v2601 = vpack.c.bf16 %v2585, %v2577
      %v2602 = vpack.c.bf16 %v2586, %v2578
      %v2603 = vpack.c.bf16 %v2587, %v2579
      %v2604 = vpack.c.bf16 %v2588, %v2580
      %v2605 = vpack.c.bf16 %v2589, %v2581
      %v2606 = vpack.c.bf16 %v2590, %v2582
      %v2607 = vpack.c.bf16 %v2591, %v2583
      %v2608 = vpack.c.bf16 %v2592, %v2584
      %v2625 = vunpack.c.l.b16 %v2593
      %v2626 = vunpack.c.l.b16 %v2594
      %v2627 = vunpack.c.l.b16 %v2595
      %v2628 = vunpack.c.l.b16 %v2596
      %v2629 = vunpack.c.l.b16 %v2597
      %v2630 = vunpack.c.l.b16 %v2598
      %v2631 = vunpack.c.l.b16 %v2599
      %v2632 = vunpack.c.l.b16 %v2600
      %v2633 = vunpack.c.h.b16 %v2593
      %v2634 = vunpack.c.h.b16 %v2594
      %v2635 = vunpack.c.h.b16 %v2595
      %v2636 = vunpack.c.h.b16 %v2596
      %v2637 = vunpack.c.h.b16 %v2597
      %v2638 = vunpack.c.h.b16 %v2598
      %v2639 = vunpack.c.h.b16 %v2599
      %v2640 = vunpack.c.h.b16 %v2600
      %v2641 = vunpack.c.l.b16 %v2601
      %v2642 = vunpack.c.l.b16 %v2602
      %v2643 = vunpack.c.l.b16 %v2603
      %v2644 = vunpack.c.l.b16 %v2604
      %v2645 = vunpack.c.l.b16 %v2605
      %v2646 = vunpack.c.l.b16 %v2606
      %v2647 = vunpack.c.l.b16 %v2607
      %v2648 = vunpack.c.l.b16 %v2608
      %v2649 = vunpack.c.h.b16 %v2601
      %v2650 = vunpack.c.h.b16 %v2602
      %v2651 = vunpack.c.h.b16 %v2603
      %v2652 = vunpack.c.h.b16 %v2604
      %v2653 = vunpack.c.h.b16 %v2605
      %v2654 = vunpack.c.h.b16 %v2606
      %v2655 = vunpack.c.h.b16 %v2607
      %v2656 = vunpack.c.h.b16 %v2608
      %v2657 = vpack.c.b16 %v2626, %v2625
      %v2658 = vpack.c.b16 %v2628, %v2627
      %v2659 = vpack.c.b16 %v2630, %v2629
      %v2660 = vpack.c.b16 %v2632, %v2631
      %v2661 = vpack.c.b16 %v2634, %v2633
      %v2662 = vpack.c.b16 %v2636, %v2635
      %v2663 = vpack.c.b16 %v2638, %v2637
      %v2664 = vpack.c.b16 %v2640, %v2639
      %v2665 = vpack.c.b16 %v2642, %v2641
      %v2666 = vpack.c.b16 %v2644, %v2643
      %v2667 = vpack.c.b16 %v2646, %v2645
      %v2668 = vpack.c.b16 %v2648, %v2647
      %v2669 = vpack.c.b16 %v2650, %v2649
      %v2670 = vpack.c.b16 %v2652, %v2651
      %v2671 = vpack.c.b16 %v2654, %v2653
      %v2672 = vpack.c.b16 %v2656, %v2655
      %2689 = vst [vmem:[%s224] sm:$0xff] %v2657
      %2690 = vst [vmem:[%s224 + $0x8] sm:$0xff] %v2658
      %2691 = vst [vmem:[%s224 + $0x10] sm:$0xff] %v2659
      %2692 = vst [vmem:[%s224 + $0x18] sm:$0xff] %v2660
      %2693 = vst [vmem:[%s224 + $0x20] sm:$0xff] %v2661
      %2694 = vst [vmem:[%s224 + $0x28] sm:$0xff] %v2662
      %2695 = vst [vmem:[%s224 + $0x30] sm:$0xff] %v2663
      %2696 = vst [vmem:[%s224 + $0x38] sm:$0xff] %v2664
      %2697 = vst [vmem:[%s224 + $0x40] sm:$0xff] %v2665
      %2698 = vst [vmem:[%s224 + $0x48] sm:$0xff] %v2666
      %2699 = vst [vmem:[%s224 + $0x50] sm:$0xff] %v2667
      %2700 = vst [vmem:[%s224 + $0x58] sm:$0xff] %v2668
      %2701 = vst [vmem:[%s224 + $0x60] sm:$0xff] %v2669
      %2702 = vst [vmem:[%s224 + $0x68] sm:$0xff] %v2670
      %2703 = vst [vmem:[%s224 + $0x70] sm:$0xff] %v2671
      %2704 = vst [vmem:[%s224 + $0x78] sm:$0xff] %v2672
      %p2705 = scmp.lt.s32.totalorder %s16, 1
      %s2706 = scalar_select %p2705, %s16, 1
      %s2707 = smul.addr %s2706, 32
      %s2708 = smul.addr %s2707, 4
      %s2709 = scalar_lea.vmem %s5, %s2708
      // Predicated region
      $region41: #{pixel_encoder_forward.2} parent=39 // pred_check
        %p2710 = pneg %p144
      $region42: #{pixel_encoder_forward.2} parent=39 // pred_check_branch
        %2712 = sbr.rel (%p2710) target = $region44
      $region43: #{pixel_encoder_forward.2} parent=39 // pred_region
        _
      $region44: #{pixel_encoder_forward.2} parent=39 // pred_fallthru
        _
    $region40: #{pixel_encoder_forward.2} parent=5 // pred_fallthru
      _
    %p2713 = scmp.le.s32.totalorder 2, %s11
    // Predicated region
    $region45: #{pixel_encoder_forward.2} parent=5 // pred_check
      %p2714 = pneg %p2713
    $region46: #{pixel_encoder_forward.2} parent=5 // pred_check_branch
      %2716 = sbr.rel (%p2714) target = $region48
    $region47: #{pixel_encoder_forward.2} parent=5 // pred_region
      %s2717 = ssub.s32 %s11, 2
      // Predicated region
      $region49: #{pixel_encoder_forward.2} parent=47 // pred_check
        %p2718 = pneg %p150
      $region50: #{pixel_encoder_forward.2} parent=47 // pred_check_branch
        %2720 = sbr.rel (%p2718) target = $region52
      $region51: #{pixel_encoder_forward.2} parent=47 // pred_region
        %p2721 = scmp.lt.s32.totalorder %s17, 1
        %s2722 = scalar_select %p2721, %s17, 1
        %s2723 = smul.addr %s2722, 32
        %s2724 = smul.addr %s2723, 4
        %s2725 = scalar_lea.vmem %s5, %s2724
      $region52: #{pixel_encoder_forward.2} parent=47 // pred_fallthru
        _
    $region48: #{pixel_encoder_forward.2} parent=5 // pred_fallthru
      _
  $region6: #{pixel_encoder_forward.2} parent=0 // loop_footer
    %s15 = sadd.s32 1, %s11
  $region7: #{pixel_encoder_forward.2} parent=0 // loop_footer_branch
    %10 = sbr.rel target = $region3
  $region8: #{pixel_encoder_forward.2} parent=0 // loop_exit
    _

// kernel: pixel_encoder_forward.3
$region0: #{pixel_encoder_forward.3}
  #allocation0 [shape = 'u32[]', space=smem, size = 0x4, offset = 0x4, fixed_abs, tag = 'smem constant byte address 0x4 - core index']
  #allocation1 [shape = 'u32[144,128]{1,0:T(1,128)}', space=vmem, size = 0x12000, scoped, tag = 'internal scratch']
  #allocation2 [shape = 'f32[2,32]{1,0:T(2,128)}', space=vmem, size = 0x400, scoped, tag = 'scratch operand']
  %s0 = inlined_call_operand.vmem [shape: bf16[2,32768], index: 0, kind: input, shape index: {}]
  %s1 = inlined_call_operand.vmem [shape: bf16[32,32768], index: 1, kind: input, shape index: {}]
  %s2 = inlined_call_operand.vmem [shape: f32[1,32], index: 2, kind: input, shape index: {}]
  %s3 = inlined_call_operand.vmem [shape: f32[1,32], index: 3, kind: input, shape index: {}]
  %s4 = inlined_call_operand.vmem [shape: f32[1,32], index: 4, kind: input, shape index: {}]
  %s5 = inlined_call_operand.hbm [shape: f32[2,32], index: 5, kind: output, shape index: {}]
  %s6 = sld [smem:[#allocation0]]
  $region84: #{pixel_encoder_forward.3} parent=0
    _
  %s8 = ssub.s32 1, %s6
  %s9 = scalar_select 0, %s8, %s6
  $region1: #{pixel_encoder_forward.3} parent=0
    #allocation3 [shape = 'u8[2097152]{0}', space=vmem, size = 0x200000, scoped, tag = 'input window, operand 1']
    #allocation4 [shape = 'u8[1024]{0}', space=vmem, size = 0x400, scoped, tag = 'output window, operand 0, single buffered']
    #allocation5 [shape = 's32[2]{0}', space=sflag, size = 0x8, scoped, tag = 'scoped memory for pixel_encoder_forward.3']
    %10 = vsyncpa [#allocation5], 0
    loop: start=0, step=1, limit=4
    $region2: #{pixel_encoder_forward.3} parent=1 // loop_pre_header
      _
    $region3: #{pixel_encoder_forward.3} parent=1 // loop_header
      %s12 = sphi 0, %s16
      %p13 = scmp.ge.s32.totalorder %s12, 4
      %s22 = sphi 0, %s24
      %s25 = sphi 0, %s22
      %s26 = sphi 0, %s25
      %s42 = sphi 0, %s26
      %s48 = sphi 0, %s50
      %s51 = sphi 0, %s48
      %s52 = sphi 0, %s51
      %s68 = sphi 0, %s52
      %s72 = sphi 0, %s72
      %s74 = sphi 0, %s72
      %s75 = sphi 0, %s74
      %s89 = sphi 0, %s75
      %s93 = sphi 0, %s93
      %s95 = sphi 0, %s93
      %s96 = sphi 0, %s95
      %s110 = sphi 0, %s96
      %s114 = sphi 0, %s114
      %s116 = sphi 0, %s114
      %s117 = sphi 0, %s116
      %s131 = sphi 0, %s117
      %s135 = sphi 0, %s135
      %s137 = sphi 0, %s135
      %s138 = sphi 0, %s137
      %s152 = sphi 0, %s138
    $region4: #{pixel_encoder_forward.3} parent=1 // loop_header_branch
      %15 = sbr.rel (%p13) target = $region8
    $region5: #{pixel_encoder_forward.3} parent=1 // loop_body
      %s17 = ssub.s32 %s12, 1
      %s18 = ssub.s32 %s12, 2
      %s19 = sadd.s32 %s12, 1
      %s20 = ssub.s32 %s12, %s19
      %p21 = scmp.eq.s32.totalorder %s20, 0
      %s23 = sadd.s32 %s22, 1
      %s24 = scalar_select %p21, %s22, %s23
      %p27 = pneg %p21
      %p28 = scmp.eq.s32.totalorder %s12, 1
      %p29 = por %p27, %p28
      %p30 = scmp.ne.s32.totalorder %s22, %s25
      %p31 = scmp.eq.s32.totalorder %s12, 0
      %p32 = por %p30, %p31
      %p33 = scmp.ne.s32.totalorder %s22, %s25
      %p34 = scmp.eq.s32.totalorder %s17, 1
      %p35 = por %p33, %p34
      %p36 = scmp.ne.s32.totalorder %s25, %s26
      %p37 = scmp.eq.s32.totalorder %s17, 0
      %p38 = por %p36, %p37
      %p39 = scmp.ne.s32.totalorder %s25, %s26
      %p40 = scmp.eq.s32.totalorder %s18, 1
      %p41 = por %p39, %p40
      %p43 = scmp.ne.s32.totalorder %s26, %s42
      %p44 = scmp.eq.s32.totalorder %s18, 0
      %p45 = por %p43, %p44
      %s46 = ssub.s32 %s12, %s19
      %p47 = scmp.eq.s32.totalorder %s46, 0
      %s49 = sadd.s32 %s48, 1
      %s50 = scalar_select %p47, %s48, %s49
      %p53 = pneg %p47
      %p54 = scmp.eq.s32.totalorder %s12, 1
      %p55 = por %p53, %p54
      %p56 = scmp.ne.s32.totalorder %s48, %s51
      %p57 = scmp.eq.s32.totalorder %s12, 0
      %p58 = por %p56, %p57
      %p59 = scmp.ne.s32.totalorder %s48, %s51
      %p60 = scmp.eq.s32.totalorder %s17, 1
      %p61 = por %p59, %p60
      %p62 = scmp.ne.s32.totalorder %s51, %s52
      %p63 = scmp.eq.s32.totalorder %s17, 0
      %p64 = por %p62, %p63
      %p65 = scmp.ne.s32.totalorder %s51, %s52
      %p66 = scmp.eq.s32.totalorder %s18, 1
      %p67 = por %p65, %p66
      %p69 = scmp.ne.s32.totalorder %s52, %s68
      %p70 = scmp.eq.s32.totalorder %s18, 0
      %p71 = por %p69, %p70
      %s73 = sadd.s32 %s72, 1
      %p76 = scmp.eq.s32.totalorder %s12, 1
      %p77 = scmp.ne.s32.totalorder %s72, %s74
      %p78 = scmp.eq.s32.totalorder %s12, 0
      %p79 = por %p77, %p78
      %p80 = scmp.ne.s32.totalorder %s72, %s74
      %p81 = scmp.eq.s32.totalorder %s17, 1
      %p82 = por %p80, %p81
      %p83 = scmp.ne.s32.totalorder %s74, %s75
      %p84 = scmp.eq.s32.totalorder %s17, 0
      %p85 = por %p83, %p84
      %p86 = scmp.ne.s32.totalorder %s74, %s75
      %p87 = scmp.eq.s32.totalorder %s18, 1
      %p88 = por %p86, %p87
      %p90 = scmp.ne.s32.totalorder %s75, %s89
      %p91 = scmp.eq.s32.totalorder %s18, 0
      %p92 = por %p90, %p91
      %s94 = sadd.s32 %s93, 1
      %p97 = scmp.eq.s32.totalorder %s12, 1
      %p98 = scmp.ne.s32.totalorder %s93, %s95
      %p99 = scmp.eq.s32.totalorder %s12, 0
      %p100 = por %p98, %p99
      %p101 = scmp.ne.s32.totalorder %s93, %s95
      %p102 = scmp.eq.s32.totalorder %s17, 1
      %p103 = por %p101, %p102
      %p104 = scmp.ne.s32.totalorder %s95, %s96
      %p105 = scmp.eq.s32.totalorder %s17, 0
      %p106 = por %p104, %p105
      %p107 = scmp.ne.s32.totalorder %s95, %s96
      %p108 = scmp.eq.s32.totalorder %s18, 1
      %p109 = por %p107, %p108
      %p111 = scmp.ne.s32.totalorder %s96, %s110
      %p112 = scmp.eq.s32.totalorder %s18, 0
      %p113 = por %p111, %p112
      %s115 = sadd.s32 %s114, 1
      %p118 = scmp.eq.s32.totalorder %s12, 1
      %p119 = scmp.ne.s32.totalorder %s114, %s116
      %p120 = scmp.eq.s32.totalorder %s12, 0
      %p121 = por %p119, %p120
      %p122 = scmp.ne.s32.totalorder %s114, %s116
      %p123 = scmp.eq.s32.totalorder %s17, 1
      %p124 = por %p122, %p123
      %p125 = scmp.ne.s32.totalorder %s116, %s117
      %p126 = scmp.eq.s32.totalorder %s17, 0
      %p127 = por %p125, %p126
      %p128 = scmp.ne.s32.totalorder %s116, %s117
      %p129 = scmp.eq.s32.totalorder %s18, 1
      %p130 = por %p128, %p129
      %p132 = scmp.ne.s32.totalorder %s117, %s131
      %p133 = scmp.eq.s32.totalorder %s18, 0
      %p134 = por %p132, %p133
      %s136 = sadd.s32 %s135, 1
      %p139 = scmp.eq.s32.totalorder %s12, 1
      %p140 = scmp.ne.s32.totalorder %s135, %s137
      %p141 = scmp.eq.s32.totalorder %s12, 0
      %p142 = por %p140, %p141
      %p143 = scmp.ne.s32.totalorder %s135, %s137
      %p144 = scmp.eq.s32.totalorder %s17, 1
      %p145 = por %p143, %p144
      %p146 = scmp.ne.s32.totalorder %s137, %s138
      %p147 = scmp.eq.s32.totalorder %s17, 0
      %p148 = por %p146, %p147
      %p149 = scmp.ne.s32.totalorder %s137, %s138
      %p150 = scmp.eq.s32.totalorder %s18, 1
      %p151 = por %p149, %p150
      %p153 = scmp.ne.s32.totalorder %s138, %s152
      %p154 = scmp.eq.s32.totalorder %s18, 0
      %p155 = por %p153, %p154
      %p156 = scmp.le.s32.totalorder 1, %s12
      %p157 = scmp.lt.s32.totalorder %s12, 3
      %p158 = pnand %p156, %p157
      %p159 = pneg %p158
      // Predicated region
      $region9: #{pixel_encoder_forward.3} parent=5 // pred_check
        _
      $region10: #{pixel_encoder_forward.3} parent=5 // pred_check_branch
        %161 = sbr.rel (%p158) target = $region12
      $region11: #{pixel_encoder_forward.3} parent=5 // pred_region
        %s162 = ssub.s32 %s12, 1
        // Predicated region
        $region13: #{pixel_encoder_forward.3} parent=11 // pred_check
          %p163 = pneg %p85
        $region14: #{pixel_encoder_forward.3} parent=11 // pred_check_branch
          %165 = sbr.rel (%p163) target = $region16
        $region15: #{pixel_encoder_forward.3} parent=11 // pred_region
          _
        $region16: #{pixel_encoder_forward.3} parent=11 // pred_fallthru
          _
        // Predicated region
        $region17: #{pixel_encoder_forward.3} parent=11 // pred_check
          %p166 = pneg %p106
        $region18: #{pixel_encoder_forward.3} parent=11 // pred_check_branch
          %168 = sbr.rel (%p166) target = $region20
        $region19: #{pixel_encoder_forward.3} parent=11 // pred_region
          _
        $region20: #{pixel_encoder_forward.3} parent=11 // pred_fallthru
          _
        // Predicated region
        $region21: #{pixel_encoder_forward.3} parent=11 // pred_check
          %p169 = pneg %p127
        $region22: #{pixel_encoder_forward.3} parent=11 // pred_check_branch
          %171 = sbr.rel (%p169) target = $region24
        $region23: #{pixel_encoder_forward.3} parent=11 // pred_region
          _
        $region24: #{pixel_encoder_forward.3} parent=11 // pred_fallthru
          _
      $region12: #{pixel_encoder_forward.3} parent=5 // pred_fallthru
        _
      %p172 = scmp.lt.s32.totalorder %s12, 2
      // Predicated region
      $region25: #{pixel_encoder_forward.3} parent=5 // pred_check
        %p173 = pneg %p172
      $region26: #{pixel_encoder_forward.3} parent=5 // pred_check_branch
        %175 = sbr.rel (%p173) target = $region28
      $region27: #{pixel_encoder_forward.3} parent=5 // pred_region
        // Predicated region
        $region29: #{pixel_encoder_forward.3} parent=27 // pred_check
          %p176 = pneg %p32
        $region30: #{pixel_encoder_forward.3} parent=27 // pred_check_branch
          %178 = sbr.rel (%p176) target = $region32
        $region31: #{pixel_encoder_forward.3} parent=27 // pred_region
          %s179 = smul.u32 128, %s12
          %p180 = scmp.lt.s32.totalorder %s179, 255
          %s181 = scalar_select %p180, %s179, 255
          %s182 = scalar_lea.vmem %s0, %s181
          %s183 = smul.u32 128, %s12
        $region32: #{pixel_encoder_forward.3} parent=27 // pred_fallthru
          _
        // Predicated region
        $region33: #{pixel_encoder_forward.3} parent=27 // pred_check
          %p184 = pneg %p58
        $region34: #{pixel_encoder_forward.3} parent=27 // pred_check_branch
          %186 = sbr.rel (%p184) target = $region36
        $region35: #{pixel_encoder_forward.3} parent=27 // pred_region
          %s187 = sand.u32 %s48, 1
          %s188 = sand.u32 %s48, 1
          %s189 = smul.addr %s188, 2048
          %s190 = scalar_lea.vmem [#allocation3], %s189
          %s191 = smul.u32 128, %s12
          %s192 = smul.addr %s191, 4
          %s193 = scalar_lea.vmem %s1, %s192
          // Predicated region
          $region37: #{pixel_encoder_forward.3} parent=35 // pred_check
            _
          $region38: #{pixel_encoder_forward.3} parent=35 // pred_check_branch
            %195 = sbr.rel (0) target = $region40
          $region39: #{pixel_encoder_forward.3} parent=35 // pred_region
            // Predicated region
            $region41: #{pixel_encoder_forward.3} parent=39 // pred_check
              _
            $region42: #{pixel_encoder_forward.3} parent=39 // pred_check_branch
              %197 = sbr.rel (0) target = $region44
            $region43: #{pixel_encoder_forward.3} parent=39 // pred_region
              loop: start=0, step=1, limit=1
              $region45: #{pixel_encoder_forward.3} parent=43 // loop_pre_header
                _
              $region46: #{pixel_encoder_forward.3} parent=43 // loop_header
                %s199 = sphi 0, %s203
                %p200 = scmp.ge.s32.totalorder %s199, 1
                %s204 = sphi %s193, %s193
                %s205 = sphi %s190, %s190
              $region47: #{pixel_encoder_forward.3} parent=43 // loop_header_branch
                %202 = sbr.rel (%p200) target = $region51
              $region48: #{pixel_encoder_forward.3} parent=43 // loop_body
                %v206 = vld [vmem:[%s204] sm:$0xff]
                %207 = vst [vmem:[%s205] sm:$0xff] %v206
                %v208 = vld [vmem:[%s204 + $0x8] sm:$0xff]
                %209 = vst [vmem:[%s205 + $0x8] sm:$0xff] %v208
                %v210 = vld [vmem:[%s204 + $0x10] sm:$0xff]
                %211 = vst [vmem:[%s205 + $0x10] sm:$0xff] %v210
                %v212 = vld [vmem:[%s204 + $0x18] sm:$0xff]
                %213 = vst [vmem:[%s205 + $0x18] sm:$0xff] %v212
                %v214 = vld [vmem:[%s204 + $0x20] sm:$0xff]
                %215 = vst [vmem:[%s205 + $0x20] sm:$0xff] %v214
                %v216 = vld [vmem:[%s204 + $0x28] sm:$0xff]
                %217 = vst [vmem:[%s205 + $0x28] sm:$0xff] %v216
                %v218 = vld [vmem:[%s204 + $0x30] sm:$0xff]
                %219 = vst [vmem:[%s205 + $0x30] sm:$0xff] %v218
                %v220 = vld [vmem:[%s204 + $0x38] sm:$0xff]
                %221 = vst [vmem:[%s205 + $0x38] sm:$0xff] %v220
                %v222 = vld [vmem:[%s204 + $0x40] sm:$0xff]
                %223 = vst [vmem:[%s205 + $0x40] sm:$0xff] %v222
                %v224 = vld [vmem:[%s204 + $0x48] sm:$0xff]
                %225 = vst [vmem:[%s205 + $0x48] sm:$0xff] %v224
                %v226 = vld [vmem:[%s204 + $0x50] sm:$0xff]
                %227 = vst [vmem:[%s205 + $0x50] sm:$0xff] %v226
                %v228 = vld [vmem:[%s204 + $0x58] sm:$0xff]
                %229 = vst [vmem:[%s205 + $0x58] sm:$0xff] %v228
                %v230 = vld [vmem:[%s204 + $0x60] sm:$0xff]
                %231 = vst [vmem:[%s205 + $0x60] sm:$0xff] %v230
                %v232 = vld [vmem:[%s204 + $0x68] sm:$0xff]
                %233 = vst [vmem:[%s205 + $0x68] sm:$0xff] %v232
                %v234 = vld [vmem:[%s204 + $0x70] sm:$0xff]
                %235 = vst [vmem:[%s205 + $0x70] sm:$0xff] %v234
                %v236 = vld [vmem:[%s204 + $0x78] sm:$0xff]
                %237 = vst [vmem:[%s205 + $0x78] sm:$0xff] %v236
                %v238 = vld [vmem:[%s204 + $0x80] sm:$0xff]
                %239 = vst [vmem:[%s205 + $0x80] sm:$0xff] %v238
                %v240 = vld [vmem:[%s204 + $0x88] sm:$0xff]
                %241 = vst [vmem:[%s205 + $0x88] sm:$0xff] %v240
                %v242 = vld [vmem:[%s204 + $0x90] sm:$0xff]
                %243 = vst [vmem:[%s205 + $0x90] sm:$0xff] %v242
                %v244 = vld [vmem:[%s204 + $0x98] sm:$0xff]
                %245 = vst [vmem:[%s205 + $0x98] sm:$0xff] %v244
                %v246 = vld [vmem:[%s204 + $0xa0] sm:$0xff]
                %247 = vst [vmem:[%s205 + $0xa0] sm:$0xff] %v246
                %v248 = vld [vmem:[%s204 + $0xa8] sm:$0xff]
                %249 = vst [vmem:[%s205 + $0xa8] sm:$0xff] %v248
                %v250 = vld [vmem:[%s204 + $0xb0] sm:$0xff]
                %251 = vst [vmem:[%s205 + $0xb0] sm:$0xff] %v250
                %v252 = vld [vmem:[%s204 + $0xb8] sm:$0xff]
                %253 = vst [vmem:[%s205 + $0xb8] sm:$0xff] %v252
                %v254 = vld [vmem:[%s204 + $0xc0] sm:$0xff]
                %255 = vst [vmem:[%s205 + $0xc0] sm:$0xff] %v254
                %v256 = vld [vmem:[%s204 + $0xc8] sm:$0xff]
                %257 = vst [vmem:[%s205 + $0xc8] sm:$0xff] %v256
                %v258 = vld [vmem:[%s204 + $0xd0] sm:$0xff]
                %259 = vst [vmem:[%s205 + $0xd0] sm:$0xff] %v258
                %v260 = vld [vmem:[%s204 + $0xd8] sm:$0xff]
                %261 = vst [vmem:[%s205 + $0xd8] sm:$0xff] %v260
                %v262 = vld [vmem:[%s204 + $0xe0] sm:$0xff]
                %263 = vst [vmem:[%s205 + $0xe0] sm:$0xff] %v262
                %v264 = vld [vmem:[%s204 + $0xe8] sm:$0xff]
                %265 = vst [vmem:[%s205 + $0xe8] sm:$0xff] %v264
                %v266 = vld [vmem:[%s204 + $0xf0] sm:$0xff]
                %267 = vst [vmem:[%s205 + $0xf0] sm:$0xff] %v266
                %v268 = vld [vmem:[%s204 + $0xf8] sm:$0xff]
                %269 = vst [vmem:[%s205 + $0xf8] sm:$0xff] %v268
                %v270 = vld [vmem:[%s204 + $0x100] sm:$0xff]
                %271 = vst [vmem:[%s205 + $0x100] sm:$0xff] %v270
                %v272 = vld [vmem:[%s204 + $0x108] sm:$0xff]
                %273 = vst [vmem:[%s205 + $0x108] sm:$0xff] %v272
                %v274 = vld [vmem:[%s204 + $0x110] sm:$0xff]
                %275 = vst [vmem:[%s205 + $0x110] sm:$0xff] %v274
                %v276 = vld [vmem:[%s204 + $0x118] sm:$0xff]
                %277 = vst [vmem:[%s205 + $0x118] sm:$0xff] %v276
                %v278 = vld [vmem:[%s204 + $0x120] sm:$0xff]
                %279 = vst [vmem:[%s205 + $0x120] sm:$0xff] %v278
                %v280 = vld [vmem:[%s204 + $0x128] sm:$0xff]
                %281 = vst [vmem:[%s205 + $0x128] sm:$0xff] %v280
                %v282 = vld [vmem:[%s204 + $0x130] sm:$0xff]
                %283 = vst [vmem:[%s205 + $0x130] sm:$0xff] %v282
                %v284 = vld [vmem:[%s204 + $0x138] sm:$0xff]
                %285 = vst [vmem:[%s205 + $0x138] sm:$0xff] %v284
                %v286 = vld [vmem:[%s204 + $0x140] sm:$0xff]
                %287 = vst [vmem:[%s205 + $0x140] sm:$0xff] %v286
                %v288 = vld [vmem:[%s204 + $0x148] sm:$0xff]
                %289 = vst [vmem:[%s205 + $0x148] sm:$0xff] %v288
                %v290 = vld [vmem:[%s204 + $0x150] sm:$0xff]
                %291 = vst [vmem:[%s205 + $0x150] sm:$0xff] %v290
                %v292 = vld [vmem:[%s204 + $0x158] sm:$0xff]
                %293 = vst [vmem:[%s205 + $0x158] sm:$0xff] %v292
                %v294 = vld [vmem:[%s204 + $0x160] sm:$0xff]
                %295 = vst [vmem:[%s205 + $0x160] sm:$0xff] %v294
                %v296 = vld [vmem:[%s204 + $0x168] sm:$0xff]
                %297 = vst [vmem:[%s205 + $0x168] sm:$0xff] %v296
                %v298 = vld [vmem:[%s204 + $0x170] sm:$0xff]
                %299 = vst [vmem:[%s205 + $0x170] sm:$0xff] %v298
                %v300 = vld [vmem:[%s204 + $0x178] sm:$0xff]
                %301 = vst [vmem:[%s205 + $0x178] sm:$0xff] %v300
                %v302 = vld [vmem:[%s204 + $0x180] sm:$0xff]
                %303 = vst [vmem:[%s205 + $0x180] sm:$0xff] %v302
                %v304 = vld [vmem:[%s204 + $0x188] sm:$0xff]
                %305 = vst [vmem:[%s205 + $0x188] sm:$0xff] %v304
                %v306 = vld [vmem:[%s204 + $0x190] sm:$0xff]
                %307 = vst [vmem:[%s205 + $0x190] sm:$0xff] %v306
                %v308 = vld [vmem:[%s204 + $0x198] sm:$0xff]
                %309 = vst [vmem:[%s205 + $0x198] sm:$0xff] %v308
                %v310 = vld [vmem:[%s204 + $0x1a0] sm:$0xff]
                %311 = vst [vmem:[%s205 + $0x1a0] sm:$0xff] %v310
                %v312 = vld [vmem:[%s204 + $0x1a8] sm:$0xff]
                %313 = vst [vmem:[%s205 + $0x1a8] sm:$0xff] %v312
                %v314 = vld [vmem:[%s204 + $0x1b0] sm:$0xff]
                %315 = vst [vmem:[%s205 + $0x1b0] sm:$0xff] %v314
                %v316 = vld [vmem:[%s204 + $0x1b8] sm:$0xff]
                %317 = vst [vmem:[%s205 + $0x1b8] sm:$0xff] %v316
                %v318 = vld [vmem:[%s204 + $0x1c0] sm:$0xff]
                %319 = vst [vmem:[%s205 + $0x1c0] sm:$0xff] %v318
                %v320 = vld [vmem:[%s204 + $0x1c8] sm:$0xff]
                %321 = vst [vmem:[%s205 + $0x1c8] sm:$0xff] %v320
                %v322 = vld [vmem:[%s204 + $0x1d0] sm:$0xff]
                %323 = vst [vmem:[%s205 + $0x1d0] sm:$0xff] %v322
                %v324 = vld [vmem:[%s204 + $0x1d8] sm:$0xff]
                %325 = vst [vmem:[%s205 + $0x1d8] sm:$0xff] %v324
                %v326 = vld [vmem:[%s204 + $0x1e0] sm:$0xff]
                %327 = vst [vmem:[%s205 + $0x1e0] sm:$0xff] %v326
                %v328 = vld [vmem:[%s204 + $0x1e8] sm:$0xff]
                %329 = vst [vmem:[%s205 + $0x1e8] sm:$0xff] %v328
                %v330 = vld [vmem:[%s204 + $0x1f0] sm:$0xff]
                %331 = vst [vmem:[%s205 + $0x1f0] sm:$0xff] %v330
                %v332 = vld [vmem:[%s204 + $0x1f8] sm:$0xff]
                %333 = vst [vmem:[%s205 + $0x1f8] sm:$0xff] %v332
                %v334 = vld [vmem:[%s204 + $0x400] sm:$0xff]
                %335 = vst [vmem:[%s205 + $0x200] sm:$0xff] %v334
                %v336 = vld [vmem:[%s204 + $0x408] sm:$0xff]
                %337 = vst [vmem:[%s205 + $0x208] sm:$0xff] %v336
                %v338 = vld [vmem:[%s204 + $0x410] sm:$0xff]
                %339 = vst [vmem:[%s205 + $0x210] sm:$0xff] %v338
                %v340 = vld [vmem:[%s204 + $0x418] sm:$0xff]
                %341 = vst [vmem:[%s205 + $0x218] sm:$0xff] %v340
                %v342 = vld [vmem:[%s204 + $0x420] sm:$0xff]
                %343 = vst [vmem:[%s205 + $0x220] sm:$0xff] %v342
                %v344 = vld [vmem:[%s204 + $0x428] sm:$0xff]
                %345 = vst [vmem:[%s205 + $0x228] sm:$0xff] %v344
                %v346 = vld [vmem:[%s204 + $0x430] sm:$0xff]
                %347 = vst [vmem:[%s205 + $0x230] sm:$0xff] %v346
                %v348 = vld [vmem:[%s204 + $0x438] sm:$0xff]
                %349 = vst [vmem:[%s205 + $0x238] sm:$0xff] %v348
                %v350 = vld [vmem:[%s204 + $0x440] sm:$0xff]
                %351 = vst [vmem:[%s205 + $0x240] sm:$0xff] %v350
                %v352 = vld [vmem:[%s204 + $0x448] sm:$0xff]
                %353 = vst [vmem:[%s205 + $0x248] sm:$0xff] %v352
                %v354 = vld [vmem:[%s204 + $0x450] sm:$0xff]
                %355 = vst [vmem:[%s205 + $0x250] sm:$0xff] %v354
                %v356 = vld [vmem:[%s204 + $0x458] sm:$0xff]
                %357 = vst [vmem:[%s205 + $0x258] sm:$0xff] %v356
                %v358 = vld [vmem:[%s204 + $0x460] sm:$0xff]
                %359 = vst [vmem:[%s205 + $0x260] sm:$0xff] %v358
                %v360 = vld [vmem:[%s204 + $0x468] sm:$0xff]
                %361 = vst [vmem:[%s205 + $0x268] sm:$0xff] %v360
                %v362 = vld [vmem:[%s204 + $0x470] sm:$0xff]
                %363 = vst [vmem:[%s205 + $0x270] sm:$0xff] %v362
                %v364 = vld [vmem:[%s204 + $0x478] sm:$0xff]
                %365 = vst [vmem:[%s205 + $0x278] sm:$0xff] %v364
                %v366 = vld [vmem:[%s204 + $0x480] sm:$0xff]
                %367 = vst [vmem:[%s205 + $0x280] sm:$0xff] %v366
                %v368 = vld [vmem:[%s204 + $0x488] sm:$0xff]
                %369 = vst [vmem:[%s205 + $0x288] sm:$0xff] %v368
                %v370 = vld [vmem:[%s204 + $0x490] sm:$0xff]
                %371 = vst [vmem:[%s205 + $0x290] sm:$0xff] %v370
                %v372 = vld [vmem:[%s204 + $0x498] sm:$0xff]
                %373 = vst [vmem:[%s205 + $0x298] sm:$0xff] %v372
                %v374 = vld [vmem:[%s204 + $0x4a0] sm:$0xff]
                %375 = vst [vmem:[%s205 + $0x2a0] sm:$0xff] %v374
                %v376 = vld [vmem:[%s204 + $0x4a8] sm:$0xff]
                %377 = vst [vmem:[%s205 + $0x2a8] sm:$0xff] %v376
                %v378 = vld [vmem:[%s204 + $0x4b0] sm:$0xff]
                %379 = vst [vmem:[%s205 + $0x2b0] sm:$0xff] %v378
                %v380 = vld [vmem:[%s204 + $0x4b8] sm:$0xff]
                %381 = vst [vmem:[%s205 + $0x2b8] sm:$0xff] %v380
                %v382 = vld [vmem:[%s204 + $0x4c0] sm:$0xff]
                %383 = vst [vmem:[%s205 + $0x2c0] sm:$0xff] %v382
                %v384 = vld [vmem:[%s204 + $0x4c8] sm:$0xff]
                %385 = vst [vmem:[%s205 + $0x2c8] sm:$0xff] %v384
                %v386 = vld [vmem:[%s204 + $0x4d0] sm:$0xff]
                %387 = vst [vmem:[%s205 + $0x2d0] sm:$0xff] %v386
                %v388 = vld [vmem:[%s204 + $0x4d8] sm:$0xff]
                %389 = vst [vmem:[%s205 + $0x2d8] sm:$0xff] %v388
                %v390 = vld [vmem:[%s204 + $0x4e0] sm:$0xff]
                %391 = vst [vmem:[%s205 + $0x2e0] sm:$0xff] %v390
                %v392 = vld [vmem:[%s204 + $0x4e8] sm:$0xff]
                %393 = vst [vmem:[%s205 + $0x2e8] sm:$0xff] %v392
                %v394 = vld [vmem:[%s204 + $0x4f0] sm:$0xff]
                %395 = vst [vmem:[%s205 + $0x2f0] sm:$0xff] %v394
                %v396 = vld [vmem:[%s204 + $0x4f8] sm:$0xff]
                %397 = vst [vmem:[%s205 + $0x2f8] sm:$0xff] %v396
                %v398 = vld [vmem:[%s204 + $0x500] sm:$0xff]
                %399 = vst [vmem:[%s205 + $0x300] sm:$0xff] %v398
                %v400 = vld [vmem:[%s204 + $0x508] sm:$0xff]
                %401 = vst [vmem:[%s205 + $0x308] sm:$0xff] %v400
                %v402 = vld [vmem:[%s204 + $0x510] sm:$0xff]
                %403 = vst [vmem:[%s205 + $0x310] sm:$0xff] %v402
                %v404 = vld [vmem:[%s204 + $0x518] sm:$0xff]
                %405 = vst [vmem:[%s205 + $0x318] sm:$0xff] %v404
                %v406 = vld [vmem:[%s204 + $0x520] sm:$0xff]
                %407 = vst [vmem:[%s205 + $0x320] sm:$0xff] %v406
                %v408 = vld [vmem:[%s204 + $0x528] sm:$0xff]
                %409 = vst [vmem:[%s205 + $0x328] sm:$0xff] %v408
                %v410 = vld [vmem:[%s204 + $0x530] sm:$0xff]
                %411 = vst [vmem:[%s205 + $0x330] sm:$0xff] %v410
                %v412 = vld [vmem:[%s204 + $0x538] sm:$0xff]
                %413 = vst [vmem:[%s205 + $0x338] sm:$0xff] %v412
                %v414 = vld [vmem:[%s204 + $0x540] sm:$0xff]
                %415 = vst [vmem:[%s205 + $0x340] sm:$0xff] %v414
                %v416 = vld [vmem:[%s204 + $0x548] sm:$0xff]
                %417 = vst [vmem:[%s205 + $0x348] sm:$0xff] %v416
                %v418 = vld [vmem:[%s204 + $0x550] sm:$0xff]
                %419 = vst [vmem:[%s205 + $0x350] sm:$0xff] %v418
                %v420 = vld [vmem:[%s204 + $0x558] sm:$0xff]
                %421 = vst [vmem:[%s205 + $0x358] sm:$0xff] %v420
                %v422 = vld [vmem:[%s204 + $0x560] sm:$0xff]
                %423 = vst [vmem:[%s205 + $0x360] sm:$0xff] %v422
                %v424 = vld [vmem:[%s204 + $0x568] sm:$0xff]
                %425 = vst [vmem:[%s205 + $0x368] sm:$0xff] %v424
                %v426 = vld [vmem:[%s204 + $0x570] sm:$0xff]
                %427 = vst [vmem:[%s205 + $0x370] sm:$0xff] %v426
                %v428 = vld [vmem:[%s204 + $0x578] sm:$0xff]
                %429 = vst [vmem:[%s205 + $0x378] sm:$0xff] %v428
                %v430 = vld [vmem:[%s204 + $0x580] sm:$0xff]
                %431 = vst [vmem:[%s205 + $0x380] sm:$0xff] %v430
                %v432 = vld [vmem:[%s204 + $0x588] sm:$0xff]
                %433 = vst [vmem:[%s205 + $0x388] sm:$0xff] %v432
                %v434 = vld [vmem:[%s204 + $0x590] sm:$0xff]
                %435 = vst [vmem:[%s205 + $0x390] sm:$0xff] %v434
                %v436 = vld [vmem:[%s204 + $0x598] sm:$0xff]
                %437 = vst [vmem:[%s205 + $0x398] sm:$0xff] %v436
                %v438 = vld [vmem:[%s204 + $0x5a0] sm:$0xff]
                %439 = vst [vmem:[%s205 + $0x3a0] sm:$0xff] %v438
                %v440 = vld [vmem:[%s204 + $0x5a8] sm:$0xff]
                %441 = vst [vmem:[%s205 + $0x3a8] sm:$0xff] %v440
                %v442 = vld [vmem:[%s204 + $0x5b0] sm:$0xff]
                %443 = vst [vmem:[%s205 + $0x3b0] sm:$0xff] %v442
                %v444 = vld [vmem:[%s204 + $0x5b8] sm:$0xff]
                %445 = vst [vmem:[%s205 + $0x3b8] sm:$0xff] %v444
                %v446 = vld [vmem:[%s204 + $0x5c0] sm:$0xff]
                %447 = vst [vmem:[%s205 + $0x3c0] sm:$0xff] %v446
                %v448 = vld [vmem:[%s204 + $0x5c8] sm:$0xff]
                %449 = vst [vmem:[%s205 + $0x3c8] sm:$0xff] %v448
                %v450 = vld [vmem:[%s204 + $0x5d0] sm:$0xff]
                %451 = vst [vmem:[%s205 + $0x3d0] sm:$0xff] %v450
                %v452 = vld [vmem:[%s204 + $0x5d8] sm:$0xff]
                %453 = vst [vmem:[%s205 + $0x3d8] sm:$0xff] %v452
                %v454 = vld [vmem:[%s204 + $0x5e0] sm:$0xff]
                %455 = vst [vmem:[%s205 + $0x3e0] sm:$0xff] %v454
                %v456 = vld [vmem:[%s204 + $0x5e8] sm:$0xff]
                %457 = vst [vmem:[%s205 + $0x3e8] sm:$0xff] %v456
                %v458 = vld [vmem:[%s204 + $0x5f0] sm:$0xff]
                %459 = vst [vmem:[%s205 + $0x3f0] sm:$0xff] %v458
                %v460 = vld [vmem:[%s204 + $0x5f8] sm:$0xff]
                %461 = vst [vmem:[%s205 + $0x3f8] sm:$0xff] %v460
                %v462 = vld [vmem:[%s204 + $0x800] sm:$0xff]
                %463 = vst [vmem:[%s205 + $0x400] sm:$0xff] %v462
                %v464 = vld [vmem:[%s204 + $0x808] sm:$0xff]
                %465 = vst [vmem:[%s205 + $0x408] sm:$0xff] %v464
                %v466 = vld [vmem:[%s204 + $0x810] sm:$0xff]
                %467 = vst [vmem:[%s205 + $0x410] sm:$0xff] %v466
                %v468 = vld [vmem:[%s204 + $0x818] sm:$0xff]
                %469 = vst [vmem:[%s205 + $0x418] sm:$0xff] %v468
                %v470 = vld [vmem:[%s204 + $0x820] sm:$0xff]
                %471 = vst [vmem:[%s205 + $0x420] sm:$0xff] %v470
                %v472 = vld [vmem:[%s204 + $0x828] sm:$0xff]
                %473 = vst [vmem:[%s205 + $0x428] sm:$0xff] %v472
                %v474 = vld [vmem:[%s204 + $0x830] sm:$0xff]
                %475 = vst [vmem:[%s205 + $0x430] sm:$0xff] %v474
                %v476 = vld [vmem:[%s204 + $0x838] sm:$0xff]
                %477 = vst [vmem:[%s205 + $0x438] sm:$0xff] %v476
                %v478 = vld [vmem:[%s204 + $0x840] sm:$0xff]
                %479 = vst [vmem:[%s205 + $0x440] sm:$0xff] %v478
                %v480 = vld [vmem:[%s204 + $0x848] sm:$0xff]
                %481 = vst [vmem:[%s205 + $0x448] sm:$0xff] %v480
                %v482 = vld [vmem:[%s204 + $0x850] sm:$0xff]
                %483 = vst [vmem:[%s205 + $0x450] sm:$0xff] %v482
                %v484 = vld [vmem:[%s204 + $0x858] sm:$0xff]
                %485 = vst [vmem:[%s205 + $0x458] sm:$0xff] %v484
                %v486 = vld [vmem:[%s204 + $0x860] sm:$0xff]
                %487 = vst [vmem:[%s205 + $0x460] sm:$0xff] %v486
                %v488 = vld [vmem:[%s204 + $0x868] sm:$0xff]
                %489 = vst [vmem:[%s205 + $0x468] sm:$0xff] %v488
                %v490 = vld [vmem:[%s204 + $0x870] sm:$0xff]
                %491 = vst [vmem:[%s205 + $0x470] sm:$0xff] %v490
                %v492 = vld [vmem:[%s204 + $0x878] sm:$0xff]
                %493 = vst [vmem:[%s205 + $0x478] sm:$0xff] %v492
                %v494 = vld [vmem:[%s204 + $0x880] sm:$0xff]
                %495 = vst [vmem:[%s205 + $0x480] sm:$0xff] %v494
                %v496 = vld [vmem:[%s204 + $0x888] sm:$0xff]
                %497 = vst [vmem:[%s205 + $0x488] sm:$0xff] %v496
                %v498 = vld [vmem:[%s204 + $0x890] sm:$0xff]
                %499 = vst [vmem:[%s205 + $0x490] sm:$0xff] %v498
                %v500 = vld [vmem:[%s204 + $0x898] sm:$0xff]
                %501 = vst [vmem:[%s205 + $0x498] sm:$0xff] %v500
                %v502 = vld [vmem:[%s204 + $0x8a0] sm:$0xff]
                %503 = vst [vmem:[%s205 + $0x4a0] sm:$0xff] %v502
                %v504 = vld [vmem:[%s204 + $0x8a8] sm:$0xff]
                %505 = vst [vmem:[%s205 + $0x4a8] sm:$0xff] %v504
                %v506 = vld [vmem:[%s204 + $0x8b0] sm:$0xff]
                %507 = vst [vmem:[%s205 + $0x4b0] sm:$0xff] %v506
                %v508 = vld [vmem:[%s204 + $0x8b8] sm:$0xff]
                %509 = vst [vmem:[%s205 + $0x4b8] sm:$0xff] %v508
                %v510 = vld [vmem:[%s204 + $0x8c0] sm:$0xff]
                %511 = vst [vmem:[%s205 + $0x4c0] sm:$0xff] %v510
                %v512 = vld [vmem:[%s204 + $0x8c8] sm:$0xff]
                %513 = vst [vmem:[%s205 + $0x4c8] sm:$0xff] %v512
                %v514 = vld [vmem:[%s204 + $0x8d0] sm:$0xff]
                %515 = vst [vmem:[%s205 + $0x4d0] sm:$0xff] %v514
                %v516 = vld [vmem:[%s204 + $0x8d8] sm:$0xff]
                %517 = vst [vmem:[%s205 + $0x4d8] sm:$0xff] %v516
                %v518 = vld [vmem:[%s204 + $0x8e0] sm:$0xff]
                %519 = vst [vmem:[%s205 + $0x4e0] sm:$0xff] %v518
                %v520 = vld [vmem:[%s204 + $0x8e8] sm:$0xff]
                %521 = vst [vmem:[%s205 + $0x4e8] sm:$0xff] %v520
                %v522 = vld [vmem:[%s204 + $0x8f0] sm:$0xff]
                %523 = vst [vmem:[%s205 + $0x4f0] sm:$0xff] %v522
                %v524 = vld [vmem:[%s204 + $0x8f8] sm:$0xff]
                %525 = vst [vmem:[%s205 + $0x4f8] sm:$0xff] %v524
                %v526 = vld [vmem:[%s204 + $0x900] sm:$0xff]
                %527 = vst [vmem:[%s205 + $0x500] sm:$0xff] %v526
                %v528 = vld [vmem:[%s204 + $0x908] sm:$0xff]
                %529 = vst [vmem:[%s205 + $0x508] sm:$0xff] %v528
                %v530 = vld [vmem:[%s204 + $0x910] sm:$0xff]
                %531 = vst [vmem:[%s205 + $0x510] sm:$0xff] %v530
                %v532 = vld [vmem:[%s204 + $0x918] sm:$0xff]
                %533 = vst [vmem:[%s205 + $0x518] sm:$0xff] %v532
                %v534 = vld [vmem:[%s204 + $0x920] sm:$0xff]
                %535 = vst [vmem:[%s205 + $0x520] sm:$0xff] %v534
                %v536 = vld [vmem:[%s204 + $0x928] sm:$0xff]
                %537 = vst [vmem:[%s205 + $0x528] sm:$0xff] %v536
                %v538 = vld [vmem:[%s204 + $0x930] sm:$0xff]
                %539 = vst [vmem:[%s205 + $0x530] sm:$0xff] %v538
                %v540 = vld [vmem:[%s204 + $0x938] sm:$0xff]
                %541 = vst [vmem:[%s205 + $0x538] sm:$0xff] %v540
                %v542 = vld [vmem:[%s204 + $0x940] sm:$0xff]
                %543 = vst [vmem:[%s205 + $0x540] sm:$0xff] %v542
                %v544 = vld [vmem:[%s204 + $0x948] sm:$0xff]
                %545 = vst [vmem:[%s205 + $0x548] sm:$0xff] %v544
                %v546 = vld [vmem:[%s204 + $0x950] sm:$0xff]
                %547 = vst [vmem:[%s205 + $0x550] sm:$0xff] %v546
                %v548 = vld [vmem:[%s204 + $0x958] sm:$0xff]
                %549 = vst [vmem:[%s205 + $0x558] sm:$0xff] %v548
                %v550 = vld [vmem:[%s204 + $0x960] sm:$0xff]
                %551 = vst [vmem:[%s205 + $0x560] sm:$0xff] %v550
                %v552 = vld [vmem:[%s204 + $0x968] sm:$0xff]
                %553 = vst [vmem:[%s205 + $0x568] sm:$0xff] %v552
                %v554 = vld [vmem:[%s204 + $0x970] sm:$0xff]
                %555 = vst [vmem:[%s205 + $0x570] sm:$0xff] %v554
                %v556 = vld [vmem:[%s204 + $0x978] sm:$0xff]
                %557 = vst [vmem:[%s205 + $0x578] sm:$0xff] %v556
                %v558 = vld [vmem:[%s204 + $0x980] sm:$0xff]
                %559 = vst [vmem:[%s205 + $0x580] sm:$0xff] %v558
                %v560 = vld [vmem:[%s204 + $0x988] sm:$0xff]
                %561 = vst [vmem:[%s205 + $0x588] sm:$0xff] %v560
                %v562 = vld [vmem:[%s204 + $0x990] sm:$0xff]
                %563 = vst [vmem:[%s205 + $0x590] sm:$0xff] %v562
                %v564 = vld [vmem:[%s204 + $0x998] sm:$0xff]
                %565 = vst [vmem:[%s205 + $0x598] sm:$0xff] %v564
                %v566 = vld [vmem:[%s204 + $0x9a0] sm:$0xff]
                %567 = vst [vmem:[%s205 + $0x5a0] sm:$0xff] %v566
                %v568 = vld [vmem:[%s204 + $0x9a8] sm:$0xff]
                %569 = vst [vmem:[%s205 + $0x5a8] sm:$0xff] %v568
                %v570 = vld [vmem:[%s204 + $0x9b0] sm:$0xff]
                %571 = vst [vmem:[%s205 + $0x5b0] sm:$0xff] %v570
                %v572 = vld [vmem:[%s204 + $0x9b8] sm:$0xff]
                %573 = vst [vmem:[%s205 + $0x5b8] sm:$0xff] %v572
                %v574 = vld [vmem:[%s204 + $0x9c0] sm:$0xff]
                %575 = vst [vmem:[%s205 + $0x5c0] sm:$0xff] %v574
                %v576 = vld [vmem:[%s204 + $0x9c8] sm:$0xff]
                %577 = vst [vmem:[%s205 + $0x5c8] sm:$0xff] %v576
                %v578 = vld [vmem:[%s204 + $0x9d0] sm:$0xff]
                %579 = vst [vmem:[%s205 + $0x5d0] sm:$0xff] %v578
                %v580 = vld [vmem:[%s204 + $0x9d8] sm:$0xff]
                %581 = vst [vmem:[%s205 + $0x5d8] sm:$0xff] %v580
                %v582 = vld [vmem:[%s204 + $0x9e0] sm:$0xff]
                %583 = vst [vmem:[%s205 + $0x5e0] sm:$0xff] %v582
                %v584 = vld [vmem:[%s204 + $0x9e8] sm:$0xff]
                %585 = vst [vmem:[%s205 + $0x5e8] sm:$0xff] %v584
                %v586 = vld [vmem:[%s204 + $0x9f0] sm:$0xff]
                %587 = vst [vmem:[%s205 + $0x5f0] sm:$0xff] %v586
                %v588 = vld [vmem:[%s204 + $0x9f8] sm:$0xff]
                %589 = vst [vmem:[%s205 + $0x5f8] sm:$0xff] %v588
                %v590 = vld [vmem:[%s204 + $0xc00] sm:$0xff]
                %591 = vst [vmem:[%s205 + $0x600] sm:$0xff] %v590
                %v592 = vld [vmem:[%s204 + $0xc08] sm:$0xff]
                %593 = vst [vmem:[%s205 + $0x608] sm:$0xff] %v592
                %v594 = vld [vmem:[%s204 + $0xc10] sm:$0xff]
                %595 = vst [vmem:[%s205 + $0x610] sm:$0xff] %v594
                %v596 = vld [vmem:[%s204 + $0xc18] sm:$0xff]
                %597 = vst [vmem:[%s205 + $0x618] sm:$0xff] %v596
                %v598 = vld [vmem:[%s204 + $0xc20] sm:$0xff]
                %599 = vst [vmem:[%s205 + $0x620] sm:$0xff] %v598
                %v600 = vld [vmem:[%s204 + $0xc28] sm:$0xff]
                %601 = vst [vmem:[%s205 + $0x628] sm:$0xff] %v600
                %v602 = vld [vmem:[%s204 + $0xc30] sm:$0xff]
                %603 = vst [vmem:[%s205 + $0x630] sm:$0xff] %v602
                %v604 = vld [vmem:[%s204 + $0xc38] sm:$0xff]
                %605 = vst [vmem:[%s205 + $0x638] sm:$0xff] %v604
                %v606 = vld [vmem:[%s204 + $0xc40] sm:$0xff]
                %607 = vst [vmem:[%s205 + $0x640] sm:$0xff] %v606
                %v608 = vld [vmem:[%s204 + $0xc48] sm:$0xff]
                %609 = vst [vmem:[%s205 + $0x648] sm:$0xff] %v608
                %v610 = vld [vmem:[%s204 + $0xc50] sm:$0xff]
                %611 = vst [vmem:[%s205 + $0x650] sm:$0xff] %v610
                %v612 = vld [vmem:[%s204 + $0xc58] sm:$0xff]
                %613 = vst [vmem:[%s205 + $0x658] sm:$0xff] %v612
                %v614 = vld [vmem:[%s204 + $0xc60] sm:$0xff]
                %615 = vst [vmem:[%s205 + $0x660] sm:$0xff] %v614
                %v616 = vld [vmem:[%s204 + $0xc68] sm:$0xff]
                %617 = vst [vmem:[%s205 + $0x668] sm:$0xff] %v616
                %v618 = vld [vmem:[%s204 + $0xc70] sm:$0xff]
                %619 = vst [vmem:[%s205 + $0x670] sm:$0xff] %v618
                %v620 = vld [vmem:[%s204 + $0xc78] sm:$0xff]
                %621 = vst [vmem:[%s205 + $0x678] sm:$0xff] %v620
                %v622 = vld [vmem:[%s204 + $0xc80] sm:$0xff]
                %623 = vst [vmem:[%s205 + $0x680] sm:$0xff] %v622
                %v624 = vld [vmem:[%s204 + $0xc88] sm:$0xff]
                %625 = vst [vmem:[%s205 + $0x688] sm:$0xff] %v624
                %v626 = vld [vmem:[%s204 + $0xc90] sm:$0xff]
                %627 = vst [vmem:[%s205 + $0x690] sm:$0xff] %v626
                %v628 = vld [vmem:[%s204 + $0xc98] sm:$0xff]
                %629 = vst [vmem:[%s205 + $0x698] sm:$0xff] %v628
                %v630 = vld [vmem:[%s204 + $0xca0] sm:$0xff]
                %631 = vst [vmem:[%s205 + $0x6a0] sm:$0xff] %v630
                %v632 = vld [vmem:[%s204 + $0xca8] sm:$0xff]
                %633 = vst [vmem:[%s205 + $0x6a8] sm:$0xff] %v632
                %v634 = vld [vmem:[%s204 + $0xcb0] sm:$0xff]
                %635 = vst [vmem:[%s205 + $0x6b0] sm:$0xff] %v634
                %v636 = vld [vmem:[%s204 + $0xcb8] sm:$0xff]
                %637 = vst [vmem:[%s205 + $0x6b8] sm:$0xff] %v636
                %v638 = vld [vmem:[%s204 + $0xcc0] sm:$0xff]
                %639 = vst [vmem:[%s205 + $0x6c0] sm:$0xff] %v638
                %v640 = vld [vmem:[%s204 + $0xcc8] sm:$0xff]
                %641 = vst [vmem:[%s205 + $0x6c8] sm:$0xff] %v640
                %v642 = vld [vmem:[%s204 + $0xcd0] sm:$0xff]
                %643 = vst [vmem:[%s205 + $0x6d0] sm:$0xff] %v642
                %v644 = vld [vmem:[%s204 + $0xcd8] sm:$0xff]
                %645 = vst [vmem:[%s205 + $0x6d8] sm:$0xff] %v644
                %v646 = vld [vmem:[%s204 + $0xce0] sm:$0xff]
                %647 = vst [vmem:[%s205 + $0x6e0] sm:$0xff] %v646
                %v648 = vld [vmem:[%s204 + $0xce8] sm:$0xff]
                %649 = vst [vmem:[%s205 + $0x6e8] sm:$0xff] %v648
                %v650 = vld [vmem:[%s204 + $0xcf0] sm:$0xff]
                %651 = vst [vmem:[%s205 + $0x6f0] sm:$0xff] %v650
                %v652 = vld [vmem:[%s204 + $0xcf8] sm:$0xff]
                %653 = vst [vmem:[%s205 + $0x6f8] sm:$0xff] %v652
                %v654 = vld [vmem:[%s204 + $0xd00] sm:$0xff]
                %655 = vst [vmem:[%s205 + $0x700] sm:$0xff] %v654
                %v656 = vld [vmem:[%s204 + $0xd08] sm:$0xff]
                %657 = vst [vmem:[%s205 + $0x708] sm:$0xff] %v656
                %v658 = vld [vmem:[%s204 + $0xd10] sm:$0xff]
                %659 = vst [vmem:[%s205 + $0x710] sm:$0xff] %v658
                %v660 = vld [vmem:[%s204 + $0xd18] sm:$0xff]
                %661 = vst [vmem:[%s205 + $0x718] sm:$0xff] %v660
                %v662 = vld [vmem:[%s204 + $0xd20] sm:$0xff]
                %663 = vst [vmem:[%s205 + $0x720] sm:$0xff] %v662
                %v664 = vld [vmem:[%s204 + $0xd28] sm:$0xff]
                %665 = vst [vmem:[%s205 + $0x728] sm:$0xff] %v664
                %v666 = vld [vmem:[%s204 + $0xd30] sm:$0xff]
                %667 = vst [vmem:[%s205 + $0x730] sm:$0xff] %v666
                %v668 = vld [vmem:[%s204 + $0xd38] sm:$0xff]
                %669 = vst [vmem:[%s205 + $0x738] sm:$0xff] %v668
                %v670 = vld [vmem:[%s204 + $0xd40] sm:$0xff]
                %671 = vst [vmem:[%s205 + $0x740] sm:$0xff] %v670
                %v672 = vld [vmem:[%s204 + $0xd48] sm:$0xff]
                %673 = vst [vmem:[%s205 + $0x748] sm:$0xff] %v672
                %v674 = vld [vmem:[%s204 + $0xd50] sm:$0xff]
                %675 = vst [vmem:[%s205 + $0x750] sm:$0xff] %v674
                %v676 = vld [vmem:[%s204 + $0xd58] sm:$0xff]
                %677 = vst [vmem:[%s205 + $0x758] sm:$0xff] %v676
                %v678 = vld [vmem:[%s204 + $0xd60] sm:$0xff]
                %679 = vst [vmem:[%s205 + $0x760] sm:$0xff] %v678
                %v680 = vld [vmem:[%s204 + $0xd68] sm:$0xff]
                %681 = vst [vmem:[%s205 + $0x768] sm:$0xff] %v680
                %v682 = vld [vmem:[%s204 + $0xd70] sm:$0xff]
                %683 = vst [vmem:[%s205 + $0x770] sm:$0xff] %v682
                %v684 = vld [vmem:[%s204 + $0xd78] sm:$0xff]
                %685 = vst [vmem:[%s205 + $0x778] sm:$0xff] %v684
                %v686 = vld [vmem:[%s204 + $0xd80] sm:$0xff]
                %687 = vst [vmem:[%s205 + $0x780] sm:$0xff] %v686
                %v688 = vld [vmem:[%s204 + $0xd88] sm:$0xff]
                %689 = vst [vmem:[%s205 + $0x788] sm:$0xff] %v688
                %v690 = vld [vmem:[%s204 + $0xd90] sm:$0xff]
                %691 = vst [vmem:[%s205 + $0x790] sm:$0xff] %v690
                %v692 = vld [vmem:[%s204 + $0xd98] sm:$0xff]
                %693 = vst [vmem:[%s205 + $0x798] sm:$0xff] %v692
                %v694 = vld [vmem:[%s204 + $0xda0] sm:$0xff]
                %695 = vst [vmem:[%s205 + $0x7a0] sm:$0xff] %v694
                %v696 = vld [vmem:[%s204 + $0xda8] sm:$0xff]
                %697 = vst [vmem:[%s205 + $0x7a8] sm:$0xff] %v696
                %v698 = vld [vmem:[%s204 + $0xdb0] sm:$0xff]
                %699 = vst [vmem:[%s205 + $0x7b0] sm:$0xff] %v698
                %v700 = vld [vmem:[%s204 + $0xdb8] sm:$0xff]
                %701 = vst [vmem:[%s205 + $0x7b8] sm:$0xff] %v700
                %v702 = vld [vmem:[%s204 + $0xdc0] sm:$0xff]
                %703 = vst [vmem:[%s205 + $0x7c0] sm:$0xff] %v702
                %v704 = vld [vmem:[%s204 + $0xdc8] sm:$0xff]
                %705 = vst [vmem:[%s205 + $0x7c8] sm:$0xff] %v704
                %v706 = vld [vmem:[%s204 + $0xdd0] sm:$0xff]
                %707 = vst [vmem:[%s205 + $0x7d0] sm:$0xff] %v706
                %v708 = vld [vmem:[%s204 + $0xdd8] sm:$0xff]
                %709 = vst [vmem:[%s205 + $0x7d8] sm:$0xff] %v708
                %v710 = vld [vmem:[%s204 + $0xde0] sm:$0xff]
                %711 = vst [vmem:[%s205 + $0x7e0] sm:$0xff] %v710
                %v712 = vld [vmem:[%s204 + $0xde8] sm:$0xff]
                %713 = vst [vmem:[%s205 + $0x7e8] sm:$0xff] %v712
                %v714 = vld [vmem:[%s204 + $0xdf0] sm:$0xff]
                %715 = vst [vmem:[%s205 + $0x7f0] sm:$0xff] %v714
                %v716 = vld [vmem:[%s204 + $0xdf8] sm:$0xff]
                %717 = vst [vmem:[%s205 + $0x7f8] sm:$0xff] %v716
              $region49: #{pixel_encoder_forward.3} parent=43 // loop_footer
                %s203 = sadd.s32 1, %s199
              $region50: #{pixel_encoder_forward.3} parent=43 // loop_footer_branch
                %198 = sbr.rel target = $region46
              $region51: #{pixel_encoder_forward.3} parent=43 // loop_exit
                _
            $region44: #{pixel_encoder_forward.3} parent=39 // pred_fallthru
              _
            // Predicated region
            $region52: #{pixel_encoder_forward.3} parent=39 // pred_check
              _
            $region53: #{pixel_encoder_forward.3} parent=39 // pred_check_branch
              %719 = sbr.rel target = $region55
            $region54: #{pixel_encoder_forward.3} parent=39 // pred_region
              _
            $region55: #{pixel_encoder_forward.3} parent=39 // pred_fallthru
              _
          $region40: #{pixel_encoder_forward.3} parent=35 // pred_fallthru
            _
          %720 = vnop
        $region36: #{pixel_encoder_forward.3} parent=27 // pred_fallthru
          _
      $region28: #{pixel_encoder_forward.3} parent=5 // pred_fallthru
        _
      %p721 = scmp.le.s32.totalorder 1, %s12
      %p722 = scmp.lt.s32.totalorder %s12, 3
      %p723 = pnand %p721, %p722
      %p724 = pneg %p723
      // Predicated region
      $region56: #{pixel_encoder_forward.3} parent=5 // pred_check
        _
      $region57: #{pixel_encoder_forward.3} parent=5 // pred_check_branch
        %726 = sbr.rel (%p723) target = $region59
      $region58: #{pixel_encoder_forward.3} parent=5 // pred_region
        %s727 = ssub.s32 %s12, 1
        %s728 = sand.u32 %s51, 1
        %s729 = sand.u32 %s51, 1
        %s730 = smul.addr %s729, 2048
        %s731 = scalar_lea.vmem [#allocation3], %s730
        // Predicated region
        $region60: #{pixel_encoder_forward.3} parent=58 // pred_check
          %p732 = pneg %p64
        $region61: #{pixel_encoder_forward.3} parent=58 // pred_check_branch
          %734 = sbr.rel (%p732) target = $region63
        $region62: #{pixel_encoder_forward.3} parent=58 // pred_region
          _
        $region63: #{pixel_encoder_forward.3} parent=58 // pred_fallthru
          _
        %s735 = smul.u32 128, %s17
        %p736 = scmp.lt.s32.totalorder %s735, 255
        %s737 = scalar_select %p736, %s735, 255
        %s738 = scalar_lea.vmem %s0, %s737
        %p739 = pneg %p38
        %p740 = pneg %p35
        %s741 = sand.u32 %s51, 1
        %s742 = sand.u32 %s51, 1
        %s743 = smul.addr %s742, 2048
        %s744 = scalar_lea.vmem [#allocation3], %s743
        %p745 = pneg %p64
        %p746 = pneg %p61
        %p747 = pneg %p85
        %p748 = pneg %p82
        %p749 = pneg %p106
        %p750 = pneg %p103
        %p751 = pneg %p127
        %p752 = pneg %p124
        %p753 = pneg %p148
        %p754 = pneg %p145
        %s755 = smul.u32 128, %s17
        %p756 = scmp.lt.s32.totalorder %s755, 255
        %s757 = scalar_select %p756, %s755, 255
        %s758 = scalar_lea.vmem %s0, %s757
        %s759 = smul.u32 128, %s17
        %s760 = smul.u32 128, %s17
        %p762 = scmp.eq.s32.totalorder %s17, 0
        // Predicated region
        $region64: #{pixel_encoder_forward.3} parent=58 // pred_check
          %p763 = pneg %p762
        $region65: #{pixel_encoder_forward.3} parent=58 // pred_check_branch
          %765 = sbr.rel (%p763) target = $region67
        $region66: #{pixel_encoder_forward.3} parent=58 // pred_region
          %vm766 = vcmask 254976
          %767 = vst.msk [vmem:[#allocation2] sm:$0x3] %vm766, 0.0
        $region67: #{pixel_encoder_forward.3} parent=58 // pred_fallthru
          _
        %v768 = vld [vmem:[#allocation2] sm:$0x3]
        %v769 = vld [vmem:[%s758] sm:$0xff]
        %v770 = vld [vmem:[%s758 + $0x8] sm:$0xff]
        %v771 = vld [vmem:[%s758 + $0x10] sm:$0xff]
        %v772 = vld [vmem:[%s758 + $0x18] sm:$0xff]
        %v773 = vld [vmem:[%s758 + $0x20] sm:$0xff]
        %v774 = vld [vmem:[%s758 + $0x28] sm:$0xff]
        %v775 = vld [vmem:[%s758 + $0x30] sm:$0xff]
        %v776 = vld [vmem:[%s758 + $0x38] sm:$0xff]
        %v777 = vld [vmem:[%s758 + $0x40] sm:$0xff]
        %v778 = vld [vmem:[%s758 + $0x48] sm:$0xff]
        %v779 = vld [vmem:[%s758 + $0x50] sm:$0xff]
        %v780 = vld [vmem:[%s758 + $0x58] sm:$0xff]
        %v781 = vld [vmem:[%s758 + $0x60] sm:$0xff]
        %v782 = vld [vmem:[%s758 + $0x68] sm:$0xff]
        %v783 = vld [vmem:[%s758 + $0x70] sm:$0xff]
        %v784 = vld [vmem:[%s758 + $0x78] sm:$0xff]
        %v785 = vld [vmem:[%s731] sm:$0xff]
        %v786 = vld [vmem:[%s731 + $0x8] sm:$0xff]
        %v787 = vld [vmem:[%s731 + $0x10] sm:$0xff]
        %v788 = vld [vmem:[%s731 + $0x18] sm:$0xff]
        %v789 = vld [vmem:[%s731 + $0x20] sm:$0xff]
        %v790 = vld [vmem:[%s731 + $0x28] sm:$0xff]
        %v791 = vld [vmem:[%s731 + $0x30] sm:$0xff]
        %v792 = vld [vmem:[%s731 + $0x38] sm:$0xff]
        %v793 = vld [vmem:[%s731 + $0x40] sm:$0xff]
        %v794 = vld [vmem:[%s731 + $0x48] sm:$0xff]
        %v795 = vld [vmem:[%s731 + $0x50] sm:$0xff]
        %v796 = vld [vmem:[%s731 + $0x58] sm:$0xff]
        %v797 = vld [vmem:[%s731 + $0x60] sm:$0xff]
        %v798 = vld [vmem:[%s731 + $0x68] sm:$0xff]
        %v799 = vld [vmem:[%s731 + $0x70] sm:$0xff]
        %v800 = vld [vmem:[%s731 + $0x78] sm:$0xff]
        %v801 = vld [vmem:[%s731 + $0x80] sm:$0xff]
        %v802 = vld [vmem:[%s731 + $0x88] sm:$0xff]
        %v803 = vld [vmem:[%s731 + $0x90] sm:$0xff]
        %v804 = vld [vmem:[%s731 + $0x98] sm:$0xff]
        %v805 = vld [vmem:[%s731 + $0xa0] sm:$0xff]
        %v806 = vld [vmem:[%s731 + $0xa8] sm:$0xff]
        %v807 = vld [vmem:[%s731 + $0xb0] sm:$0xff]
        %v808 = vld [vmem:[%s731 + $0xb8] sm:$0xff]
        %v809 = vld [vmem:[%s731 + $0xc0] sm:$0xff]
        %v810 = vld [vmem:[%s731 + $0xc8] sm:$0xff]
        %v811 = vld [vmem:[%s731 + $0xd0] sm:$0xff]
        %v812 = vld [vmem:[%s731 + $0xd8] sm:$0xff]
        %v813 = vld [vmem:[%s731 + $0xe0] sm:$0xff]
        %v814 = vld [vmem:[%s731 + $0xe8] sm:$0xff]
        %v815 = vld [vmem:[%s731 + $0xf0] sm:$0xff]
        %v816 = vld [vmem:[%s731 + $0xf8] sm:$0xff]
        %v817 = vld [vmem:[%s731 + $0x100] sm:$0xff]
        %v818 = vld [vmem:[%s731 + $0x108] sm:$0xff]
        %v819 = vld [vmem:[%s731 + $0x110] sm:$0xff]
        %v820 = vld [vmem:[%s731 + $0x118] sm:$0xff]
        %v821 = vld [vmem:[%s731 + $0x120] sm:$0xff]
        %v822 = vld [vmem:[%s731 + $0x128] sm:$0xff]
        %v823 = vld [vmem:[%s731 + $0x130] sm:$0xff]
        %v824 = vld [vmem:[%s731 + $0x138] sm:$0xff]
        %v825 = vld [vmem:[%s731 + $0x140] sm:$0xff]
        %v826 = vld [vmem:[%s731 + $0x148] sm:$0xff]
        %v827 = vld [vmem:[%s731 + $0x150] sm:$0xff]
        %v828 = vld [vmem:[%s731 + $0x158] sm:$0xff]
        %v829 = vld [vmem:[%s731 + $0x160] sm:$0xff]
        %v830 = vld [vmem:[%s731 + $0x168] sm:$0xff]
        %v831 = vld [vmem:[%s731 + $0x170] sm:$0xff]
        %v832 = vld [vmem:[%s731 + $0x178] sm:$0xff]
        %v833 = vld [vmem:[%s731 + $0x180] sm:$0xff]
        %v834 = vld [vmem:[%s731 + $0x188] sm:$0xff]
        %v835 = vld [vmem:[%s731 + $0x190] sm:$0xff]
        %v836 = vld [vmem:[%s731 + $0x198] sm:$0xff]
        %v837 = vld [vmem:[%s731 + $0x1a0] sm:$0xff]
        %v838 = vld [vmem:[%s731 + $0x1a8] sm:$0xff]
        %v839 = vld [vmem:[%s731 + $0x1b0] sm:$0xff]
        %v840 = vld [vmem:[%s731 + $0x1b8] sm:$0xff]
        %v841 = vld [vmem:[%s731 + $0x1c0] sm:$0xff]
        %v842 = vld [vmem:[%s731 + $0x1c8] sm:$0xff]
        %v843 = vld [vmem:[%s731 + $0x1d0] sm:$0xff]
        %v844 = vld [vmem:[%s731 + $0x1d8] sm:$0xff]
        %v845 = vld [vmem:[%s731 + $0x1e0] sm:$0xff]
        %v846 = vld [vmem:[%s731 + $0x1e8] sm:$0xff]
        %v847 = vld [vmem:[%s731 + $0x1f0] sm:$0xff]
        %v848 = vld [vmem:[%s731 + $0x1f8] sm:$0xff]
        %v849 = vld [vmem:[%s731 + $0x200] sm:$0xff]
        %v850 = vld [vmem:[%s731 + $0x208] sm:$0xff]
        %v851 = vld [vmem:[%s731 + $0x210] sm:$0xff]
        %v852 = vld [vmem:[%s731 + $0x218] sm:$0xff]
        %v853 = vld [vmem:[%s731 + $0x220] sm:$0xff]
        %v854 = vld [vmem:[%s731 + $0x228] sm:$0xff]
        %v855 = vld [vmem:[%s731 + $0x230] sm:$0xff]
        %v856 = vld [vmem:[%s731 + $0x238] sm:$0xff]
        %v857 = vld [vmem:[%s731 + $0x240] sm:$0xff]
        %v858 = vld [vmem:[%s731 + $0x248] sm:$0xff]
        %v859 = vld [vmem:[%s731 + $0x250] sm:$0xff]
        %v860 = vld [vmem:[%s731 + $0x258] sm:$0xff]
        %v861 = vld [vmem:[%s731 + $0x260] sm:$0xff]
        %v862 = vld [vmem:[%s731 + $0x268] sm:$0xff]
        %v863 = vld [vmem:[%s731 + $0x270] sm:$0xff]
        %v864 = vld [vmem:[%s731 + $0x278] sm:$0xff]
        %v865 = vld [vmem:[%s731 + $0x280] sm:$0xff]
        %v866 = vld [vmem:[%s731 + $0x288] sm:$0xff]
        %v867 = vld [vmem:[%s731 + $0x290] sm:$0xff]
        %v868 = vld [vmem:[%s731 + $0x298] sm:$0xff]
        %v869 = vld [vmem:[%s731 + $0x2a0] sm:$0xff]
        %v870 = vld [vmem:[%s731 + $0x2a8] sm:$0xff]
        %v871 = vld [vmem:[%s731 + $0x2b0] sm:$0xff]
        %v872 = vld [vmem:[%s731 + $0x2b8] sm:$0xff]
        %v873 = vld [vmem:[%s731 + $0x2c0] sm:$0xff]
        %v874 = vld [vmem:[%s731 + $0x2c8] sm:$0xff]
        %v875 = vld [vmem:[%s731 + $0x2d0] sm:$0xff]
        %v876 = vld [vmem:[%s731 + $0x2d8] sm:$0xff]
        %v877 = vld [vmem:[%s731 + $0x2e0] sm:$0xff]
        %v878 = vld [vmem:[%s731 + $0x2e8] sm:$0xff]
        %v879 = vld [vmem:[%s731 + $0x2f0] sm:$0xff]
        %v880 = vld [vmem:[%s731 + $0x2f8] sm:$0xff]
        %v881 = vld [vmem:[%s731 + $0x300] sm:$0xff]
        %v882 = vld [vmem:[%s731 + $0x308] sm:$0xff]
        %v883 = vld [vmem:[%s731 + $0x310] sm:$0xff]
        %v884 = vld [vmem:[%s731 + $0x318] sm:$0xff]
        %v885 = vld [vmem:[%s731 + $0x320] sm:$0xff]
        %v886 = vld [vmem:[%s731 + $0x328] sm:$0xff]
        %v887 = vld [vmem:[%s731 + $0x330] sm:$0xff]
        %v888 = vld [vmem:[%s731 + $0x338] sm:$0xff]
        %v889 = vld [vmem:[%s731 + $0x340] sm:$0xff]
        %v890 = vld [vmem:[%s731 + $0x348] sm:$0xff]
        %v891 = vld [vmem:[%s731 + $0x350] sm:$0xff]
        %v892 = vld [vmem:[%s731 + $0x358] sm:$0xff]
        %v893 = vld [vmem:[%s731 + $0x360] sm:$0xff]
        %v894 = vld [vmem:[%s731 + $0x368] sm:$0xff]
        %v895 = vld [vmem:[%s731 + $0x370] sm:$0xff]
        %v896 = vld [vmem:[%s731 + $0x378] sm:$0xff]
        %v897 = vld [vmem:[%s731 + $0x380] sm:$0xff]
        %v898 = vld [vmem:[%s731 + $0x388] sm:$0xff]
        %v899 = vld [vmem:[%s731 + $0x390] sm:$0xff]
        %v900 = vld [vmem:[%s731 + $0x398] sm:$0xff]
        %v901 = vld [vmem:[%s731 + $0x3a0] sm:$0xff]
        %v902 = vld [vmem:[%s731 + $0x3a8] sm:$0xff]
        %v903 = vld [vmem:[%s731 + $0x3b0] sm:$0xff]
        %v904 = vld [vmem:[%s731 + $0x3b8] sm:$0xff]
        %v905 = vld [vmem:[%s731 + $0x3c0] sm:$0xff]
        %v906 = vld [vmem:[%s731 + $0x3c8] sm:$0xff]
        %v907 = vld [vmem:[%s731 + $0x3d0] sm:$0xff]
        %v908 = vld [vmem:[%s731 + $0x3d8] sm:$0xff]
        %v909 = vld [vmem:[%s731 + $0x3e0] sm:$0xff]
        %v910 = vld [vmem:[%s731 + $0x3e8] sm:$0xff]
        %v911 = vld [vmem:[%s731 + $0x3f0] sm:$0xff]
        %v912 = vld [vmem:[%s731 + $0x3f8] sm:$0xff]
        %v913 = vld [vmem:[%s731 + $0x400] sm:$0xff]
        %v914 = vld [vmem:[%s731 + $0x408] sm:$0xff]
        %v915 = vld [vmem:[%s731 + $0x410] sm:$0xff]
        %v916 = vld [vmem:[%s731 + $0x418] sm:$0xff]
        %v917 = vld [vmem:[%s731 + $0x420] sm:$0xff]
        %v918 = vld [vmem:[%s731 + $0x428] sm:$0xff]
        %v919 = vld [vmem:[%s731 + $0x430] sm:$0xff]
        %v920 = vld [vmem:[%s731 + $0x438] sm:$0xff]
        %v921 = vld [vmem:[%s731 + $0x440] sm:$0xff]
        %v922 = vld [vmem:[%s731 + $0x448] sm:$0xff]
        %v923 = vld [vmem:[%s731 + $0x450] sm:$0xff]
        %v924 = vld [vmem:[%s731 + $0x458] sm:$0xff]
        %v925 = vld [vmem:[%s731 + $0x460] sm:$0xff]
        %v926 = vld [vmem:[%s731 + $0x468] sm:$0xff]
        %v927 = vld [vmem:[%s731 + $0x470] sm:$0xff]
        %v928 = vld [vmem:[%s731 + $0x478] sm:$0xff]
        %v929 = vld [vmem:[%s731 + $0x480] sm:$0xff]
        %v930 = vld [vmem:[%s731 + $0x488] sm:$0xff]
        %v931 = vld [vmem:[%s731 + $0x490] sm:$0xff]
        %v932 = vld [vmem:[%s731 + $0x498] sm:$0xff]
        %v933 = vld [vmem:[%s731 + $0x4a0] sm:$0xff]
        %v934 = vld [vmem:[%s731 + $0x4a8] sm:$0xff]
        %v935 = vld [vmem:[%s731 + $0x4b0] sm:$0xff]
        %v936 = vld [vmem:[%s731 + $0x4b8] sm:$0xff]
        %v937 = vld [vmem:[%s731 + $0x4c0] sm:$0xff]
        %v938 = vld [vmem:[%s731 + $0x4c8] sm:$0xff]
        %v939 = vld [vmem:[%s731 + $0x4d0] sm:$0xff]
        %v940 = vld [vmem:[%s731 + $0x4d8] sm:$0xff]
        %v941 = vld [vmem:[%s731 + $0x4e0] sm:$0xff]
        %v942 = vld [vmem:[%s731 + $0x4e8] sm:$0xff]
        %v943 = vld [vmem:[%s731 + $0x4f0] sm:$0xff]
        %v944 = vld [vmem:[%s731 + $0x4f8] sm:$0xff]
        %v945 = vld [vmem:[%s731 + $0x500] sm:$0xff]
        %v946 = vld [vmem:[%s731 + $0x508] sm:$0xff]
        %v947 = vld [vmem:[%s731 + $0x510] sm:$0xff]
        %v948 = vld [vmem:[%s731 + $0x518] sm:$0xff]
        %v949 = vld [vmem:[%s731 + $0x520] sm:$0xff]
        %v950 = vld [vmem:[%s731 + $0x528] sm:$0xff]
        %v951 = vld [vmem:[%s731 + $0x530] sm:$0xff]
        %v952 = vld [vmem:[%s731 + $0x538] sm:$0xff]
        %v953 = vld [vmem:[%s731 + $0x540] sm:$0xff]
        %v954 = vld [vmem:[%s731 + $0x548] sm:$0xff]
        %v955 = vld [vmem:[%s731 + $0x550] sm:$0xff]
        %v956 = vld [vmem:[%s731 + $0x558] sm:$0xff]
        %v957 = vld [vmem:[%s731 + $0x560] sm:$0xff]
        %v958 = vld [vmem:[%s731 + $0x568] sm:$0xff]
        %v959 = vld [vmem:[%s731 + $0x570] sm:$0xff]
        %v960 = vld [vmem:[%s731 + $0x578] sm:$0xff]
        %v961 = vld [vmem:[%s731 + $0x580] sm:$0xff]
        %v962 = vld [vmem:[%s731 + $0x588] sm:$0xff]
        %v963 = vld [vmem:[%s731 + $0x590] sm:$0xff]
        %v964 = vld [vmem:[%s731 + $0x598] sm:$0xff]
        %v965 = vld [vmem:[%s731 + $0x5a0] sm:$0xff]
        %v966 = vld [vmem:[%s731 + $0x5a8] sm:$0xff]
        %v967 = vld [vmem:[%s731 + $0x5b0] sm:$0xff]
        %v968 = vld [vmem:[%s731 + $0x5b8] sm:$0xff]
        %v969 = vld [vmem:[%s731 + $0x5c0] sm:$0xff]
        %v970 = vld [vmem:[%s731 + $0x5c8] sm:$0xff]
        %v971 = vld [vmem:[%s731 + $0x5d0] sm:$0xff]
        %v972 = vld [vmem:[%s731 + $0x5d8] sm:$0xff]
        %v973 = vld [vmem:[%s731 + $0x5e0] sm:$0xff]
        %v974 = vld [vmem:[%s731 + $0x5e8] sm:$0xff]
        %v975 = vld [vmem:[%s731 + $0x5f0] sm:$0xff]
        %v976 = vld [vmem:[%s731 + $0x5f8] sm:$0xff]
        %v977 = vld [vmem:[%s731 + $0x600] sm:$0xff]
        %v978 = vld [vmem:[%s731 + $0x608] sm:$0xff]
        %v979 = vld [vmem:[%s731 + $0x610] sm:$0xff]
        %v980 = vld [vmem:[%s731 + $0x618] sm:$0xff]
        %v981 = vld [vmem:[%s731 + $0x620] sm:$0xff]
        %v982 = vld [vmem:[%s731 + $0x628] sm:$0xff]
        %v983 = vld [vmem:[%s731 + $0x630] sm:$0xff]
        %v984 = vld [vmem:[%s731 + $0x638] sm:$0xff]
        %v985 = vld [vmem:[%s731 + $0x640] sm:$0xff]
        %v986 = vld [vmem:[%s731 + $0x648] sm:$0xff]
        %v987 = vld [vmem:[%s731 + $0x650] sm:$0xff]
        %v988 = vld [vmem:[%s731 + $0x658] sm:$0xff]
        %v989 = vld [vmem:[%s731 + $0x660] sm:$0xff]
        %v990 = vld [vmem:[%s731 + $0x668] sm:$0xff]
        %v991 = vld [vmem:[%s731 + $0x670] sm:$0xff]
        %v992 = vld [vmem:[%s731 + $0x678] sm:$0xff]
        %v993 = vld [vmem:[%s731 + $0x680] sm:$0xff]
        %v994 = vld [vmem:[%s731 + $0x688] sm:$0xff]
        %v995 = vld [vmem:[%s731 + $0x690] sm:$0xff]
        %v996 = vld [vmem:[%s731 + $0x698] sm:$0xff]
        %v997 = vld [vmem:[%s731 + $0x6a0] sm:$0xff]
        %v998 = vld [vmem:[%s731 + $0x6a8] sm:$0xff]
        %v999 = vld [vmem:[%s731 + $0x6b0] sm:$0xff]
        %v1000 = vld [vmem:[%s731 + $0x6b8] sm:$0xff]
        %v1001 = vld [vmem:[%s731 + $0x6c0] sm:$0xff]
        %v1002 = vld [vmem:[%s731 + $0x6c8] sm:$0xff]
        %v1003 = vld [vmem:[%s731 + $0x6d0] sm:$0xff]
        %v1004 = vld [vmem:[%s731 + $0x6d8] sm:$0xff]
        %v1005 = vld [vmem:[%s731 + $0x6e0] sm:$0xff]
        %v1006 = vld [vmem:[%s731 + $0x6e8] sm:$0xff]
        %v1007 = vld [vmem:[%s731 + $0x6f0] sm:$0xff]
        %v1008 = vld [vmem:[%s731 + $0x6f8] sm:$0xff]
        %v1009 = vld [vmem:[%s731 + $0x700] sm:$0xff]
        %v1010 = vld [vmem:[%s731 + $0x708] sm:$0xff]
        %v1011 = vld [vmem:[%s731 + $0x710] sm:$0xff]
        %v1012 = vld [vmem:[%s731 + $0x718] sm:$0xff]
        %v1013 = vld [vmem:[%s731 + $0x720] sm:$0xff]
        %v1014 = vld [vmem:[%s731 + $0x728] sm:$0xff]
        %v1015 = vld [vmem:[%s731 + $0x730] sm:$0xff]
        %v1016 = vld [vmem:[%s731 + $0x738] sm:$0xff]
        %v1017 = vld [vmem:[%s731 + $0x740] sm:$0xff]
        %v1018 = vld [vmem:[%s731 + $0x748] sm:$0xff]
        %v1019 = vld [vmem:[%s731 + $0x750] sm:$0xff]
        %v1020 = vld [vmem:[%s731 + $0x758] sm:$0xff]
        %v1021 = vld [vmem:[%s731 + $0x760] sm:$0xff]
        %v1022 = vld [vmem:[%s731 + $0x768] sm:$0xff]
        %v1023 = vld [vmem:[%s731 + $0x770] sm:$0xff]
        %v1024 = vld [vmem:[%s731 + $0x778] sm:$0xff]
        %v1025 = vld [vmem:[%s731 + $0x780] sm:$0xff]
        %v1026 = vld [vmem:[%s731 + $0x788] sm:$0xff]
        %v1027 = vld [vmem:[%s731 + $0x790] sm:$0xff]
        %v1028 = vld [vmem:[%s731 + $0x798] sm:$0xff]
        %v1029 = vld [vmem:[%s731 + $0x7a0] sm:$0xff]
        %v1030 = vld [vmem:[%s731 + $0x7a8] sm:$0xff]
        %v1031 = vld [vmem:[%s731 + $0x7b0] sm:$0xff]
        %v1032 = vld [vmem:[%s731 + $0x7b8] sm:$0xff]
        %v1033 = vld [vmem:[%s731 + $0x7c0] sm:$0xff]
        %v1034 = vld [vmem:[%s731 + $0x7c8] sm:$0xff]
        %v1035 = vld [vmem:[%s731 + $0x7d0] sm:$0xff]
        %v1036 = vld [vmem:[%s731 + $0x7d8] sm:$0xff]
        %v1037 = vld [vmem:[%s731 + $0x7e0] sm:$0xff]
        %v1038 = vld [vmem:[%s731 + $0x7e8] sm:$0xff]
        %v1039 = vld [vmem:[%s731 + $0x7f0] sm:$0xff]
        %v1040 = vld [vmem:[%s731 + $0x7f8] sm:$0xff]
        %v1057 = vcombine.high %v769, %v769
        %v1059 = vunpack.c.l.s4 1966171168
        %v1060 = vunpack.c.0.s8 %v1059
        %v1061 = vlaneseq
        %v1062 = vshrl.u32 %v1061, 7
        %v1063 = vsub.s32 %v1060, %v1062
        %v1064 = vrot.slane %v769, %v1063
        %v1066 = vunpack.c.l.s4 1966171168
        %v1067 = vunpack.c.0.s8 %v1066
        %v1068 = vlaneseq
        %v1069 = vshrl.u32 %v1068, 7
        %v1070 = vsub.s32 %v1067, %v1069
        %v1071 = vrot.slane %v1057, %v1070
        %v1072 = vcombine.high %v1064, %v1064
        %v1073 = vcombine.high %v1071, %v1071
        %v1075 = vunpack.c.l.s4 1966171168
        %v1076 = vunpack.c.0.s8 %v1075
        %v1077 = vlaneseq
        %v1078 = vshrl.u32 %v1077, 7
        %v1079 = vsub.s32 %v1076, %v1078
        %v1080 = vrot.slane %v1064, %v1079
        %v1082 = vunpack.c.l.s4 1966171168
        %v1083 = vunpack.c.0.s8 %v1082
        %v1084 = vlaneseq
        %v1085 = vshrl.u32 %v1084, 7
        %v1086 = vsub.s32 %v1083, %v1085
        %v1087 = vrot.slane %v1071, %v1086
        %v1089 = vunpack.c.l.s4 1966171168
        %v1090 = vunpack.c.0.s8 %v1089
        %v1091 = vlaneseq
        %v1092 = vshrl.u32 %v1091, 7
        %v1093 = vsub.s32 %v1090, %v1092
        %v1094 = vrot.slane %v1072, %v1093
        %v1096 = vunpack.c.l.s4 1966171168
        %v1097 = vunpack.c.0.s8 %v1096
        %v1098 = vlaneseq
        %v1099 = vshrl.u32 %v1098, 7
        %v1100 = vsub.s32 %v1097, %v1099
        %v1101 = vrot.slane %v1073, %v1100
        %v1102 = vcombine.high %v1080, %v1080
        %v1103 = vcombine.high %v1087, %v1087
        %v1104 = vcombine.high %v1094, %v1094
        %v1105 = vcombine.high %v1101, %v1101
        %v1106 = vcombine.high %v770, %v770
        %v1108 = vunpack.c.l.s4 1966171168
        %v1109 = vunpack.c.0.s8 %v1108
        %v1110 = vlaneseq
        %v1111 = vshrl.u32 %v1110, 7
        %v1112 = vsub.s32 %v1109, %v1111
        %v1113 = vrot.slane %v770, %v1112
        %v1115 = vunpack.c.l.s4 1966171168
        %v1116 = vunpack.c.0.s8 %v1115
        %v1117 = vlaneseq
        %v1118 = vshrl.u32 %v1117, 7
        %v1119 = vsub.s32 %v1116, %v1118
        %v1120 = vrot.slane %v1106, %v1119
        %v1121 = vcombine.high %v1113, %v1113
        %v1122 = vcombine.high %v1120, %v1120
        %v1124 = vunpack.c.l.s4 1966171168
        %v1125 = vunpack.c.0.s8 %v1124
        %v1126 = vlaneseq
        %v1127 = vshrl.u32 %v1126, 7
        %v1128 = vsub.s32 %v1125, %v1127
        %v1129 = vrot.slane %v1113, %v1128
        %v1131 = vunpack.c.l.s4 1966171168
        %v1132 = vunpack.c.0.s8 %v1131
        %v1133 = vlaneseq
        %v1134 = vshrl.u32 %v1133, 7
        %v1135 = vsub.s32 %v1132, %v1134
        %v1136 = vrot.slane %v1120, %v1135
        %v1138 = vunpack.c.l.s4 1966171168
        %v1139 = vunpack.c.0.s8 %v1138
        %v1140 = vlaneseq
        %v1141 = vshrl.u32 %v1140, 7
        %v1142 = vsub.s32 %v1139, %v1141
        %v1143 = vrot.slane %v1121, %v1142
        %v1145 = vunpack.c.l.s4 1966171168
        %v1146 = vunpack.c.0.s8 %v1145
        %v1147 = vlaneseq
        %v1148 = vshrl.u32 %v1147, 7
        %v1149 = vsub.s32 %v1146, %v1148
        %v1150 = vrot.slane %v1122, %v1149
        %v1151 = vcombine.high %v1129, %v1129
        %v1152 = vcombine.high %v1136, %v1136
        %v1153 = vcombine.high %v1143, %v1143
        %v1154 = vcombine.high %v1150, %v1150
        %v1155 = vcombine.high %v771, %v771
        %v1157 = vunpack.c.l.s4 1966171168
        %v1158 = vunpack.c.0.s8 %v1157
        %v1159 = vlaneseq
        %v1160 = vshrl.u32 %v1159, 7
        %v1161 = vsub.s32 %v1158, %v1160
        %v1162 = vrot.slane %v771, %v1161
        %v1164 = vunpack.c.l.s4 1966171168
        %v1165 = vunpack.c.0.s8 %v1164
        %v1166 = vlaneseq
        %v1167 = vshrl.u32 %v1166, 7
        %v1168 = vsub.s32 %v1165, %v1167
        %v1169 = vrot.slane %v1155, %v1168
        %v1170 = vcombine.high %v1162, %v1162
        %v1171 = vcombine.high %v1169, %v1169
        %v1173 = vunpack.c.l.s4 1966171168
        %v1174 = vunpack.c.0.s8 %v1173
        %v1175 = vlaneseq
        %v1176 = vshrl.u32 %v1175, 7
        %v1177 = vsub.s32 %v1174, %v1176
        %v1178 = vrot.slane %v1162, %v1177
        %v1180 = vunpack.c.l.s4 1966171168
        %v1181 = vunpack.c.0.s8 %v1180
        %v1182 = vlaneseq
        %v1183 = vshrl.u32 %v1182, 7
        %v1184 = vsub.s32 %v1181, %v1183
        %v1185 = vrot.slane %v1169, %v1184
        %v1187 = vunpack.c.l.s4 1966171168
        %v1188 = vunpack.c.0.s8 %v1187
        %v1189 = vlaneseq
        %v1190 = vshrl.u32 %v1189, 7
        %v1191 = vsub.s32 %v1188, %v1190
        %v1192 = vrot.slane %v1170, %v1191
        %v1194 = vunpack.c.l.s4 1966171168
        %v1195 = vunpack.c.0.s8 %v1194
        %v1196 = vlaneseq
        %v1197 = vshrl.u32 %v1196, 7
        %v1198 = vsub.s32 %v1195, %v1197
        %v1199 = vrot.slane %v1171, %v1198
        %v1200 = vcombine.high %v1178, %v1178
        %v1201 = vcombine.high %v1185, %v1185
        %v1202 = vcombine.high %v1192, %v1192
        %v1203 = vcombine.high %v1199, %v1199
        %v1204 = vcombine.high %v772, %v772
        %v1206 = vunpack.c.l.s4 1966171168
        %v1207 = vunpack.c.0.s8 %v1206
        %v1208 = vlaneseq
        %v1209 = vshrl.u32 %v1208, 7
        %v1210 = vsub.s32 %v1207, %v1209
        %v1211 = vrot.slane %v772, %v1210
        %v1213 = vunpack.c.l.s4 1966171168
        %v1214 = vunpack.c.0.s8 %v1213
        %v1215 = vlaneseq
        %v1216 = vshrl.u32 %v1215, 7
        %v1217 = vsub.s32 %v1214, %v1216
        %v1218 = vrot.slane %v1204, %v1217
        %v1219 = vcombine.high %v1211, %v1211
        %v1220 = vcombine.high %v1218, %v1218
        %v1222 = vunpack.c.l.s4 1966171168
        %v1223 = vunpack.c.0.s8 %v1222
        %v1224 = vlaneseq
        %v1225 = vshrl.u32 %v1224, 7
        %v1226 = vsub.s32 %v1223, %v1225
        %v1227 = vrot.slane %v1211, %v1226
        %v1229 = vunpack.c.l.s4 1966171168
        %v1230 = vunpack.c.0.s8 %v1229
        %v1231 = vlaneseq
        %v1232 = vshrl.u32 %v1231, 7
        %v1233 = vsub.s32 %v1230, %v1232
        %v1234 = vrot.slane %v1218, %v1233
        %v1236 = vunpack.c.l.s4 1966171168
        %v1237 = vunpack.c.0.s8 %v1236
        %v1238 = vlaneseq
        %v1239 = vshrl.u32 %v1238, 7
        %v1240 = vsub.s32 %v1237, %v1239
        %v1241 = vrot.slane %v1219, %v1240
        %v1243 = vunpack.c.l.s4 1966171168
        %v1244 = vunpack.c.0.s8 %v1243
        %v1245 = vlaneseq
        %v1246 = vshrl.u32 %v1245, 7
        %v1247 = vsub.s32 %v1244, %v1246
        %v1248 = vrot.slane %v1220, %v1247
        %v1249 = vcombine.high %v1227, %v1227
        %v1250 = vcombine.high %v1234, %v1234
        %v1251 = vcombine.high %v1241, %v1241
        %v1252 = vcombine.high %v1248, %v1248
        %v1253 = vcombine.high %v773, %v773
        %v1255 = vunpack.c.l.s4 1966171168
        %v1256 = vunpack.c.0.s8 %v1255
        %v1257 = vlaneseq
        %v1258 = vshrl.u32 %v1257, 7
        %v1259 = vsub.s32 %v1256, %v1258
        %v1260 = vrot.slane %v773, %v1259
        %v1262 = vunpack.c.l.s4 1966171168
        %v1263 = vunpack.c.0.s8 %v1262
        %v1264 = vlaneseq
        %v1265 = vshrl.u32 %v1264, 7
        %v1266 = vsub.s32 %v1263, %v1265
        %v1267 = vrot.slane %v1253, %v1266
        %v1268 = vcombine.high %v1260, %v1260
        %v1269 = vcombine.high %v1267, %v1267
        %v1271 = vunpack.c.l.s4 1966171168
        %v1272 = vunpack.c.0.s8 %v1271
        %v1273 = vlaneseq
        %v1274 = vshrl.u32 %v1273, 7
        %v1275 = vsub.s32 %v1272, %v1274
        %v1276 = vrot.slane %v1260, %v1275
        %v1278 = vunpack.c.l.s4 1966171168
        %v1279 = vunpack.c.0.s8 %v1278
        %v1280 = vlaneseq
        %v1281 = vshrl.u32 %v1280, 7
        %v1282 = vsub.s32 %v1279, %v1281
        %v1283 = vrot.slane %v1267, %v1282
        %v1285 = vunpack.c.l.s4 1966171168
        %v1286 = vunpack.c.0.s8 %v1285
        %v1287 = vlaneseq
        %v1288 = vshrl.u32 %v1287, 7
        %v1289 = vsub.s32 %v1286, %v1288
        %v1290 = vrot.slane %v1268, %v1289
        %v1292 = vunpack.c.l.s4 1966171168
        %v1293 = vunpack.c.0.s8 %v1292
        %v1294 = vlaneseq
        %v1295 = vshrl.u32 %v1294, 7
        %v1296 = vsub.s32 %v1293, %v1295
        %v1297 = vrot.slane %v1269, %v1296
        %v1298 = vcombine.high %v1276, %v1276
        %v1299 = vcombine.high %v1283, %v1283
        %v1300 = vcombine.high %v1290, %v1290
        %v1301 = vcombine.high %v1297, %v1297
        %v1302 = vcombine.high %v774, %v774
        %v1304 = vunpack.c.l.s4 1966171168
        %v1305 = vunpack.c.0.s8 %v1304
        %v1306 = vlaneseq
        %v1307 = vshrl.u32 %v1306, 7
        %v1308 = vsub.s32 %v1305, %v1307
        %v1309 = vrot.slane %v774, %v1308
        %v1311 = vunpack.c.l.s4 1966171168
        %v1312 = vunpack.c.0.s8 %v1311
        %v1313 = vlaneseq
        %v1314 = vshrl.u32 %v1313, 7
        %v1315 = vsub.s32 %v1312, %v1314
        %v1316 = vrot.slane %v1302, %v1315
        %v1317 = vcombine.high %v1309, %v1309
        %v1318 = vcombine.high %v1316, %v1316
        %v1320 = vunpack.c.l.s4 1966171168
        %v1321 = vunpack.c.0.s8 %v1320
        %v1322 = vlaneseq
        %v1323 = vshrl.u32 %v1322, 7
        %v1324 = vsub.s32 %v1321, %v1323
        %v1325 = vrot.slane %v1309, %v1324
        %v1327 = vunpack.c.l.s4 1966171168
        %v1328 = vunpack.c.0.s8 %v1327
        %v1329 = vlaneseq
        %v1330 = vshrl.u32 %v1329, 7
        %v1331 = vsub.s32 %v1328, %v1330
        %v1332 = vrot.slane %v1316, %v1331
        %v1334 = vunpack.c.l.s4 1966171168
        %v1335 = vunpack.c.0.s8 %v1334
        %v1336 = vlaneseq
        %v1337 = vshrl.u32 %v1336, 7
        %v1338 = vsub.s32 %v1335, %v1337
        %v1339 = vrot.slane %v1317, %v1338
        %v1341 = vunpack.c.l.s4 1966171168
        %v1342 = vunpack.c.0.s8 %v1341
        %v1343 = vlaneseq
        %v1344 = vshrl.u32 %v1343, 7
        %v1345 = vsub.s32 %v1342, %v1344
        %v1346 = vrot.slane %v1318, %v1345
        %v1347 = vcombine.high %v1325, %v1325
        %v1348 = vcombine.high %v1332, %v1332
        %v1349 = vcombine.high %v1339, %v1339
        %v1350 = vcombine.high %v1346, %v1346
        %v1351 = vcombine.high %v775, %v775
        %v1353 = vunpack.c.l.s4 1966171168
        %v1354 = vunpack.c.0.s8 %v1353
        %v1355 = vlaneseq
        %v1356 = vshrl.u32 %v1355, 7
        %v1357 = vsub.s32 %v1354, %v1356
        %v1358 = vrot.slane %v775, %v1357
        %v1360 = vunpack.c.l.s4 1966171168
        %v1361 = vunpack.c.0.s8 %v1360
        %v1362 = vlaneseq
        %v1363 = vshrl.u32 %v1362, 7
        %v1364 = vsub.s32 %v1361, %v1363
        %v1365 = vrot.slane %v1351, %v1364
        %v1366 = vcombine.high %v1358, %v1358
        %v1367 = vcombine.high %v1365, %v1365
        %v1369 = vunpack.c.l.s4 1966171168
        %v1370 = vunpack.c.0.s8 %v1369
        %v1371 = vlaneseq
        %v1372 = vshrl.u32 %v1371, 7
        %v1373 = vsub.s32 %v1370, %v1372
        %v1374 = vrot.slane %v1358, %v1373
        %v1376 = vunpack.c.l.s4 1966171168
        %v1377 = vunpack.c.0.s8 %v1376
        %v1378 = vlaneseq
        %v1379 = vshrl.u32 %v1378, 7
        %v1380 = vsub.s32 %v1377, %v1379
        %v1381 = vrot.slane %v1365, %v1380
        %v1383 = vunpack.c.l.s4 1966171168
        %v1384 = vunpack.c.0.s8 %v1383
        %v1385 = vlaneseq
        %v1386 = vshrl.u32 %v1385, 7
        %v1387 = vsub.s32 %v1384, %v1386
        %v1388 = vrot.slane %v1366, %v1387
        %v1390 = vunpack.c.l.s4 1966171168
        %v1391 = vunpack.c.0.s8 %v1390
        %v1392 = vlaneseq
        %v1393 = vshrl.u32 %v1392, 7
        %v1394 = vsub.s32 %v1391, %v1393
        %v1395 = vrot.slane %v1367, %v1394
        %v1396 = vcombine.high %v1374, %v1374
        %v1397 = vcombine.high %v1381, %v1381
        %v1398 = vcombine.high %v1388, %v1388
        %v1399 = vcombine.high %v1395, %v1395
        %v1400 = vcombine.high %v776, %v776
        %v1402 = vunpack.c.l.s4 1966171168
        %v1403 = vunpack.c.0.s8 %v1402
        %v1404 = vlaneseq
        %v1405 = vshrl.u32 %v1404, 7
        %v1406 = vsub.s32 %v1403, %v1405
        %v1407 = vrot.slane %v776, %v1406
        %v1409 = vunpack.c.l.s4 1966171168
        %v1410 = vunpack.c.0.s8 %v1409
        %v1411 = vlaneseq
        %v1412 = vshrl.u32 %v1411, 7
        %v1413 = vsub.s32 %v1410, %v1412
        %v1414 = vrot.slane %v1400, %v1413
        %v1415 = vcombine.high %v1407, %v1407
        %v1416 = vcombine.high %v1414, %v1414
        %v1418 = vunpack.c.l.s4 1966171168
        %v1419 = vunpack.c.0.s8 %v1418
        %v1420 = vlaneseq
        %v1421 = vshrl.u32 %v1420, 7
        %v1422 = vsub.s32 %v1419, %v1421
        %v1423 = vrot.slane %v1407, %v1422
        %v1425 = vunpack.c.l.s4 1966171168
        %v1426 = vunpack.c.0.s8 %v1425
        %v1427 = vlaneseq
        %v1428 = vshrl.u32 %v1427, 7
        %v1429 = vsub.s32 %v1426, %v1428
        %v1430 = vrot.slane %v1414, %v1429
        %v1432 = vunpack.c.l.s4 1966171168
        %v1433 = vunpack.c.0.s8 %v1432
        %v1434 = vlaneseq
        %v1435 = vshrl.u32 %v1434, 7
        %v1436 = vsub.s32 %v1433, %v1435
        %v1437 = vrot.slane %v1415, %v1436
        %v1439 = vunpack.c.l.s4 1966171168
        %v1440 = vunpack.c.0.s8 %v1439
        %v1441 = vlaneseq
        %v1442 = vshrl.u32 %v1441, 7
        %v1443 = vsub.s32 %v1440, %v1442
        %v1444 = vrot.slane %v1416, %v1443
        %v1445 = vcombine.high %v1423, %v1423
        %v1446 = vcombine.high %v1430, %v1430
        %v1447 = vcombine.high %v1437, %v1437
        %v1448 = vcombine.high %v1444, %v1444
        %v1449 = vcombine.high %v777, %v777
        %v1451 = vunpack.c.l.s4 1966171168
        %v1452 = vunpack.c.0.s8 %v1451
        %v1453 = vlaneseq
        %v1454 = vshrl.u32 %v1453, 7
        %v1455 = vsub.s32 %v1452, %v1454
        %v1456 = vrot.slane %v777, %v1455
        %v1458 = vunpack.c.l.s4 1966171168
        %v1459 = vunpack.c.0.s8 %v1458
        %v1460 = vlaneseq
        %v1461 = vshrl.u32 %v1460, 7
        %v1462 = vsub.s32 %v1459, %v1461
        %v1463 = vrot.slane %v1449, %v1462
        %v1464 = vcombine.high %v1456, %v1456
        %v1465 = vcombine.high %v1463, %v1463
        %v1467 = vunpack.c.l.s4 1966171168
        %v1468 = vunpack.c.0.s8 %v1467
        %v1469 = vlaneseq
        %v1470 = vshrl.u32 %v1469, 7
        %v1471 = vsub.s32 %v1468, %v1470
        %v1472 = vrot.slane %v1456, %v1471
        %v1474 = vunpack.c.l.s4 1966171168
        %v1475 = vunpack.c.0.s8 %v1474
        %v1476 = vlaneseq
        %v1477 = vshrl.u32 %v1476, 7
        %v1478 = vsub.s32 %v1475, %v1477
        %v1479 = vrot.slane %v1463, %v1478
        %v1481 = vunpack.c.l.s4 1966171168
        %v1482 = vunpack.c.0.s8 %v1481
        %v1483 = vlaneseq
        %v1484 = vshrl.u32 %v1483, 7
        %v1485 = vsub.s32 %v1482, %v1484
        %v1486 = vrot.slane %v1464, %v1485
        %v1488 = vunpack.c.l.s4 1966171168
        %v1489 = vunpack.c.0.s8 %v1488
        %v1490 = vlaneseq
        %v1491 = vshrl.u32 %v1490, 7
        %v1492 = vsub.s32 %v1489, %v1491
        %v1493 = vrot.slane %v1465, %v1492
        %v1494 = vcombine.high %v1472, %v1472
        %v1495 = vcombine.high %v1479, %v1479
        %v1496 = vcombine.high %v1486, %v1486
        %v1497 = vcombine.high %v1493, %v1493
        %v1498 = vcombine.high %v778, %v778
        %v1500 = vunpack.c.l.s4 1966171168
        %v1501 = vunpack.c.0.s8 %v1500
        %v1502 = vlaneseq
        %v1503 = vshrl.u32 %v1502, 7
        %v1504 = vsub.s32 %v1501, %v1503
        %v1505 = vrot.slane %v778, %v1504
        %v1507 = vunpack.c.l.s4 1966171168
        %v1508 = vunpack.c.0.s8 %v1507
        %v1509 = vlaneseq
        %v1510 = vshrl.u32 %v1509, 7
        %v1511 = vsub.s32 %v1508, %v1510
        %v1512 = vrot.slane %v1498, %v1511
        %v1513 = vcombine.high %v1505, %v1505
        %v1514 = vcombine.high %v1512, %v1512
        %v1516 = vunpack.c.l.s4 1966171168
        %v1517 = vunpack.c.0.s8 %v1516
        %v1518 = vlaneseq
        %v1519 = vshrl.u32 %v1518, 7
        %v1520 = vsub.s32 %v1517, %v1519
        %v1521 = vrot.slane %v1505, %v1520
        %v1523 = vunpack.c.l.s4 1966171168
        %v1524 = vunpack.c.0.s8 %v1523
        %v1525 = vlaneseq
        %v1526 = vshrl.u32 %v1525, 7
        %v1527 = vsub.s32 %v1524, %v1526
        %v1528 = vrot.slane %v1512, %v1527
        %v1530 = vunpack.c.l.s4 1966171168
        %v1531 = vunpack.c.0.s8 %v1530
        %v1532 = vlaneseq
        %v1533 = vshrl.u32 %v1532, 7
        %v1534 = vsub.s32 %v1531, %v1533
        %v1535 = vrot.slane %v1513, %v1534
        %v1537 = vunpack.c.l.s4 1966171168
        %v1538 = vunpack.c.0.s8 %v1537
        %v1539 = vlaneseq
        %v1540 = vshrl.u32 %v1539, 7
        %v1541 = vsub.s32 %v1538, %v1540
        %v1542 = vrot.slane %v1514, %v1541
        %v1543 = vcombine.high %v1521, %v1521
        %v1544 = vcombine.high %v1528, %v1528
        %v1545 = vcombine.high %v1535, %v1535
        %v1546 = vcombine.high %v1542, %v1542
        %v1547 = vcombine.high %v779, %v779
        %v1549 = vunpack.c.l.s4 1966171168
        %v1550 = vunpack.c.0.s8 %v1549
        %v1551 = vlaneseq
        %v1552 = vshrl.u32 %v1551, 7
        %v1553 = vsub.s32 %v1550, %v1552
        %v1554 = vrot.slane %v779, %v1553
        %v1556 = vunpack.c.l.s4 1966171168
        %v1557 = vunpack.c.0.s8 %v1556
        %v1558 = vlaneseq
        %v1559 = vshrl.u32 %v1558, 7
        %v1560 = vsub.s32 %v1557, %v1559
        %v1561 = vrot.slane %v1547, %v1560
        %v1562 = vcombine.high %v1554, %v1554
        %v1563 = vcombine.high %v1561, %v1561
        %v1565 = vunpack.c.l.s4 1966171168
        %v1566 = vunpack.c.0.s8 %v1565
        %v1567 = vlaneseq
        %v1568 = vshrl.u32 %v1567, 7
        %v1569 = vsub.s32 %v1566, %v1568
        %v1570 = vrot.slane %v1554, %v1569
        %v1572 = vunpack.c.l.s4 1966171168
        %v1573 = vunpack.c.0.s8 %v1572
        %v1574 = vlaneseq
        %v1575 = vshrl.u32 %v1574, 7
        %v1576 = vsub.s32 %v1573, %v1575
        %v1577 = vrot.slane %v1561, %v1576
        %v1579 = vunpack.c.l.s4 1966171168
        %v1580 = vunpack.c.0.s8 %v1579
        %v1581 = vlaneseq
        %v1582 = vshrl.u32 %v1581, 7
        %v1583 = vsub.s32 %v1580, %v1582
        %v1584 = vrot.slane %v1562, %v1583
        %v1586 = vunpack.c.l.s4 1966171168
        %v1587 = vunpack.c.0.s8 %v1586
        %v1588 = vlaneseq
        %v1589 = vshrl.u32 %v1588, 7
        %v1590 = vsub.s32 %v1587, %v1589
        %v1591 = vrot.slane %v1563, %v1590
        %v1592 = vcombine.high %v1570, %v1570
        %v1593 = vcombine.high %v1577, %v1577
        %v1594 = vcombine.high %v1584, %v1584
        %v1595 = vcombine.high %v1591, %v1591
        %v1596 = vcombine.high %v780, %v780
        %v1598 = vunpack.c.l.s4 1966171168
        %v1599 = vunpack.c.0.s8 %v1598
        %v1600 = vlaneseq
        %v1601 = vshrl.u32 %v1600, 7
        %v1602 = vsub.s32 %v1599, %v1601
        %v1603 = vrot.slane %v780, %v1602
        %v1605 = vunpack.c.l.s4 1966171168
        %v1606 = vunpack.c.0.s8 %v1605
        %v1607 = vlaneseq
        %v1608 = vshrl.u32 %v1607, 7
        %v1609 = vsub.s32 %v1606, %v1608
        %v1610 = vrot.slane %v1596, %v1609
        %v1611 = vcombine.high %v1603, %v1603
        %v1612 = vcombine.high %v1610, %v1610
        %v1614 = vunpack.c.l.s4 1966171168
        %v1615 = vunpack.c.0.s8 %v1614
        %v1616 = vlaneseq
        %v1617 = vshrl.u32 %v1616, 7
        %v1618 = vsub.s32 %v1615, %v1617
        %v1619 = vrot.slane %v1603, %v1618
        %v1621 = vunpack.c.l.s4 1966171168
        %v1622 = vunpack.c.0.s8 %v1621
        %v1623 = vlaneseq
        %v1624 = vshrl.u32 %v1623, 7
        %v1625 = vsub.s32 %v1622, %v1624
        %v1626 = vrot.slane %v1610, %v1625
        %v1628 = vunpack.c.l.s4 1966171168
        %v1629 = vunpack.c.0.s8 %v1628
        %v1630 = vlaneseq
        %v1631 = vshrl.u32 %v1630, 7
        %v1632 = vsub.s32 %v1629, %v1631
        %v1633 = vrot.slane %v1611, %v1632
        %v1635 = vunpack.c.l.s4 1966171168
        %v1636 = vunpack.c.0.s8 %v1635
        %v1637 = vlaneseq
        %v1638 = vshrl.u32 %v1637, 7
        %v1639 = vsub.s32 %v1636, %v1638
        %v1640 = vrot.slane %v1612, %v1639
        %v1641 = vcombine.high %v1619, %v1619
        %v1642 = vcombine.high %v1626, %v1626
        %v1643 = vcombine.high %v1633, %v1633
        %v1644 = vcombine.high %v1640, %v1640
        %v1645 = vcombine.high %v781, %v781
        %v1647 = vunpack.c.l.s4 1966171168
        %v1648 = vunpack.c.0.s8 %v1647
        %v1649 = vlaneseq
        %v1650 = vshrl.u32 %v1649, 7
        %v1651 = vsub.s32 %v1648, %v1650
        %v1652 = vrot.slane %v781, %v1651
        %v1654 = vunpack.c.l.s4 1966171168
        %v1655 = vunpack.c.0.s8 %v1654
        %v1656 = vlaneseq
        %v1657 = vshrl.u32 %v1656, 7
        %v1658 = vsub.s32 %v1655, %v1657
        %v1659 = vrot.slane %v1645, %v1658
        %v1660 = vcombine.high %v1652, %v1652
        %v1661 = vcombine.high %v1659, %v1659
        %v1663 = vunpack.c.l.s4 1966171168
        %v1664 = vunpack.c.0.s8 %v1663
        %v1665 = vlaneseq
        %v1666 = vshrl.u32 %v1665, 7
        %v1667 = vsub.s32 %v1664, %v1666
        %v1668 = vrot.slane %v1652, %v1667
        %v1670 = vunpack.c.l.s4 1966171168
        %v1671 = vunpack.c.0.s8 %v1670
        %v1672 = vlaneseq
        %v1673 = vshrl.u32 %v1672, 7
        %v1674 = vsub.s32 %v1671, %v1673
        %v1675 = vrot.slane %v1659, %v1674
        %v1677 = vunpack.c.l.s4 1966171168
        %v1678 = vunpack.c.0.s8 %v1677
        %v1679 = vlaneseq
        %v1680 = vshrl.u32 %v1679, 7
        %v1681 = vsub.s32 %v1678, %v1680
        %v1682 = vrot.slane %v1660, %v1681
        %v1684 = vunpack.c.l.s4 1966171168
        %v1685 = vunpack.c.0.s8 %v1684
        %v1686 = vlaneseq
        %v1687 = vshrl.u32 %v1686, 7
        %v1688 = vsub.s32 %v1685, %v1687
        %v1689 = vrot.slane %v1661, %v1688
        %v1690 = vcombine.high %v1668, %v1668
        %v1691 = vcombine.high %v1675, %v1675
        %v1692 = vcombine.high %v1682, %v1682
        %v1693 = vcombine.high %v1689, %v1689
        %v1694 = vcombine.high %v782, %v782
        %v1696 = vunpack.c.l.s4 1966171168
        %v1697 = vunpack.c.0.s8 %v1696
        %v1698 = vlaneseq
        %v1699 = vshrl.u32 %v1698, 7
        %v1700 = vsub.s32 %v1697, %v1699
        %v1701 = vrot.slane %v782, %v1700
        %v1703 = vunpack.c.l.s4 1966171168
        %v1704 = vunpack.c.0.s8 %v1703
        %v1705 = vlaneseq
        %v1706 = vshrl.u32 %v1705, 7
        %v1707 = vsub.s32 %v1704, %v1706
        %v1708 = vrot.slane %v1694, %v1707
        %v1709 = vcombine.high %v1701, %v1701
        %v1710 = vcombine.high %v1708, %v1708
        %v1712 = vunpack.c.l.s4 1966171168
        %v1713 = vunpack.c.0.s8 %v1712
        %v1714 = vlaneseq
        %v1715 = vshrl.u32 %v1714, 7
        %v1716 = vsub.s32 %v1713, %v1715
        %v1717 = vrot.slane %v1701, %v1716
        %v1719 = vunpack.c.l.s4 1966171168
        %v1720 = vunpack.c.0.s8 %v1719
        %v1721 = vlaneseq
        %v1722 = vshrl.u32 %v1721, 7
        %v1723 = vsub.s32 %v1720, %v1722
        %v1724 = vrot.slane %v1708, %v1723
        %v1726 = vunpack.c.l.s4 1966171168
        %v1727 = vunpack.c.0.s8 %v1726
        %v1728 = vlaneseq
        %v1729 = vshrl.u32 %v1728, 7
        %v1730 = vsub.s32 %v1727, %v1729
        %v1731 = vrot.slane %v1709, %v1730
        %v1733 = vunpack.c.l.s4 1966171168
        %v1734 = vunpack.c.0.s8 %v1733
        %v1735 = vlaneseq
        %v1736 = vshrl.u32 %v1735, 7
        %v1737 = vsub.s32 %v1734, %v1736
        %v1738 = vrot.slane %v1710, %v1737
        %v1739 = vcombine.high %v1717, %v1717
        %v1740 = vcombine.high %v1724, %v1724
        %v1741 = vcombine.high %v1731, %v1731
        %v1742 = vcombine.high %v1738, %v1738
        %v1743 = vcombine.high %v783, %v783
        %v1745 = vunpack.c.l.s4 1966171168
        %v1746 = vunpack.c.0.s8 %v1745
        %v1747 = vlaneseq
        %v1748 = vshrl.u32 %v1747, 7
        %v1749 = vsub.s32 %v1746, %v1748
        %v1750 = vrot.slane %v783, %v1749
        %v1752 = vunpack.c.l.s4 1966171168
        %v1753 = vunpack.c.0.s8 %v1752
        %v1754 = vlaneseq
        %v1755 = vshrl.u32 %v1754, 7
        %v1756 = vsub.s32 %v1753, %v1755
        %v1757 = vrot.slane %v1743, %v1756
        %v1758 = vcombine.high %v1750, %v1750
        %v1759 = vcombine.high %v1757, %v1757
        %v1761 = vunpack.c.l.s4 1966171168
        %v1762 = vunpack.c.0.s8 %v1761
        %v1763 = vlaneseq
        %v1764 = vshrl.u32 %v1763, 7
        %v1765 = vsub.s32 %v1762, %v1764
        %v1766 = vrot.slane %v1750, %v1765
        %v1768 = vunpack.c.l.s4 1966171168
        %v1769 = vunpack.c.0.s8 %v1768
        %v1770 = vlaneseq
        %v1771 = vshrl.u32 %v1770, 7
        %v1772 = vsub.s32 %v1769, %v1771
        %v1773 = vrot.slane %v1757, %v1772
        %v1775 = vunpack.c.l.s4 1966171168
        %v1776 = vunpack.c.0.s8 %v1775
        %v1777 = vlaneseq
        %v1778 = vshrl.u32 %v1777, 7
        %v1779 = vsub.s32 %v1776, %v1778
        %v1780 = vrot.slane %v1758, %v1779
        %v1782 = vunpack.c.l.s4 1966171168
        %v1783 = vunpack.c.0.s8 %v1782
        %v1784 = vlaneseq
        %v1785 = vshrl.u32 %v1784, 7
        %v1786 = vsub.s32 %v1783, %v1785
        %v1787 = vrot.slane %v1759, %v1786
        %v1788 = vcombine.high %v1766, %v1766
        %v1789 = vcombine.high %v1773, %v1773
        %v1790 = vcombine.high %v1780, %v1780
        %v1791 = vcombine.high %v1787, %v1787
        %v1792 = vcombine.high %v784, %v784
        %v1794 = vunpack.c.l.s4 1966171168
        %v1795 = vunpack.c.0.s8 %v1794
        %v1796 = vlaneseq
        %v1797 = vshrl.u32 %v1796, 7
        %v1798 = vsub.s32 %v1795, %v1797
        %v1799 = vrot.slane %v784, %v1798
        %v1801 = vunpack.c.l.s4 1966171168
        %v1802 = vunpack.c.0.s8 %v1801
        %v1803 = vlaneseq
        %v1804 = vshrl.u32 %v1803, 7
        %v1805 = vsub.s32 %v1802, %v1804
        %v1806 = vrot.slane %v1792, %v1805
        %v1807 = vcombine.high %v1799, %v1799
        %v1808 = vcombine.high %v1806, %v1806
        %v1810 = vunpack.c.l.s4 1966171168
        %v1811 = vunpack.c.0.s8 %v1810
        %v1812 = vlaneseq
        %v1813 = vshrl.u32 %v1812, 7
        %v1814 = vsub.s32 %v1811, %v1813
        %v1815 = vrot.slane %v1799, %v1814
        %v1817 = vunpack.c.l.s4 1966171168
        %v1818 = vunpack.c.0.s8 %v1817
        %v1819 = vlaneseq
        %v1820 = vshrl.u32 %v1819, 7
        %v1821 = vsub.s32 %v1818, %v1820
        %v1822 = vrot.slane %v1806, %v1821
        %v1824 = vunpack.c.l.s4 1966171168
        %v1825 = vunpack.c.0.s8 %v1824
        %v1826 = vlaneseq
        %v1827 = vshrl.u32 %v1826, 7
        %v1828 = vsub.s32 %v1825, %v1827
        %v1829 = vrot.slane %v1807, %v1828
        %v1831 = vunpack.c.l.s4 1966171168
        %v1832 = vunpack.c.0.s8 %v1831
        %v1833 = vlaneseq
        %v1834 = vshrl.u32 %v1833, 7
        %v1835 = vsub.s32 %v1832, %v1834
        %v1836 = vrot.slane %v1808, %v1835
        %v1837 = vcombine.high %v1815, %v1815
        %v1838 = vcombine.high %v1822, %v1822
        %v1839 = vcombine.high %v1829, %v1829
        %v1840 = vcombine.high %v1836, %v1836
        %v2225 = vunpack.c.l.b16 %v785
        %v2226 = vunpack.c.h.b16 %v785
        %v2227 = vunpack.c.l.b16 %v786
        %v2228 = vunpack.c.h.b16 %v786
        %v2229 = vunpack.c.l.b16 %v787
        %v2230 = vunpack.c.h.b16 %v787
        %v2231 = vunpack.c.l.b16 %v788
        %v2232 = vunpack.c.h.b16 %v788
        %v2233 = vunpack.c.l.b16 %v789
        %v2234 = vunpack.c.h.b16 %v789
        %v2235 = vunpack.c.l.b16 %v790
        %v2236 = vunpack.c.h.b16 %v790
        %v2237 = vunpack.c.l.b16 %v791
        %v2238 = vunpack.c.h.b16 %v791
        %v2239 = vunpack.c.l.b16 %v792
        %v2240 = vunpack.c.h.b16 %v792
        %v2241 = vunpack.c.l.b16 %v793
        %v2242 = vunpack.c.h.b16 %v793
        %v2243 = vunpack.c.l.b16 %v794
        %v2244 = vunpack.c.h.b16 %v794
        %v2245 = vunpack.c.l.b16 %v795
        %v2246 = vunpack.c.h.b16 %v795
        %v2247 = vunpack.c.l.b16 %v796
        %v2248 = vunpack.c.h.b16 %v796
        %v2249 = vunpack.c.l.b16 %v797
        %v2250 = vunpack.c.h.b16 %v797
        %v2251 = vunpack.c.l.b16 %v798
        %v2252 = vunpack.c.h.b16 %v798
        %v2253 = vunpack.c.l.b16 %v799
        %v2254 = vunpack.c.h.b16 %v799
        %v2255 = vunpack.c.l.b16 %v800
        %v2256 = vunpack.c.h.b16 %v800
        %v2257 = vunpack.c.l.b16 %v801
        %v2258 = vunpack.c.h.b16 %v801
        %v2259 = vunpack.c.l.b16 %v802
        %v2260 = vunpack.c.h.b16 %v802
        %v2261 = vunpack.c.l.b16 %v803
        %v2262 = vunpack.c.h.b16 %v803
        %v2263 = vunpack.c.l.b16 %v804
        %v2264 = vunpack.c.h.b16 %v804
        %v2265 = vunpack.c.l.b16 %v805
        %v2266 = vunpack.c.h.b16 %v805
        %v2267 = vunpack.c.l.b16 %v806
        %v2268 = vunpack.c.h.b16 %v806
        %v2269 = vunpack.c.l.b16 %v807
        %v2270 = vunpack.c.h.b16 %v807
        %v2271 = vunpack.c.l.b16 %v808
        %v2272 = vunpack.c.h.b16 %v808
        %v2273 = vunpack.c.l.b16 %v809
        %v2274 = vunpack.c.h.b16 %v809
        %v2275 = vunpack.c.l.b16 %v810
        %v2276 = vunpack.c.h.b16 %v810
        %v2277 = vunpack.c.l.b16 %v811
        %v2278 = vunpack.c.h.b16 %v811
        %v2279 = vunpack.c.l.b16 %v812
        %v2280 = vunpack.c.h.b16 %v812
        %v2281 = vunpack.c.l.b16 %v813
        %v2282 = vunpack.c.h.b16 %v813
        %v2283 = vunpack.c.l.b16 %v814
        %v2284 = vunpack.c.h.b16 %v814
        %v2285 = vunpack.c.l.b16 %v815
        %v2286 = vunpack.c.h.b16 %v815
        %v2287 = vunpack.c.l.b16 %v816
        %v2288 = vunpack.c.h.b16 %v816
        %v2289 = vunpack.c.l.b16 %v817
        %v2290 = vunpack.c.h.b16 %v817
        %v2291 = vunpack.c.l.b16 %v818
        %v2292 = vunpack.c.h.b16 %v818
        %v2293 = vunpack.c.l.b16 %v819
        %v2294 = vunpack.c.h.b16 %v819
        %v2295 = vunpack.c.l.b16 %v820
        %v2296 = vunpack.c.h.b16 %v820
        %v2297 = vunpack.c.l.b16 %v821
        %v2298 = vunpack.c.h.b16 %v821
        %v2299 = vunpack.c.l.b16 %v822
        %v2300 = vunpack.c.h.b16 %v822
        %v2301 = vunpack.c.l.b16 %v823
        %v2302 = vunpack.c.h.b16 %v823
        %v2303 = vunpack.c.l.b16 %v824
        %v2304 = vunpack.c.h.b16 %v824
        %v2305 = vunpack.c.l.b16 %v825
        %v2306 = vunpack.c.h.b16 %v825
        %v2307 = vunpack.c.l.b16 %v826
        %v2308 = vunpack.c.h.b16 %v826
        %v2309 = vunpack.c.l.b16 %v827
        %v2310 = vunpack.c.h.b16 %v827
        %v2311 = vunpack.c.l.b16 %v828
        %v2312 = vunpack.c.h.b16 %v828
        %v2313 = vunpack.c.l.b16 %v829
        %v2314 = vunpack.c.h.b16 %v829
        %v2315 = vunpack.c.l.b16 %v830
        %v2316 = vunpack.c.h.b16 %v830
        %v2317 = vunpack.c.l.b16 %v831
        %v2318 = vunpack.c.h.b16 %v831
        %v2319 = vunpack.c.l.b16 %v832
        %v2320 = vunpack.c.h.b16 %v832
        %v2321 = vunpack.c.l.b16 %v833
        %v2322 = vunpack.c.h.b16 %v833
        %v2323 = vunpack.c.l.b16 %v834
        %v2324 = vunpack.c.h.b16 %v834
        %v2325 = vunpack.c.l.b16 %v835
        %v2326 = vunpack.c.h.b16 %v835
        %v2327 = vunpack.c.l.b16 %v836
        %v2328 = vunpack.c.h.b16 %v836
        %v2329 = vunpack.c.l.b16 %v837
        %v2330 = vunpack.c.h.b16 %v837
        %v2331 = vunpack.c.l.b16 %v838
        %v2332 = vunpack.c.h.b16 %v838
        %v2333 = vunpack.c.l.b16 %v839
        %v2334 = vunpack.c.h.b16 %v839
        %v2335 = vunpack.c.l.b16 %v840
        %v2336 = vunpack.c.h.b16 %v840
        %v2337 = vunpack.c.l.b16 %v841
        %v2338 = vunpack.c.h.b16 %v841
        %v2339 = vunpack.c.l.b16 %v842
        %v2340 = vunpack.c.h.b16 %v842
        %v2341 = vunpack.c.l.b16 %v843
        %v2342 = vunpack.c.h.b16 %v843
        %v2343 = vunpack.c.l.b16 %v844
        %v2344 = vunpack.c.h.b16 %v844
        %v2345 = vunpack.c.l.b16 %v845
        %v2346 = vunpack.c.h.b16 %v845
        %v2347 = vunpack.c.l.b16 %v846
        %v2348 = vunpack.c.h.b16 %v846
        %v2349 = vunpack.c.l.b16 %v847
        %v2350 = vunpack.c.h.b16 %v847
        %v2351 = vunpack.c.l.b16 %v848
        %v2352 = vunpack.c.h.b16 %v848
        %v2353 = vunpack.c.l.b16 %v849
        %v2354 = vunpack.c.h.b16 %v849
        %v2355 = vunpack.c.l.b16 %v850
        %v2356 = vunpack.c.h.b16 %v850
        %v2357 = vunpack.c.l.b16 %v851
        %v2358 = vunpack.c.h.b16 %v851
        %v2359 = vunpack.c.l.b16 %v852
        %v2360 = vunpack.c.h.b16 %v852
        %v2361 = vunpack.c.l.b16 %v853
        %v2362 = vunpack.c.h.b16 %v853
        %v2363 = vunpack.c.l.b16 %v854
        %v2364 = vunpack.c.h.b16 %v854
        %v2365 = vunpack.c.l.b16 %v855
        %v2366 = vunpack.c.h.b16 %v855
        %v2367 = vunpack.c.l.b16 %v856
        %v2368 = vunpack.c.h.b16 %v856
        %v2369 = vunpack.c.l.b16 %v857
        %v2370 = vunpack.c.h.b16 %v857
        %v2371 = vunpack.c.l.b16 %v858
        %v2372 = vunpack.c.h.b16 %v858
        %v2373 = vunpack.c.l.b16 %v859
        %v2374 = vunpack.c.h.b16 %v859
        %v2375 = vunpack.c.l.b16 %v860
        %v2376 = vunpack.c.h.b16 %v860
        %v2377 = vunpack.c.l.b16 %v861
        %v2378 = vunpack.c.h.b16 %v861
        %v2379 = vunpack.c.l.b16 %v862
        %v2380 = vunpack.c.h.b16 %v862
        %v2381 = vunpack.c.l.b16 %v863
        %v2382 = vunpack.c.h.b16 %v863
        %v2383 = vunpack.c.l.b16 %v864
        %v2384 = vunpack.c.h.b16 %v864
        %v2385 = vunpack.c.l.b16 %v865
        %v2386 = vunpack.c.h.b16 %v865
        %v2387 = vunpack.c.l.b16 %v866
        %v2388 = vunpack.c.h.b16 %v866
        %v2389 = vunpack.c.l.b16 %v867
        %v2390 = vunpack.c.h.b16 %v867
        %v2391 = vunpack.c.l.b16 %v868
        %v2392 = vunpack.c.h.b16 %v868
        %v2393 = vunpack.c.l.b16 %v869
        %v2394 = vunpack.c.h.b16 %v869
        %v2395 = vunpack.c.l.b16 %v870
        %v2396 = vunpack.c.h.b16 %v870
        %v2397 = vunpack.c.l.b16 %v871
        %v2398 = vunpack.c.h.b16 %v871
        %v2399 = vunpack.c.l.b16 %v872
        %v2400 = vunpack.c.h.b16 %v872
        %v2401 = vunpack.c.l.b16 %v873
        %v2402 = vunpack.c.h.b16 %v873
        %v2403 = vunpack.c.l.b16 %v874
        %v2404 = vunpack.c.h.b16 %v874
        %v2405 = vunpack.c.l.b16 %v875
        %v2406 = vunpack.c.h.b16 %v875
        %v2407 = vunpack.c.l.b16 %v876
        %v2408 = vunpack.c.h.b16 %v876
        %v2409 = vunpack.c.l.b16 %v877
        %v2410 = vunpack.c.h.b16 %v877
        %v2411 = vunpack.c.l.b16 %v878
        %v2412 = vunpack.c.h.b16 %v878
        %v2413 = vunpack.c.l.b16 %v879
        %v2414 = vunpack.c.h.b16 %v879
        %v2415 = vunpack.c.l.b16 %v880
        %v2416 = vunpack.c.h.b16 %v880
        %v2417 = vunpack.c.l.b16 %v881
        %v2418 = vunpack.c.h.b16 %v881
        %v2419 = vunpack.c.l.b16 %v882
        %v2420 = vunpack.c.h.b16 %v882
        %v2421 = vunpack.c.l.b16 %v883
        %v2422 = vunpack.c.h.b16 %v883
        %v2423 = vunpack.c.l.b16 %v884
        %v2424 = vunpack.c.h.b16 %v884
        %v2425 = vunpack.c.l.b16 %v885
        %v2426 = vunpack.c.h.b16 %v885
        %v2427 = vunpack.c.l.b16 %v886
        %v2428 = vunpack.c.h.b16 %v886
        %v2429 = vunpack.c.l.b16 %v887
        %v2430 = vunpack.c.h.b16 %v887
        %v2431 = vunpack.c.l.b16 %v888
        %v2432 = vunpack.c.h.b16 %v888
        %v2433 = vunpack.c.l.b16 %v889
        %v2434 = vunpack.c.h.b16 %v889
        %v2435 = vunpack.c.l.b16 %v890
        %v2436 = vunpack.c.h.b16 %v890
        %v2437 = vunpack.c.l.b16 %v891
        %v2438 = vunpack.c.h.b16 %v891
        %v2439 = vunpack.c.l.b16 %v892
        %v2440 = vunpack.c.h.b16 %v892
        %v2441 = vunpack.c.l.b16 %v893
        %v2442 = vunpack.c.h.b16 %v893
        %v2443 = vunpack.c.l.b16 %v894
        %v2444 = vunpack.c.h.b16 %v894
        %v2445 = vunpack.c.l.b16 %v895
        %v2446 = vunpack.c.h.b16 %v895
        %v2447 = vunpack.c.l.b16 %v896
        %v2448 = vunpack.c.h.b16 %v896
        %v2449 = vunpack.c.l.b16 %v897
        %v2450 = vunpack.c.h.b16 %v897
        %v2451 = vunpack.c.l.b16 %v898
        %v2452 = vunpack.c.h.b16 %v898
        %v2453 = vunpack.c.l.b16 %v899
        %v2454 = vunpack.c.h.b16 %v899
        %v2455 = vunpack.c.l.b16 %v900
        %v2456 = vunpack.c.h.b16 %v900
        %v2457 = vunpack.c.l.b16 %v901
        %v2458 = vunpack.c.h.b16 %v901
        %v2459 = vunpack.c.l.b16 %v902
        %v2460 = vunpack.c.h.b16 %v902
        %v2461 = vunpack.c.l.b16 %v903
        %v2462 = vunpack.c.h.b16 %v903
        %v2463 = vunpack.c.l.b16 %v904
        %v2464 = vunpack.c.h.b16 %v904
        %v2465 = vunpack.c.l.b16 %v905
        %v2466 = vunpack.c.h.b16 %v905
        %v2467 = vunpack.c.l.b16 %v906
        %v2468 = vunpack.c.h.b16 %v906
        %v2469 = vunpack.c.l.b16 %v907
        %v2470 = vunpack.c.h.b16 %v907
        %v2471 = vunpack.c.l.b16 %v908
        %v2472 = vunpack.c.h.b16 %v908
        %v2473 = vunpack.c.l.b16 %v909
        %v2474 = vunpack.c.h.b16 %v909
        %v2475 = vunpack.c.l.b16 %v910
        %v2476 = vunpack.c.h.b16 %v910
        %v2477 = vunpack.c.l.b16 %v911
        %v2478 = vunpack.c.h.b16 %v911
        %v2479 = vunpack.c.l.b16 %v912
        %v2480 = vunpack.c.h.b16 %v912
        %v2481 = vunpack.c.l.b16 %v913
        %v2482 = vunpack.c.h.b16 %v913
        %v2483 = vunpack.c.l.b16 %v914
        %v2484 = vunpack.c.h.b16 %v914
        %v2485 = vunpack.c.l.b16 %v915
        %v2486 = vunpack.c.h.b16 %v915
        %v2487 = vunpack.c.l.b16 %v916
        %v2488 = vunpack.c.h.b16 %v916
        %v2489 = vunpack.c.l.b16 %v917
        %v2490 = vunpack.c.h.b16 %v917
        %v2491 = vunpack.c.l.b16 %v918
        %v2492 = vunpack.c.h.b16 %v918
        %v2493 = vunpack.c.l.b16 %v919
        %v2494 = vunpack.c.h.b16 %v919
        %v2495 = vunpack.c.l.b16 %v920
        %v2496 = vunpack.c.h.b16 %v920
        %v2497 = vunpack.c.l.b16 %v921
        %v2498 = vunpack.c.h.b16 %v921
        %v2499 = vunpack.c.l.b16 %v922
        %v2500 = vunpack.c.h.b16 %v922
        %v2501 = vunpack.c.l.b16 %v923
        %v2502 = vunpack.c.h.b16 %v923
        %v2503 = vunpack.c.l.b16 %v924
        %v2504 = vunpack.c.h.b16 %v924
        %v2505 = vunpack.c.l.b16 %v925
        %v2506 = vunpack.c.h.b16 %v925
        %v2507 = vunpack.c.l.b16 %v926
        %v2508 = vunpack.c.h.b16 %v926
        %v2509 = vunpack.c.l.b16 %v927
        %v2510 = vunpack.c.h.b16 %v927
        %v2511 = vunpack.c.l.b16 %v928
        %v2512 = vunpack.c.h.b16 %v928
        %v2513 = vunpack.c.l.b16 %v929
        %v2514 = vunpack.c.h.b16 %v929
        %v2515 = vunpack.c.l.b16 %v930
        %v2516 = vunpack.c.h.b16 %v930
        %v2517 = vunpack.c.l.b16 %v931
        %v2518 = vunpack.c.h.b16 %v931
        %v2519 = vunpack.c.l.b16 %v932
        %v2520 = vunpack.c.h.b16 %v932
        %v2521 = vunpack.c.l.b16 %v933
        %v2522 = vunpack.c.h.b16 %v933
        %v2523 = vunpack.c.l.b16 %v934
        %v2524 = vunpack.c.h.b16 %v934
        %v2525 = vunpack.c.l.b16 %v935
        %v2526 = vunpack.c.h.b16 %v935
        %v2527 = vunpack.c.l.b16 %v936
        %v2528 = vunpack.c.h.b16 %v936
        %v2529 = vunpack.c.l.b16 %v937
        %v2530 = vunpack.c.h.b16 %v937
        %v2531 = vunpack.c.l.b16 %v938
        %v2532 = vunpack.c.h.b16 %v938
        %v2533 = vunpack.c.l.b16 %v939
        %v2534 = vunpack.c.h.b16 %v939
        %v2535 = vunpack.c.l.b16 %v940
        %v2536 = vunpack.c.h.b16 %v940
        %v2537 = vunpack.c.l.b16 %v941
        %v2538 = vunpack.c.h.b16 %v941
        %v2539 = vunpack.c.l.b16 %v942
        %v2540 = vunpack.c.h.b16 %v942
        %v2541 = vunpack.c.l.b16 %v943
        %v2542 = vunpack.c.h.b16 %v943
        %v2543 = vunpack.c.l.b16 %v944
        %v2544 = vunpack.c.h.b16 %v944
        %v2545 = vunpack.c.l.b16 %v945
        %v2546 = vunpack.c.h.b16 %v945
        %v2547 = vunpack.c.l.b16 %v946
        %v2548 = vunpack.c.h.b16 %v946
        %v2549 = vunpack.c.l.b16 %v947
        %v2550 = vunpack.c.h.b16 %v947
        %v2551 = vunpack.c.l.b16 %v948
        %v2552 = vunpack.c.h.b16 %v948
        %v2553 = vunpack.c.l.b16 %v949
        %v2554 = vunpack.c.h.b16 %v949
        %v2555 = vunpack.c.l.b16 %v950
        %v2556 = vunpack.c.h.b16 %v950
        %v2557 = vunpack.c.l.b16 %v951
        %v2558 = vunpack.c.h.b16 %v951
        %v2559 = vunpack.c.l.b16 %v952
        %v2560 = vunpack.c.h.b16 %v952
        %v2561 = vunpack.c.l.b16 %v953
        %v2562 = vunpack.c.h.b16 %v953
        %v2563 = vunpack.c.l.b16 %v954
        %v2564 = vunpack.c.h.b16 %v954
        %v2565 = vunpack.c.l.b16 %v955
        %v2566 = vunpack.c.h.b16 %v955
        %v2567 = vunpack.c.l.b16 %v956
        %v2568 = vunpack.c.h.b16 %v956
        %v2569 = vunpack.c.l.b16 %v957
        %v2570 = vunpack.c.h.b16 %v957
        %v2571 = vunpack.c.l.b16 %v958
        %v2572 = vunpack.c.h.b16 %v958
        %v2573 = vunpack.c.l.b16 %v959
        %v2574 = vunpack.c.h.b16 %v959
        %v2575 = vunpack.c.l.b16 %v960
        %v2576 = vunpack.c.h.b16 %v960
        %v2577 = vunpack.c.l.b16 %v961
        %v2578 = vunpack.c.h.b16 %v961
        %v2579 = vunpack.c.l.b16 %v962
        %v2580 = vunpack.c.h.b16 %v962
        %v2581 = vunpack.c.l.b16 %v963
        %v2582 = vunpack.c.h.b16 %v963
        %v2583 = vunpack.c.l.b16 %v964
        %v2584 = vunpack.c.h.b16 %v964
        %v2585 = vunpack.c.l.b16 %v965
        %v2586 = vunpack.c.h.b16 %v965
        %v2587 = vunpack.c.l.b16 %v966
        %v2588 = vunpack.c.h.b16 %v966
        %v2589 = vunpack.c.l.b16 %v967
        %v2590 = vunpack.c.h.b16 %v967
        %v2591 = vunpack.c.l.b16 %v968
        %v2592 = vunpack.c.h.b16 %v968
        %v2593 = vunpack.c.l.b16 %v969
        %v2594 = vunpack.c.h.b16 %v969
        %v2595 = vunpack.c.l.b16 %v970
        %v2596 = vunpack.c.h.b16 %v970
        %v2597 = vunpack.c.l.b16 %v971
        %v2598 = vunpack.c.h.b16 %v971
        %v2599 = vunpack.c.l.b16 %v972
        %v2600 = vunpack.c.h.b16 %v972
        %v2601 = vunpack.c.l.b16 %v973
        %v2602 = vunpack.c.h.b16 %v973
        %v2603 = vunpack.c.l.b16 %v974
        %v2604 = vunpack.c.h.b16 %v974
        %v2605 = vunpack.c.l.b16 %v975
        %v2606 = vunpack.c.h.b16 %v975
        %v2607 = vunpack.c.l.b16 %v976
        %v2608 = vunpack.c.h.b16 %v976
        %v2609 = vunpack.c.l.b16 %v977
        %v2610 = vunpack.c.h.b16 %v977
        %v2611 = vunpack.c.l.b16 %v978
        %v2612 = vunpack.c.h.b16 %v978
        %v2613 = vunpack.c.l.b16 %v979
        %v2614 = vunpack.c.h.b16 %v979
        %v2615 = vunpack.c.l.b16 %v980
        %v2616 = vunpack.c.h.b16 %v980
        %v2617 = vunpack.c.l.b16 %v981
        %v2618 = vunpack.c.h.b16 %v981
        %v2619 = vunpack.c.l.b16 %v982
        %v2620 = vunpack.c.h.b16 %v982
        %v2621 = vunpack.c.l.b16 %v983
        %v2622 = vunpack.c.h.b16 %v983
        %v2623 = vunpack.c.l.b16 %v984
        %v2624 = vunpack.c.h.b16 %v984
        %v2625 = vunpack.c.l.b16 %v985
        %v2626 = vunpack.c.h.b16 %v985
        %v2627 = vunpack.c.l.b16 %v986
        %v2628 = vunpack.c.h.b16 %v986
        %v2629 = vunpack.c.l.b16 %v987
        %v2630 = vunpack.c.h.b16 %v987
        %v2631 = vunpack.c.l.b16 %v988
        %v2632 = vunpack.c.h.b16 %v988
        %v2633 = vunpack.c.l.b16 %v989
        %v2634 = vunpack.c.h.b16 %v989
        %v2635 = vunpack.c.l.b16 %v990
        %v2636 = vunpack.c.h.b16 %v990
        %v2637 = vunpack.c.l.b16 %v991
        %v2638 = vunpack.c.h.b16 %v991
        %v2639 = vunpack.c.l.b16 %v992
        %v2640 = vunpack.c.h.b16 %v992
        %v2641 = vunpack.c.l.b16 %v993
        %v2642 = vunpack.c.h.b16 %v993
        %v2643 = vunpack.c.l.b16 %v994
        %v2644 = vunpack.c.h.b16 %v994
        %v2645 = vunpack.c.l.b16 %v995
        %v2646 = vunpack.c.h.b16 %v995
        %v2647 = vunpack.c.l.b16 %v996
        %v2648 = vunpack.c.h.b16 %v996
        %v2649 = vunpack.c.l.b16 %v997
        %v2650 = vunpack.c.h.b16 %v997
        %v2651 = vunpack.c.l.b16 %v998
        %v2652 = vunpack.c.h.b16 %v998
        %v2653 = vunpack.c.l.b16 %v999
        %v2654 = vunpack.c.h.b16 %v999
        %v2655 = vunpack.c.l.b16 %v1000
        %v2656 = vunpack.c.h.b16 %v1000
        %v2657 = vunpack.c.l.b16 %v1001
        %v2658 = vunpack.c.h.b16 %v1001
        %v2659 = vunpack.c.l.b16 %v1002
        %v2660 = vunpack.c.h.b16 %v1002
        %v2661 = vunpack.c.l.b16 %v1003
        %v2662 = vunpack.c.h.b16 %v1003
        %v2663 = vunpack.c.l.b16 %v1004
        %v2664 = vunpack.c.h.b16 %v1004
        %v2665 = vunpack.c.l.b16 %v1005
        %v2666 = vunpack.c.h.b16 %v1005
        %v2667 = vunpack.c.l.b16 %v1006
        %v2668 = vunpack.c.h.b16 %v1006
        %v2669 = vunpack.c.l.b16 %v1007
        %v2670 = vunpack.c.h.b16 %v1007
        %v2671 = vunpack.c.l.b16 %v1008
        %v2672 = vunpack.c.h.b16 %v1008
        %v2673 = vunpack.c.l.b16 %v1009
        %v2674 = vunpack.c.h.b16 %v1009
        %v2675 = vunpack.c.l.b16 %v1010
        %v2676 = vunpack.c.h.b16 %v1010
        %v2677 = vunpack.c.l.b16 %v1011
        %v2678 = vunpack.c.h.b16 %v1011
        %v2679 = vunpack.c.l.b16 %v1012
        %v2680 = vunpack.c.h.b16 %v1012
        %v2681 = vunpack.c.l.b16 %v1013
        %v2682 = vunpack.c.h.b16 %v1013
        %v2683 = vunpack.c.l.b16 %v1014
        %v2684 = vunpack.c.h.b16 %v1014
        %v2685 = vunpack.c.l.b16 %v1015
        %v2686 = vunpack.c.h.b16 %v1015
        %v2687 = vunpack.c.l.b16 %v1016
        %v2688 = vunpack.c.h.b16 %v1016
        %v2689 = vunpack.c.l.b16 %v1017
        %v2690 = vunpack.c.h.b16 %v1017
        %v2691 = vunpack.c.l.b16 %v1018
        %v2692 = vunpack.c.h.b16 %v1018
        %v2693 = vunpack.c.l.b16 %v1019
        %v2694 = vunpack.c.h.b16 %v1019
        %v2695 = vunpack.c.l.b16 %v1020
        %v2696 = vunpack.c.h.b16 %v1020
        %v2697 = vunpack.c.l.b16 %v1021
        %v2698 = vunpack.c.h.b16 %v1021
        %v2699 = vunpack.c.l.b16 %v1022
        %v2700 = vunpack.c.h.b16 %v1022
        %v2701 = vunpack.c.l.b16 %v1023
        %v2702 = vunpack.c.h.b16 %v1023
        %v2703 = vunpack.c.l.b16 %v1024
        %v2704 = vunpack.c.h.b16 %v1024
        %v2705 = vunpack.c.l.b16 %v1025
        %v2706 = vunpack.c.h.b16 %v1025
        %v2707 = vunpack.c.l.b16 %v1026
        %v2708 = vunpack.c.h.b16 %v1026
        %v2709 = vunpack.c.l.b16 %v1027
        %v2710 = vunpack.c.h.b16 %v1027
        %v2711 = vunpack.c.l.b16 %v1028
        %v2712 = vunpack.c.h.b16 %v1028
        %v2713 = vunpack.c.l.b16 %v1029
        %v2714 = vunpack.c.h.b16 %v1029
        %v2715 = vunpack.c.l.b16 %v1030
        %v2716 = vunpack.c.h.b16 %v1030
        %v2717 = vunpack.c.l.b16 %v1031
        %v2718 = vunpack.c.h.b16 %v1031
        %v2719 = vunpack.c.l.b16 %v1032
        %v2720 = vunpack.c.h.b16 %v1032
        %v2721 = vunpack.c.l.b16 %v1033
        %v2722 = vunpack.c.h.b16 %v1033
        %v2723 = vunpack.c.l.b16 %v1034
        %v2724 = vunpack.c.h.b16 %v1034
        %v2725 = vunpack.c.l.b16 %v1035
        %v2726 = vunpack.c.h.b16 %v1035
        %v2727 = vunpack.c.l.b16 %v1036
        %v2728 = vunpack.c.h.b16 %v1036
        %v2729 = vunpack.c.l.b16 %v1037
        %v2730 = vunpack.c.h.b16 %v1037
        %v2731 = vunpack.c.l.b16 %v1038
        %v2732 = vunpack.c.h.b16 %v1038
        %v2733 = vunpack.c.l.b16 %v1039
        %v2734 = vunpack.c.h.b16 %v1039
        %v2735 = vunpack.c.l.b16 %v1040
        %v2736 = vunpack.c.h.b16 %v1040
        %v2737 = vpack.c.b16 %v2353, %v2225
        %v2738 = vpack.c.b16 %v2354, %v2226
        %v2739 = vpack.c.b16 %v2355, %v2227
        %v2740 = vpack.c.b16 %v2356, %v2228
        %v2741 = vpack.c.b16 %v2357, %v2229
        %v2742 = vpack.c.b16 %v2358, %v2230
        %v2743 = vpack.c.b16 %v2359, %v2231
        %v2744 = vpack.c.b16 %v2360, %v2232
        %v2745 = vpack.c.b16 %v2361, %v2233
        %v2746 = vpack.c.b16 %v2362, %v2234
        %v2747 = vpack.c.b16 %v2363, %v2235
        %v2748 = vpack.c.b16 %v2364, %v2236
        %v2749 = vpack.c.b16 %v2365, %v2237
        %v2750 = vpack.c.b16 %v2366, %v2238
        %v2751 = vpack.c.b16 %v2367, %v2239
        %v2752 = vpack.c.b16 %v2368, %v2240
        %v2753 = vpack.c.b16 %v2369, %v2241
        %v2754 = vpack.c.b16 %v2370, %v2242
        %v2755 = vpack.c.b16 %v2371, %v2243
        %v2756 = vpack.c.b16 %v2372, %v2244
        %v2757 = vpack.c.b16 %v2373, %v2245
        %v2758 = vpack.c.b16 %v2374, %v2246
        %v2759 = vpack.c.b16 %v2375, %v2247
        %v2760 = vpack.c.b16 %v2376, %v2248
        %v2761 = vpack.c.b16 %v2377, %v2249
        %v2762 = vpack.c.b16 %v2378, %v2250
        %v2763 = vpack.c.b16 %v2379, %v2251
        %v2764 = vpack.c.b16 %v2380, %v2252
        %v2765 = vpack.c.b16 %v2381, %v2253
        %v2766 = vpack.c.b16 %v2382, %v2254
        %v2767 = vpack.c.b16 %v2383, %v2255
        %v2768 = vpack.c.b16 %v2384, %v2256
        %v2769 = vpack.c.b16 %v2385, %v2257
        %v2770 = vpack.c.b16 %v2386, %v2258
        %v2771 = vpack.c.b16 %v2387, %v2259
        %v2772 = vpack.c.b16 %v2388, %v2260
        %v2773 = vpack.c.b16 %v2389, %v2261
        %v2774 = vpack.c.b16 %v2390, %v2262
        %v2775 = vpack.c.b16 %v2391, %v2263
        %v2776 = vpack.c.b16 %v2392, %v2264
        %v2777 = vpack.c.b16 %v2393, %v2265
        %v2778 = vpack.c.b16 %v2394, %v2266
        %v2779 = vpack.c.b16 %v2395, %v2267
        %v2780 = vpack.c.b16 %v2396, %v2268
        %v2781 = vpack.c.b16 %v2397, %v2269
        %v2782 = vpack.c.b16 %v2398, %v2270
        %v2783 = vpack.c.b16 %v2399, %v2271
        %v2784 = vpack.c.b16 %v2400, %v2272
        %v2785 = vpack.c.b16 %v2401, %v2273
        %v2786 = vpack.c.b16 %v2402, %v2274
        %v2787 = vpack.c.b16 %v2403, %v2275
        %v2788 = vpack.c.b16 %v2404, %v2276
        %v2789 = vpack.c.b16 %v2405, %v2277
        %v2790 = vpack.c.b16 %v2406, %v2278
        %v2791 = vpack.c.b16 %v2407, %v2279
        %v2792 = vpack.c.b16 %v2408, %v2280
        %v2793 = vpack.c.b16 %v2409, %v2281
        %v2794 = vpack.c.b16 %v2410, %v2282
        %v2795 = vpack.c.b16 %v2411, %v2283
        %v2796 = vpack.c.b16 %v2412, %v2284
        %v2797 = vpack.c.b16 %v2413, %v2285
        %v2798 = vpack.c.b16 %v2414, %v2286
        %v2799 = vpack.c.b16 %v2415, %v2287
        %v2800 = vpack.c.b16 %v2416, %v2288
        %v2801 = vpack.c.b16 %v2417, %v2289
        %v2802 = vpack.c.b16 %v2418, %v2290
        %v2803 = vpack.c.b16 %v2419, %v2291
        %v2804 = vpack.c.b16 %v2420, %v2292
        %v2805 = vpack.c.b16 %v2421, %v2293
        %v2806 = vpack.c.b16 %v2422, %v2294
        %v2807 = vpack.c.b16 %v2423, %v2295
        %v2808 = vpack.c.b16 %v2424, %v2296
        %v2809 = vpack.c.b16 %v2425, %v2297
        %v2810 = vpack.c.b16 %v2426, %v2298
        %v2811 = vpack.c.b16 %v2427, %v2299
        %v2812 = vpack.c.b16 %v2428, %v2300
        %v2813 = vpack.c.b16 %v2429, %v2301
        %v2814 = vpack.c.b16 %v2430, %v2302
        %v2815 = vpack.c.b16 %v2431, %v2303
        %v2816 = vpack.c.b16 %v2432, %v2304
        %v2817 = vpack.c.b16 %v2433, %v2305
        %v2818 = vpack.c.b16 %v2434, %v2306
        %v2819 = vpack.c.b16 %v2435, %v2307
        %v2820 = vpack.c.b16 %v2436, %v2308
        %v2821 = vpack.c.b16 %v2437, %v2309
        %v2822 = vpack.c.b16 %v2438, %v2310
        %v2823 = vpack.c.b16 %v2439, %v2311
        %v2824 = vpack.c.b16 %v2440, %v2312
        %v2825 = vpack.c.b16 %v2441, %v2313
        %v2826 = vpack.c.b16 %v2442, %v2314
        %v2827 = vpack.c.b16 %v2443, %v2315
        %v2828 = vpack.c.b16 %v2444, %v2316
        %v2829 = vpack.c.b16 %v2445, %v2317
        %v2830 = vpack.c.b16 %v2446, %v2318
        %v2831 = vpack.c.b16 %v2447, %v2319
        %v2832 = vpack.c.b16 %v2448, %v2320
        %v2833 = vpack.c.b16 %v2449, %v2321
        %v2834 = vpack.c.b16 %v2450, %v2322
        %v2835 = vpack.c.b16 %v2451, %v2323
        %v2836 = vpack.c.b16 %v2452, %v2324
        %v2837 = vpack.c.b16 %v2453, %v2325
        %v2838 = vpack.c.b16 %v2454, %v2326
        %v2839 = vpack.c.b16 %v2455, %v2327
        %v2840 = vpack.c.b16 %v2456, %v2328
        %v2841 = vpack.c.b16 %v2457, %v2329
        %v2842 = vpack.c.b16 %v2458, %v2330
        %v2843 = vpack.c.b16 %v2459, %v2331
        %v2844 = vpack.c.b16 %v2460, %v2332
        %v2845 = vpack.c.b16 %v2461, %v2333
        %v2846 = vpack.c.b16 %v2462, %v2334
        %v2847 = vpack.c.b16 %v2463, %v2335
        %v2848 = vpack.c.b16 %v2464, %v2336
        %v2849 = vpack.c.b16 %v2465, %v2337
        %v2850 = vpack.c.b16 %v2466, %v2338
        %v2851 = vpack.c.b16 %v2467, %v2339
        %v2852 = vpack.c.b16 %v2468, %v2340
        %v2853 = vpack.c.b16 %v2469, %v2341
        %v2854 = vpack.c.b16 %v2470, %v2342
        %v2855 = vpack.c.b16 %v2471, %v2343
        %v2856 = vpack.c.b16 %v2472, %v2344
        %v2857 = vpack.c.b16 %v2473, %v2345
        %v2858 = vpack.c.b16 %v2474, %v2346
        %v2859 = vpack.c.b16 %v2475, %v2347
        %v2860 = vpack.c.b16 %v2476, %v2348
        %v2861 = vpack.c.b16 %v2477, %v2349
        %v2862 = vpack.c.b16 %v2478, %v2350
        %v2863 = vpack.c.b16 %v2479, %v2351
        %v2864 = vpack.c.b16 %v2480, %v2352
        %v2865 = vpack.c.b16 %v2609, %v2481
        %v2866 = vpack.c.b16 %v2610, %v2482
        %v2867 = vpack.c.b16 %v2611, %v2483
        %v2868 = vpack.c.b16 %v2612, %v2484
        %v2869 = vpack.c.b16 %v2613, %v2485
        %v2870 = vpack.c.b16 %v2614, %v2486
        %v2871 = vpack.c.b16 %v2615, %v2487
        %v2872 = vpack.c.b16 %v2616, %v2488
        %v2873 = vpack.c.b16 %v2617, %v2489
        %v2874 = vpack.c.b16 %v2618, %v2490
        %v2875 = vpack.c.b16 %v2619, %v2491
        %v2876 = vpack.c.b16 %v2620, %v2492
        %v2877 = vpack.c.b16 %v2621, %v2493
        %v2878 = vpack.c.b16 %v2622, %v2494
        %v2879 = vpack.c.b16 %v2623, %v2495
        %v2880 = vpack.c.b16 %v2624, %v2496
        %v2881 = vpack.c.b16 %v2625, %v2497
        %v2882 = vpack.c.b16 %v2626, %v2498
        %v2883 = vpack.c.b16 %v2627, %v2499
        %v2884 = vpack.c.b16 %v2628, %v2500
        %v2885 = vpack.c.b16 %v2629, %v2501
        %v2886 = vpack.c.b16 %v2630, %v2502
        %v2887 = vpack.c.b16 %v2631, %v2503
        %v2888 = vpack.c.b16 %v2632, %v2504
        %v2889 = vpack.c.b16 %v2633, %v2505
        %v2890 = vpack.c.b16 %v2634, %v2506
        %v2891 = vpack.c.b16 %v2635, %v2507
        %v2892 = vpack.c.b16 %v2636, %v2508
        %v2893 = vpack.c.b16 %v2637, %v2509
        %v2894 = vpack.c.b16 %v2638, %v2510
        %v2895 = vpack.c.b16 %v2639, %v2511
        %v2896 = vpack.c.b16 %v2640, %v2512
        %v2897 = vpack.c.b16 %v2641, %v2513
        %v2898 = vpack.c.b16 %v2642, %v2514
        %v2899 = vpack.c.b16 %v2643, %v2515
        %v2900 = vpack.c.b16 %v2644, %v2516
        %v2901 = vpack.c.b16 %v2645, %v2517
        %v2902 = vpack.c.b16 %v2646, %v2518
        %v2903 = vpack.c.b16 %v2647, %v2519
        %v2904 = vpack.c.b16 %v2648, %v2520
        %v2905 = vpack.c.b16 %v2649, %v2521
        %v2906 = vpack.c.b16 %v2650, %v2522
        %v2907 = vpack.c.b16 %v2651, %v2523
        %v2908 = vpack.c.b16 %v2652, %v2524
        %v2909 = vpack.c.b16 %v2653, %v2525
        %v2910 = vpack.c.b16 %v2654, %v2526
        %v2911 = vpack.c.b16 %v2655, %v2527
        %v2912 = vpack.c.b16 %v2656, %v2528
        %v2913 = vpack.c.b16 %v2657, %v2529
        %v2914 = vpack.c.b16 %v2658, %v2530
        %v2915 = vpack.c.b16 %v2659, %v2531
        %v2916 = vpack.c.b16 %v2660, %v2532
        %v2917 = vpack.c.b16 %v2661, %v2533
        %v2918 = vpack.c.b16 %v2662, %v2534
        %v2919 = vpack.c.b16 %v2663, %v2535
        %v2920 = vpack.c.b16 %v2664, %v2536
        %v2921 = vpack.c.b16 %v2665, %v2537
        %v2922 = vpack.c.b16 %v2666, %v2538
        %v2923 = vpack.c.b16 %v2667, %v2539
        %v2924 = vpack.c.b16 %v2668, %v2540
        %v2925 = vpack.c.b16 %v2669, %v2541
        %v2926 = vpack.c.b16 %v2670, %v2542
        %v2927 = vpack.c.b16 %v2671, %v2543
        %v2928 = vpack.c.b16 %v2672, %v2544
        %v2929 = vpack.c.b16 %v2673, %v2545
        %v2930 = vpack.c.b16 %v2674, %v2546
        %v2931 = vpack.c.b16 %v2675, %v2547
        %v2932 = vpack.c.b16 %v2676, %v2548
        %v2933 = vpack.c.b16 %v2677, %v2549
        %v2934 = vpack.c.b16 %v2678, %v2550
        %v2935 = vpack.c.b16 %v2679, %v2551
        %v2936 = vpack.c.b16 %v2680, %v2552
        %v2937 = vpack.c.b16 %v2681, %v2553
        %v2938 = vpack.c.b16 %v2682, %v2554
        %v2939 = vpack.c.b16 %v2683, %v2555
        %v2940 = vpack.c.b16 %v2684, %v2556
        %v2941 = vpack.c.b16 %v2685, %v2557
        %v2942 = vpack.c.b16 %v2686, %v2558
        %v2943 = vpack.c.b16 %v2687, %v2559
        %v2944 = vpack.c.b16 %v2688, %v2560
        %v2945 = vpack.c.b16 %v2689, %v2561
        %v2946 = vpack.c.b16 %v2690, %v2562
        %v2947 = vpack.c.b16 %v2691, %v2563
        %v2948 = vpack.c.b16 %v2692, %v2564
        %v2949 = vpack.c.b16 %v2693, %v2565
        %v2950 = vpack.c.b16 %v2694, %v2566
        %v2951 = vpack.c.b16 %v2695, %v2567
        %v2952 = vpack.c.b16 %v2696, %v2568
        %v2953 = vpack.c.b16 %v2697, %v2569
        %v2954 = vpack.c.b16 %v2698, %v2570
        %v2955 = vpack.c.b16 %v2699, %v2571
        %v2956 = vpack.c.b16 %v2700, %v2572
        %v2957 = vpack.c.b16 %v2701, %v2573
        %v2958 = vpack.c.b16 %v2702, %v2574
        %v2959 = vpack.c.b16 %v2703, %v2575
        %v2960 = vpack.c.b16 %v2704, %v2576
        %v2961 = vpack.c.b16 %v2705, %v2577
        %v2962 = vpack.c.b16 %v2706, %v2578
        %v2963 = vpack.c.b16 %v2707, %v2579
        %v2964 = vpack.c.b16 %v2708, %v2580
        %v2965 = vpack.c.b16 %v2709, %v2581
        %v2966 = vpack.c.b16 %v2710, %v2582
        %v2967 = vpack.c.b16 %v2711, %v2583
        %v2968 = vpack.c.b16 %v2712, %v2584
        %v2969 = vpack.c.b16 %v2713, %v2585
        %v2970 = vpack.c.b16 %v2714, %v2586
        %v2971 = vpack.c.b16 %v2715, %v2587
        %v2972 = vpack.c.b16 %v2716, %v2588
        %v2973 = vpack.c.b16 %v2717, %v2589
        %v2974 = vpack.c.b16 %v2718, %v2590
        %v2975 = vpack.c.b16 %v2719, %v2591
        %v2976 = vpack.c.b16 %v2720, %v2592
        %v2977 = vpack.c.b16 %v2721, %v2593
        %v2978 = vpack.c.b16 %v2722, %v2594
        %v2979 = vpack.c.b16 %v2723, %v2595
        %v2980 = vpack.c.b16 %v2724, %v2596
        %v2981 = vpack.c.b16 %v2725, %v2597
        %v2982 = vpack.c.b16 %v2726, %v2598
        %v2983 = vpack.c.b16 %v2727, %v2599
        %v2984 = vpack.c.b16 %v2728, %v2600
        %v2985 = vpack.c.b16 %v2729, %v2601
        %v2986 = vpack.c.b16 %v2730, %v2602
        %v2987 = vpack.c.b16 %v2731, %v2603
        %v2988 = vpack.c.b16 %v2732, %v2604
        %v2989 = vpack.c.b16 %v2733, %v2605
        %v2990 = vpack.c.b16 %v2734, %v2606
        %v2991 = vpack.c.b16 %v2735, %v2607
        %v2992 = vpack.c.b16 %v2736, %v2608
        %3249 = vmatprep.subr.bf16.mxu0 0
        %3250 = vmatpush1.bf16.xpose.msra.mxu0 0
        %3251 = vmatprep.subr.bf16.mxu0 0
        %3252 = vmatpush1.bf16.xpose.msra.mxu0 0
        %3253 = vmatprep.subr.bf16.mxu0 0
        %3254 = vmatpush1.bf16.xpose.msra.mxu0 0
        %3255 = vmatprep.subr.bf16.mxu0 0
        %3256 = vmatpush1.bf16.xpose.msra.mxu0 0
        %3257 = vmatprep.subr.bf16.mxu0 0
        %3258 = vmatpush1.bf16.xpose.msra.mxu0 0
        %3259 = vmatprep.subr.bf16.mxu0 0
        %3260 = vmatpush1.bf16.xpose.msra.mxu0 0
        %3261 = vmatprep.subr.bf16.mxu0 %v2866
        %3262 = vmatpush1.bf16.xpose.msra.mxu0 %v2865
        %3263 = vmatprep.subr.bf16.mxu0 %v2738
        %3264 = vmatpush1.bf16.xpose.msra.mxu0 %v2737
        %3265 = vmatprep.subr.bf16.mxu0 0
        %3266 = vmatpush2.bf16.xpose.msra.mxu0 0
        %3267 = vmatprep.subr.bf16.mxu0 0
        %3268 = vmatpush2.bf16.xpose.msra.mxu0 0
        %3269 = vmatprep.subr.bf16.mxu0 0
        %3270 = vmatpush2.bf16.xpose.msra.mxu0 0
        %3271 = vmatprep.subr.bf16.mxu0 0
        %3272 = vmatpush2.bf16.xpose.msra.mxu0 0
        %3273 = vmatprep.subr.bf16.mxu0 0
        %3274 = vmatpush2.bf16.xpose.msra.mxu0 0
        %3275 = vmatprep.subr.bf16.mxu0 0
        %3276 = vmatpush2.bf16.xpose.msra.mxu0 0
        %3277 = vmatprep.subr.bf16.mxu0 0
        %3278 = vmatpush2.bf16.xpose.msra.mxu0 0
        %3279 = vmatprep.subr.bf16.mxu0 0
        %3280 = vmatpush2.bf16.xpose.msra.mxu0 0
        %3281 = vmatprep.mubr.bf16.mxu0 %v1094
        %3282 = vmatmul.mubr.bf16.gmra.mxu0 %v1080
        %v3283 = vpop.f32.mrf.mxu0
        %v3284 = vadd.f32 0.0, %v3283
        %v3285 = vpop.f32.mrf.mxu0
        %v3286 = vpop.f32.mrf.mxu0
        %v3287 = vpop.f32.mrf.mxu0
        %3288 = vdwg.mxu0
        %3289 = vmatprep.subr.bf16.mxu0 0
        %3290 = vmatpush1.bf16.xpose.msra.mxu0 0
        %3291 = vmatprep.subr.bf16.mxu0 0
        %3292 = vmatpush1.bf16.xpose.msra.mxu0 0
        %3293 = vmatprep.subr.bf16.mxu0 0
        %3294 = vmatpush1.bf16.xpose.msra.mxu0 0
        %3295 = vmatprep.subr.bf16.mxu0 0
        %3296 = vmatpush1.bf16.xpose.msra.mxu0 0
        %3297 = vmatprep.subr.bf16.mxu0 0
        %3298 = vmatpush1.bf16.xpose.msra.mxu0 0
        %3299 = vmatprep.subr.bf16.mxu0 0
        %3300 = vmatpush1.bf16.xpose.msra.mxu0 0
        %3301 = vmatprep.subr.bf16.mxu0 %v2868
        %3302 = vmatpush1.bf16.xpose.msra.mxu0 %v2867
        %3303 = vmatprep.subr.bf16.mxu0 %v2740
        %3304 = vmatpush1.bf16.xpose.msra.mxu0 %v2739
        %3305 = vmatprep.subr.bf16.mxu0 0
        %3306 = vmatpush2.bf16.xpose.msra.mxu0 0
        %3307 = vmatprep.subr.bf16.mxu0 0
        %3308 = vmatpush2.bf16.xpose.msra.mxu0 0
        %3309 = vmatprep.subr.bf16.mxu0 0
        %3310 = vmatpush2.bf16.xpose.msra.mxu0 0
        %3311 = vmatprep.subr.bf16.mxu0 0
        %3312 = vmatpush2.bf16.xpose.msra.mxu0 0
        %3313 = vmatprep.subr.bf16.mxu0 0
        %3314 = vmatpush2.bf16.xpose.msra.mxu0 0
        %3315 = vmatprep.subr.bf16.mxu0 0
        %3316 = vmatpush2.bf16.xpose.msra.mxu0 0
        %3317 = vmatprep.subr.bf16.mxu0 0
        %3318 = vmatpush2.bf16.xpose.msra.mxu0 0
        %3319 = vmatprep.subr.bf16.mxu0 0
        %3320 = vmatpush2.bf16.xpose.msra.mxu0 0
        %3321 = vmatprep.mubr.bf16.mxu0 %v1104
        %3322 = vmatmul.mubr.bf16.gmra.mxu0 %v1102
        %v3323 = vpop.f32.mrf.mxu0
        %v3324 = vadd.f32 %v3284, %v3323
        %v3325 = vpop.f32.mrf.mxu0
        %v3326 = vpop.f32.mrf.mxu0
        %v3327 = vpop.f32.mrf.mxu0
        %3328 = vdwg.mxu0
        %3329 = vmatprep.subr.bf16.mxu0 0
        %3330 = vmatpush1.bf16.xpose.msra.mxu0 0
        %3331 = vmatprep.subr.bf16.mxu0 0
        %3332 = vmatpush1.bf16.xpose.msra.mxu0 0
        %3333 = vmatprep.subr.bf16.mxu0 0
        %3334 = vmatpush1.bf16.xpose.msra.mxu0 0
        %3335 = vmatprep.subr.bf16.mxu0 0
        %3336 = vmatpush1.bf16.xpose.msra.mxu0 0
        %3337 = vmatprep.subr.bf16.mxu0 0
        %3338 = vmatpush1.bf16.xpose.msra.mxu0 0
        %3339 = vmatprep.subr.bf16.mxu0 0
        %3340 = vmatpush1.bf16.xpose.msra.mxu0 0
        %3341 = vmatprep.subr.bf16.mxu0 %v2870
        %3342 = vmatpush1.bf16.xpose.msra.mxu0 %v2869
        %3343 = vmatprep.subr.bf16.mxu0 %v2742
        %3344 = vmatpush1.bf16.xpose.msra.mxu0 %v2741
        %3345 = vmatprep.subr.bf16.mxu0 0
        %3346 = vmatpush2.bf16.xpose.msra.mxu0 0
        %3347 = vmatprep.subr.bf16.mxu0 0
        %3348 = vmatpush2.bf16.xpose.msra.mxu0 0
        %3349 = vmatprep.subr.bf16.mxu0 0
        %3350 = vmatpush2.bf16.xpose.msra.mxu0 0
        %3351 = vmatprep.subr.bf16.mxu0 0
        %3352 = vmatpush2.bf16.xpose.msra.mxu0 0
        %3353 = vmatprep.subr.bf16.mxu0 0
        %3354 = vmatpush2.bf16.xpose.msra.mxu0 0
        %3355 = vmatprep.subr.bf16.mxu0 0
        %3356 = vmatpush2.bf16.xpose.msra.mxu0 0
        %3357 = vmatprep.subr.bf16.mxu0 0
        %3358 = vmatpush2.bf16.xpose.msra.mxu0 0
        %3359 = vmatprep.subr.bf16.mxu0 0
        %3360 = vmatpush2.bf16.xpose.msra.mxu0 0
        %3361 = vmatprep.mubr.bf16.mxu0 %v1101
        %3362 = vmatmul.mubr.bf16.gmra.mxu0 %v1087
        %v3363 = vpop.f32.mrf.mxu0
        %v3364 = vadd.f32 %v3324, %v3363
        %v3365 = vpop.f32.mrf.mxu0
        %v3366 = vpop.f32.mrf.mxu0
        %v3367 = vpop.f32.mrf.mxu0
        %3368 = vdwg.mxu0
        %3369 = vmatprep.subr.bf16.mxu0 0
        %3370 = vmatpush1.bf16.xpose.msra.mxu0 0
        %3371 = vmatprep.subr.bf16.mxu0 0
        %3372 = vmatpush1.bf16.xpose.msra.mxu0 0
        %3373 = vmatprep.subr.bf16.mxu0 0
        %3374 = vmatpush1.bf16.xpose.msra.mxu0 0
        %3375 = vmatprep.subr.bf16.mxu0 0
        %3376 = vmatpush1.bf16.xpose.msra.mxu0 0
        %3377 = vmatprep.subr.bf16.mxu0 0
        %3378 = vmatpush1.bf16.xpose.msra.mxu0 0
        %3379 = vmatprep.subr.bf16.mxu0 0
        %3380 = vmatpush1.bf16.xpose.msra.mxu0 0
        %3381 = vmatprep.subr.bf16.mxu0 %v2872
        %3382 = vmatpush1.bf16.xpose.msra.mxu0 %v2871
        %3383 = vmatprep.subr.bf16.mxu0 %v2744
        %3384 = vmatpush1.bf16.xpose.msra.mxu0 %v2743
        %3385 = vmatprep.subr.bf16.mxu0 0
        %3386 = vmatpush2.bf16.xpose.msra.mxu0 0
        %3387 = vmatprep.subr.bf16.mxu0 0
        %3388 = vmatpush2.bf16.xpose.msra.mxu0 0
        %3389 = vmatprep.subr.bf16.mxu0 0
        %3390 = vmatpush2.bf16.xpose.msra.mxu0 0
        %3391 = vmatprep.subr.bf16.mxu0 0
        %3392 = vmatpush2.bf16.xpose.msra.mxu0 0
        %3393 = vmatprep.subr.bf16.mxu0 0
        %3394 = vmatpush2.bf16.xpose.msra.mxu0 0
        %3395 = vmatprep.subr.bf16.mxu0 0
        %3396 = vmatpush2.bf16.xpose.msra.mxu0 0
        %3397 = vmatprep.subr.bf16.mxu0 0
        %3398 = vmatpush2.bf16.xpose.msra.mxu0 0
        %3399 = vmatprep.subr.bf16.mxu0 0
        %3400 = vmatpush2.bf16.xpose.msra.mxu0 0
        %3401 = vmatprep.mubr.bf16.mxu0 %v1105
        %3402 = vmatmul.mubr.bf16.gmra.mxu0 %v1103
        %v3403 = vpop.f32.mrf.mxu0
        %v3404 = vadd.f32 %v3364, %v3403
        %v3405 = vpop.f32.mrf.mxu0
        %v3406 = vpop.f32.mrf.mxu0
        %v3407 = vpop.f32.mrf.mxu0
        %3408 = vdwg.mxu0
        %3409 = vmatprep.subr.bf16.mxu0 0
        %3410 = vmatpush1.bf16.xpose.msra.mxu0 0
        %3411 = vmatprep.subr.bf16.mxu0 0
        %3412 = vmatpush1.bf16.xpose.msra.mxu0 0
        %3413 = vmatprep.subr.bf16.mxu0 0
        %3414 = vmatpush1.bf16.xpose.msra.mxu0 0
        %3415 = vmatprep.subr.bf16.mxu0 0
        %3416 = vmatpush1.bf16.xpose.msra.mxu0 0
        %3417 = vmatprep.subr.bf16.mxu0 0
        %3418 = vmatpush1.bf16.xpose.msra.mxu0 0
        %3419 = vmatprep.subr.bf16.mxu0 0
        %3420 = vmatpush1.bf16.xpose.msra.mxu0 0
        %3421 = vmatprep.subr.bf16.mxu0 %v2874
        %3422 = vmatpush1.bf16.xpose.msra.mxu0 %v2873
        %3423 = vmatprep.subr.bf16.mxu0 %v2746
        %3424 = vmatpush1.bf16.xpose.msra.mxu0 %v2745
        %3425 = vmatprep.subr.bf16.mxu0 0
        %3426 = vmatpush2.bf16.xpose.msra.mxu0 0
        %3427 = vmatprep.subr.bf16.mxu0 0
        %3428 = vmatpush2.bf16.xpose.msra.mxu0 0
        %3429 = vmatprep.subr.bf16.mxu0 0
        %3430 = vmatpush2.bf16.xpose.msra.mxu0 0
        %3431 = vmatprep.subr.bf16.mxu0 0
        %3432 = vmatpush2.bf16.xpose.msra.mxu0 0
        %3433 = vmatprep.subr.bf16.mxu0 0
        %3434 = vmatpush2.bf16.xpose.msra.mxu0 0
        %3435 = vmatprep.subr.bf16.mxu0 0
        %3436 = vmatpush2.bf16.xpose.msra.mxu0 0
        %3437 = vmatprep.subr.bf16.mxu0 0
        %3438 = vmatpush2.bf16.xpose.msra.mxu0 0
        %3439 = vmatprep.subr.bf16.mxu0 0
        %3440 = vmatpush2.bf16.xpose.msra.mxu0 0
        %3441 = vmatprep.mubr.bf16.mxu0 %v1143
        %3442 = vmatmul.mubr.bf16.gmra.mxu0 %v1129
        %v3443 = vpop.f32.mrf.mxu0
        %v3444 = vadd.f32 %v3404, %v3443
        %v3445 = vpop.f32.mrf.mxu0
        %v3446 = vpop.f32.mrf.mxu0
        %v3447 = vpop.f32.mrf.mxu0
        %3448 = vdwg.mxu0
        %3449 = vmatprep.subr.bf16.mxu0 0
        %3450 = vmatpush1.bf16.xpose.msra.mxu0 0
        %3451 = vmatprep.subr.bf16.mxu0 0
        %3452 = vmatpush1.bf16.xpose.msra.mxu0 0
        %3453 = vmatprep.subr.bf16.mxu0 0
        %3454 = vmatpush1.bf16.xpose.msra.mxu0 0
        %3455 = vmatprep.subr.bf16.mxu0 0
        %3456 = vmatpush1.bf16.xpose.msra.mxu0 0
        %3457 = vmatprep.subr.bf16.mxu0 0
        %3458 = vmatpush1.bf16.xpose.msra.mxu0 0
        %3459 = vmatprep.subr.bf16.mxu0 0
        %3460 = vmatpush1.bf16.xpose.msra.mxu0 0
        %3461 = vmatprep.subr.bf16.mxu0 %v2876
        %3462 = vmatpush1.bf16.xpose.msra.mxu0 %v2875
        %3463 = vmatprep.subr.bf16.mxu0 %v2748
        %3464 = vmatpush1.bf16.xpose.msra.mxu0 %v2747
        %3465 = vmatprep.subr.bf16.mxu0 0
        %3466 = vmatpush2.bf16.xpose.msra.mxu0 0
        %3467 = vmatprep.subr.bf16.mxu0 0
        %3468 = vmatpush2.bf16.xpose.msra.mxu0 0
        %3469 = vmatprep.subr.bf16.mxu0 0
        %3470 = vmatpush2.bf16.xpose.msra.mxu0 0
        %3471 = vmatprep.subr.bf16.mxu0 0
        %3472 = vmatpush2.bf16.xpose.msra.mxu0 0
        %3473 = vmatprep.subr.bf16.mxu0 0
        %3474 = vmatpush2.bf16.xpose.msra.mxu0 0
        %3475 = vmatprep.subr.bf16.mxu0 0
        %3476 = vmatpush2.bf16.xpose.msra.mxu0 0
        %3477 = vmatprep.subr.bf16.mxu0 0
        %3478 = vmatpush2.bf16.xpose.msra.mxu0 0
        %3479 = vmatprep.subr.bf16.mxu0 0
        %3480 = vmatpush2.bf16.xpose.msra.mxu0 0
        %3481 = vmatprep.mubr.bf16.mxu0 %v1153
        %3482 = vmatmul.mubr.bf16.gmra.mxu0 %v1151
        %v3483 = vpop.f32.mrf.mxu0
        %v3484 = vadd.f32 %v3444, %v3483
        %v3485 = vpop.f32.mrf.mxu0
        %v3486 = vpop.f32.mrf.mxu0
        %v3487 = vpop.f32.mrf.mxu0
        %3488 = vdwg.mxu0
        %3489 = vmatprep.subr.bf16.mxu0 0
        %3490 = vmatpush1.bf16.xpose.msra.mxu0 0
        %3491 = vmatprep.subr.bf16.mxu0 0
        %3492 = vmatpush1.bf16.xpose.msra.mxu0 0
        %3493 = vmatprep.subr.bf16.mxu0 0
        %3494 = vmatpush1.bf16.xpose.msra.mxu0 0
        %3495 = vmatprep.subr.bf16.mxu0 0
        %3496 = vmatpush1.bf16.xpose.msra.mxu0 0
        %3497 = vmatprep.subr.bf16.mxu0 0
        %3498 = vmatpush1.bf16.xpose.msra.mxu0 0
        %3499 = vmatprep.subr.bf16.mxu0 0
        %3500 = vmatpush1.bf16.xpose.msra.mxu0 0
        %3501 = vmatprep.subr.bf16.mxu0 %v2878
        %3502 = vmatpush1.bf16.xpose.msra.mxu0 %v2877
        %3503 = vmatprep.subr.bf16.mxu0 %v2750
        %3504 = vmatpush1.bf16.xpose.msra.mxu0 %v2749
        %3505 = vmatprep.subr.bf16.mxu0 0
        %3506 = vmatpush2.bf16.xpose.msra.mxu0 0
        %3507 = vmatprep.subr.bf16.mxu0 0
        %3508 = vmatpush2.bf16.xpose.msra.mxu0 0
        %3509 = vmatprep.subr.bf16.mxu0 0
        %3510 = vmatpush2.bf16.xpose.msra.mxu0 0
        %3511 = vmatprep.subr.bf16.mxu0 0
        %3512 = vmatpush2.bf16.xpose.msra.mxu0 0
        %3513 = vmatprep.subr.bf16.mxu0 0
        %3514 = vmatpush2.bf16.xpose.msra.mxu0 0
        %3515 = vmatprep.subr.bf16.mxu0 0
        %3516 = vmatpush2.bf16.xpose.msra.mxu0 0
        %3517 = vmatprep.subr.bf16.mxu0 0
        %3518 = vmatpush2.bf16.xpose.msra.mxu0 0
        %3519 = vmatprep.subr.bf16.mxu0 0
        %3520 = vmatpush2.bf16.xpose.msra.mxu0 0
        %3521 = vmatprep.mubr.bf16.mxu0 %v1150
        %3522 = vmatmul.mubr.bf16.gmra.mxu0 %v1136
        %v3523 = vpop.f32.mrf.mxu0
        %v3524 = vadd.f32 %v3484, %v3523
        %v3525 = vpop.f32.mrf.mxu0
        %v3526 = vpop.f32.mrf.mxu0
        %v3527 = vpop.f32.mrf.mxu0
        %3528 = vdwg.mxu0
        %3529 = vmatprep.subr.bf16.mxu0 0
        %3530 = vmatpush1.bf16.xpose.msra.mxu0 0
        %3531 = vmatprep.subr.bf16.mxu0 0
        %3532 = vmatpush1.bf16.xpose.msra.mxu0 0
        %3533 = vmatprep.subr.bf16.mxu0 0
        %3534 = vmatpush1.bf16.xpose.msra.mxu0 0
        %3535 = vmatprep.subr.bf16.mxu0 0
        %3536 = vmatpush1.bf16.xpose.msra.mxu0 0
        %3537 = vmatprep.subr.bf16.mxu0 0
        %3538 = vmatpush1.bf16.xpose.msra.mxu0 0
        %3539 = vmatprep.subr.bf16.mxu0 0
        %3540 = vmatpush1.bf16.xpose.msra.mxu0 0
        %3541 = vmatprep.subr.bf16.mxu0 %v2880
        %3542 = vmatpush1.bf16.xpose.msra.mxu0 %v2879
        %3543 = vmatprep.subr.bf16.mxu0 %v2752
        %3544 = vmatpush1.bf16.xpose.msra.mxu0 %v2751
        %3545 = vmatprep.subr.bf16.mxu0 0
        %3546 = vmatpush2.bf16.xpose.msra.mxu0 0
        %3547 = vmatprep.subr.bf16.mxu0 0
        %3548 = vmatpush2.bf16.xpose.msra.mxu0 0
        %3549 = vmatprep.subr.bf16.mxu0 0
        %3550 = vmatpush2.bf16.xpose.msra.mxu0 0
        %3551 = vmatprep.subr.bf16.mxu0 0
        %3552 = vmatpush2.bf16.xpose.msra.mxu0 0
        %3553 = vmatprep.subr.bf16.mxu0 0
        %3554 = vmatpush2.bf16.xpose.msra.mxu0 0
        %3555 = vmatprep.subr.bf16.mxu0 0
        %3556 = vmatpush2.bf16.xpose.msra.mxu0 0
        %3557 = vmatprep.subr.bf16.mxu0 0
        %3558 = vmatpush2.bf16.xpose.msra.mxu0 0
        %3559 = vmatprep.subr.bf16.mxu0 0
        %3560 = vmatpush2.bf16.xpose.msra.mxu0 0
        %3561 = vmatprep.mubr.bf16.mxu0 %v1154
        %3562 = vmatmul.mubr.bf16.gmra.mxu0 %v1152
        %v3563 = vpop.f32.mrf.mxu0
        %v3564 = vadd.f32 %v3524, %v3563
        %v3565 = vpop.f32.mrf.mxu0
        %v3566 = vpop.f32.mrf.mxu0
        %v3567 = vpop.f32.mrf.mxu0
        %3568 = vdwg.mxu0
        %3569 = vmatprep.subr.bf16.mxu0 0
        %3570 = vmatpush1.bf16.xpose.msra.mxu0 0
        %3571 = vmatprep.subr.bf16.mxu0 0
        %3572 = vmatpush1.bf16.xpose.msra.mxu0 0
        %3573 = vmatprep.subr.bf16.mxu0 0
        %3574 = vmatpush1.bf16.xpose.msra.mxu0 0
        %3575 = vmatprep.subr.bf16.mxu0 0
        %3576 = vmatpush1.bf16.xpose.msra.mxu0 0
        %3577 = vmatprep.subr.bf16.mxu0 0
        %3578 = vmatpush1.bf16.xpose.msra.mxu0 0
        %3579 = vmatprep.subr.bf16.mxu0 0
        %3580 = vmatpush1.bf16.xpose.msra.mxu0 0
        %3581 = vmatprep.subr.bf16.mxu0 %v2882
        %3582 = vmatpush1.bf16.xpose.msra.mxu0 %v2881
        %3583 = vmatprep.subr.bf16.mxu0 %v2754
        %3584 = vmatpush1.bf16.xpose.msra.mxu0 %v2753
        %3585 = vmatprep.subr.bf16.mxu0 0
        %3586 = vmatpush2.bf16.xpose.msra.mxu0 0
        %3587 = vmatprep.subr.bf16.mxu0 0
        %3588 = vmatpush2.bf16.xpose.msra.mxu0 0
        %3589 = vmatprep.subr.bf16.mxu0 0
        %3590 = vmatpush2.bf16.xpose.msra.mxu0 0
        %3591 = vmatprep.subr.bf16.mxu0 0
        %3592 = vmatpush2.bf16.xpose.msra.mxu0 0
        %3593 = vmatprep.subr.bf16.mxu0 0
        %3594 = vmatpush2.bf16.xpose.msra.mxu0 0
        %3595 = vmatprep.subr.bf16.mxu0 0
        %3596 = vmatpush2.bf16.xpose.msra.mxu0 0
        %3597 = vmatprep.subr.bf16.mxu0 0
        %3598 = vmatpush2.bf16.xpose.msra.mxu0 0
        %3599 = vmatprep.subr.bf16.mxu0 0
        %3600 = vmatpush2.bf16.xpose.msra.mxu0 0
        %3601 = vmatprep.mubr.bf16.mxu0 %v1192
        %3602 = vmatmul.mubr.bf16.gmra.mxu0 %v1178
        %v3603 = vpop.f32.mrf.mxu0
        %v3604 = vadd.f32 %v3564, %v3603
        %v3605 = vpop.f32.mrf.mxu0
        %v3606 = vpop.f32.mrf.mxu0
        %v3607 = vpop.f32.mrf.mxu0
        %3608 = vdwg.mxu0
        %3609 = vmatprep.subr.bf16.mxu0 0
        %3610 = vmatpush1.bf16.xpose.msra.mxu0 0
        %3611 = vmatprep.subr.bf16.mxu0 0
        %3612 = vmatpush1.bf16.xpose.msra.mxu0 0
        %3613 = vmatprep.subr.bf16.mxu0 0
        %3614 = vmatpush1.bf16.xpose.msra.mxu0 0
        %3615 = vmatprep.subr.bf16.mxu0 0
        %3616 = vmatpush1.bf16.xpose.msra.mxu0 0
        %3617 = vmatprep.subr.bf16.mxu0 0
        %3618 = vmatpush1.bf16.xpose.msra.mxu0 0
        %3619 = vmatprep.subr.bf16.mxu0 0
        %3620 = vmatpush1.bf16.xpose.msra.mxu0 0
        %3621 = vmatprep.subr.bf16.mxu0 %v2884
        %3622 = vmatpush1.bf16.xpose.msra.mxu0 %v2883
        %3623 = vmatprep.subr.bf16.mxu0 %v2756
        %3624 = vmatpush1.bf16.xpose.msra.mxu0 %v2755
        %3625 = vmatprep.subr.bf16.mxu0 0
        %3626 = vmatpush2.bf16.xpose.msra.mxu0 0
        %3627 = vmatprep.subr.bf16.mxu0 0
        %3628 = vmatpush2.bf16.xpose.msra.mxu0 0
        %3629 = vmatprep.subr.bf16.mxu0 0
        %3630 = vmatpush2.bf16.xpose.msra.mxu0 0
        %3631 = vmatprep.subr.bf16.mxu0 0
        %3632 = vmatpush2.bf16.xpose.msra.mxu0 0
        %3633 = vmatprep.subr.bf16.mxu0 0
        %3634 = vmatpush2.bf16.xpose.msra.mxu0 0
        %3635 = vmatprep.subr.bf16.mxu0 0
        %3636 = vmatpush2.bf16.xpose.msra.mxu0 0
        %3637 = vmatprep.subr.bf16.mxu0 0
        %3638 = vmatpush2.bf16.xpose.msra.mxu0 0
        %3639 = vmatprep.subr.bf16.mxu0 0
        %3640 = vmatpush2.bf16.xpose.msra.mxu0 0
        %3641 = vmatprep.mubr.bf16.mxu0 %v1202
        %3642 = vmatmul.mubr.bf16.gmra.mxu0 %v1200
        %v3643 = vpop.f32.mrf.mxu0
        %v3644 = vadd.f32 %v3604, %v3643
        %v3645 = vpop.f32.mrf.mxu0
        %v3646 = vpop.f32.mrf.mxu0
        %v3647 = vpop.f32.mrf.mxu0
        %3648 = vdwg.mxu0
        %3649 = vmatprep.subr.bf16.mxu0 0
        %3650 = vmatpush1.bf16.xpose.msra.mxu0 0
        %3651 = vmatprep.subr.bf16.mxu0 0
        %3652 = vmatpush1.bf16.xpose.msra.mxu0 0
        %3653 = vmatprep.subr.bf16.mxu0 0
        %3654 = vmatpush1.bf16.xpose.msra.mxu0 0
        %3655 = vmatprep.subr.bf16.mxu0 0
        %3656 = vmatpush1.bf16.xpose.msra.mxu0 0
        %3657 = vmatprep.subr.bf16.mxu0 0
        %3658 = vmatpush1.bf16.xpose.msra.mxu0 0
        %3659 = vmatprep.subr.bf16.mxu0 0
        %3660 = vmatpush1.bf16.xpose.msra.mxu0 0
        %3661 = vmatprep.subr.bf16.mxu0 %v2886
        %3662 = vmatpush1.bf16.xpose.msra.mxu0 %v2885
        %3663 = vmatprep.subr.bf16.mxu0 %v2758
        %3664 = vmatpush1.bf16.xpose.msra.mxu0 %v2757
        %3665 = vmatprep.subr.bf16.mxu0 0
        %3666 = vmatpush2.bf16.xpose.msra.mxu0 0
        %3667 = vmatprep.subr.bf16.mxu0 0
        %3668 = vmatpush2.bf16.xpose.msra.mxu0 0
        %3669 = vmatprep.subr.bf16.mxu0 0
        %3670 = vmatpush2.bf16.xpose.msra.mxu0 0
        %3671 = vmatprep.subr.bf16.mxu0 0
        %3672 = vmatpush2.bf16.xpose.msra.mxu0 0
        %3673 = vmatprep.subr.bf16.mxu0 0
        %3674 = vmatpush2.bf16.xpose.msra.mxu0 0
        %3675 = vmatprep.subr.bf16.mxu0 0
        %3676 = vmatpush2.bf16.xpose.msra.mxu0 0
        %3677 = vmatprep.subr.bf16.mxu0 0
        %3678 = vmatpush2.bf16.xpose.msra.mxu0 0
        %3679 = vmatprep.subr.bf16.mxu0 0
        %3680 = vmatpush2.bf16.xpose.msra.mxu0 0
        %3681 = vmatprep.mubr.bf16.mxu0 %v1199
        %3682 = vmatmul.mubr.bf16.gmra.mxu0 %v1185
        %v3683 = vpop.f32.mrf.mxu0
        %v3684 = vadd.f32 %v3644, %v3683
        %v3685 = vpop.f32.mrf.mxu0
        %v3686 = vpop.f32.mrf.mxu0
        %v3687 = vpop.f32.mrf.mxu0
        %3688 = vdwg.mxu0
        %3689 = vmatprep.subr.bf16.mxu0 0
        %3690 = vmatpush1.bf16.xpose.msra.mxu0 0
        %3691 = vmatprep.subr.bf16.mxu0 0
        %3692 = vmatpush1.bf16.xpose.msra.mxu0 0
        %3693 = vmatprep.subr.bf16.mxu0 0
        %3694 = vmatpush1.bf16.xpose.msra.mxu0 0
        %3695 = vmatprep.subr.bf16.mxu0 0
        %3696 = vmatpush1.bf16.xpose.msra.mxu0 0
        %3697 = vmatprep.subr.bf16.mxu0 0
        %3698 = vmatpush1.bf16.xpose.msra.mxu0 0
        %3699 = vmatprep.subr.bf16.mxu0 0
        %3700 = vmatpush1.bf16.xpose.msra.mxu0 0
        %3701 = vmatprep.subr.bf16.mxu0 %v2888
        %3702 = vmatpush1.bf16.xpose.msra.mxu0 %v2887
        %3703 = vmatprep.subr.bf16.mxu0 %v2760
        %3704 = vmatpush1.bf16.xpose.msra.mxu0 %v2759
        %3705 = vmatprep.subr.bf16.mxu0 0
        %3706 = vmatpush2.bf16.xpose.msra.mxu0 0
        %3707 = vmatprep.subr.bf16.mxu0 0
        %3708 = vmatpush2.bf16.xpose.msra.mxu0 0
        %3709 = vmatprep.subr.bf16.mxu0 0
        %3710 = vmatpush2.bf16.xpose.msra.mxu0 0
        %3711 = vmatprep.subr.bf16.mxu0 0
        %3712 = vmatpush2.bf16.xpose.msra.mxu0 0
        %3713 = vmatprep.subr.bf16.mxu0 0
        %3714 = vmatpush2.bf16.xpose.msra.mxu0 0
        %3715 = vmatprep.subr.bf16.mxu0 0
        %3716 = vmatpush2.bf16.xpose.msra.mxu0 0
        %3717 = vmatprep.subr.bf16.mxu0 0
        %3718 = vmatpush2.bf16.xpose.msra.mxu0 0
        %3719 = vmatprep.subr.bf16.mxu0 0
        %3720 = vmatpush2.bf16.xpose.msra.mxu0 0
        %3721 = vmatprep.mubr.bf16.mxu0 %v1203
        %3722 = vmatmul.mubr.bf16.gmra.mxu0 %v1201
        %v3723 = vpop.f32.mrf.mxu0
        %v3724 = vadd.f32 %v3684, %v3723
        %v3725 = vpop.f32.mrf.mxu0
        %v3726 = vpop.f32.mrf.mxu0
        %v3727 = vpop.f32.mrf.mxu0
        %3728 = vdwg.mxu0
        %3729 = vmatprep.subr.bf16.mxu0 0
        %3730 = vmatpush1.bf16.xpose.msra.mxu0 0
        %3731 = vmatprep.subr.bf16.mxu0 0
        %3732 = vmatpush1.bf16.xpose.msra.mxu0 0
        %3733 = vmatprep.subr.bf16.mxu0 0
        %3734 = vmatpush1.bf16.xpose.msra.mxu0 0
        %3735 = vmatprep.subr.bf16.mxu0 0
        %3736 = vmatpush1.bf16.xpose.msra.mxu0 0
        %3737 = vmatprep.subr.bf16.mxu0 0
        %3738 = vmatpush1.bf16.xpose.msra.mxu0 0
        %3739 = vmatprep.subr.bf16.mxu0 0
        %3740 = vmatpush1.bf16.xpose.msra.mxu0 0
        %3741 = vmatprep.subr.bf16.mxu0 %v2890
        %3742 = vmatpush1.bf16.xpose.msra.mxu0 %v2889
        %3743 = vmatprep.subr.bf16.mxu0 %v2762
        %3744 = vmatpush1.bf16.xpose.msra.mxu0 %v2761
        %3745 = vmatprep.subr.bf16.mxu0 0
        %3746 = vmatpush2.bf16.xpose.msra.mxu0 0
        %3747 = vmatprep.subr.bf16.mxu0 0
        %3748 = vmatpush2.bf16.xpose.msra.mxu0 0
        %3749 = vmatprep.subr.bf16.mxu0 0
        %3750 = vmatpush2.bf16.xpose.msra.mxu0 0
        %3751 = vmatprep.subr.bf16.mxu0 0
        %3752 = vmatpush2.bf16.xpose.msra.mxu0 0
        %3753 = vmatprep.subr.bf16.mxu0 0
        %3754 = vmatpush2.bf16.xpose.msra.mxu0 0
        %3755 = vmatprep.subr.bf16.mxu0 0
        %3756 = vmatpush2.bf16.xpose.msra.mxu0 0
        %3757 = vmatprep.subr.bf16.mxu0 0
        %3758 = vmatpush2.bf16.xpose.msra.mxu0 0
        %3759 = vmatprep.subr.bf16.mxu0 0
        %3760 = vmatpush2.bf16.xpose.msra.mxu0 0
        %3761 = vmatprep.mubr.bf16.mxu0 %v1241
        %3762 = vmatmul.mubr.bf16.gmra.mxu0 %v1227
        %v3763 = vpop.f32.mrf.mxu0
        %v3764 = vadd.f32 %v3724, %v3763
        %v3765 = vpop.f32.mrf.mxu0
        %v3766 = vpop.f32.mrf.mxu0
        %v3767 = vpop.f32.mrf.mxu0
        %3768 = vdwg.mxu0
        %3769 = vmatprep.subr.bf16.mxu0 0
        %3770 = vmatpush1.bf16.xpose.msra.mxu0 0
        %3771 = vmatprep.subr.bf16.mxu0 0
        %3772 = vmatpush1.bf16.xpose.msra.mxu0 0
        %3773 = vmatprep.subr.bf16.mxu0 0
        %3774 = vmatpush1.bf16.xpose.msra.mxu0 0
        %3775 = vmatprep.subr.bf16.mxu0 0
        %3776 = vmatpush1.bf16.xpose.msra.mxu0 0
        %3777 = vmatprep.subr.bf16.mxu0 0
        %3778 = vmatpush1.bf16.xpose.msra.mxu0 0
        %3779 = vmatprep.subr.bf16.mxu0 0
        %3780 = vmatpush1.bf16.xpose.msra.mxu0 0
        %3781 = vmatprep.subr.bf16.mxu0 %v2892
        %3782 = vmatpush1.bf16.xpose.msra.mxu0 %v2891
        %3783 = vmatprep.subr.bf16.mxu0 %v2764
        %3784 = vmatpush1.bf16.xpose.msra.mxu0 %v2763
        %3785 = vmatprep.subr.bf16.mxu0 0
        %3786 = vmatpush2.bf16.xpose.msra.mxu0 0
        %3787 = vmatprep.subr.bf16.mxu0 0
        %3788 = vmatpush2.bf16.xpose.msra.mxu0 0
        %3789 = vmatprep.subr.bf16.mxu0 0
        %3790 = vmatpush2.bf16.xpose.msra.mxu0 0
        %3791 = vmatprep.subr.bf16.mxu0 0
        %3792 = vmatpush2.bf16.xpose.msra.mxu0 0
        %3793 = vmatprep.subr.bf16.mxu0 0
        %3794 = vmatpush2.bf16.xpose.msra.mxu0 0
        %3795 = vmatprep.subr.bf16.mxu0 0
        %3796 = vmatpush2.bf16.xpose.msra.mxu0 0
        %3797 = vmatprep.subr.bf16.mxu0 0
        %3798 = vmatpush2.bf16.xpose.msra.mxu0 0
        %3799 = vmatprep.subr.bf16.mxu0 0
        %3800 = vmatpush2.bf16.xpose.msra.mxu0 0
        %3801 = vmatprep.mubr.bf16.mxu0 %v1251
        %3802 = vmatmul.mubr.bf16.gmra.mxu0 %v1249
        %v3803 = vpop.f32.mrf.mxu0
        %v3804 = vadd.f32 %v3764, %v3803
        %v3805 = vpop.f32.mrf.mxu0
        %v3806 = vpop.f32.mrf.mxu0
        %v3807 = vpop.f32.mrf.mxu0
        %3808 = vdwg.mxu0
        %3809 = vmatprep.subr.bf16.mxu0 0
        %3810 = vmatpush1.bf16.xpose.msra.mxu0 0
        %3811 = vmatprep.subr.bf16.mxu0 0
        %3812 = vmatpush1.bf16.xpose.msra.mxu0 0
        %3813 = vmatprep.subr.bf16.mxu0 0
        %3814 = vmatpush1.bf16.xpose.msra.mxu0 0
        %3815 = vmatprep.subr.bf16.mxu0 0
        %3816 = vmatpush1.bf16.xpose.msra.mxu0 0
        %3817 = vmatprep.subr.bf16.mxu0 0
        %3818 = vmatpush1.bf16.xpose.msra.mxu0 0
        %3819 = vmatprep.subr.bf16.mxu0 0
        %3820 = vmatpush1.bf16.xpose.msra.mxu0 0
        %3821 = vmatprep.subr.bf16.mxu0 %v2894
        %3822 = vmatpush1.bf16.xpose.msra.mxu0 %v2893
        %3823 = vmatprep.subr.bf16.mxu0 %v2766
        %3824 = vmatpush1.bf16.xpose.msra.mxu0 %v2765
        %3825 = vmatprep.subr.bf16.mxu0 0
        %3826 = vmatpush2.bf16.xpose.msra.mxu0 0
        %3827 = vmatprep.subr.bf16.mxu0 0
        %3828 = vmatpush2.bf16.xpose.msra.mxu0 0
        %3829 = vmatprep.subr.bf16.mxu0 0
        %3830 = vmatpush2.bf16.xpose.msra.mxu0 0
        %3831 = vmatprep.subr.bf16.mxu0 0
        %3832 = vmatpush2.bf16.xpose.msra.mxu0 0
        %3833 = vmatprep.subr.bf16.mxu0 0
        %3834 = vmatpush2.bf16.xpose.msra.mxu0 0
        %3835 = vmatprep.subr.bf16.mxu0 0
        %3836 = vmatpush2.bf16.xpose.msra.mxu0 0
        %3837 = vmatprep.subr.bf16.mxu0 0
        %3838 = vmatpush2.bf16.xpose.msra.mxu0 0
        %3839 = vmatprep.subr.bf16.mxu0 0
        %3840 = vmatpush2.bf16.xpose.msra.mxu0 0
        %3841 = vmatprep.mubr.bf16.mxu0 %v1248
        %3842 = vmatmul.mubr.bf16.gmra.mxu0 %v1234
        %v3843 = vpop.f32.mrf.mxu0
        %v3844 = vadd.f32 %v3804, %v3843
        %v3845 = vpop.f32.mrf.mxu0
        %v3846 = vpop.f32.mrf.mxu0
        %v3847 = vpop.f32.mrf.mxu0
        %3848 = vdwg.mxu0
        %3849 = vmatprep.subr.bf16.mxu0 0
        %3850 = vmatpush1.bf16.xpose.msra.mxu0 0
        %3851 = vmatprep.subr.bf16.mxu0 0
        %3852 = vmatpush1.bf16.xpose.msra.mxu0 0
        %3853 = vmatprep.subr.bf16.mxu0 0
        %3854 = vmatpush1.bf16.xpose.msra.mxu0 0
        %3855 = vmatprep.subr.bf16.mxu0 0
        %3856 = vmatpush1.bf16.xpose.msra.mxu0 0
        %3857 = vmatprep.subr.bf16.mxu0 0
        %3858 = vmatpush1.bf16.xpose.msra.mxu0 0
        %3859 = vmatprep.subr.bf16.mxu0 0
        %3860 = vmatpush1.bf16.xpose.msra.mxu0 0
        %3861 = vmatprep.subr.bf16.mxu0 %v2896
        %3862 = vmatpush1.bf16.xpose.msra.mxu0 %v2895
        %3863 = vmatprep.subr.bf16.mxu0 %v2768
        %3864 = vmatpush1.bf16.xpose.msra.mxu0 %v2767
        %3865 = vmatprep.subr.bf16.mxu0 0
        %3866 = vmatpush2.bf16.xpose.msra.mxu0 0
        %3867 = vmatprep.subr.bf16.mxu0 0
        %3868 = vmatpush2.bf16.xpose.msra.mxu0 0
        %3869 = vmatprep.subr.bf16.mxu0 0
        %3870 = vmatpush2.bf16.xpose.msra.mxu0 0
        %3871 = vmatprep.subr.bf16.mxu0 0
        %3872 = vmatpush2.bf16.xpose.msra.mxu0 0
        %3873 = vmatprep.subr.bf16.mxu0 0
        %3874 = vmatpush2.bf16.xpose.msra.mxu0 0
        %3875 = vmatprep.subr.bf16.mxu0 0
        %3876 = vmatpush2.bf16.xpose.msra.mxu0 0
        %3877 = vmatprep.subr.bf16.mxu0 0
        %3878 = vmatpush2.bf16.xpose.msra.mxu0 0
        %3879 = vmatprep.subr.bf16.mxu0 0
        %3880 = vmatpush2.bf16.xpose.msra.mxu0 0
        %3881 = vmatprep.mubr.bf16.mxu0 %v1252
        %3882 = vmatmul.mubr.bf16.gmra.mxu0 %v1250
        %v3883 = vpop.f32.mrf.mxu0
        %v3884 = vadd.f32 %v3844, %v3883
        %v3885 = vpop.f32.mrf.mxu0
        %v3886 = vpop.f32.mrf.mxu0
        %v3887 = vpop.f32.mrf.mxu0
        %3888 = vdwg.mxu0
        %3889 = vmatprep.subr.bf16.mxu0 0
        %3890 = vmatpush1.bf16.xpose.msra.mxu0 0
        %3891 = vmatprep.subr.bf16.mxu0 0
        %3892 = vmatpush1.bf16.xpose.msra.mxu0 0
        %3893 = vmatprep.subr.bf16.mxu0 0
        %3894 = vmatpush1.bf16.xpose.msra.mxu0 0
        %3895 = vmatprep.subr.bf16.mxu0 0
        %3896 = vmatpush1.bf16.xpose.msra.mxu0 0
        %3897 = vmatprep.subr.bf16.mxu0 0
        %3898 = vmatpush1.bf16.xpose.msra.mxu0 0
        %3899 = vmatprep.subr.bf16.mxu0 0
        %3900 = vmatpush1.bf16.xpose.msra.mxu0 0
        %3901 = vmatprep.subr.bf16.mxu0 %v2898
        %3902 = vmatpush1.bf16.xpose.msra.mxu0 %v2897
        %3903 = vmatprep.subr.bf16.mxu0 %v2770
        %3904 = vmatpush1.bf16.xpose.msra.mxu0 %v2769
        %3905 = vmatprep.subr.bf16.mxu0 0
        %3906 = vmatpush2.bf16.xpose.msra.mxu0 0
        %3907 = vmatprep.subr.bf16.mxu0 0
        %3908 = vmatpush2.bf16.xpose.msra.mxu0 0
        %3909 = vmatprep.subr.bf16.mxu0 0
        %3910 = vmatpush2.bf16.xpose.msra.mxu0 0
        %3911 = vmatprep.subr.bf16.mxu0 0
        %3912 = vmatpush2.bf16.xpose.msra.mxu0 0
        %3913 = vmatprep.subr.bf16.mxu0 0
        %3914 = vmatpush2.bf16.xpose.msra.mxu0 0
        %3915 = vmatprep.subr.bf16.mxu0 0
        %3916 = vmatpush2.bf16.xpose.msra.mxu0 0
        %3917 = vmatprep.subr.bf16.mxu0 0
        %3918 = vmatpush2.bf16.xpose.msra.mxu0 0
        %3919 = vmatprep.subr.bf16.mxu0 0
        %3920 = vmatpush2.bf16.xpose.msra.mxu0 0
        %3921 = vmatprep.mubr.bf16.mxu0 %v1290
        %3922 = vmatmul.mubr.bf16.gmra.mxu0 %v1276
        %v3923 = vpop.f32.mrf.mxu0
        %v3924 = vadd.f32 %v3884, %v3923
        %v3925 = vpop.f32.mrf.mxu0
        %v3926 = vpop.f32.mrf.mxu0
        %v3927 = vpop.f32.mrf.mxu0
        %3928 = vdwg.mxu0
        %3929 = vmatprep.subr.bf16.mxu0 0
        %3930 = vmatpush1.bf16.xpose.msra.mxu0 0
        %3931 = vmatprep.subr.bf16.mxu0 0
        %3932 = vmatpush1.bf16.xpose.msra.mxu0 0
        %3933 = vmatprep.subr.bf16.mxu0 0
        %3934 = vmatpush1.bf16.xpose.msra.mxu0 0
        %3935 = vmatprep.subr.bf16.mxu0 0
        %3936 = vmatpush1.bf16.xpose.msra.mxu0 0
        %3937 = vmatprep.subr.bf16.mxu0 0
        %3938 = vmatpush1.bf16.xpose.msra.mxu0 0
        %3939 = vmatprep.subr.bf16.mxu0 0
        %3940 = vmatpush1.bf16.xpose.msra.mxu0 0
        %3941 = vmatprep.subr.bf16.mxu0 %v2900
        %3942 = vmatpush1.bf16.xpose.msra.mxu0 %v2899
        %3943 = vmatprep.subr.bf16.mxu0 %v2772
        %3944 = vmatpush1.bf16.xpose.msra.mxu0 %v2771
        %3945 = vmatprep.subr.bf16.mxu0 0
        %3946 = vmatpush2.bf16.xpose.msra.mxu0 0
        %3947 = vmatprep.subr.bf16.mxu0 0
        %3948 = vmatpush2.bf16.xpose.msra.mxu0 0
        %3949 = vmatprep.subr.bf16.mxu0 0
        %3950 = vmatpush2.bf16.xpose.msra.mxu0 0
        %3951 = vmatprep.subr.bf16.mxu0 0
        %3952 = vmatpush2.bf16.xpose.msra.mxu0 0
        %3953 = vmatprep.subr.bf16.mxu0 0
        %3954 = vmatpush2.bf16.xpose.msra.mxu0 0
        %3955 = vmatprep.subr.bf16.mxu0 0
        %3956 = vmatpush2.bf16.xpose.msra.mxu0 0
        %3957 = vmatprep.subr.bf16.mxu0 0
        %3958 = vmatpush2.bf16.xpose.msra.mxu0 0
        %3959 = vmatprep.subr.bf16.mxu0 0
        %3960 = vmatpush2.bf16.xpose.msra.mxu0 0
        %3961 = vmatprep.mubr.bf16.mxu0 %v1300
        %3962 = vmatmul.mubr.bf16.gmra.mxu0 %v1298
        %v3963 = vpop.f32.mrf.mxu0
        %v3964 = vadd.f32 %v3924, %v3963
        %v3965 = vpop.f32.mrf.mxu0
        %v3966 = vpop.f32.mrf.mxu0
        %v3967 = vpop.f32.mrf.mxu0
        %3968 = vdwg.mxu0
        %3969 = vmatprep.subr.bf16.mxu0 0
        %3970 = vmatpush1.bf16.xpose.msra.mxu0 0
        %3971 = vmatprep.subr.bf16.mxu0 0
        %3972 = vmatpush1.bf16.xpose.msra.mxu0 0
        %3973 = vmatprep.subr.bf16.mxu0 0
        %3974 = vmatpush1.bf16.xpose.msra.mxu0 0
        %3975 = vmatprep.subr.bf16.mxu0 0
        %3976 = vmatpush1.bf16.xpose.msra.mxu0 0
        %3977 = vmatprep.subr.bf16.mxu0 0
        %3978 = vmatpush1.bf16.xpose.msra.mxu0 0
        %3979 = vmatprep.subr.bf16.mxu0 0
        %3980 = vmatpush1.bf16.xpose.msra.mxu0 0
        %3981 = vmatprep.subr.bf16.mxu0 %v2902
        %3982 = vmatpush1.bf16.xpose.msra.mxu0 %v2901
        %3983 = vmatprep.subr.bf16.mxu0 %v2774
        %3984 = vmatpush1.bf16.xpose.msra.mxu0 %v2773
        %3985 = vmatprep.subr.bf16.mxu0 0
        %3986 = vmatpush2.bf16.xpose.msra.mxu0 0
        %3987 = vmatprep.subr.bf16.mxu0 0
        %3988 = vmatpush2.bf16.xpose.msra.mxu0 0
        %3989 = vmatprep.subr.bf16.mxu0 0
        %3990 = vmatpush2.bf16.xpose.msra.mxu0 0
        %3991 = vmatprep.subr.bf16.mxu0 0
        %3992 = vmatpush2.bf16.xpose.msra.mxu0 0
        %3993 = vmatprep.subr.bf16.mxu0 0
        %3994 = vmatpush2.bf16.xpose.msra.mxu0 0
        %3995 = vmatprep.subr.bf16.mxu0 0
        %3996 = vmatpush2.bf16.xpose.msra.mxu0 0
        %3997 = vmatprep.subr.bf16.mxu0 0
        %3998 = vmatpush2.bf16.xpose.msra.mxu0 0
        %3999 = vmatprep.subr.bf16.mxu0 0
        %4000 = vmatpush2.bf16.xpose.msra.mxu0 0
        %4001 = vmatprep.mubr.bf16.mxu0 %v1297
        %4002 = vmatmul.mubr.bf16.gmra.mxu0 %v1283
        %v4003 = vpop.f32.mrf.mxu0
        %v4004 = vadd.f32 %v3964, %v4003
        %v4005 = vpop.f32.mrf.mxu0
        %v4006 = vpop.f32.mrf.mxu0
        %v4007 = vpop.f32.mrf.mxu0
        %4008 = vdwg.mxu0
        %4009 = vmatprep.subr.bf16.mxu0 0
        %4010 = vmatpush1.bf16.xpose.msra.mxu0 0
        %4011 = vmatprep.subr.bf16.mxu0 0
        %4012 = vmatpush1.bf16.xpose.msra.mxu0 0
        %4013 = vmatprep.subr.bf16.mxu0 0
        %4014 = vmatpush1.bf16.xpose.msra.mxu0 0
        %4015 = vmatprep.subr.bf16.mxu0 0
        %4016 = vmatpush1.bf16.xpose.msra.mxu0 0
        %4017 = vmatprep.subr.bf16.mxu0 0
        %4018 = vmatpush1.bf16.xpose.msra.mxu0 0
        %4019 = vmatprep.subr.bf16.mxu0 0
        %4020 = vmatpush1.bf16.xpose.msra.mxu0 0
        %4021 = vmatprep.subr.bf16.mxu0 %v2904
        %4022 = vmatpush1.bf16.xpose.msra.mxu0 %v2903
        %4023 = vmatprep.subr.bf16.mxu0 %v2776
        %4024 = vmatpush1.bf16.xpose.msra.mxu0 %v2775
        %4025 = vmatprep.subr.bf16.mxu0 0
        %4026 = vmatpush2.bf16.xpose.msra.mxu0 0
        %4027 = vmatprep.subr.bf16.mxu0 0
        %4028 = vmatpush2.bf16.xpose.msra.mxu0 0
        %4029 = vmatprep.subr.bf16.mxu0 0
        %4030 = vmatpush2.bf16.xpose.msra.mxu0 0
        %4031 = vmatprep.subr.bf16.mxu0 0
        %4032 = vmatpush2.bf16.xpose.msra.mxu0 0
        %4033 = vmatprep.subr.bf16.mxu0 0
        %4034 = vmatpush2.bf16.xpose.msra.mxu0 0
        %4035 = vmatprep.subr.bf16.mxu0 0
        %4036 = vmatpush2.bf16.xpose.msra.mxu0 0
        %4037 = vmatprep.subr.bf16.mxu0 0
        %4038 = vmatpush2.bf16.xpose.msra.mxu0 0
        %4039 = vmatprep.subr.bf16.mxu0 0
        %4040 = vmatpush2.bf16.xpose.msra.mxu0 0
        %4041 = vmatprep.mubr.bf16.mxu0 %v1301
        %4042 = vmatmul.mubr.bf16.gmra.mxu0 %v1299
        %v4043 = vpop.f32.mrf.mxu0
        %v4044 = vadd.f32 %v4004, %v4043
        %v4045 = vpop.f32.mrf.mxu0
        %v4046 = vpop.f32.mrf.mxu0
        %v4047 = vpop.f32.mrf.mxu0
        %4048 = vdwg.mxu0
        %4049 = vmatprep.subr.bf16.mxu0 0
        %4050 = vmatpush1.bf16.xpose.msra.mxu0 0
        %4051 = vmatprep.subr.bf16.mxu0 0
        %4052 = vmatpush1.bf16.xpose.msra.mxu0 0
        %4053 = vmatprep.subr.bf16.mxu0 0
        %4054 = vmatpush1.bf16.xpose.msra.mxu0 0
        %4055 = vmatprep.subr.bf16.mxu0 0
        %4056 = vmatpush1.bf16.xpose.msra.mxu0 0
        %4057 = vmatprep.subr.bf16.mxu0 0
        %4058 = vmatpush1.bf16.xpose.msra.mxu0 0
        %4059 = vmatprep.subr.bf16.mxu0 0
        %4060 = vmatpush1.bf16.xpose.msra.mxu0 0
        %4061 = vmatprep.subr.bf16.mxu0 %v2906
        %4062 = vmatpush1.bf16.xpose.msra.mxu0 %v2905
        %4063 = vmatprep.subr.bf16.mxu0 %v2778
        %4064 = vmatpush1.bf16.xpose.msra.mxu0 %v2777
        %4065 = vmatprep.subr.bf16.mxu0 0
        %4066 = vmatpush2.bf16.xpose.msra.mxu0 0
        %4067 = vmatprep.subr.bf16.mxu0 0
        %4068 = vmatpush2.bf16.xpose.msra.mxu0 0
        %4069 = vmatprep.subr.bf16.mxu0 0
        %4070 = vmatpush2.bf16.xpose.msra.mxu0 0
        %4071 = vmatprep.subr.bf16.mxu0 0
        %4072 = vmatpush2.bf16.xpose.msra.mxu0 0
        %4073 = vmatprep.subr.bf16.mxu0 0
        %4074 = vmatpush2.bf16.xpose.msra.mxu0 0
        %4075 = vmatprep.subr.bf16.mxu0 0
        %4076 = vmatpush2.bf16.xpose.msra.mxu0 0
        %4077 = vmatprep.subr.bf16.mxu0 0
        %4078 = vmatpush2.bf16.xpose.msra.mxu0 0
        %4079 = vmatprep.subr.bf16.mxu0 0
        %4080 = vmatpush2.bf16.xpose.msra.mxu0 0
        %4081 = vmatprep.mubr.bf16.mxu0 %v1339
        %4082 = vmatmul.mubr.bf16.gmra.mxu0 %v1325
        %v4083 = vpop.f32.mrf.mxu0
        %v4084 = vadd.f32 %v4044, %v4083
        %v4085 = vpop.f32.mrf.mxu0
        %v4086 = vpop.f32.mrf.mxu0
        %v4087 = vpop.f32.mrf.mxu0
        %4088 = vdwg.mxu0
        %4089 = vmatprep.subr.bf16.mxu0 0
        %4090 = vmatpush1.bf16.xpose.msra.mxu0 0
        %4091 = vmatprep.subr.bf16.mxu0 0
        %4092 = vmatpush1.bf16.xpose.msra.mxu0 0
        %4093 = vmatprep.subr.bf16.mxu0 0
        %4094 = vmatpush1.bf16.xpose.msra.mxu0 0
        %4095 = vmatprep.subr.bf16.mxu0 0
        %4096 = vmatpush1.bf16.xpose.msra.mxu0 0
        %4097 = vmatprep.subr.bf16.mxu0 0
        %4098 = vmatpush1.bf16.xpose.msra.mxu0 0
        %4099 = vmatprep.subr.bf16.mxu0 0
        %4100 = vmatpush1.bf16.xpose.msra.mxu0 0
        %4101 = vmatprep.subr.bf16.mxu0 %v2908
        %4102 = vmatpush1.bf16.xpose.msra.mxu0 %v2907
        %4103 = vmatprep.subr.bf16.mxu0 %v2780
        %4104 = vmatpush1.bf16.xpose.msra.mxu0 %v2779
        %4105 = vmatprep.subr.bf16.mxu0 0
        %4106 = vmatpush2.bf16.xpose.msra.mxu0 0
        %4107 = vmatprep.subr.bf16.mxu0 0
        %4108 = vmatpush2.bf16.xpose.msra.mxu0 0
        %4109 = vmatprep.subr.bf16.mxu0 0
        %4110 = vmatpush2.bf16.xpose.msra.mxu0 0
        %4111 = vmatprep.subr.bf16.mxu0 0
        %4112 = vmatpush2.bf16.xpose.msra.mxu0 0
        %4113 = vmatprep.subr.bf16.mxu0 0
        %4114 = vmatpush2.bf16.xpose.msra.mxu0 0
        %4115 = vmatprep.subr.bf16.mxu0 0
        %4116 = vmatpush2.bf16.xpose.msra.mxu0 0
        %4117 = vmatprep.subr.bf16.mxu0 0
        %4118 = vmatpush2.bf16.xpose.msra.mxu0 0
        %4119 = vmatprep.subr.bf16.mxu0 0
        %4120 = vmatpush2.bf16.xpose.msra.mxu0 0
        %4121 = vmatprep.mubr.bf16.mxu0 %v1349
        %4122 = vmatmul.mubr.bf16.gmra.mxu0 %v1347
        %v4123 = vpop.f32.mrf.mxu0
        %v4124 = vadd.f32 %v4084, %v4123
        %v4125 = vpop.f32.mrf.mxu0
        %v4126 = vpop.f32.mrf.mxu0
        %v4127 = vpop.f32.mrf.mxu0
        %4128 = vdwg.mxu0
        %4129 = vmatprep.subr.bf16.mxu0 0
        %4130 = vmatpush1.bf16.xpose.msra.mxu0 0
        %4131 = vmatprep.subr.bf16.mxu0 0
        %4132 = vmatpush1.bf16.xpose.msra.mxu0 0
        %4133 = vmatprep.subr.bf16.mxu0 0
        %4134 = vmatpush1.bf16.xpose.msra.mxu0 0
        %4135 = vmatprep.subr.bf16.mxu0 0
        %4136 = vmatpush1.bf16.xpose.msra.mxu0 0
        %4137 = vmatprep.subr.bf16.mxu0 0
        %4138 = vmatpush1.bf16.xpose.msra.mxu0 0
        %4139 = vmatprep.subr.bf16.mxu0 0
        %4140 = vmatpush1.bf16.xpose.msra.mxu0 0
        %4141 = vmatprep.subr.bf16.mxu0 %v2910
        %4142 = vmatpush1.bf16.xpose.msra.mxu0 %v2909
        %4143 = vmatprep.subr.bf16.mxu0 %v2782
        %4144 = vmatpush1.bf16.xpose.msra.mxu0 %v2781
        %4145 = vmatprep.subr.bf16.mxu0 0
        %4146 = vmatpush2.bf16.xpose.msra.mxu0 0
        %4147 = vmatprep.subr.bf16.mxu0 0
        %4148 = vmatpush2.bf16.xpose.msra.mxu0 0
        %4149 = vmatprep.subr.bf16.mxu0 0
        %4150 = vmatpush2.bf16.xpose.msra.mxu0 0
        %4151 = vmatprep.subr.bf16.mxu0 0
        %4152 = vmatpush2.bf16.xpose.msra.mxu0 0
        %4153 = vmatprep.subr.bf16.mxu0 0
        %4154 = vmatpush2.bf16.xpose.msra.mxu0 0
        %4155 = vmatprep.subr.bf16.mxu0 0
        %4156 = vmatpush2.bf16.xpose.msra.mxu0 0
        %4157 = vmatprep.subr.bf16.mxu0 0
        %4158 = vmatpush2.bf16.xpose.msra.mxu0 0
        %4159 = vmatprep.subr.bf16.mxu0 0
        %4160 = vmatpush2.bf16.xpose.msra.mxu0 0
        %4161 = vmatprep.mubr.bf16.mxu0 %v1346
        %4162 = vmatmul.mubr.bf16.gmra.mxu0 %v1332
        %v4163 = vpop.f32.mrf.mxu0
        %v4164 = vadd.f32 %v4124, %v4163
        %v4165 = vpop.f32.mrf.mxu0
        %v4166 = vpop.f32.mrf.mxu0
        %v4167 = vpop.f32.mrf.mxu0
        %4168 = vdwg.mxu0
        %4169 = vmatprep.subr.bf16.mxu0 0
        %4170 = vmatpush1.bf16.xpose.msra.mxu0 0
        %4171 = vmatprep.subr.bf16.mxu0 0
        %4172 = vmatpush1.bf16.xpose.msra.mxu0 0
        %4173 = vmatprep.subr.bf16.mxu0 0
        %4174 = vmatpush1.bf16.xpose.msra.mxu0 0
        %4175 = vmatprep.subr.bf16.mxu0 0
        %4176 = vmatpush1.bf16.xpose.msra.mxu0 0
        %4177 = vmatprep.subr.bf16.mxu0 0
        %4178 = vmatpush1.bf16.xpose.msra.mxu0 0
        %4179 = vmatprep.subr.bf16.mxu0 0
        %4180 = vmatpush1.bf16.xpose.msra.mxu0 0
        %4181 = vmatprep.subr.bf16.mxu0 %v2912
        %4182 = vmatpush1.bf16.xpose.msra.mxu0 %v2911
        %4183 = vmatprep.subr.bf16.mxu0 %v2784
        %4184 = vmatpush1.bf16.xpose.msra.mxu0 %v2783
        %4185 = vmatprep.subr.bf16.mxu0 0
        %4186 = vmatpush2.bf16.xpose.msra.mxu0 0
        %4187 = vmatprep.subr.bf16.mxu0 0
        %4188 = vmatpush2.bf16.xpose.msra.mxu0 0
        %4189 = vmatprep.subr.bf16.mxu0 0
        %4190 = vmatpush2.bf16.xpose.msra.mxu0 0
        %4191 = vmatprep.subr.bf16.mxu0 0
        %4192 = vmatpush2.bf16.xpose.msra.mxu0 0
        %4193 = vmatprep.subr.bf16.mxu0 0
        %4194 = vmatpush2.bf16.xpose.msra.mxu0 0
        %4195 = vmatprep.subr.bf16.mxu0 0
        %4196 = vmatpush2.bf16.xpose.msra.mxu0 0
        %4197 = vmatprep.subr.bf16.mxu0 0
        %4198 = vmatpush2.bf16.xpose.msra.mxu0 0
        %4199 = vmatprep.subr.bf16.mxu0 0
        %4200 = vmatpush2.bf16.xpose.msra.mxu0 0
        %4201 = vmatprep.mubr.bf16.mxu0 %v1350
        %4202 = vmatmul.mubr.bf16.gmra.mxu0 %v1348
        %v4203 = vpop.f32.mrf.mxu0
        %v4204 = vadd.f32 %v4164, %v4203
        %v4205 = vpop.f32.mrf.mxu0
        %v4206 = vpop.f32.mrf.mxu0
        %v4207 = vpop.f32.mrf.mxu0
        %4208 = vdwg.mxu0
        %4209 = vmatprep.subr.bf16.mxu0 0
        %4210 = vmatpush1.bf16.xpose.msra.mxu0 0
        %4211 = vmatprep.subr.bf16.mxu0 0
        %4212 = vmatpush1.bf16.xpose.msra.mxu0 0
        %4213 = vmatprep.subr.bf16.mxu0 0
        %4214 = vmatpush1.bf16.xpose.msra.mxu0 0
        %4215 = vmatprep.subr.bf16.mxu0 0
        %4216 = vmatpush1.bf16.xpose.msra.mxu0 0
        %4217 = vmatprep.subr.bf16.mxu0 0
        %4218 = vmatpush1.bf16.xpose.msra.mxu0 0
        %4219 = vmatprep.subr.bf16.mxu0 0
        %4220 = vmatpush1.bf16.xpose.msra.mxu0 0
        %4221 = vmatprep.subr.bf16.mxu0 %v2914
        %4222 = vmatpush1.bf16.xpose.msra.mxu0 %v2913
        %4223 = vmatprep.subr.bf16.mxu0 %v2786
        %4224 = vmatpush1.bf16.xpose.msra.mxu0 %v2785
        %4225 = vmatprep.subr.bf16.mxu0 0
        %4226 = vmatpush2.bf16.xpose.msra.mxu0 0
        %4227 = vmatprep.subr.bf16.mxu0 0
        %4228 = vmatpush2.bf16.xpose.msra.mxu0 0
        %4229 = vmatprep.subr.bf16.mxu0 0
        %4230 = vmatpush2.bf16.xpose.msra.mxu0 0
        %4231 = vmatprep.subr.bf16.mxu0 0
        %4232 = vmatpush2.bf16.xpose.msra.mxu0 0
        %4233 = vmatprep.subr.bf16.mxu0 0
        %4234 = vmatpush2.bf16.xpose.msra.mxu0 0
        %4235 = vmatprep.subr.bf16.mxu0 0
        %4236 = vmatpush2.bf16.xpose.msra.mxu0 0
        %4237 = vmatprep.subr.bf16.mxu0 0
        %4238 = vmatpush2.bf16.xpose.msra.mxu0 0
        %4239 = vmatprep.subr.bf16.mxu0 0
        %4240 = vmatpush2.bf16.xpose.msra.mxu0 0
        %4241 = vmatprep.mubr.bf16.mxu0 %v1388
        %4242 = vmatmul.mubr.bf16.gmra.mxu0 %v1374
        %v4243 = vpop.f32.mrf.mxu0
        %v4244 = vadd.f32 %v4204, %v4243
        %v4245 = vpop.f32.mrf.mxu0
        %v4246 = vpop.f32.mrf.mxu0
        %v4247 = vpop.f32.mrf.mxu0
        %4248 = vdwg.mxu0
        %4249 = vmatprep.subr.bf16.mxu0 0
        %4250 = vmatpush1.bf16.xpose.msra.mxu0 0
        %4251 = vmatprep.subr.bf16.mxu0 0
        %4252 = vmatpush1.bf16.xpose.msra.mxu0 0
        %4253 = vmatprep.subr.bf16.mxu0 0
        %4254 = vmatpush1.bf16.xpose.msra.mxu0 0
        %4255 = vmatprep.subr.bf16.mxu0 0
        %4256 = vmatpush1.bf16.xpose.msra.mxu0 0
        %4257 = vmatprep.subr.bf16.mxu0 0
        %4258 = vmatpush1.bf16.xpose.msra.mxu0 0
        %4259 = vmatprep.subr.bf16.mxu0 0
        %4260 = vmatpush1.bf16.xpose.msra.mxu0 0
        %4261 = vmatprep.subr.bf16.mxu0 %v2916
        %4262 = vmatpush1.bf16.xpose.msra.mxu0 %v2915
        %4263 = vmatprep.subr.bf16.mxu0 %v2788
        %4264 = vmatpush1.bf16.xpose.msra.mxu0 %v2787
        %4265 = vmatprep.subr.bf16.mxu0 0
        %4266 = vmatpush2.bf16.xpose.msra.mxu0 0
        %4267 = vmatprep.subr.bf16.mxu0 0
        %4268 = vmatpush2.bf16.xpose.msra.mxu0 0
        %4269 = vmatprep.subr.bf16.mxu0 0
        %4270 = vmatpush2.bf16.xpose.msra.mxu0 0
        %4271 = vmatprep.subr.bf16.mxu0 0
        %4272 = vmatpush2.bf16.xpose.msra.mxu0 0
        %4273 = vmatprep.subr.bf16.mxu0 0
        %4274 = vmatpush2.bf16.xpose.msra.mxu0 0
        %4275 = vmatprep.subr.bf16.mxu0 0
        %4276 = vmatpush2.bf16.xpose.msra.mxu0 0
        %4277 = vmatprep.subr.bf16.mxu0 0
        %4278 = vmatpush2.bf16.xpose.msra.mxu0 0
        %4279 = vmatprep.subr.bf16.mxu0 0
        %4280 = vmatpush2.bf16.xpose.msra.mxu0 0
        %4281 = vmatprep.mubr.bf16.mxu0 %v1398
        %4282 = vmatmul.mubr.bf16.gmra.mxu0 %v1396
        %v4283 = vpop.f32.mrf.mxu0
        %v4284 = vadd.f32 %v4244, %v4283
        %v4285 = vpop.f32.mrf.mxu0
        %v4286 = vpop.f32.mrf.mxu0
        %v4287 = vpop.f32.mrf.mxu0
        %4288 = vdwg.mxu0
        %4289 = vmatprep.subr.bf16.mxu0 0
        %4290 = vmatpush1.bf16.xpose.msra.mxu0 0
        %4291 = vmatprep.subr.bf16.mxu0 0
        %4292 = vmatpush1.bf16.xpose.msra.mxu0 0
        %4293 = vmatprep.subr.bf16.mxu0 0
        %4294 = vmatpush1.bf16.xpose.msra.mxu0 0
        %4295 = vmatprep.subr.bf16.mxu0 0
        %4296 = vmatpush1.bf16.xpose.msra.mxu0 0
        %4297 = vmatprep.subr.bf16.mxu0 0
        %4298 = vmatpush1.bf16.xpose.msra.mxu0 0
        %4299 = vmatprep.subr.bf16.mxu0 0
        %4300 = vmatpush1.bf16.xpose.msra.mxu0 0
        %4301 = vmatprep.subr.bf16.mxu0 %v2918
        %4302 = vmatpush1.bf16.xpose.msra.mxu0 %v2917
        %4303 = vmatprep.subr.bf16.mxu0 %v2790
        %4304 = vmatpush1.bf16.xpose.msra.mxu0 %v2789
        %4305 = vmatprep.subr.bf16.mxu0 0
        %4306 = vmatpush2.bf16.xpose.msra.mxu0 0
        %4307 = vmatprep.subr.bf16.mxu0 0
        %4308 = vmatpush2.bf16.xpose.msra.mxu0 0
        %4309 = vmatprep.subr.bf16.mxu0 0
        %4310 = vmatpush2.bf16.xpose.msra.mxu0 0
        %4311 = vmatprep.subr.bf16.mxu0 0
        %4312 = vmatpush2.bf16.xpose.msra.mxu0 0
        %4313 = vmatprep.subr.bf16.mxu0 0
        %4314 = vmatpush2.bf16.xpose.msra.mxu0 0
        %4315 = vmatprep.subr.bf16.mxu0 0
        %4316 = vmatpush2.bf16.xpose.msra.mxu0 0
        %4317 = vmatprep.subr.bf16.mxu0 0
        %4318 = vmatpush2.bf16.xpose.msra.mxu0 0
        %4319 = vmatprep.subr.bf16.mxu0 0
        %4320 = vmatpush2.bf16.xpose.msra.mxu0 0
        %4321 = vmatprep.mubr.bf16.mxu0 %v1395
        %4322 = vmatmul.mubr.bf16.gmra.mxu0 %v1381
        %v4323 = vpop.f32.mrf.mxu0
        %v4324 = vadd.f32 %v4284, %v4323
        %v4325 = vpop.f32.mrf.mxu0
        %v4326 = vpop.f32.mrf.mxu0
        %v4327 = vpop.f32.mrf.mxu0
        %4328 = vdwg.mxu0
        %4329 = vmatprep.subr.bf16.mxu0 0
        %4330 = vmatpush1.bf16.xpose.msra.mxu0 0
        %4331 = vmatprep.subr.bf16.mxu0 0
        %4332 = vmatpush1.bf16.xpose.msra.mxu0 0
        %4333 = vmatprep.subr.bf16.mxu0 0
        %4334 = vmatpush1.bf16.xpose.msra.mxu0 0
        %4335 = vmatprep.subr.bf16.mxu0 0
        %4336 = vmatpush1.bf16.xpose.msra.mxu0 0
        %4337 = vmatprep.subr.bf16.mxu0 0
        %4338 = vmatpush1.bf16.xpose.msra.mxu0 0
        %4339 = vmatprep.subr.bf16.mxu0 0
        %4340 = vmatpush1.bf16.xpose.msra.mxu0 0
        %4341 = vmatprep.subr.bf16.mxu0 %v2920
        %4342 = vmatpush1.bf16.xpose.msra.mxu0 %v2919
        %4343 = vmatprep.subr.bf16.mxu0 %v2792
        %4344 = vmatpush1.bf16.xpose.msra.mxu0 %v2791
        %4345 = vmatprep.subr.bf16.mxu0 0
        %4346 = vmatpush2.bf16.xpose.msra.mxu0 0
        %4347 = vmatprep.subr.bf16.mxu0 0
        %4348 = vmatpush2.bf16.xpose.msra.mxu0 0
        %4349 = vmatprep.subr.bf16.mxu0 0
        %4350 = vmatpush2.bf16.xpose.msra.mxu0 0
        %4351 = vmatprep.subr.bf16.mxu0 0
        %4352 = vmatpush2.bf16.xpose.msra.mxu0 0
        %4353 = vmatprep.subr.bf16.mxu0 0
        %4354 = vmatpush2.bf16.xpose.msra.mxu0 0
        %4355 = vmatprep.subr.bf16.mxu0 0
        %4356 = vmatpush2.bf16.xpose.msra.mxu0 0
        %4357 = vmatprep.subr.bf16.mxu0 0
        %4358 = vmatpush2.bf16.xpose.msra.mxu0 0
        %4359 = vmatprep.subr.bf16.mxu0 0
        %4360 = vmatpush2.bf16.xpose.msra.mxu0 0
        %4361 = vmatprep.mubr.bf16.mxu0 %v1399
        %4362 = vmatmul.mubr.bf16.gmra.mxu0 %v1397
        %v4363 = vpop.f32.mrf.mxu0
        %v4364 = vadd.f32 %v4324, %v4363
        %v4365 = vpop.f32.mrf.mxu0
        %v4366 = vpop.f32.mrf.mxu0
        %v4367 = vpop.f32.mrf.mxu0
        %4368 = vdwg.mxu0
        %4369 = vmatprep.subr.bf16.mxu0 0
        %4370 = vmatpush1.bf16.xpose.msra.mxu0 0
        %4371 = vmatprep.subr.bf16.mxu0 0
        %4372 = vmatpush1.bf16.xpose.msra.mxu0 0
        %4373 = vmatprep.subr.bf16.mxu0 0
        %4374 = vmatpush1.bf16.xpose.msra.mxu0 0
        %4375 = vmatprep.subr.bf16.mxu0 0
        %4376 = vmatpush1.bf16.xpose.msra.mxu0 0
        %4377 = vmatprep.subr.bf16.mxu0 0
        %4378 = vmatpush1.bf16.xpose.msra.mxu0 0
        %4379 = vmatprep.subr.bf16.mxu0 0
        %4380 = vmatpush1.bf16.xpose.msra.mxu0 0
        %4381 = vmatprep.subr.bf16.mxu0 %v2922
        %4382 = vmatpush1.bf16.xpose.msra.mxu0 %v2921
        %4383 = vmatprep.subr.bf16.mxu0 %v2794
        %4384 = vmatpush1.bf16.xpose.msra.mxu0 %v2793
        %4385 = vmatprep.subr.bf16.mxu0 0
        %4386 = vmatpush2.bf16.xpose.msra.mxu0 0
        %4387 = vmatprep.subr.bf16.mxu0 0
        %4388 = vmatpush2.bf16.xpose.msra.mxu0 0
        %4389 = vmatprep.subr.bf16.mxu0 0
        %4390 = vmatpush2.bf16.xpose.msra.mxu0 0
        %4391 = vmatprep.subr.bf16.mxu0 0
        %4392 = vmatpush2.bf16.xpose.msra.mxu0 0
        %4393 = vmatprep.subr.bf16.mxu0 0
        %4394 = vmatpush2.bf16.xpose.msra.mxu0 0
        %4395 = vmatprep.subr.bf16.mxu0 0
        %4396 = vmatpush2.bf16.xpose.msra.mxu0 0
        %4397 = vmatprep.subr.bf16.mxu0 0
        %4398 = vmatpush2.bf16.xpose.msra.mxu0 0
        %4399 = vmatprep.subr.bf16.mxu0 0
        %4400 = vmatpush2.bf16.xpose.msra.mxu0 0
        %4401 = vmatprep.mubr.bf16.mxu0 %v1437
        %4402 = vmatmul.mubr.bf16.gmra.mxu0 %v1423
        %v4403 = vpop.f32.mrf.mxu0
        %v4404 = vadd.f32 %v4364, %v4403
        %v4405 = vpop.f32.mrf.mxu0
        %v4406 = vpop.f32.mrf.mxu0
        %v4407 = vpop.f32.mrf.mxu0
        %4408 = vdwg.mxu0
        %4409 = vmatprep.subr.bf16.mxu0 0
        %4410 = vmatpush1.bf16.xpose.msra.mxu0 0
        %4411 = vmatprep.subr.bf16.mxu0 0
        %4412 = vmatpush1.bf16.xpose.msra.mxu0 0
        %4413 = vmatprep.subr.bf16.mxu0 0
        %4414 = vmatpush1.bf16.xpose.msra.mxu0 0
        %4415 = vmatprep.subr.bf16.mxu0 0
        %4416 = vmatpush1.bf16.xpose.msra.mxu0 0
        %4417 = vmatprep.subr.bf16.mxu0 0
        %4418 = vmatpush1.bf16.xpose.msra.mxu0 0
        %4419 = vmatprep.subr.bf16.mxu0 0
        %4420 = vmatpush1.bf16.xpose.msra.mxu0 0
        %4421 = vmatprep.subr.bf16.mxu0 %v2924
        %4422 = vmatpush1.bf16.xpose.msra.mxu0 %v2923
        %4423 = vmatprep.subr.bf16.mxu0 %v2796
        %4424 = vmatpush1.bf16.xpose.msra.mxu0 %v2795
        %4425 = vmatprep.subr.bf16.mxu0 0
        %4426 = vmatpush2.bf16.xpose.msra.mxu0 0
        %4427 = vmatprep.subr.bf16.mxu0 0
        %4428 = vmatpush2.bf16.xpose.msra.mxu0 0
        %4429 = vmatprep.subr.bf16.mxu0 0
        %4430 = vmatpush2.bf16.xpose.msra.mxu0 0
        %4431 = vmatprep.subr.bf16.mxu0 0
        %4432 = vmatpush2.bf16.xpose.msra.mxu0 0
        %4433 = vmatprep.subr.bf16.mxu0 0
        %4434 = vmatpush2.bf16.xpose.msra.mxu0 0
        %4435 = vmatprep.subr.bf16.mxu0 0
        %4436 = vmatpush2.bf16.xpose.msra.mxu0 0
        %4437 = vmatprep.subr.bf16.mxu0 0
        %4438 = vmatpush2.bf16.xpose.msra.mxu0 0
        %4439 = vmatprep.subr.bf16.mxu0 0
        %4440 = vmatpush2.bf16.xpose.msra.mxu0 0
        %4441 = vmatprep.mubr.bf16.mxu0 %v1447
        %4442 = vmatmul.mubr.bf16.gmra.mxu0 %v1445
        %v4443 = vpop.f32.mrf.mxu0
        %v4444 = vadd.f32 %v4404, %v4443
        %v4445 = vpop.f32.mrf.mxu0
        %v4446 = vpop.f32.mrf.mxu0
        %v4447 = vpop.f32.mrf.mxu0
        %4448 = vdwg.mxu0
        %4449 = vmatprep.subr.bf16.mxu0 0
        %4450 = vmatpush1.bf16.xpose.msra.mxu0 0
        %4451 = vmatprep.subr.bf16.mxu0 0
        %4452 = vmatpush1.bf16.xpose.msra.mxu0 0
        %4453 = vmatprep.subr.bf16.mxu0 0
        %4454 = vmatpush1.bf16.xpose.msra.mxu0 0
        %4455 = vmatprep.subr.bf16.mxu0 0
        %4456 = vmatpush1.bf16.xpose.msra.mxu0 0
        %4457 = vmatprep.subr.bf16.mxu0 0
        %4458 = vmatpush1.bf16.xpose.msra.mxu0 0
        %4459 = vmatprep.subr.bf16.mxu0 0
        %4460 = vmatpush1.bf16.xpose.msra.mxu0 0
        %4461 = vmatprep.subr.bf16.mxu0 %v2926
        %4462 = vmatpush1.bf16.xpose.msra.mxu0 %v2925
        %4463 = vmatprep.subr.bf16.mxu0 %v2798
        %4464 = vmatpush1.bf16.xpose.msra.mxu0 %v2797
        %4465 = vmatprep.subr.bf16.mxu0 0
        %4466 = vmatpush2.bf16.xpose.msra.mxu0 0
        %4467 = vmatprep.subr.bf16.mxu0 0
        %4468 = vmatpush2.bf16.xpose.msra.mxu0 0
        %4469 = vmatprep.subr.bf16.mxu0 0
        %4470 = vmatpush2.bf16.xpose.msra.mxu0 0
        %4471 = vmatprep.subr.bf16.mxu0 0
        %4472 = vmatpush2.bf16.xpose.msra.mxu0 0
        %4473 = vmatprep.subr.bf16.mxu0 0
        %4474 = vmatpush2.bf16.xpose.msra.mxu0 0
        %4475 = vmatprep.subr.bf16.mxu0 0
        %4476 = vmatpush2.bf16.xpose.msra.mxu0 0
        %4477 = vmatprep.subr.bf16.mxu0 0
        %4478 = vmatpush2.bf16.xpose.msra.mxu0 0
        %4479 = vmatprep.subr.bf16.mxu0 0
        %4480 = vmatpush2.bf16.xpose.msra.mxu0 0
        %4481 = vmatprep.mubr.bf16.mxu0 %v1444
        %4482 = vmatmul.mubr.bf16.gmra.mxu0 %v1430
        %v4483 = vpop.f32.mrf.mxu0
        %v4484 = vadd.f32 %v4444, %v4483
        %v4485 = vpop.f32.mrf.mxu0
        %v4486 = vpop.f32.mrf.mxu0
        %v4487 = vpop.f32.mrf.mxu0
        %4488 = vdwg.mxu0
        %4489 = vmatprep.subr.bf16.mxu0 0
        %4490 = vmatpush1.bf16.xpose.msra.mxu0 0
        %4491 = vmatprep.subr.bf16.mxu0 0
        %4492 = vmatpush1.bf16.xpose.msra.mxu0 0
        %4493 = vmatprep.subr.bf16.mxu0 0
        %4494 = vmatpush1.bf16.xpose.msra.mxu0 0
        %4495 = vmatprep.subr.bf16.mxu0 0
        %4496 = vmatpush1.bf16.xpose.msra.mxu0 0
        %4497 = vmatprep.subr.bf16.mxu0 0
        %4498 = vmatpush1.bf16.xpose.msra.mxu0 0
        %4499 = vmatprep.subr.bf16.mxu0 0
        %4500 = vmatpush1.bf16.xpose.msra.mxu0 0
        %4501 = vmatprep.subr.bf16.mxu0 %v2928
        %4502 = vmatpush1.bf16.xpose.msra.mxu0 %v2927
        %4503 = vmatprep.subr.bf16.mxu0 %v2800
        %4504 = vmatpush1.bf16.xpose.msra.mxu0 %v2799
        %4505 = vmatprep.subr.bf16.mxu0 0
        %4506 = vmatpush2.bf16.xpose.msra.mxu0 0
        %4507 = vmatprep.subr.bf16.mxu0 0
        %4508 = vmatpush2.bf16.xpose.msra.mxu0 0
        %4509 = vmatprep.subr.bf16.mxu0 0
        %4510 = vmatpush2.bf16.xpose.msra.mxu0 0
        %4511 = vmatprep.subr.bf16.mxu0 0
        %4512 = vmatpush2.bf16.xpose.msra.mxu0 0
        %4513 = vmatprep.subr.bf16.mxu0 0
        %4514 = vmatpush2.bf16.xpose.msra.mxu0 0
        %4515 = vmatprep.subr.bf16.mxu0 0
        %4516 = vmatpush2.bf16.xpose.msra.mxu0 0
        %4517 = vmatprep.subr.bf16.mxu0 0
        %4518 = vmatpush2.bf16.xpose.msra.mxu0 0
        %4519 = vmatprep.subr.bf16.mxu0 0
        %4520 = vmatpush2.bf16.xpose.msra.mxu0 0
        %4521 = vmatprep.mubr.bf16.mxu0 %v1448
        %4522 = vmatmul.mubr.bf16.gmra.mxu0 %v1446
        %v4523 = vpop.f32.mrf.mxu0
        %v4524 = vadd.f32 %v4484, %v4523
        %v4525 = vpop.f32.mrf.mxu0
        %v4526 = vpop.f32.mrf.mxu0
        %v4527 = vpop.f32.mrf.mxu0
        %4528 = vdwg.mxu0
        %4529 = vmatprep.subr.bf16.mxu0 0
        %4530 = vmatpush1.bf16.xpose.msra.mxu0 0
        %4531 = vmatprep.subr.bf16.mxu0 0
        %4532 = vmatpush1.bf16.xpose.msra.mxu0 0
        %4533 = vmatprep.subr.bf16.mxu0 0
        %4534 = vmatpush1.bf16.xpose.msra.mxu0 0
        %4535 = vmatprep.subr.bf16.mxu0 0
        %4536 = vmatpush1.bf16.xpose.msra.mxu0 0
        %4537 = vmatprep.subr.bf16.mxu0 0
        %4538 = vmatpush1.bf16.xpose.msra.mxu0 0
        %4539 = vmatprep.subr.bf16.mxu0 0
        %4540 = vmatpush1.bf16.xpose.msra.mxu0 0
        %4541 = vmatprep.subr.bf16.mxu0 %v2930
        %4542 = vmatpush1.bf16.xpose.msra.mxu0 %v2929
        %4543 = vmatprep.subr.bf16.mxu0 %v2802
        %4544 = vmatpush1.bf16.xpose.msra.mxu0 %v2801
        %4545 = vmatprep.subr.bf16.mxu0 0
        %4546 = vmatpush2.bf16.xpose.msra.mxu0 0
        %4547 = vmatprep.subr.bf16.mxu0 0
        %4548 = vmatpush2.bf16.xpose.msra.mxu0 0
        %4549 = vmatprep.subr.bf16.mxu0 0
        %4550 = vmatpush2.bf16.xpose.msra.mxu0 0
        %4551 = vmatprep.subr.bf16.mxu0 0
        %4552 = vmatpush2.bf16.xpose.msra.mxu0 0
        %4553 = vmatprep.subr.bf16.mxu0 0
        %4554 = vmatpush2.bf16.xpose.msra.mxu0 0
        %4555 = vmatprep.subr.bf16.mxu0 0
        %4556 = vmatpush2.bf16.xpose.msra.mxu0 0
        %4557 = vmatprep.subr.bf16.mxu0 0
        %4558 = vmatpush2.bf16.xpose.msra.mxu0 0
        %4559 = vmatprep.subr.bf16.mxu0 0
        %4560 = vmatpush2.bf16.xpose.msra.mxu0 0
        %4561 = vmatprep.mubr.bf16.mxu0 %v1486
        %4562 = vmatmul.mubr.bf16.gmra.mxu0 %v1472
        %v4563 = vpop.f32.mrf.mxu0
        %v4564 = vadd.f32 %v4524, %v4563
        %v4565 = vpop.f32.mrf.mxu0
        %v4566 = vpop.f32.mrf.mxu0
        %v4567 = vpop.f32.mrf.mxu0
        %4568 = vdwg.mxu0
        %4569 = vmatprep.subr.bf16.mxu0 0
        %4570 = vmatpush1.bf16.xpose.msra.mxu0 0
        %4571 = vmatprep.subr.bf16.mxu0 0
        %4572 = vmatpush1.bf16.xpose.msra.mxu0 0
        %4573 = vmatprep.subr.bf16.mxu0 0
        %4574 = vmatpush1.bf16.xpose.msra.mxu0 0
        %4575 = vmatprep.subr.bf16.mxu0 0
        %4576 = vmatpush1.bf16.xpose.msra.mxu0 0
        %4577 = vmatprep.subr.bf16.mxu0 0
        %4578 = vmatpush1.bf16.xpose.msra.mxu0 0
        %4579 = vmatprep.subr.bf16.mxu0 0
        %4580 = vmatpush1.bf16.xpose.msra.mxu0 0
        %4581 = vmatprep.subr.bf16.mxu0 %v2932
        %4582 = vmatpush1.bf16.xpose.msra.mxu0 %v2931
        %4583 = vmatprep.subr.bf16.mxu0 %v2804
        %4584 = vmatpush1.bf16.xpose.msra.mxu0 %v2803
        %4585 = vmatprep.subr.bf16.mxu0 0
        %4586 = vmatpush2.bf16.xpose.msra.mxu0 0
        %4587 = vmatprep.subr.bf16.mxu0 0
        %4588 = vmatpush2.bf16.xpose.msra.mxu0 0
        %4589 = vmatprep.subr.bf16.mxu0 0
        %4590 = vmatpush2.bf16.xpose.msra.mxu0 0
        %4591 = vmatprep.subr.bf16.mxu0 0
        %4592 = vmatpush2.bf16.xpose.msra.mxu0 0
        %4593 = vmatprep.subr.bf16.mxu0 0
        %4594 = vmatpush2.bf16.xpose.msra.mxu0 0
        %4595 = vmatprep.subr.bf16.mxu0 0
        %4596 = vmatpush2.bf16.xpose.msra.mxu0 0
        %4597 = vmatprep.subr.bf16.mxu0 0
        %4598 = vmatpush2.bf16.xpose.msra.mxu0 0
        %4599 = vmatprep.subr.bf16.mxu0 0
        %4600 = vmatpush2.bf16.xpose.msra.mxu0 0
        %4601 = vmatprep.mubr.bf16.mxu0 %v1496
        %4602 = vmatmul.mubr.bf16.gmra.mxu0 %v1494
        %v4603 = vpop.f32.mrf.mxu0
        %v4604 = vadd.f32 %v4564, %v4603
        %v4605 = vpop.f32.mrf.mxu0
        %v4606 = vpop.f32.mrf.mxu0
        %v4607 = vpop.f32.mrf.mxu0
        %4608 = vdwg.mxu0
        %4609 = vmatprep.subr.bf16.mxu0 0
        %4610 = vmatpush1.bf16.xpose.msra.mxu0 0
        %4611 = vmatprep.subr.bf16.mxu0 0
        %4612 = vmatpush1.bf16.xpose.msra.mxu0 0
        %4613 = vmatprep.subr.bf16.mxu0 0
        %4614 = vmatpush1.bf16.xpose.msra.mxu0 0
        %4615 = vmatprep.subr.bf16.mxu0 0
        %4616 = vmatpush1.bf16.xpose.msra.mxu0 0
        %4617 = vmatprep.subr.bf16.mxu0 0
        %4618 = vmatpush1.bf16.xpose.msra.mxu0 0
        %4619 = vmatprep.subr.bf16.mxu0 0
        %4620 = vmatpush1.bf16.xpose.msra.mxu0 0
        %4621 = vmatprep.subr.bf16.mxu0 %v2934
        %4622 = vmatpush1.bf16.xpose.msra.mxu0 %v2933
        %4623 = vmatprep.subr.bf16.mxu0 %v2806
        %4624 = vmatpush1.bf16.xpose.msra.mxu0 %v2805
        %4625 = vmatprep.subr.bf16.mxu0 0
        %4626 = vmatpush2.bf16.xpose.msra.mxu0 0
        %4627 = vmatprep.subr.bf16.mxu0 0
        %4628 = vmatpush2.bf16.xpose.msra.mxu0 0
        %4629 = vmatprep.subr.bf16.mxu0 0
        %4630 = vmatpush2.bf16.xpose.msra.mxu0 0
        %4631 = vmatprep.subr.bf16.mxu0 0
        %4632 = vmatpush2.bf16.xpose.msra.mxu0 0
        %4633 = vmatprep.subr.bf16.mxu0 0
        %4634 = vmatpush2.bf16.xpose.msra.mxu0 0
        %4635 = vmatprep.subr.bf16.mxu0 0
        %4636 = vmatpush2.bf16.xpose.msra.mxu0 0
        %4637 = vmatprep.subr.bf16.mxu0 0
        %4638 = vmatpush2.bf16.xpose.msra.mxu0 0
        %4639 = vmatprep.subr.bf16.mxu0 0
        %4640 = vmatpush2.bf16.xpose.msra.mxu0 0
        %4641 = vmatprep.mubr.bf16.mxu0 %v1493
        %4642 = vmatmul.mubr.bf16.gmra.mxu0 %v1479
        %v4643 = vpop.f32.mrf.mxu0
        %v4644 = vadd.f32 %v4604, %v4643
        %v4645 = vpop.f32.mrf.mxu0
        %v4646 = vpop.f32.mrf.mxu0
        %v4647 = vpop.f32.mrf.mxu0
        %4648 = vdwg.mxu0
        %4649 = vmatprep.subr.bf16.mxu0 0
        %4650 = vmatpush1.bf16.xpose.msra.mxu0 0
        %4651 = vmatprep.subr.bf16.mxu0 0
        %4652 = vmatpush1.bf16.xpose.msra.mxu0 0
        %4653 = vmatprep.subr.bf16.mxu0 0
        %4654 = vmatpush1.bf16.xpose.msra.mxu0 0
        %4655 = vmatprep.subr.bf16.mxu0 0
        %4656 = vmatpush1.bf16.xpose.msra.mxu0 0
        %4657 = vmatprep.subr.bf16.mxu0 0
        %4658 = vmatpush1.bf16.xpose.msra.mxu0 0
        %4659 = vmatprep.subr.bf16.mxu0 0
        %4660 = vmatpush1.bf16.xpose.msra.mxu0 0
        %4661 = vmatprep.subr.bf16.mxu0 %v2936
        %4662 = vmatpush1.bf16.xpose.msra.mxu0 %v2935
        %4663 = vmatprep.subr.bf16.mxu0 %v2808
        %4664 = vmatpush1.bf16.xpose.msra.mxu0 %v2807
        %4665 = vmatprep.subr.bf16.mxu0 0
        %4666 = vmatpush2.bf16.xpose.msra.mxu0 0
        %4667 = vmatprep.subr.bf16.mxu0 0
        %4668 = vmatpush2.bf16.xpose.msra.mxu0 0
        %4669 = vmatprep.subr.bf16.mxu0 0
        %4670 = vmatpush2.bf16.xpose.msra.mxu0 0
        %4671 = vmatprep.subr.bf16.mxu0 0
        %4672 = vmatpush2.bf16.xpose.msra.mxu0 0
        %4673 = vmatprep.subr.bf16.mxu0 0
        %4674 = vmatpush2.bf16.xpose.msra.mxu0 0
        %4675 = vmatprep.subr.bf16.mxu0 0
        %4676 = vmatpush2.bf16.xpose.msra.mxu0 0
        %4677 = vmatprep.subr.bf16.mxu0 0
        %4678 = vmatpush2.bf16.xpose.msra.mxu0 0
        %4679 = vmatprep.subr.bf16.mxu0 0
        %4680 = vmatpush2.bf16.xpose.msra.mxu0 0
        %4681 = vmatprep.mubr.bf16.mxu0 %v1497
        %4682 = vmatmul.mubr.bf16.gmra.mxu0 %v1495
        %v4683 = vpop.f32.mrf.mxu0
        %v4684 = vadd.f32 %v4644, %v4683
        %v4685 = vpop.f32.mrf.mxu0
        %v4686 = vpop.f32.mrf.mxu0
        %v4687 = vpop.f32.mrf.mxu0
        %4688 = vdwg.mxu0
        %4689 = vmatprep.subr.bf16.mxu0 0
        %4690 = vmatpush1.bf16.xpose.msra.mxu0 0
        %4691 = vmatprep.subr.bf16.mxu0 0
        %4692 = vmatpush1.bf16.xpose.msra.mxu0 0
        %4693 = vmatprep.subr.bf16.mxu0 0
        %4694 = vmatpush1.bf16.xpose.msra.mxu0 0
        %4695 = vmatprep.subr.bf16.mxu0 0
        %4696 = vmatpush1.bf16.xpose.msra.mxu0 0
        %4697 = vmatprep.subr.bf16.mxu0 0
        %4698 = vmatpush1.bf16.xpose.msra.mxu0 0
        %4699 = vmatprep.subr.bf16.mxu0 0
        %4700 = vmatpush1.bf16.xpose.msra.mxu0 0
        %4701 = vmatprep.subr.bf16.mxu0 %v2938
        %4702 = vmatpush1.bf16.xpose.msra.mxu0 %v2937
        %4703 = vmatprep.subr.bf16.mxu0 %v2810
        %4704 = vmatpush1.bf16.xpose.msra.mxu0 %v2809
        %4705 = vmatprep.subr.bf16.mxu0 0
        %4706 = vmatpush2.bf16.xpose.msra.mxu0 0
        %4707 = vmatprep.subr.bf16.mxu0 0
        %4708 = vmatpush2.bf16.xpose.msra.mxu0 0
        %4709 = vmatprep.subr.bf16.mxu0 0
        %4710 = vmatpush2.bf16.xpose.msra.mxu0 0
        %4711 = vmatprep.subr.bf16.mxu0 0
        %4712 = vmatpush2.bf16.xpose.msra.mxu0 0
        %4713 = vmatprep.subr.bf16.mxu0 0
        %4714 = vmatpush2.bf16.xpose.msra.mxu0 0
        %4715 = vmatprep.subr.bf16.mxu0 0
        %4716 = vmatpush2.bf16.xpose.msra.mxu0 0
        %4717 = vmatprep.subr.bf16.mxu0 0
        %4718 = vmatpush2.bf16.xpose.msra.mxu0 0
        %4719 = vmatprep.subr.bf16.mxu0 0
        %4720 = vmatpush2.bf16.xpose.msra.mxu0 0
        %4721 = vmatprep.mubr.bf16.mxu0 %v1535
        %4722 = vmatmul.mubr.bf16.gmra.mxu0 %v1521
        %v4723 = vpop.f32.mrf.mxu0
        %v4724 = vadd.f32 %v4684, %v4723
        %v4725 = vpop.f32.mrf.mxu0
        %v4726 = vpop.f32.mrf.mxu0
        %v4727 = vpop.f32.mrf.mxu0
        %4728 = vdwg.mxu0
        %4729 = vmatprep.subr.bf16.mxu0 0
        %4730 = vmatpush1.bf16.xpose.msra.mxu0 0
        %4731 = vmatprep.subr.bf16.mxu0 0
        %4732 = vmatpush1.bf16.xpose.msra.mxu0 0
        %4733 = vmatprep.subr.bf16.mxu0 0
        %4734 = vmatpush1.bf16.xpose.msra.mxu0 0
        %4735 = vmatprep.subr.bf16.mxu0 0
        %4736 = vmatpush1.bf16.xpose.msra.mxu0 0
        %4737 = vmatprep.subr.bf16.mxu0 0
        %4738 = vmatpush1.bf16.xpose.msra.mxu0 0
        %4739 = vmatprep.subr.bf16.mxu0 0
        %4740 = vmatpush1.bf16.xpose.msra.mxu0 0
        %4741 = vmatprep.subr.bf16.mxu0 %v2940
        %4742 = vmatpush1.bf16.xpose.msra.mxu0 %v2939
        %4743 = vmatprep.subr.bf16.mxu0 %v2812
        %4744 = vmatpush1.bf16.xpose.msra.mxu0 %v2811
        %4745 = vmatprep.subr.bf16.mxu0 0
        %4746 = vmatpush2.bf16.xpose.msra.mxu0 0
        %4747 = vmatprep.subr.bf16.mxu0 0
        %4748 = vmatpush2.bf16.xpose.msra.mxu0 0
        %4749 = vmatprep.subr.bf16.mxu0 0
        %4750 = vmatpush2.bf16.xpose.msra.mxu0 0
        %4751 = vmatprep.subr.bf16.mxu0 0
        %4752 = vmatpush2.bf16.xpose.msra.mxu0 0
        %4753 = vmatprep.subr.bf16.mxu0 0
        %4754 = vmatpush2.bf16.xpose.msra.mxu0 0
        %4755 = vmatprep.subr.bf16.mxu0 0
        %4756 = vmatpush2.bf16.xpose.msra.mxu0 0
        %4757 = vmatprep.subr.bf16.mxu0 0
        %4758 = vmatpush2.bf16.xpose.msra.mxu0 0
        %4759 = vmatprep.subr.bf16.mxu0 0
        %4760 = vmatpush2.bf16.xpose.msra.mxu0 0
        %4761 = vmatprep.mubr.bf16.mxu0 %v1545
        %4762 = vmatmul.mubr.bf16.gmra.mxu0 %v1543
        %v4763 = vpop.f32.mrf.mxu0
        %v4764 = vadd.f32 %v4724, %v4763
        %v4765 = vpop.f32.mrf.mxu0
        %v4766 = vpop.f32.mrf.mxu0
        %v4767 = vpop.f32.mrf.mxu0
        %4768 = vdwg.mxu0
        %4769 = vmatprep.subr.bf16.mxu0 0
        %4770 = vmatpush1.bf16.xpose.msra.mxu0 0
        %4771 = vmatprep.subr.bf16.mxu0 0
        %4772 = vmatpush1.bf16.xpose.msra.mxu0 0
        %4773 = vmatprep.subr.bf16.mxu0 0
        %4774 = vmatpush1.bf16.xpose.msra.mxu0 0
        %4775 = vmatprep.subr.bf16.mxu0 0
        %4776 = vmatpush1.bf16.xpose.msra.mxu0 0
        %4777 = vmatprep.subr.bf16.mxu0 0
        %4778 = vmatpush1.bf16.xpose.msra.mxu0 0
        %4779 = vmatprep.subr.bf16.mxu0 0
        %4780 = vmatpush1.bf16.xpose.msra.mxu0 0
        %4781 = vmatprep.subr.bf16.mxu0 %v2942
        %4782 = vmatpush1.bf16.xpose.msra.mxu0 %v2941
        %4783 = vmatprep.subr.bf16.mxu0 %v2814
        %4784 = vmatpush1.bf16.xpose.msra.mxu0 %v2813
        %4785 = vmatprep.subr.bf16.mxu0 0
        %4786 = vmatpush2.bf16.xpose.msra.mxu0 0
        %4787 = vmatprep.subr.bf16.mxu0 0
        %4788 = vmatpush2.bf16.xpose.msra.mxu0 0
        %4789 = vmatprep.subr.bf16.mxu0 0
        %4790 = vmatpush2.bf16.xpose.msra.mxu0 0
        %4791 = vmatprep.subr.bf16.mxu0 0
        %4792 = vmatpush2.bf16.xpose.msra.mxu0 0
        %4793 = vmatprep.subr.bf16.mxu0 0
        %4794 = vmatpush2.bf16.xpose.msra.mxu0 0
        %4795 = vmatprep.subr.bf16.mxu0 0
        %4796 = vmatpush2.bf16.xpose.msra.mxu0 0
        %4797 = vmatprep.subr.bf16.mxu0 0
        %4798 = vmatpush2.bf16.xpose.msra.mxu0 0
        %4799 = vmatprep.subr.bf16.mxu0 0
        %4800 = vmatpush2.bf16.xpose.msra.mxu0 0
        %4801 = vmatprep.mubr.bf16.mxu0 %v1542
        %4802 = vmatmul.mubr.bf16.gmra.mxu0 %v1528
        %v4803 = vpop.f32.mrf.mxu0
        %v4804 = vadd.f32 %v4764, %v4803
        %v4805 = vpop.f32.mrf.mxu0
        %v4806 = vpop.f32.mrf.mxu0
        %v4807 = vpop.f32.mrf.mxu0
        %4808 = vdwg.mxu0
        %4809 = vmatprep.subr.bf16.mxu0 0
        %4810 = vmatpush1.bf16.xpose.msra.mxu0 0
        %4811 = vmatprep.subr.bf16.mxu0 0
        %4812 = vmatpush1.bf16.xpose.msra.mxu0 0
        %4813 = vmatprep.subr.bf16.mxu0 0
        %4814 = vmatpush1.bf16.xpose.msra.mxu0 0
        %4815 = vmatprep.subr.bf16.mxu0 0
        %4816 = vmatpush1.bf16.xpose.msra.mxu0 0
        %4817 = vmatprep.subr.bf16.mxu0 0
        %4818 = vmatpush1.bf16.xpose.msra.mxu0 0
        %4819 = vmatprep.subr.bf16.mxu0 0
        %4820 = vmatpush1.bf16.xpose.msra.mxu0 0
        %4821 = vmatprep.subr.bf16.mxu0 %v2944
        %4822 = vmatpush1.bf16.xpose.msra.mxu0 %v2943
        %4823 = vmatprep.subr.bf16.mxu0 %v2816
        %4824 = vmatpush1.bf16.xpose.msra.mxu0 %v2815
        %4825 = vmatprep.subr.bf16.mxu0 0
        %4826 = vmatpush2.bf16.xpose.msra.mxu0 0
        %4827 = vmatprep.subr.bf16.mxu0 0
        %4828 = vmatpush2.bf16.xpose.msra.mxu0 0
        %4829 = vmatprep.subr.bf16.mxu0 0
        %4830 = vmatpush2.bf16.xpose.msra.mxu0 0
        %4831 = vmatprep.subr.bf16.mxu0 0
        %4832 = vmatpush2.bf16.xpose.msra.mxu0 0
        %4833 = vmatprep.subr.bf16.mxu0 0
        %4834 = vmatpush2.bf16.xpose.msra.mxu0 0
        %4835 = vmatprep.subr.bf16.mxu0 0
        %4836 = vmatpush2.bf16.xpose.msra.mxu0 0
        %4837 = vmatprep.subr.bf16.mxu0 0
        %4838 = vmatpush2.bf16.xpose.msra.mxu0 0
        %4839 = vmatprep.subr.bf16.mxu0 0
        %4840 = vmatpush2.bf16.xpose.msra.mxu0 0
        %4841 = vmatprep.mubr.bf16.mxu0 %v1546
        %4842 = vmatmul.mubr.bf16.gmra.mxu0 %v1544
        %v4843 = vpop.f32.mrf.mxu0
        %v4844 = vadd.f32 %v4804, %v4843
        %v4845 = vpop.f32.mrf.mxu0
        %v4846 = vpop.f32.mrf.mxu0
        %v4847 = vpop.f32.mrf.mxu0
        %4848 = vdwg.mxu0
        %4849 = vmatprep.subr.bf16.mxu0 0
        %4850 = vmatpush1.bf16.xpose.msra.mxu0 0
        %4851 = vmatprep.subr.bf16.mxu0 0
        %4852 = vmatpush1.bf16.xpose.msra.mxu0 0
        %4853 = vmatprep.subr.bf16.mxu0 0
        %4854 = vmatpush1.bf16.xpose.msra.mxu0 0
        %4855 = vmatprep.subr.bf16.mxu0 0
        %4856 = vmatpush1.bf16.xpose.msra.mxu0 0
        %4857 = vmatprep.subr.bf16.mxu0 0
        %4858 = vmatpush1.bf16.xpose.msra.mxu0 0
        %4859 = vmatprep.subr.bf16.mxu0 0
        %4860 = vmatpush1.bf16.xpose.msra.mxu0 0
        %4861 = vmatprep.subr.bf16.mxu0 %v2946
        %4862 = vmatpush1.bf16.xpose.msra.mxu0 %v2945
        %4863 = vmatprep.subr.bf16.mxu0 %v2818
        %4864 = vmatpush1.bf16.xpose.msra.mxu0 %v2817
        %4865 = vmatprep.subr.bf16.mxu0 0
        %4866 = vmatpush2.bf16.xpose.msra.mxu0 0
        %4867 = vmatprep.subr.bf16.mxu0 0
        %4868 = vmatpush2.bf16.xpose.msra.mxu0 0
        %4869 = vmatprep.subr.bf16.mxu0 0
        %4870 = vmatpush2.bf16.xpose.msra.mxu0 0
        %4871 = vmatprep.subr.bf16.mxu0 0
        %4872 = vmatpush2.bf16.xpose.msra.mxu0 0
        %4873 = vmatprep.subr.bf16.mxu0 0
        %4874 = vmatpush2.bf16.xpose.msra.mxu0 0
        %4875 = vmatprep.subr.bf16.mxu0 0
        %4876 = vmatpush2.bf16.xpose.msra.mxu0 0
        %4877 = vmatprep.subr.bf16.mxu0 0
        %4878 = vmatpush2.bf16.xpose.msra.mxu0 0
        %4879 = vmatprep.subr.bf16.mxu0 0
        %4880 = vmatpush2.bf16.xpose.msra.mxu0 0
        %4881 = vmatprep.mubr.bf16.mxu0 %v1584
        %4882 = vmatmul.mubr.bf16.gmra.mxu0 %v1570
        %v4883 = vpop.f32.mrf.mxu0
        %v4884 = vadd.f32 %v4844, %v4883
        %v4885 = vpop.f32.mrf.mxu0
        %v4886 = vpop.f32.mrf.mxu0
        %v4887 = vpop.f32.mrf.mxu0
        %4888 = vdwg.mxu0
        %4889 = vmatprep.subr.bf16.mxu0 0
        %4890 = vmatpush1.bf16.xpose.msra.mxu0 0
        %4891 = vmatprep.subr.bf16.mxu0 0
        %4892 = vmatpush1.bf16.xpose.msra.mxu0 0
        %4893 = vmatprep.subr.bf16.mxu0 0
        %4894 = vmatpush1.bf16.xpose.msra.mxu0 0
        %4895 = vmatprep.subr.bf16.mxu0 0
        %4896 = vmatpush1.bf16.xpose.msra.mxu0 0
        %4897 = vmatprep.subr.bf16.mxu0 0
        %4898 = vmatpush1.bf16.xpose.msra.mxu0 0
        %4899 = vmatprep.subr.bf16.mxu0 0
        %4900 = vmatpush1.bf16.xpose.msra.mxu0 0
        %4901 = vmatprep.subr.bf16.mxu0 %v2948
        %4902 = vmatpush1.bf16.xpose.msra.mxu0 %v2947
        %4903 = vmatprep.subr.bf16.mxu0 %v2820
        %4904 = vmatpush1.bf16.xpose.msra.mxu0 %v2819
        %4905 = vmatprep.subr.bf16.mxu0 0
        %4906 = vmatpush2.bf16.xpose.msra.mxu0 0
        %4907 = vmatprep.subr.bf16.mxu0 0
        %4908 = vmatpush2.bf16.xpose.msra.mxu0 0
        %4909 = vmatprep.subr.bf16.mxu0 0
        %4910 = vmatpush2.bf16.xpose.msra.mxu0 0
        %4911 = vmatprep.subr.bf16.mxu0 0
        %4912 = vmatpush2.bf16.xpose.msra.mxu0 0
        %4913 = vmatprep.subr.bf16.mxu0 0
        %4914 = vmatpush2.bf16.xpose.msra.mxu0 0
        %4915 = vmatprep.subr.bf16.mxu0 0
        %4916 = vmatpush2.bf16.xpose.msra.mxu0 0
        %4917 = vmatprep.subr.bf16.mxu0 0
        %4918 = vmatpush2.bf16.xpose.msra.mxu0 0
        %4919 = vmatprep.subr.bf16.mxu0 0
        %4920 = vmatpush2.bf16.xpose.msra.mxu0 0
        %4921 = vmatprep.mubr.bf16.mxu0 %v1594
        %4922 = vmatmul.mubr.bf16.gmra.mxu0 %v1592
        %v4923 = vpop.f32.mrf.mxu0
        %v4924 = vadd.f32 %v4884, %v4923
        %v4925 = vpop.f32.mrf.mxu0
        %v4926 = vpop.f32.mrf.mxu0
        %v4927 = vpop.f32.mrf.mxu0
        %4928 = vdwg.mxu0
        %4929 = vmatprep.subr.bf16.mxu0 0
        %4930 = vmatpush1.bf16.xpose.msra.mxu0 0
        %4931 = vmatprep.subr.bf16.mxu0 0
        %4932 = vmatpush1.bf16.xpose.msra.mxu0 0
        %4933 = vmatprep.subr.bf16.mxu0 0
        %4934 = vmatpush1.bf16.xpose.msra.mxu0 0
        %4935 = vmatprep.subr.bf16.mxu0 0
        %4936 = vmatpush1.bf16.xpose.msra.mxu0 0
        %4937 = vmatprep.subr.bf16.mxu0 0
        %4938 = vmatpush1.bf16.xpose.msra.mxu0 0
        %4939 = vmatprep.subr.bf16.mxu0 0
        %4940 = vmatpush1.bf16.xpose.msra.mxu0 0
        %4941 = vmatprep.subr.bf16.mxu0 %v2950
        %4942 = vmatpush1.bf16.xpose.msra.mxu0 %v2949
        %4943 = vmatprep.subr.bf16.mxu0 %v2822
        %4944 = vmatpush1.bf16.xpose.msra.mxu0 %v2821
        %4945 = vmatprep.subr.bf16.mxu0 0
        %4946 = vmatpush2.bf16.xpose.msra.mxu0 0
        %4947 = vmatprep.subr.bf16.mxu0 0
        %4948 = vmatpush2.bf16.xpose.msra.mxu0 0
        %4949 = vmatprep.subr.bf16.mxu0 0
        %4950 = vmatpush2.bf16.xpose.msra.mxu0 0
        %4951 = vmatprep.subr.bf16.mxu0 0
        %4952 = vmatpush2.bf16.xpose.msra.mxu0 0
        %4953 = vmatprep.subr.bf16.mxu0 0
        %4954 = vmatpush2.bf16.xpose.msra.mxu0 0
        %4955 = vmatprep.subr.bf16.mxu0 0
        %4956 = vmatpush2.bf16.xpose.msra.mxu0 0
        %4957 = vmatprep.subr.bf16.mxu0 0
        %4958 = vmatpush2.bf16.xpose.msra.mxu0 0
        %4959 = vmatprep.subr.bf16.mxu0 0
        %4960 = vmatpush2.bf16.xpose.msra.mxu0 0
        %4961 = vmatprep.mubr.bf16.mxu0 %v1591
        %4962 = vmatmul.mubr.bf16.gmra.mxu0 %v1577
        %v4963 = vpop.f32.mrf.mxu0
        %v4964 = vadd.f32 %v4924, %v4963
        %v4965 = vpop.f32.mrf.mxu0
        %v4966 = vpop.f32.mrf.mxu0
        %v4967 = vpop.f32.mrf.mxu0
        %4968 = vdwg.mxu0
        %4969 = vmatprep.subr.bf16.mxu0 0
        %4970 = vmatpush1.bf16.xpose.msra.mxu0 0
        %4971 = vmatprep.subr.bf16.mxu0 0
        %4972 = vmatpush1.bf16.xpose.msra.mxu0 0
        %4973 = vmatprep.subr.bf16.mxu0 0
        %4974 = vmatpush1.bf16.xpose.msra.mxu0 0
        %4975 = vmatprep.subr.bf16.mxu0 0
        %4976 = vmatpush1.bf16.xpose.msra.mxu0 0
        %4977 = vmatprep.subr.bf16.mxu0 0
        %4978 = vmatpush1.bf16.xpose.msra.mxu0 0
        %4979 = vmatprep.subr.bf16.mxu0 0
        %4980 = vmatpush1.bf16.xpose.msra.mxu0 0
        %4981 = vmatprep.subr.bf16.mxu0 %v2952
        %4982 = vmatpush1.bf16.xpose.msra.mxu0 %v2951
        %4983 = vmatprep.subr.bf16.mxu0 %v2824
        %4984 = vmatpush1.bf16.xpose.msra.mxu0 %v2823
        %4985 = vmatprep.subr.bf16.mxu0 0
        %4986 = vmatpush2.bf16.xpose.msra.mxu0 0
        %4987 = vmatprep.subr.bf16.mxu0 0
        %4988 = vmatpush2.bf16.xpose.msra.mxu0 0
        %4989 = vmatprep.subr.bf16.mxu0 0
        %4990 = vmatpush2.bf16.xpose.msra.mxu0 0
        %4991 = vmatprep.subr.bf16.mxu0 0
        %4992 = vmatpush2.bf16.xpose.msra.mxu0 0
        %4993 = vmatprep.subr.bf16.mxu0 0
        %4994 = vmatpush2.bf16.xpose.msra.mxu0 0
        %4995 = vmatprep.subr.bf16.mxu0 0
        %4996 = vmatpush2.bf16.xpose.msra.mxu0 0
        %4997 = vmatprep.subr.bf16.mxu0 0
        %4998 = vmatpush2.bf16.xpose.msra.mxu0 0
        %4999 = vmatprep.subr.bf16.mxu0 0
        %5000 = vmatpush2.bf16.xpose.msra.mxu0 0
        %5001 = vmatprep.mubr.bf16.mxu0 %v1595
        %5002 = vmatmul.mubr.bf16.gmra.mxu0 %v1593
        %v5003 = vpop.f32.mrf.mxu0
        %v5004 = vadd.f32 %v4964, %v5003
        %v5005 = vpop.f32.mrf.mxu0
        %v5006 = vpop.f32.mrf.mxu0
        %v5007 = vpop.f32.mrf.mxu0
        %5008 = vdwg.mxu0
        %5009 = vmatprep.subr.bf16.mxu0 0
        %5010 = vmatpush1.bf16.xpose.msra.mxu0 0
        %5011 = vmatprep.subr.bf16.mxu0 0
        %5012 = vmatpush1.bf16.xpose.msra.mxu0 0
        %5013 = vmatprep.subr.bf16.mxu0 0
        %5014 = vmatpush1.bf16.xpose.msra.mxu0 0
        %5015 = vmatprep.subr.bf16.mxu0 0
        %5016 = vmatpush1.bf16.xpose.msra.mxu0 0
        %5017 = vmatprep.subr.bf16.mxu0 0
        %5018 = vmatpush1.bf16.xpose.msra.mxu0 0
        %5019 = vmatprep.subr.bf16.mxu0 0
        %5020 = vmatpush1.bf16.xpose.msra.mxu0 0
        %5021 = vmatprep.subr.bf16.mxu0 %v2954
        %5022 = vmatpush1.bf16.xpose.msra.mxu0 %v2953
        %5023 = vmatprep.subr.bf16.mxu0 %v2826
        %5024 = vmatpush1.bf16.xpose.msra.mxu0 %v2825
        %5025 = vmatprep.subr.bf16.mxu0 0
        %5026 = vmatpush2.bf16.xpose.msra.mxu0 0
        %5027 = vmatprep.subr.bf16.mxu0 0
        %5028 = vmatpush2.bf16.xpose.msra.mxu0 0
        %5029 = vmatprep.subr.bf16.mxu0 0
        %5030 = vmatpush2.bf16.xpose.msra.mxu0 0
        %5031 = vmatprep.subr.bf16.mxu0 0
        %5032 = vmatpush2.bf16.xpose.msra.mxu0 0
        %5033 = vmatprep.subr.bf16.mxu0 0
        %5034 = vmatpush2.bf16.xpose.msra.mxu0 0
        %5035 = vmatprep.subr.bf16.mxu0 0
        %5036 = vmatpush2.bf16.xpose.msra.mxu0 0
        %5037 = vmatprep.subr.bf16.mxu0 0
        %5038 = vmatpush2.bf16.xpose.msra.mxu0 0
        %5039 = vmatprep.subr.bf16.mxu0 0
        %5040 = vmatpush2.bf16.xpose.msra.mxu0 0
        %5041 = vmatprep.mubr.bf16.mxu0 %v1633
        %5042 = vmatmul.mubr.bf16.gmra.mxu0 %v1619
        %v5043 = vpop.f32.mrf.mxu0
        %v5044 = vadd.f32 %v5004, %v5043
        %v5045 = vpop.f32.mrf.mxu0
        %v5046 = vpop.f32.mrf.mxu0
        %v5047 = vpop.f32.mrf.mxu0
        %5048 = vdwg.mxu0
        %5049 = vmatprep.subr.bf16.mxu0 0
        %5050 = vmatpush1.bf16.xpose.msra.mxu0 0
        %5051 = vmatprep.subr.bf16.mxu0 0
        %5052 = vmatpush1.bf16.xpose.msra.mxu0 0
        %5053 = vmatprep.subr.bf16.mxu0 0
        %5054 = vmatpush1.bf16.xpose.msra.mxu0 0
        %5055 = vmatprep.subr.bf16.mxu0 0
        %5056 = vmatpush1.bf16.xpose.msra.mxu0 0
        %5057 = vmatprep.subr.bf16.mxu0 0
        %5058 = vmatpush1.bf16.xpose.msra.mxu0 0
        %5059 = vmatprep.subr.bf16.mxu0 0
        %5060 = vmatpush1.bf16.xpose.msra.mxu0 0
        %5061 = vmatprep.subr.bf16.mxu0 %v2956
        %5062 = vmatpush1.bf16.xpose.msra.mxu0 %v2955
        %5063 = vmatprep.subr.bf16.mxu0 %v2828
        %5064 = vmatpush1.bf16.xpose.msra.mxu0 %v2827
        %5065 = vmatprep.subr.bf16.mxu0 0
        %5066 = vmatpush2.bf16.xpose.msra.mxu0 0
        %5067 = vmatprep.subr.bf16.mxu0 0
        %5068 = vmatpush2.bf16.xpose.msra.mxu0 0
        %5069 = vmatprep.subr.bf16.mxu0 0
        %5070 = vmatpush2.bf16.xpose.msra.mxu0 0
        %5071 = vmatprep.subr.bf16.mxu0 0
        %5072 = vmatpush2.bf16.xpose.msra.mxu0 0
        %5073 = vmatprep.subr.bf16.mxu0 0
        %5074 = vmatpush2.bf16.xpose.msra.mxu0 0
        %5075 = vmatprep.subr.bf16.mxu0 0
        %5076 = vmatpush2.bf16.xpose.msra.mxu0 0
        %5077 = vmatprep.subr.bf16.mxu0 0
        %5078 = vmatpush2.bf16.xpose.msra.mxu0 0
        %5079 = vmatprep.subr.bf16.mxu0 0
        %5080 = vmatpush2.bf16.xpose.msra.mxu0 0
        %5081 = vmatprep.mubr.bf16.mxu0 %v1643
        %5082 = vmatmul.mubr.bf16.gmra.mxu0 %v1641
        %v5083 = vpop.f32.mrf.mxu0
        %v5084 = vadd.f32 %v5044, %v5083
        %v5085 = vpop.f32.mrf.mxu0
        %v5086 = vpop.f32.mrf.mxu0
        %v5087 = vpop.f32.mrf.mxu0
        %5088 = vdwg.mxu0
        %5089 = vmatprep.subr.bf16.mxu0 0
        %5090 = vmatpush1.bf16.xpose.msra.mxu0 0
        %5091 = vmatprep.subr.bf16.mxu0 0
        %5092 = vmatpush1.bf16.xpose.msra.mxu0 0
        %5093 = vmatprep.subr.bf16.mxu0 0
        %5094 = vmatpush1.bf16.xpose.msra.mxu0 0
        %5095 = vmatprep.subr.bf16.mxu0 0
        %5096 = vmatpush1.bf16.xpose.msra.mxu0 0
        %5097 = vmatprep.subr.bf16.mxu0 0
        %5098 = vmatpush1.bf16.xpose.msra.mxu0 0
        %5099 = vmatprep.subr.bf16.mxu0 0
        %5100 = vmatpush1.bf16.xpose.msra.mxu0 0
        %5101 = vmatprep.subr.bf16.mxu0 %v2958
        %5102 = vmatpush1.bf16.xpose.msra.mxu0 %v2957
        %5103 = vmatprep.subr.bf16.mxu0 %v2830
        %5104 = vmatpush1.bf16.xpose.msra.mxu0 %v2829
        %5105 = vmatprep.subr.bf16.mxu0 0
        %5106 = vmatpush2.bf16.xpose.msra.mxu0 0
        %5107 = vmatprep.subr.bf16.mxu0 0
        %5108 = vmatpush2.bf16.xpose.msra.mxu0 0
        %5109 = vmatprep.subr.bf16.mxu0 0
        %5110 = vmatpush2.bf16.xpose.msra.mxu0 0
        %5111 = vmatprep.subr.bf16.mxu0 0
        %5112 = vmatpush2.bf16.xpose.msra.mxu0 0
        %5113 = vmatprep.subr.bf16.mxu0 0
        %5114 = vmatpush2.bf16.xpose.msra.mxu0 0
        %5115 = vmatprep.subr.bf16.mxu0 0
        %5116 = vmatpush2.bf16.xpose.msra.mxu0 0
        %5117 = vmatprep.subr.bf16.mxu0 0
        %5118 = vmatpush2.bf16.xpose.msra.mxu0 0
        %5119 = vmatprep.subr.bf16.mxu0 0
        %5120 = vmatpush2.bf16.xpose.msra.mxu0 0
        %5121 = vmatprep.mubr.bf16.mxu0 %v1640
        %5122 = vmatmul.mubr.bf16.gmra.mxu0 %v1626
        %v5123 = vpop.f32.mrf.mxu0
        %v5124 = vadd.f32 %v5084, %v5123
        %v5125 = vpop.f32.mrf.mxu0
        %v5126 = vpop.f32.mrf.mxu0
        %v5127 = vpop.f32.mrf.mxu0
        %5128 = vdwg.mxu0
        %5129 = vmatprep.subr.bf16.mxu0 0
        %5130 = vmatpush1.bf16.xpose.msra.mxu0 0
        %5131 = vmatprep.subr.bf16.mxu0 0
        %5132 = vmatpush1.bf16.xpose.msra.mxu0 0
        %5133 = vmatprep.subr.bf16.mxu0 0
        %5134 = vmatpush1.bf16.xpose.msra.mxu0 0
        %5135 = vmatprep.subr.bf16.mxu0 0
        %5136 = vmatpush1.bf16.xpose.msra.mxu0 0
        %5137 = vmatprep.subr.bf16.mxu0 0
        %5138 = vmatpush1.bf16.xpose.msra.mxu0 0
        %5139 = vmatprep.subr.bf16.mxu0 0
        %5140 = vmatpush1.bf16.xpose.msra.mxu0 0
        %5141 = vmatprep.subr.bf16.mxu0 %v2960
        %5142 = vmatpush1.bf16.xpose.msra.mxu0 %v2959
        %5143 = vmatprep.subr.bf16.mxu0 %v2832
        %5144 = vmatpush1.bf16.xpose.msra.mxu0 %v2831
        %5145 = vmatprep.subr.bf16.mxu0 0
        %5146 = vmatpush2.bf16.xpose.msra.mxu0 0
        %5147 = vmatprep.subr.bf16.mxu0 0
        %5148 = vmatpush2.bf16.xpose.msra.mxu0 0
        %5149 = vmatprep.subr.bf16.mxu0 0
        %5150 = vmatpush2.bf16.xpose.msra.mxu0 0
        %5151 = vmatprep.subr.bf16.mxu0 0
        %5152 = vmatpush2.bf16.xpose.msra.mxu0 0
        %5153 = vmatprep.subr.bf16.mxu0 0
        %5154 = vmatpush2.bf16.xpose.msra.mxu0 0
        %5155 = vmatprep.subr.bf16.mxu0 0
        %5156 = vmatpush2.bf16.xpose.msra.mxu0 0
        %5157 = vmatprep.subr.bf16.mxu0 0
        %5158 = vmatpush2.bf16.xpose.msra.mxu0 0
        %5159 = vmatprep.subr.bf16.mxu0 0
        %5160 = vmatpush2.bf16.xpose.msra.mxu0 0
        %5161 = vmatprep.mubr.bf16.mxu0 %v1644
        %5162 = vmatmul.mubr.bf16.gmra.mxu0 %v1642
        %v5163 = vpop.f32.mrf.mxu0
        %v5164 = vadd.f32 %v5124, %v5163
        %v5165 = vpop.f32.mrf.mxu0
        %v5166 = vpop.f32.mrf.mxu0
        %v5167 = vpop.f32.mrf.mxu0
        %5168 = vdwg.mxu0
        %5169 = vmatprep.subr.bf16.mxu0 0
        %5170 = vmatpush1.bf16.xpose.msra.mxu0 0
        %5171 = vmatprep.subr.bf16.mxu0 0
        %5172 = vmatpush1.bf16.xpose.msra.mxu0 0
        %5173 = vmatprep.subr.bf16.mxu0 0
        %5174 = vmatpush1.bf16.xpose.msra.mxu0 0
        %5175 = vmatprep.subr.bf16.mxu0 0
        %5176 = vmatpush1.bf16.xpose.msra.mxu0 0
        %5177 = vmatprep.subr.bf16.mxu0 0
        %5178 = vmatpush1.bf16.xpose.msra.mxu0 0
        %5179 = vmatprep.subr.bf16.mxu0 0
        %5180 = vmatpush1.bf16.xpose.msra.mxu0 0
        %5181 = vmatprep.subr.bf16.mxu0 %v2962
        %5182 = vmatpush1.bf16.xpose.msra.mxu0 %v2961
        %5183 = vmatprep.subr.bf16.mxu0 %v2834
        %5184 = vmatpush1.bf16.xpose.msra.mxu0 %v2833
        %5185 = vmatprep.subr.bf16.mxu0 0
        %5186 = vmatpush2.bf16.xpose.msra.mxu0 0
        %5187 = vmatprep.subr.bf16.mxu0 0
        %5188 = vmatpush2.bf16.xpose.msra.mxu0 0
        %5189 = vmatprep.subr.bf16.mxu0 0
        %5190 = vmatpush2.bf16.xpose.msra.mxu0 0
        %5191 = vmatprep.subr.bf16.mxu0 0
        %5192 = vmatpush2.bf16.xpose.msra.mxu0 0
        %5193 = vmatprep.subr.bf16.mxu0 0
        %5194 = vmatpush2.bf16.xpose.msra.mxu0 0
        %5195 = vmatprep.subr.bf16.mxu0 0
        %5196 = vmatpush2.bf16.xpose.msra.mxu0 0
        %5197 = vmatprep.subr.bf16.mxu0 0
        %5198 = vmatpush2.bf16.xpose.msra.mxu0 0
        %5199 = vmatprep.subr.bf16.mxu0 0
        %5200 = vmatpush2.bf16.xpose.msra.mxu0 0
        %5201 = vmatprep.mubr.bf16.mxu0 %v1682
        %5202 = vmatmul.mubr.bf16.gmra.mxu0 %v1668
        %v5203 = vpop.f32.mrf.mxu0
        %v5204 = vadd.f32 %v5164, %v5203
        %v5205 = vpop.f32.mrf.mxu0
        %v5206 = vpop.f32.mrf.mxu0
        %v5207 = vpop.f32.mrf.mxu0
        %5208 = vdwg.mxu0
        %5209 = vmatprep.subr.bf16.mxu0 0
        %5210 = vmatpush1.bf16.xpose.msra.mxu0 0
        %5211 = vmatprep.subr.bf16.mxu0 0
        %5212 = vmatpush1.bf16.xpose.msra.mxu0 0
        %5213 = vmatprep.subr.bf16.mxu0 0
        %5214 = vmatpush1.bf16.xpose.msra.mxu0 0
        %5215 = vmatprep.subr.bf16.mxu0 0
        %5216 = vmatpush1.bf16.xpose.msra.mxu0 0
        %5217 = vmatprep.subr.bf16.mxu0 0
        %5218 = vmatpush1.bf16.xpose.msra.mxu0 0
        %5219 = vmatprep.subr.bf16.mxu0 0
        %5220 = vmatpush1.bf16.xpose.msra.mxu0 0
        %5221 = vmatprep.subr.bf16.mxu0 %v2964
        %5222 = vmatpush1.bf16.xpose.msra.mxu0 %v2963
        %5223 = vmatprep.subr.bf16.mxu0 %v2836
        %5224 = vmatpush1.bf16.xpose.msra.mxu0 %v2835
        %5225 = vmatprep.subr.bf16.mxu0 0
        %5226 = vmatpush2.bf16.xpose.msra.mxu0 0
        %5227 = vmatprep.subr.bf16.mxu0 0
        %5228 = vmatpush2.bf16.xpose.msra.mxu0 0
        %5229 = vmatprep.subr.bf16.mxu0 0
        %5230 = vmatpush2.bf16.xpose.msra.mxu0 0
        %5231 = vmatprep.subr.bf16.mxu0 0
        %5232 = vmatpush2.bf16.xpose.msra.mxu0 0
        %5233 = vmatprep.subr.bf16.mxu0 0
        %5234 = vmatpush2.bf16.xpose.msra.mxu0 0
        %5235 = vmatprep.subr.bf16.mxu0 0
        %5236 = vmatpush2.bf16.xpose.msra.mxu0 0
        %5237 = vmatprep.subr.bf16.mxu0 0
        %5238 = vmatpush2.bf16.xpose.msra.mxu0 0
        %5239 = vmatprep.subr.bf16.mxu0 0
        %5240 = vmatpush2.bf16.xpose.msra.mxu0 0
        %5241 = vmatprep.mubr.bf16.mxu0 %v1692
        %5242 = vmatmul.mubr.bf16.gmra.mxu0 %v1690
        %v5243 = vpop.f32.mrf.mxu0
        %v5244 = vadd.f32 %v5204, %v5243
        %v5245 = vpop.f32.mrf.mxu0
        %v5246 = vpop.f32.mrf.mxu0
        %v5247 = vpop.f32.mrf.mxu0
        %5248 = vdwg.mxu0
        %5249 = vmatprep.subr.bf16.mxu0 0
        %5250 = vmatpush1.bf16.xpose.msra.mxu0 0
        %5251 = vmatprep.subr.bf16.mxu0 0
        %5252 = vmatpush1.bf16.xpose.msra.mxu0 0
        %5253 = vmatprep.subr.bf16.mxu0 0
        %5254 = vmatpush1.bf16.xpose.msra.mxu0 0
        %5255 = vmatprep.subr.bf16.mxu0 0
        %5256 = vmatpush1.bf16.xpose.msra.mxu0 0
        %5257 = vmatprep.subr.bf16.mxu0 0
        %5258 = vmatpush1.bf16.xpose.msra.mxu0 0
        %5259 = vmatprep.subr.bf16.mxu0 0
        %5260 = vmatpush1.bf16.xpose.msra.mxu0 0
        %5261 = vmatprep.subr.bf16.mxu0 %v2966
        %5262 = vmatpush1.bf16.xpose.msra.mxu0 %v2965
        %5263 = vmatprep.subr.bf16.mxu0 %v2838
        %5264 = vmatpush1.bf16.xpose.msra.mxu0 %v2837
        %5265 = vmatprep.subr.bf16.mxu0 0
        %5266 = vmatpush2.bf16.xpose.msra.mxu0 0
        %5267 = vmatprep.subr.bf16.mxu0 0
        %5268 = vmatpush2.bf16.xpose.msra.mxu0 0
        %5269 = vmatprep.subr.bf16.mxu0 0
        %5270 = vmatpush2.bf16.xpose.msra.mxu0 0
        %5271 = vmatprep.subr.bf16.mxu0 0
        %5272 = vmatpush2.bf16.xpose.msra.mxu0 0
        %5273 = vmatprep.subr.bf16.mxu0 0
        %5274 = vmatpush2.bf16.xpose.msra.mxu0 0
        %5275 = vmatprep.subr.bf16.mxu0 0
        %5276 = vmatpush2.bf16.xpose.msra.mxu0 0
        %5277 = vmatprep.subr.bf16.mxu0 0
        %5278 = vmatpush2.bf16.xpose.msra.mxu0 0
        %5279 = vmatprep.subr.bf16.mxu0 0
        %5280 = vmatpush2.bf16.xpose.msra.mxu0 0
        %5281 = vmatprep.mubr.bf16.mxu0 %v1689
        %5282 = vmatmul.mubr.bf16.gmra.mxu0 %v1675
        %v5283 = vpop.f32.mrf.mxu0
        %v5284 = vadd.f32 %v5244, %v5283
        %v5285 = vpop.f32.mrf.mxu0
        %v5286 = vpop.f32.mrf.mxu0
        %v5287 = vpop.f32.mrf.mxu0
        %5288 = vdwg.mxu0
        %5289 = vmatprep.subr.bf16.mxu0 0
        %5290 = vmatpush1.bf16.xpose.msra.mxu0 0
        %5291 = vmatprep.subr.bf16.mxu0 0
        %5292 = vmatpush1.bf16.xpose.msra.mxu0 0
        %5293 = vmatprep.subr.bf16.mxu0 0
        %5294 = vmatpush1.bf16.xpose.msra.mxu0 0
        %5295 = vmatprep.subr.bf16.mxu0 0
        %5296 = vmatpush1.bf16.xpose.msra.mxu0 0
        %5297 = vmatprep.subr.bf16.mxu0 0
        %5298 = vmatpush1.bf16.xpose.msra.mxu0 0
        %5299 = vmatprep.subr.bf16.mxu0 0
        %5300 = vmatpush1.bf16.xpose.msra.mxu0 0
        %5301 = vmatprep.subr.bf16.mxu0 %v2968
        %5302 = vmatpush1.bf16.xpose.msra.mxu0 %v2967
        %5303 = vmatprep.subr.bf16.mxu0 %v2840
        %5304 = vmatpush1.bf16.xpose.msra.mxu0 %v2839
        %5305 = vmatprep.subr.bf16.mxu0 0
        %5306 = vmatpush2.bf16.xpose.msra.mxu0 0
        %5307 = vmatprep.subr.bf16.mxu0 0
        %5308 = vmatpush2.bf16.xpose.msra.mxu0 0
        %5309 = vmatprep.subr.bf16.mxu0 0
        %5310 = vmatpush2.bf16.xpose.msra.mxu0 0
        %5311 = vmatprep.subr.bf16.mxu0 0
        %5312 = vmatpush2.bf16.xpose.msra.mxu0 0
        %5313 = vmatprep.subr.bf16.mxu0 0
        %5314 = vmatpush2.bf16.xpose.msra.mxu0 0
        %5315 = vmatprep.subr.bf16.mxu0 0
        %5316 = vmatpush2.bf16.xpose.msra.mxu0 0
        %5317 = vmatprep.subr.bf16.mxu0 0
        %5318 = vmatpush2.bf16.xpose.msra.mxu0 0
        %5319 = vmatprep.subr.bf16.mxu0 0
        %5320 = vmatpush2.bf16.xpose.msra.mxu0 0
        %5321 = vmatprep.mubr.bf16.mxu0 %v1693
        %5322 = vmatmul.mubr.bf16.gmra.mxu0 %v1691
        %v5323 = vpop.f32.mrf.mxu0
        %v5324 = vadd.f32 %v5284, %v5323
        %v5325 = vpop.f32.mrf.mxu0
        %v5326 = vpop.f32.mrf.mxu0
        %v5327 = vpop.f32.mrf.mxu0
        %5328 = vdwg.mxu0
        %5329 = vmatprep.subr.bf16.mxu0 0
        %5330 = vmatpush1.bf16.xpose.msra.mxu0 0
        %5331 = vmatprep.subr.bf16.mxu0 0
        %5332 = vmatpush1.bf16.xpose.msra.mxu0 0
        %5333 = vmatprep.subr.bf16.mxu0 0
        %5334 = vmatpush1.bf16.xpose.msra.mxu0 0
        %5335 = vmatprep.subr.bf16.mxu0 0
        %5336 = vmatpush1.bf16.xpose.msra.mxu0 0
        %5337 = vmatprep.subr.bf16.mxu0 0
        %5338 = vmatpush1.bf16.xpose.msra.mxu0 0
        %5339 = vmatprep.subr.bf16.mxu0 0
        %5340 = vmatpush1.bf16.xpose.msra.mxu0 0
        %5341 = vmatprep.subr.bf16.mxu0 %v2970
        %5342 = vmatpush1.bf16.xpose.msra.mxu0 %v2969
        %5343 = vmatprep.subr.bf16.mxu0 %v2842
        %5344 = vmatpush1.bf16.xpose.msra.mxu0 %v2841
        %5345 = vmatprep.subr.bf16.mxu0 0
        %5346 = vmatpush2.bf16.xpose.msra.mxu0 0
        %5347 = vmatprep.subr.bf16.mxu0 0
        %5348 = vmatpush2.bf16.xpose.msra.mxu0 0
        %5349 = vmatprep.subr.bf16.mxu0 0
        %5350 = vmatpush2.bf16.xpose.msra.mxu0 0
        %5351 = vmatprep.subr.bf16.mxu0 0
        %5352 = vmatpush2.bf16.xpose.msra.mxu0 0
        %5353 = vmatprep.subr.bf16.mxu0 0
        %5354 = vmatpush2.bf16.xpose.msra.mxu0 0
        %5355 = vmatprep.subr.bf16.mxu0 0
        %5356 = vmatpush2.bf16.xpose.msra.mxu0 0
        %5357 = vmatprep.subr.bf16.mxu0 0
        %5358 = vmatpush2.bf16.xpose.msra.mxu0 0
        %5359 = vmatprep.subr.bf16.mxu0 0
        %5360 = vmatpush2.bf16.xpose.msra.mxu0 0
        %5361 = vmatprep.mubr.bf16.mxu0 %v1731
        %5362 = vmatmul.mubr.bf16.gmra.mxu0 %v1717
        %v5363 = vpop.f32.mrf.mxu0
        %v5364 = vadd.f32 %v5324, %v5363
        %v5365 = vpop.f32.mrf.mxu0
        %v5366 = vpop.f32.mrf.mxu0
        %v5367 = vpop.f32.mrf.mxu0
        %5368 = vdwg.mxu0
        %5369 = vmatprep.subr.bf16.mxu0 0
        %5370 = vmatpush1.bf16.xpose.msra.mxu0 0
        %5371 = vmatprep.subr.bf16.mxu0 0
        %5372 = vmatpush1.bf16.xpose.msra.mxu0 0
        %5373 = vmatprep.subr.bf16.mxu0 0
        %5374 = vmatpush1.bf16.xpose.msra.mxu0 0
        %5375 = vmatprep.subr.bf16.mxu0 0
        %5376 = vmatpush1.bf16.xpose.msra.mxu0 0
        %5377 = vmatprep.subr.bf16.mxu0 0
        %5378 = vmatpush1.bf16.xpose.msra.mxu0 0
        %5379 = vmatprep.subr.bf16.mxu0 0
        %5380 = vmatpush1.bf16.xpose.msra.mxu0 0
        %5381 = vmatprep.subr.bf16.mxu0 %v2972
        %5382 = vmatpush1.bf16.xpose.msra.mxu0 %v2971
        %5383 = vmatprep.subr.bf16.mxu0 %v2844
        %5384 = vmatpush1.bf16.xpose.msra.mxu0 %v2843
        %5385 = vmatprep.subr.bf16.mxu0 0
        %5386 = vmatpush2.bf16.xpose.msra.mxu0 0
        %5387 = vmatprep.subr.bf16.mxu0 0
        %5388 = vmatpush2.bf16.xpose.msra.mxu0 0
        %5389 = vmatprep.subr.bf16.mxu0 0
        %5390 = vmatpush2.bf16.xpose.msra.mxu0 0
        %5391 = vmatprep.subr.bf16.mxu0 0
        %5392 = vmatpush2.bf16.xpose.msra.mxu0 0
        %5393 = vmatprep.subr.bf16.mxu0 0
        %5394 = vmatpush2.bf16.xpose.msra.mxu0 0
        %5395 = vmatprep.subr.bf16.mxu0 0
        %5396 = vmatpush2.bf16.xpose.msra.mxu0 0
        %5397 = vmatprep.subr.bf16.mxu0 0
        %5398 = vmatpush2.bf16.xpose.msra.mxu0 0
        %5399 = vmatprep.subr.bf16.mxu0 0
        %5400 = vmatpush2.bf16.xpose.msra.mxu0 0
        %5401 = vmatprep.mubr.bf16.mxu0 %v1741
        %5402 = vmatmul.mubr.bf16.gmra.mxu0 %v1739
        %v5403 = vpop.f32.mrf.mxu0
        %v5404 = vadd.f32 %v5364, %v5403
        %v5405 = vpop.f32.mrf.mxu0
        %v5406 = vpop.f32.mrf.mxu0
        %v5407 = vpop.f32.mrf.mxu0
        %5408 = vdwg.mxu0
        %5409 = vmatprep.subr.bf16.mxu0 0
        %5410 = vmatpush1.bf16.xpose.msra.mxu0 0
        %5411 = vmatprep.subr.bf16.mxu0 0
        %5412 = vmatpush1.bf16.xpose.msra.mxu0 0
        %5413 = vmatprep.subr.bf16.mxu0 0
        %5414 = vmatpush1.bf16.xpose.msra.mxu0 0
        %5415 = vmatprep.subr.bf16.mxu0 0
        %5416 = vmatpush1.bf16.xpose.msra.mxu0 0
        %5417 = vmatprep.subr.bf16.mxu0 0
        %5418 = vmatpush1.bf16.xpose.msra.mxu0 0
        %5419 = vmatprep.subr.bf16.mxu0 0
        %5420 = vmatpush1.bf16.xpose.msra.mxu0 0
        %5421 = vmatprep.subr.bf16.mxu0 %v2974
        %5422 = vmatpush1.bf16.xpose.msra.mxu0 %v2973
        %5423 = vmatprep.subr.bf16.mxu0 %v2846
        %5424 = vmatpush1.bf16.xpose.msra.mxu0 %v2845
        %5425 = vmatprep.subr.bf16.mxu0 0
        %5426 = vmatpush2.bf16.xpose.msra.mxu0 0
        %5427 = vmatprep.subr.bf16.mxu0 0
        %5428 = vmatpush2.bf16.xpose.msra.mxu0 0
        %5429 = vmatprep.subr.bf16.mxu0 0
        %5430 = vmatpush2.bf16.xpose.msra.mxu0 0
        %5431 = vmatprep.subr.bf16.mxu0 0
        %5432 = vmatpush2.bf16.xpose.msra.mxu0 0
        %5433 = vmatprep.subr.bf16.mxu0 0
        %5434 = vmatpush2.bf16.xpose.msra.mxu0 0
        %5435 = vmatprep.subr.bf16.mxu0 0
        %5436 = vmatpush2.bf16.xpose.msra.mxu0 0
        %5437 = vmatprep.subr.bf16.mxu0 0
        %5438 = vmatpush2.bf16.xpose.msra.mxu0 0
        %5439 = vmatprep.subr.bf16.mxu0 0
        %5440 = vmatpush2.bf16.xpose.msra.mxu0 0
        %5441 = vmatprep.mubr.bf16.mxu0 %v1738
        %5442 = vmatmul.mubr.bf16.gmra.mxu0 %v1724
        %v5443 = vpop.f32.mrf.mxu0
        %v5444 = vadd.f32 %v5404, %v5443
        %v5445 = vpop.f32.mrf.mxu0
        %v5446 = vpop.f32.mrf.mxu0
        %v5447 = vpop.f32.mrf.mxu0
        %5448 = vdwg.mxu0
        %5449 = vmatprep.subr.bf16.mxu0 0
        %5450 = vmatpush1.bf16.xpose.msra.mxu0 0
        %5451 = vmatprep.subr.bf16.mxu0 0
        %5452 = vmatpush1.bf16.xpose.msra.mxu0 0
        %5453 = vmatprep.subr.bf16.mxu0 0
        %5454 = vmatpush1.bf16.xpose.msra.mxu0 0
        %5455 = vmatprep.subr.bf16.mxu0 0
        %5456 = vmatpush1.bf16.xpose.msra.mxu0 0
        %5457 = vmatprep.subr.bf16.mxu0 0
        %5458 = vmatpush1.bf16.xpose.msra.mxu0 0
        %5459 = vmatprep.subr.bf16.mxu0 0
        %5460 = vmatpush1.bf16.xpose.msra.mxu0 0
        %5461 = vmatprep.subr.bf16.mxu0 %v2976
        %5462 = vmatpush1.bf16.xpose.msra.mxu0 %v2975
        %5463 = vmatprep.subr.bf16.mxu0 %v2848
        %5464 = vmatpush1.bf16.xpose.msra.mxu0 %v2847
        %5465 = vmatprep.subr.bf16.mxu0 0
        %5466 = vmatpush2.bf16.xpose.msra.mxu0 0
        %5467 = vmatprep.subr.bf16.mxu0 0
        %5468 = vmatpush2.bf16.xpose.msra.mxu0 0
        %5469 = vmatprep.subr.bf16.mxu0 0
        %5470 = vmatpush2.bf16.xpose.msra.mxu0 0
        %5471 = vmatprep.subr.bf16.mxu0 0
        %5472 = vmatpush2.bf16.xpose.msra.mxu0 0
        %5473 = vmatprep.subr.bf16.mxu0 0
        %5474 = vmatpush2.bf16.xpose.msra.mxu0 0
        %5475 = vmatprep.subr.bf16.mxu0 0
        %5476 = vmatpush2.bf16.xpose.msra.mxu0 0
        %5477 = vmatprep.subr.bf16.mxu0 0
        %5478 = vmatpush2.bf16.xpose.msra.mxu0 0
        %5479 = vmatprep.subr.bf16.mxu0 0
        %5480 = vmatpush2.bf16.xpose.msra.mxu0 0
        %5481 = vmatprep.mubr.bf16.mxu0 %v1742
        %5482 = vmatmul.mubr.bf16.gmra.mxu0 %v1740
        %v5483 = vpop.f32.mrf.mxu0
        %v5484 = vadd.f32 %v5444, %v5483
        %v5485 = vpop.f32.mrf.mxu0
        %v5486 = vpop.f32.mrf.mxu0
        %v5487 = vpop.f32.mrf.mxu0
        %5488 = vdwg.mxu0
        %5489 = vmatprep.subr.bf16.mxu0 0
        %5490 = vmatpush1.bf16.xpose.msra.mxu0 0
        %5491 = vmatprep.subr.bf16.mxu0 0
        %5492 = vmatpush1.bf16.xpose.msra.mxu0 0
        %5493 = vmatprep.subr.bf16.mxu0 0
        %5494 = vmatpush1.bf16.xpose.msra.mxu0 0
        %5495 = vmatprep.subr.bf16.mxu0 0
        %5496 = vmatpush1.bf16.xpose.msra.mxu0 0
        %5497 = vmatprep.subr.bf16.mxu0 0
        %5498 = vmatpush1.bf16.xpose.msra.mxu0 0
        %5499 = vmatprep.subr.bf16.mxu0 0
        %5500 = vmatpush1.bf16.xpose.msra.mxu0 0
        %5501 = vmatprep.subr.bf16.mxu0 %v2978
        %5502 = vmatpush1.bf16.xpose.msra.mxu0 %v2977
        %5503 = vmatprep.subr.bf16.mxu0 %v2850
        %5504 = vmatpush1.bf16.xpose.msra.mxu0 %v2849
        %5505 = vmatprep.subr.bf16.mxu0 0
        %5506 = vmatpush2.bf16.xpose.msra.mxu0 0
        %5507 = vmatprep.subr.bf16.mxu0 0
        %5508 = vmatpush2.bf16.xpose.msra.mxu0 0
        %5509 = vmatprep.subr.bf16.mxu0 0
        %5510 = vmatpush2.bf16.xpose.msra.mxu0 0
        %5511 = vmatprep.subr.bf16.mxu0 0
        %5512 = vmatpush2.bf16.xpose.msra.mxu0 0
        %5513 = vmatprep.subr.bf16.mxu0 0
        %5514 = vmatpush2.bf16.xpose.msra.mxu0 0
        %5515 = vmatprep.subr.bf16.mxu0 0
        %5516 = vmatpush2.bf16.xpose.msra.mxu0 0
        %5517 = vmatprep.subr.bf16.mxu0 0
        %5518 = vmatpush2.bf16.xpose.msra.mxu0 0
        %5519 = vmatprep.subr.bf16.mxu0 0
        %5520 = vmatpush2.bf16.xpose.msra.mxu0 0
        %5521 = vmatprep.mubr.bf16.mxu0 %v1780
        %5522 = vmatmul.mubr.bf16.gmra.mxu0 %v1766
        %v5523 = vpop.f32.mrf.mxu0
        %v5524 = vadd.f32 %v5484, %v5523
        %v5525 = vpop.f32.mrf.mxu0
        %v5526 = vpop.f32.mrf.mxu0
        %v5527 = vpop.f32.mrf.mxu0
        %5528 = vdwg.mxu0
        %5529 = vmatprep.subr.bf16.mxu0 0
        %5530 = vmatpush1.bf16.xpose.msra.mxu0 0
        %5531 = vmatprep.subr.bf16.mxu0 0
        %5532 = vmatpush1.bf16.xpose.msra.mxu0 0
        %5533 = vmatprep.subr.bf16.mxu0 0
        %5534 = vmatpush1.bf16.xpose.msra.mxu0 0
        %5535 = vmatprep.subr.bf16.mxu0 0
        %5536 = vmatpush1.bf16.xpose.msra.mxu0 0
        %5537 = vmatprep.subr.bf16.mxu0 0
        %5538 = vmatpush1.bf16.xpose.msra.mxu0 0
        %5539 = vmatprep.subr.bf16.mxu0 0
        %5540 = vmatpush1.bf16.xpose.msra.mxu0 0
        %5541 = vmatprep.subr.bf16.mxu0 %v2980
        %5542 = vmatpush1.bf16.xpose.msra.mxu0 %v2979
        %5543 = vmatprep.subr.bf16.mxu0 %v2852
        %5544 = vmatpush1.bf16.xpose.msra.mxu0 %v2851
        %5545 = vmatprep.subr.bf16.mxu0 0
        %5546 = vmatpush2.bf16.xpose.msra.mxu0 0
        %5547 = vmatprep.subr.bf16.mxu0 0
        %5548 = vmatpush2.bf16.xpose.msra.mxu0 0
        %5549 = vmatprep.subr.bf16.mxu0 0
        %5550 = vmatpush2.bf16.xpose.msra.mxu0 0
        %5551 = vmatprep.subr.bf16.mxu0 0
        %5552 = vmatpush2.bf16.xpose.msra.mxu0 0
        %5553 = vmatprep.subr.bf16.mxu0 0
        %5554 = vmatpush2.bf16.xpose.msra.mxu0 0
        %5555 = vmatprep.subr.bf16.mxu0 0
        %5556 = vmatpush2.bf16.xpose.msra.mxu0 0
        %5557 = vmatprep.subr.bf16.mxu0 0
        %5558 = vmatpush2.bf16.xpose.msra.mxu0 0
        %5559 = vmatprep.subr.bf16.mxu0 0
        %5560 = vmatpush2.bf16.xpose.msra.mxu0 0
        %5561 = vmatprep.mubr.bf16.mxu0 %v1790
        %5562 = vmatmul.mubr.bf16.gmra.mxu0 %v1788
        %v5563 = vpop.f32.mrf.mxu0
        %v5564 = vadd.f32 %v5524, %v5563
        %v5565 = vpop.f32.mrf.mxu0
        %v5566 = vpop.f32.mrf.mxu0
        %v5567 = vpop.f32.mrf.mxu0
        %5568 = vdwg.mxu0
        %5569 = vmatprep.subr.bf16.mxu0 0
        %5570 = vmatpush1.bf16.xpose.msra.mxu0 0
        %5571 = vmatprep.subr.bf16.mxu0 0
        %5572 = vmatpush1.bf16.xpose.msra.mxu0 0
        %5573 = vmatprep.subr.bf16.mxu0 0
        %5574 = vmatpush1.bf16.xpose.msra.mxu0 0
        %5575 = vmatprep.subr.bf16.mxu0 0
        %5576 = vmatpush1.bf16.xpose.msra.mxu0 0
        %5577 = vmatprep.subr.bf16.mxu0 0
        %5578 = vmatpush1.bf16.xpose.msra.mxu0 0
        %5579 = vmatprep.subr.bf16.mxu0 0
        %5580 = vmatpush1.bf16.xpose.msra.mxu0 0
        %5581 = vmatprep.subr.bf16.mxu0 %v2982
        %5582 = vmatpush1.bf16.xpose.msra.mxu0 %v2981
        %5583 = vmatprep.subr.bf16.mxu0 %v2854
        %5584 = vmatpush1.bf16.xpose.msra.mxu0 %v2853
        %5585 = vmatprep.subr.bf16.mxu0 0
        %5586 = vmatpush2.bf16.xpose.msra.mxu0 0
        %5587 = vmatprep.subr.bf16.mxu0 0
        %5588 = vmatpush2.bf16.xpose.msra.mxu0 0
        %5589 = vmatprep.subr.bf16.mxu0 0
        %5590 = vmatpush2.bf16.xpose.msra.mxu0 0
        %5591 = vmatprep.subr.bf16.mxu0 0
        %5592 = vmatpush2.bf16.xpose.msra.mxu0 0
        %5593 = vmatprep.subr.bf16.mxu0 0
        %5594 = vmatpush2.bf16.xpose.msra.mxu0 0
        %5595 = vmatprep.subr.bf16.mxu0 0
        %5596 = vmatpush2.bf16.xpose.msra.mxu0 0
        %5597 = vmatprep.subr.bf16.mxu0 0
        %5598 = vmatpush2.bf16.xpose.msra.mxu0 0
        %5599 = vmatprep.subr.bf16.mxu0 0
        %5600 = vmatpush2.bf16.xpose.msra.mxu0 0
        %5601 = vmatprep.mubr.bf16.mxu0 %v1787
        %5602 = vmatmul.mubr.bf16.gmra.mxu0 %v1773
        %v5603 = vpop.f32.mrf.mxu0
        %v5604 = vadd.f32 %v5564, %v5603
        %v5605 = vpop.f32.mrf.mxu0
        %v5606 = vpop.f32.mrf.mxu0
        %v5607 = vpop.f32.mrf.mxu0
        %5608 = vdwg.mxu0
        %5609 = vmatprep.subr.bf16.mxu0 0
        %5610 = vmatpush1.bf16.xpose.msra.mxu0 0
        %5611 = vmatprep.subr.bf16.mxu0 0
        %5612 = vmatpush1.bf16.xpose.msra.mxu0 0
        %5613 = vmatprep.subr.bf16.mxu0 0
        %5614 = vmatpush1.bf16.xpose.msra.mxu0 0
        %5615 = vmatprep.subr.bf16.mxu0 0
        %5616 = vmatpush1.bf16.xpose.msra.mxu0 0
        %5617 = vmatprep.subr.bf16.mxu0 0
        %5618 = vmatpush1.bf16.xpose.msra.mxu0 0
        %5619 = vmatprep.subr.bf16.mxu0 0
        %5620 = vmatpush1.bf16.xpose.msra.mxu0 0
        %5621 = vmatprep.subr.bf16.mxu0 %v2984
        %5622 = vmatpush1.bf16.xpose.msra.mxu0 %v2983
        %5623 = vmatprep.subr.bf16.mxu0 %v2856
        %5624 = vmatpush1.bf16.xpose.msra.mxu0 %v2855
        %5625 = vmatprep.subr.bf16.mxu0 0
        %5626 = vmatpush2.bf16.xpose.msra.mxu0 0
        %5627 = vmatprep.subr.bf16.mxu0 0
        %5628 = vmatpush2.bf16.xpose.msra.mxu0 0
        %5629 = vmatprep.subr.bf16.mxu0 0
        %5630 = vmatpush2.bf16.xpose.msra.mxu0 0
        %5631 = vmatprep.subr.bf16.mxu0 0
        %5632 = vmatpush2.bf16.xpose.msra.mxu0 0
        %5633 = vmatprep.subr.bf16.mxu0 0
        %5634 = vmatpush2.bf16.xpose.msra.mxu0 0
        %5635 = vmatprep.subr.bf16.mxu0 0
        %5636 = vmatpush2.bf16.xpose.msra.mxu0 0
        %5637 = vmatprep.subr.bf16.mxu0 0
        %5638 = vmatpush2.bf16.xpose.msra.mxu0 0
        %5639 = vmatprep.subr.bf16.mxu0 0
        %5640 = vmatpush2.bf16.xpose.msra.mxu0 0
        %5641 = vmatprep.mubr.bf16.mxu0 %v1791
        %5642 = vmatmul.mubr.bf16.gmra.mxu0 %v1789
        %v5643 = vpop.f32.mrf.mxu0
        %v5644 = vadd.f32 %v5604, %v5643
        %v5645 = vpop.f32.mrf.mxu0
        %v5646 = vpop.f32.mrf.mxu0
        %v5647 = vpop.f32.mrf.mxu0
        %5648 = vdwg.mxu0
        %5649 = vmatprep.subr.bf16.mxu0 0
        %5650 = vmatpush1.bf16.xpose.msra.mxu0 0
        %5651 = vmatprep.subr.bf16.mxu0 0
        %5652 = vmatpush1.bf16.xpose.msra.mxu0 0
        %5653 = vmatprep.subr.bf16.mxu0 0
        %5654 = vmatpush1.bf16.xpose.msra.mxu0 0
        %5655 = vmatprep.subr.bf16.mxu0 0
        %5656 = vmatpush1.bf16.xpose.msra.mxu0 0
        %5657 = vmatprep.subr.bf16.mxu0 0
        %5658 = vmatpush1.bf16.xpose.msra.mxu0 0
        %5659 = vmatprep.subr.bf16.mxu0 0
        %5660 = vmatpush1.bf16.xpose.msra.mxu0 0
        %5661 = vmatprep.subr.bf16.mxu0 %v2986
        %5662 = vmatpush1.bf16.xpose.msra.mxu0 %v2985
        %5663 = vmatprep.subr.bf16.mxu0 %v2858
        %5664 = vmatpush1.bf16.xpose.msra.mxu0 %v2857
        %5665 = vmatprep.subr.bf16.mxu0 0
        %5666 = vmatpush2.bf16.xpose.msra.mxu0 0
        %5667 = vmatprep.subr.bf16.mxu0 0
        %5668 = vmatpush2.bf16.xpose.msra.mxu0 0
        %5669 = vmatprep.subr.bf16.mxu0 0
        %5670 = vmatpush2.bf16.xpose.msra.mxu0 0
        %5671 = vmatprep.subr.bf16.mxu0 0
        %5672 = vmatpush2.bf16.xpose.msra.mxu0 0
        %5673 = vmatprep.subr.bf16.mxu0 0
        %5674 = vmatpush2.bf16.xpose.msra.mxu0 0
        %5675 = vmatprep.subr.bf16.mxu0 0
        %5676 = vmatpush2.bf16.xpose.msra.mxu0 0
        %5677 = vmatprep.subr.bf16.mxu0 0
        %5678 = vmatpush2.bf16.xpose.msra.mxu0 0
        %5679 = vmatprep.subr.bf16.mxu0 0
        %5680 = vmatpush2.bf16.xpose.msra.mxu0 0
        %5681 = vmatprep.mubr.bf16.mxu0 %v1829
        %5682 = vmatmul.mubr.bf16.gmra.mxu0 %v1815
        %v5683 = vpop.f32.mrf.mxu0
        %v5684 = vadd.f32 %v5644, %v5683
        %v5685 = vpop.f32.mrf.mxu0
        %v5686 = vpop.f32.mrf.mxu0
        %v5687 = vpop.f32.mrf.mxu0
        %5688 = vdwg.mxu0
        %5689 = vmatprep.subr.bf16.mxu0 0
        %5690 = vmatpush1.bf16.xpose.msra.mxu0 0
        %5691 = vmatprep.subr.bf16.mxu0 0
        %5692 = vmatpush1.bf16.xpose.msra.mxu0 0
        %5693 = vmatprep.subr.bf16.mxu0 0
        %5694 = vmatpush1.bf16.xpose.msra.mxu0 0
        %5695 = vmatprep.subr.bf16.mxu0 0
        %5696 = vmatpush1.bf16.xpose.msra.mxu0 0
        %5697 = vmatprep.subr.bf16.mxu0 0
        %5698 = vmatpush1.bf16.xpose.msra.mxu0 0
        %5699 = vmatprep.subr.bf16.mxu0 0
        %5700 = vmatpush1.bf16.xpose.msra.mxu0 0
        %5701 = vmatprep.subr.bf16.mxu0 %v2988
        %5702 = vmatpush1.bf16.xpose.msra.mxu0 %v2987
        %5703 = vmatprep.subr.bf16.mxu0 %v2860
        %5704 = vmatpush1.bf16.xpose.msra.mxu0 %v2859
        %5705 = vmatprep.subr.bf16.mxu0 0
        %5706 = vmatpush2.bf16.xpose.msra.mxu0 0
        %5707 = vmatprep.subr.bf16.mxu0 0
        %5708 = vmatpush2.bf16.xpose.msra.mxu0 0
        %5709 = vmatprep.subr.bf16.mxu0 0
        %5710 = vmatpush2.bf16.xpose.msra.mxu0 0
        %5711 = vmatprep.subr.bf16.mxu0 0
        %5712 = vmatpush2.bf16.xpose.msra.mxu0 0
        %5713 = vmatprep.subr.bf16.mxu0 0
        %5714 = vmatpush2.bf16.xpose.msra.mxu0 0
        %5715 = vmatprep.subr.bf16.mxu0 0
        %5716 = vmatpush2.bf16.xpose.msra.mxu0 0
        %5717 = vmatprep.subr.bf16.mxu0 0
        %5718 = vmatpush2.bf16.xpose.msra.mxu0 0
        %5719 = vmatprep.subr.bf16.mxu0 0
        %5720 = vmatpush2.bf16.xpose.msra.mxu0 0
        %5721 = vmatprep.mubr.bf16.mxu0 %v1839
        %5722 = vmatmul.mubr.bf16.gmra.mxu0 %v1837
        %v5723 = vpop.f32.mrf.mxu0
        %v5724 = vadd.f32 %v5684, %v5723
        %v5725 = vpop.f32.mrf.mxu0
        %v5726 = vpop.f32.mrf.mxu0
        %v5727 = vpop.f32.mrf.mxu0
        %5728 = vdwg.mxu0
        %5729 = vmatprep.subr.bf16.mxu0 0
        %5730 = vmatpush1.bf16.xpose.msra.mxu0 0
        %5731 = vmatprep.subr.bf16.mxu0 0
        %5732 = vmatpush1.bf16.xpose.msra.mxu0 0
        %5733 = vmatprep.subr.bf16.mxu0 0
        %5734 = vmatpush1.bf16.xpose.msra.mxu0 0
        %5735 = vmatprep.subr.bf16.mxu0 0
        %5736 = vmatpush1.bf16.xpose.msra.mxu0 0
        %5737 = vmatprep.subr.bf16.mxu0 0
        %5738 = vmatpush1.bf16.xpose.msra.mxu0 0
        %5739 = vmatprep.subr.bf16.mxu0 0
        %5740 = vmatpush1.bf16.xpose.msra.mxu0 0
        %5741 = vmatprep.subr.bf16.mxu0 %v2990
        %5742 = vmatpush1.bf16.xpose.msra.mxu0 %v2989
        %5743 = vmatprep.subr.bf16.mxu0 %v2862
        %5744 = vmatpush1.bf16.xpose.msra.mxu0 %v2861
        %5745 = vmatprep.subr.bf16.mxu0 0
        %5746 = vmatpush2.bf16.xpose.msra.mxu0 0
        %5747 = vmatprep.subr.bf16.mxu0 0
        %5748 = vmatpush2.bf16.xpose.msra.mxu0 0
        %5749 = vmatprep.subr.bf16.mxu0 0
        %5750 = vmatpush2.bf16.xpose.msra.mxu0 0
        %5751 = vmatprep.subr.bf16.mxu0 0
        %5752 = vmatpush2.bf16.xpose.msra.mxu0 0
        %5753 = vmatprep.subr.bf16.mxu0 0
        %5754 = vmatpush2.bf16.xpose.msra.mxu0 0
        %5755 = vmatprep.subr.bf16.mxu0 0
        %5756 = vmatpush2.bf16.xpose.msra.mxu0 0
        %5757 = vmatprep.subr.bf16.mxu0 0
        %5758 = vmatpush2.bf16.xpose.msra.mxu0 0
        %5759 = vmatprep.subr.bf16.mxu0 0
        %5760 = vmatpush2.bf16.xpose.msra.mxu0 0
        %5761 = vmatprep.mubr.bf16.mxu0 %v1836
        %5762 = vmatmul.mubr.bf16.gmra.mxu0 %v1822
        %v5763 = vpop.f32.mrf.mxu0
        %v5764 = vadd.f32 %v5724, %v5763
        %v5765 = vpop.f32.mrf.mxu0
        %v5766 = vpop.f32.mrf.mxu0
        %v5767 = vpop.f32.mrf.mxu0
        %5768 = vdwg.mxu0
        %5769 = vmatprep.subr.bf16.mxu0 0
        %5770 = vmatpush1.bf16.xpose.msra.mxu0 0
        %5771 = vmatprep.subr.bf16.mxu0 0
        %5772 = vmatpush1.bf16.xpose.msra.mxu0 0
        %5773 = vmatprep.subr.bf16.mxu0 0
        %5774 = vmatpush1.bf16.xpose.msra.mxu0 0
        %5775 = vmatprep.subr.bf16.mxu0 0
        %5776 = vmatpush1.bf16.xpose.msra.mxu0 0
        %5777 = vmatprep.subr.bf16.mxu0 0
        %5778 = vmatpush1.bf16.xpose.msra.mxu0 0
        %5779 = vmatprep.subr.bf16.mxu0 0
        %5780 = vmatpush1.bf16.xpose.msra.mxu0 0
        %5781 = vmatprep.subr.bf16.mxu0 %v2992
        %5782 = vmatpush1.bf16.xpose.msra.mxu0 %v2991
        %5783 = vmatprep.subr.bf16.mxu0 %v2864
        %5784 = vmatpush1.bf16.xpose.msra.mxu0 %v2863
        %5785 = vmatprep.subr.bf16.mxu0 0
        %5786 = vmatpush2.bf16.xpose.msra.mxu0 0
        %5787 = vmatprep.subr.bf16.mxu0 0
        %5788 = vmatpush2.bf16.xpose.msra.mxu0 0
        %5789 = vmatprep.subr.bf16.mxu0 0
        %5790 = vmatpush2.bf16.xpose.msra.mxu0 0
        %5791 = vmatprep.subr.bf16.mxu0 0
        %5792 = vmatpush2.bf16.xpose.msra.mxu0 0
        %5793 = vmatprep.subr.bf16.mxu0 0
        %5794 = vmatpush2.bf16.xpose.msra.mxu0 0
        %5795 = vmatprep.subr.bf16.mxu0 0
        %5796 = vmatpush2.bf16.xpose.msra.mxu0 0
        %5797 = vmatprep.subr.bf16.mxu0 0
        %5798 = vmatpush2.bf16.xpose.msra.mxu0 0
        %5799 = vmatprep.subr.bf16.mxu0 0
        %5800 = vmatpush2.bf16.xpose.msra.mxu0 0
        %5801 = vmatprep.mubr.bf16.mxu0 %v1840
        %5802 = vmatmul.mubr.bf16.gmra.mxu0 %v1838
        %v5803 = vpop.f32.mrf.mxu0
        %v5804 = vadd.f32 %v5764, %v5803
        %v5805 = vpop.f32.mrf.mxu0
        %v5806 = vpop.f32.mrf.mxu0
        %v5807 = vpop.f32.mrf.mxu0
        %5808 = vdwg.mxu0
        %v5809 = vadd.f32 %v768, %v5804
        %vm5810 = vcmask 254976
        %5811 = vst.msk [vmem:[#allocation2] sm:$0x3] %vm5810, %v5809
        %p5812 = scmp.eq.s32.totalorder %s17, 1
        // Predicated region
        $region68: #{pixel_encoder_forward.3} parent=58 // pred_check
          %p5813 = pneg %p5812
        $region69: #{pixel_encoder_forward.3} parent=58 // pred_check_branch
          %5815 = sbr.rel (%p5813) target = $region71
        $region70: #{pixel_encoder_forward.3} parent=58 // pred_region
          %v5816 = vld [vmem:[#allocation2] sm:$0x3]
          %v5817 = vld [vmem:[%s2] sm:$0x1]
          %v5819 = vlaneseq
          %v5820 = vshrl.u32 %v5819, 7
          %v5821 = vsub.s32 0, %v5820
          %v5822 = vrot.slane %v5817, %v5821
          %v5824 = vadd.f32 %v5816, %v5822
          %v5825 = vsel %vm5810, %v5824, 0.0
          %5826 = vadd.xlane.f32.xlu0 %v5825
          %v5827 = vpop.xlane.xlu0 %5826
          %v5828 = vrcp.pop 32.0
          %v5829 = vmul.f32 %v5827, %v5828
          %v5830 = vsub.f32 %v5824, %v5829
          %v5831 = vmul.f32 %v5830, %v5830
          %v5832 = vsel %vm5810, %v5831, 0.0
          %5833 = vadd.xlane.f32.xlu0 %v5832
          %v5834 = vpop.xlane.xlu0 %5833
          %v5835 = vmul.f32 %v5834, %v5828
          %v5836 = vadd.f32 %v5835, 1e-05
          %v5837 = vrsqrt.pop %v5836
          %v5838 = vmul.f32 %v5830, %v5837
          %v5839 = vld [vmem:[%s3] sm:$0x1]
          %v5841 = vlaneseq
          %v5842 = vshrl.u32 %v5841, 7
          %v5843 = vsub.s32 0, %v5842
          %v5844 = vrot.slane %v5839, %v5843
          %v5846 = vmul.f32 %v5838, %v5844
          %v5847 = vld [vmem:[%s4] sm:$0x1]
          %v5849 = vlaneseq
          %v5850 = vshrl.u32 %v5849, 7
          %v5851 = vsub.s32 0, %v5850
          %v5852 = vrot.slane %v5847, %v5851
          %v5854 = vadd.f32 %v5846, %v5852
          %v5855 = vtanh.pop %v5854
          %5856 = vst.msk [vmem:[#allocation4] sm:$0x3] %vm5810, %v5855
        $region71: #{pixel_encoder_forward.3} parent=58 // pred_fallthru
          _
        // Predicated region
        $region72: #{pixel_encoder_forward.3} parent=58 // pred_check
          %p5857 = pneg %p145
        $region73: #{pixel_encoder_forward.3} parent=58 // pred_check_branch
          %5859 = sbr.rel (%p5857) target = $region75
        $region74: #{pixel_encoder_forward.3} parent=58 // pred_region
          %s5861 = ssub.s32 32, 32
          %5862 = vsyncadd [#allocation5], %s5861
          %s5864 = sshll.u32 [#allocation4], 4
          %s5865 = int_to_ptr.vmem [resolvable:$true] %s5864
          %5867 = dma.vmem_to_hbm [thread:$0]  %s5865, 32, %s5, [#allocation5]
        $region75: #{pixel_encoder_forward.3} parent=58 // pred_fallthru
          _
        // Predicated region
        $region76: #{pixel_encoder_forward.3} parent=58 // pred_check
          %p5868 = pneg %p145
        $region77: #{pixel_encoder_forward.3} parent=58 // pred_check_branch
          %5870 = sbr.rel (%p5868) target = $region79
        $region78: #{pixel_encoder_forward.3} parent=58 // pred_region
          %5871 = dma.done [#allocation5], 32
        $region79: #{pixel_encoder_forward.3} parent=58 // pred_fallthru
          _
      $region59: #{pixel_encoder_forward.3} parent=5 // pred_fallthru
        _
      %p5872 = scmp.le.s32.totalorder 2, %s12
      // Predicated region
      $region80: #{pixel_encoder_forward.3} parent=5 // pred_check
        %p5873 = pneg %p5872
      $region81: #{pixel_encoder_forward.3} parent=5 // pred_check_branch
        %5875 = sbr.rel (%p5873) target = $region83
      $region82: #{pixel_encoder_forward.3} parent=5 // pred_region
        %s5876 = ssub.s32 %s12, 2
      $region83: #{pixel_encoder_forward.3} parent=5 // pred_fallthru
        _
    $region6: #{pixel_encoder_forward.3} parent=1 // loop_footer
      %s16 = sadd.s32 1, %s12
    $region7: #{pixel_encoder_forward.3} parent=1 // loop_footer_branch
      %11 = sbr.rel target = $region3
    $region8: #{pixel_encoder_forward.3} parent=1 // loop_exit
      _
    %5877 = vsyncpa [#allocation5], 1
    %s5878 = scalar_lea.sflag [#allocation5], 1
    %5879 = vsyncpa %s5878, 1

</llo_original>
